<compile_context>
chip_gen: v5e
topology: v5e:2x2
jax: 0.10.0
libtpu: 0.0.40
codegen_flags: <defaults>
</compile_context>

<pallas_src>
import functools

import jax
import jax.numpy as jnp
from jax.experimental import pallas as pl
from jax.experimental.pallas import tpu as pltpu

EPS = 1e-5
LANE = 128


def _ceil_to(v, m):
    return (v + m - 1) // m * m


# ------------------------------ fused Pallas kernel ---------------------------

def _vgg_block_kernel(xcol_ref, w1_ref, g1_ref, beta1_ref,
                      w2_ref, g2_ref, beta2_ref,
                      o_ref, mid_ref, *, n, h, w, eps):
    """Fused VGGBlock: conv1(3x3,pad=1) + BN1 + ReLU + conv2(3x3,pad=1) + BN2 + ReLU.

    xcol_ref : (m, k1p)              bf16  layer-1 im2col (taps packed into K, lane-padded)
    w1_ref   : (k1p, c1p)            bf16  layer-1 weights, (kh,kw,cin)-major packed K
    g1_ref   : (1, c1p)              f32   BN1 gamma
    beta1_ref: (1, c1p)              f32   BN1 beta
    w2_ref   : (9, c1p, c2p)         bf16  layer-2 weights, tap-major
    g2_ref   : (1, c2p)              f32   BN2 gamma
    beta2_ref: (1, c2p)              f32   BN2 beta
    o_ref    : (m, c2p)              f32   output rows = N*H*W, lane-dense channels
    mid_ref  : (n, h+2, w_pad, c1p)  bf16  VMEM scratch: spatially padded layer-1 output
    """
    c1p = mid_ref.shape[-1]
    m = n * h * w
    inv_m = 1.0 / m

    # ---------------- layer 1: single packed-K matmul + BN(batch stats) + ReLU -------------
    y1 = jnp.dot(xcol_ref[...], w1_ref[...], preferred_element_type=jnp.float32)  # (m, c1p)
    mean1 = jnp.sum(y1, axis=0, keepdims=True) * inv_m
    yc1 = y1 - mean1
    var1 = jnp.sum(yc1 * yc1, axis=0, keepdims=True) * inv_m       # biased var (PyTorch norm)
    scale1 = g1_ref[...] * jax.lax.rsqrt(var1 + eps)               # folded per-channel scale
    h1 = jnp.maximum(yc1 * scale1 + beta1_ref[...], 0.0)

    # Store layer-1 activation into the spatially padded VMEM scratch (bf16, zero halo).
    # Zero-padded channel columns stay exactly zero through conv/BN/ReLU.
    mid_ref[...] = jnp.zeros_like(mid_ref)
    mid_ref[:, 1:h + 1, 1:w + 1, :] = h1.astype(mid_ref.dtype).reshape(n, h, w, c1p)

    # ---------------- layer 2: 9-tap window matmuls read straight from VMEM ----------------
    # The 3 kw taps of each kh row are summed in one expression; the first kh group writes
    # o_ref with '=' (no zero-fill), so only 3 accumulator passes hit VMEM.
    for kh in range(3):
        t = None
        for kw in range(3):
            patch = mid_ref[:, kh:kh + h, kw:kw + w, :].reshape(m, c1p)      # bf16, in VMEM
            d = jnp.dot(patch, w2_ref[kh * 3 + kw], preferred_element_type=jnp.float32)
            t = d if t is None else t + d
        if kh == 0:
            o_ref[...] = t
        else:
            o_ref[...] += t

    # ---------------- BN2 (batch stats) + ReLU epilogue, in place in o_ref -----------------
    y2 = o_ref[...]
    mean2 = jnp.sum(y2, axis=0, keepdims=True) * inv_m
    yc2 = y2 - mean2
    var2 = jnp.sum(yc2 * yc2, axis=0, keepdims=True) * inv_m
    scale2 = g2_ref[...] * jax.lax.rsqrt(var2 + eps)
    o_ref[...] = jnp.maximum(yc2 * scale2 + beta2_ref[...], 0.0)


# ------------------------------ op wrapper / forward ---------------------------

def vgg_block_forward(params, x_nchw):
    """VGGBlock forward: conv1 -> bn1 -> relu -> conv2 -> bn2 -> relu (one pallas_call)."""
    x = jnp.transpose(x_nchw, (0, 2, 3, 1)).astype(jnp.float32)    # NCHW -> NHWC
    n, h, w, cin = x.shape
    c1 = params['w1'].shape[-1]
    c2 = params['w2'].shape[-1]
    m = n * h * w
    assert w % 8 == 0 and m % 8 == 0, "W and N*H*W should be multiples of 8"

    c1p = _ceil_to(c1, LANE)
    c2p = _ceil_to(c2, LANE)
    k1 = 9 * cin
    k1p = _ceil_to(k1, LANE)
    w_pad = _ceil_to(w + 2, 8)                                     # sublane-friendly width

    # Layer-1 im2col: pack the 9 taps (real cin only) into the contraction dim, bf16.
    xp = jnp.pad(x, ((0, 0), (1, 1), (1, 1), (0, 0))).astype(jnp.bfloat16)
    cols = [xp[:, kh:kh + h, kw:kw + w, :] for kh in range(3) for kw in range(3)]
    xcol = jnp.concatenate(cols, axis=-1).reshape(m, k1)
    xcol = jnp.pad(xcol, ((0, 0), (0, k1p - k1)))                  # (m, k1p) bf16

    # Weights: layer-1 packed (K, Cout); layer-2 tap-major (9, Cin_p, Cout_p). bf16 for MXU.
    w1 = params['w1'].reshape(k1, c1)
    w1 = jnp.pad(w1, ((0, k1p - k1), (0, c1p - c1))).astype(jnp.bfloat16)
    w2 = jnp.pad(params['w2'], ((0, 0), (0, 0), (0, c1p - c1), (0, c2p - c2)))
    w2 = w2.reshape(9, c1p, c2p).astype(jnp.bfloat16)

    # BN affine params (conv biases are NOT passed: training-mode BN mean-subtraction
    # cancels a per-channel constant bias exactly).
    g1 = jnp.pad(params['bn1_g'], (0, c1p - c1)).reshape(1, c1p).astype(jnp.float32)
    b1 = jnp.pad(params['bn1_b'], (0, c1p - c1)).reshape(1, c1p).astype(jnp.float32)
    g2 = jnp.pad(params['bn2_g'], (0, c2p - c2)).reshape(1, c2p).astype(jnp.float32)
    b2 = jnp.pad(params['bn2_b'], (0, c2p - c2)).reshape(1, c2p).astype(jnp.float32)

    out = pl.pallas_call(
        functools.partial(_vgg_block_kernel, n=n, h=h, w=w, eps=EPS),
        out_shape=jax.ShapeDtypeStruct((m, c2p), jnp.float32),
        scratch_shapes=[pltpu.VMEM((n, h + 2, w_pad, c1p), jnp.bfloat16)],
    )(xcol, w1, g1, b1, w2, g2, b2)

    out = out[:, :c2].reshape(n, h, w, c2)
    return jnp.transpose(out, (0, 3, 1, 2))                        # NHWC -> NCHW


# ------------------------------- pure-JAX reference ----------------------------

def vgg_block_reference(params, x_nchw):
    """bf16-matched pure-JAX reference (includes the conv bias, which BN cancels)."""
    x = jnp.transpose(x_nchw, (0, 2, 3, 1)).astype(jnp.float32)

    def layer(inp, wt, bias, gamma, beta):
        n, h, w, cin = inp.shape
        xp = jnp.pad(inp, ((0, 0), (1, 1), (1, 1), (0, 0))).astype(jnp.bfloat16)
        cols = [xp[:, kh:kh + h, kw:kw + w, :] for kh in range(3) for kw in range(3)]
        xcol = jnp.concatenate(cols, axis=-1).reshape(n * h * w, 9 * cin)
        wk = wt.reshape(9 * cin, -1).astype(jnp.bfloat16)
        y = jnp.dot(xcol, wk, preferred_element_type=jnp.float32) + bias[None, :]
        mean = jnp.mean(y, axis=0, keepdims=True)
        yc = y - mean
        var = jnp.mean(yc * yc, axis=0, keepdims=True)
        out = jnp.maximum(yc * (gamma * jax.lax.rsqrt(var + EPS)) + beta, 0.0)
        return out.reshape(n, h, w, -1)

    h1 = layer(x, params['w1'], params['b1'], params['bn1_g'], params['bn1_b'])
    h2 = layer(h1, params['w2'], params['b2'], params['bn2_g'], params['bn2_b'])
    return jnp.transpose(h2, (0, 3, 1, 2))


# ------------------------------- parameters ------------------------------------

def build_params(key, in_c, mid_c, out_c):
    # Deterministic random init; BN affine params use the PyTorch defaults (weight=1, bias=0).
    # BN runs with batch statistics (freshly constructed module in default training mode).
    k1, k2, k3, k4 = jax.random.split(key, 4)

    def conv_w(k, cin, cout):
        fan_in = cin * 9
        return jax.random.normal(k, (3, 3, cin, cout), jnp.float32) / (fan_in ** 0.5)

    return {
        'w1': conv_w(k1, in_c, mid_c),
        'b1': 0.01 * jax.random.normal(k2, (mid_c,), jnp.float32),
        'bn1_g': jnp.ones((mid_c,), jnp.float32),
        'bn1_b': jnp.zeros((mid_c,), jnp.float32),
        'w2': conv_w(k3, mid_c, out_c),
        'b2': 0.01 * jax.random.normal(k4, (out_c,), jnp.float32),
        'bn2_g': jnp.ones((out_c,), jnp.float32),
        'bn2_b': jnp.zeros((out_c,), jnp.float32),
    }


# ---------------------------------- main ---------------------------------------

if __name__ == "__main__":
    N, C, H, W = 2, 4, 16, 16          # small NCHW input
    MID, OUT = 32, 32                  # VGGBlock(in=4, middle=32, out=32)

    key = jax.random.PRNGKey(0)
    x = jax.random.normal(key, (N, C, H, W), jnp.float32)
    params = build_params(jax.random.fold_in(key, 1), C, MID, OUT)

    fwd = jax.jit(vgg_block_forward)
    out = jax.block_until_ready(fwd(params, x))

    assert out.shape == (N, OUT, H, W), out.shape
    assert bool(jnp.all(jnp.isfinite(out)))

    ref = vgg_block_reference(params, x)
    max_err = float(jnp.max(jnp.abs(out - ref)))
    assert max_err < 1e-2, f"max abs err vs reference: {max_err}"

    print("KERNEL_OK")
</pallas_src>

<mosaic_0001>
module attributes {stable_mosaic.version = 11 : i64} {
  func.func @_vgg_block_kernel(%arg0: memref<512x128xbf16, #tpu.memory_space<vmem>>, %arg1: memref<128x128xbf16, #tpu.memory_space<vmem>>, %arg2: memref<1x128xf32, #tpu.memory_space<vmem>>, %arg3: memref<1x128xf32, #tpu.memory_space<vmem>>, %arg4: memref<9x128x128xbf16, #tpu.memory_space<vmem>>, %arg5: memref<1x128xf32, #tpu.memory_space<vmem>>, %arg6: memref<1x128xf32, #tpu.memory_space<vmem>>, %arg7: memref<512x128xf32, #tpu.memory_space<vmem>>, %arg8: memref<2x18x24x128xbf16, #tpu.memory_space<vmem>>) attributes {dimension_semantics = [], scalar_prefetch = 0 : i64, scratch_operands = 1 : i64, tpu.core_type = #tpu.core_type<tc>} {
    %c0 = arith.constant 0 : index
    %c0_0 = arith.constant 0 : index
    %0 = vector.load %arg0[%c0, %c0_0] : memref<512x128xbf16, #tpu.memory_space<vmem>>, vector<512x128xbf16>
    %c0_1 = arith.constant 0 : index
    %c0_2 = arith.constant 0 : index
    %1 = vector.load %arg1[%c0_1, %c0_2] : memref<128x128xbf16, #tpu.memory_space<vmem>>, vector<128x128xbf16>
    %cst = arith.constant dense<0.000000e+00> : vector<512x128xf32>
    %2 = tpu.matmul %0, %1, %cst {dimension_numbers = #tpu.dot_dimension_numbers<[1], [0], [0], [1], [0, 0, 1, 1], [], []>} : vector<512x128xbf16>, vector<128x128xbf16>, vector<512x128xf32> -> vector<512x128xf32>
    %cst_3 = arith.constant dense<0.000000e+00> : vector<128xf32>
    %3 = vector.multi_reduction <add>, %2, %cst_3 [0] : vector<512x128xf32> to vector<128xf32>
    %4 = vector.shape_cast %3 : vector<128xf32> to vector<1x128xf32>
    %cst_4 = arith.constant 0.001953125 : f32
    %5 = vector.broadcast %cst_4 : f32 to vector<1x128xf32>
    %6 = arith.mulf %4, %5 : vector<1x128xf32>
    %7 = vector.broadcast %6 : vector<1x128xf32> to vector<512x128xf32>
    %8 = arith.subf %2, %7 : vector<512x128xf32>
    %9 = arith.mulf %8, %8 : vector<512x128xf32>
    %cst_5 = arith.constant dense<0.000000e+00> : vector<128xf32>
    %10 = vector.multi_reduction <add>, %9, %cst_5 [0] : vector<512x128xf32> to vector<128xf32>
    %11 = vector.shape_cast %10 : vector<128xf32> to vector<1x128xf32>
    %cst_6 = arith.constant 0.001953125 : f32
    %12 = vector.broadcast %cst_6 : f32 to vector<1x128xf32>
    %13 = arith.mulf %11, %12 : vector<1x128xf32>
    %c0_7 = arith.constant 0 : index
    %c0_8 = arith.constant 0 : index
    %14 = vector.load %arg2[%c0_7, %c0_8] : memref<1x128xf32, #tpu.memory_space<vmem>>, vector<1x128xf32>
    %cst_9 = arith.constant 9.99999974E-6 : f32
    %15 = vector.broadcast %cst_9 : f32 to vector<1x128xf32>
    %16 = arith.addf %13, %15 : vector<1x128xf32>
    %17 = math.rsqrt %16 : vector<1x128xf32>
    %18 = arith.mulf %14, %17 : vector<1x128xf32>
    %19 = vector.broadcast %18 : vector<1x128xf32> to vector<512x128xf32>
    %20 = arith.mulf %8, %19 : vector<512x128xf32>
    %c0_10 = arith.constant 0 : index
    %c0_11 = arith.constant 0 : index
    %21 = vector.load %arg3[%c0_10, %c0_11] : memref<1x128xf32, #tpu.memory_space<vmem>>, vector<1x128xf32>
    %22 = vector.broadcast %21 : vector<1x128xf32> to vector<512x128xf32>
    %23 = arith.addf %20, %22 : vector<512x128xf32>
    %cst_12 = arith.constant 0.000000e+00 : f32
    %24 = vector.broadcast %cst_12 : f32 to vector<512x128xf32>
    %25 = arith.maximumf %23, %24 : vector<512x128xf32>
    %cst_13 = arith.constant 0.000000e+00 : bf16
    %26 = vector.broadcast %cst_13 : bf16 to vector<2x18x24x128xbf16>
    %c0_14 = arith.constant 0 : index
    %c0_15 = arith.constant 0 : index
    %c0_16 = arith.constant 0 : index
    %c0_17 = arith.constant 0 : index
    %27 = vector.load %arg8[%c0_14, %c0_15, %c0_16, %c0_17] : memref<2x18x24x128xbf16, #tpu.memory_space<vmem>>, vector<2x18x24x128xbf16>
    tpu.vector_store %arg8[%c0_14, %c0_15, %c0_16, %c0_17], %26 {strides = array<i32>} : memref<2x18x24x128xbf16, #tpu.memory_space<vmem>>, vector<2x18x24x128xbf16>,
    %28 = arith.truncf %25 : vector<512x128xf32> to vector<512x128xbf16>
    %29 = vector.shape_cast %28 : vector<512x128xbf16> to vector<2x16x16x128xbf16>
    %c0_18 = arith.constant 0 : index
    %c1 = arith.constant 1 : index
    %c1_19 = arith.constant 1 : index
    %c0_20 = arith.constant 0 : index
    %30 = vector.load %arg8[%c0_18, %c1, %c1_19, %c0_20] : memref<2x18x24x128xbf16, #tpu.memory_space<vmem>>, vector<2x16x16x128xbf16>
    tpu.vector_store %arg8[%c0_18, %c1, %c1_19, %c0_20], %29 {strides = array<i32>} : memref<2x18x24x128xbf16, #tpu.memory_space<vmem>>, vector<2x16x16x128xbf16>,
    %c0_21 = arith.constant 0 : index
    %c0_22 = arith.constant 0 : index
    %c0_23 = arith.constant 0 : index
    %c0_24 = arith.constant 0 : index
    %31 = vector.load %arg8[%c0_21, %c0_22, %c0_23, %c0_24] : memref<2x18x24x128xbf16, #tpu.memory_space<vmem>>, vector<2x16x16x128xbf16>
    %32 = vector.shape_cast %31 : vector<2x16x16x128xbf16> to vector<512x128xbf16>
    %c0_25 = arith.constant 0 : index
    %c0_26 = arith.constant 0 : index
    %c0_27 = arith.constant 0 : index
    %33 = vector.load %arg4[%c0_25, %c0_26, %c0_27] : memref<9x128x128xbf16, #tpu.memory_space<vmem>>, vector<1x128x128xbf16>
    %34 = vector.shape_cast %33 : vector<1x128x128xbf16> to vector<128x128xbf16>
    %cst_28 = arith.constant dense<0.000000e+00> : vector<512x128xf32>
    %35 = tpu.matmul %32, %34, %cst_28 {dimension_numbers = #tpu.dot_dimension_numbers<[1], [0], [0], [1], [0, 0, 1, 1], [], []>} : vector<512x128xbf16>, vector<128x128xbf16>, vector<512x128xf32> -> vector<512x128xf32>
    %c0_29 = arith.constant 0 : index
    %c0_30 = arith.constant 0 : index
    %c1_31 = arith.constant 1 : index
    %c0_32 = arith.constant 0 : index
    %36 = vector.load %arg8[%c0_29, %c0_30, %c1_31, %c0_32] : memref<2x18x24x128xbf16, #tpu.memory_space<vmem>>, vector<2x16x16x128xbf16>
    %37 = vector.shape_cast %36 : vector<2x16x16x128xbf16> to vector<512x128xbf16>
    %c1_33 = arith.constant 1 : index
    %c0_34 = arith.constant 0 : index
    %c0_35 = arith.constant 0 : index
    %38 = vector.load %arg4[%c1_33, %c0_34, %c0_35] : memref<9x128x128xbf16, #tpu.memory_space<vmem>>, vector<1x128x128xbf16>
    %39 = vector.shape_cast %38 : vector<1x128x128xbf16> to vector<128x128xbf16>
    %cst_36 = arith.constant dense<0.000000e+00> : vector<512x128xf32>
    %40 = tpu.matmul %37, %39, %cst_36 {dimension_numbers = #tpu.dot_dimension_numbers<[1], [0], [0], [1], [0, 0, 1, 1], [], []>} : vector<512x128xbf16>, vector<128x128xbf16>, vector<512x128xf32> -> vector<512x128xf32>
    %41 = arith.addf %35, %40 : vector<512x128xf32>
    %c0_37 = arith.constant 0 : index
    %c0_38 = arith.constant 0 : index
    %c2 = arith.constant 2 : index
    %c0_39 = arith.constant 0 : index
    %42 = vector.load %arg8[%c0_37, %c0_38, %c2, %c0_39] : memref<2x18x24x128xbf16, #tpu.memory_space<vmem>>, vector<2x16x16x128xbf16>
    %43 = vector.shape_cast %42 : vector<2x16x16x128xbf16> to vector<512x128xbf16>
    %c2_40 = arith.constant 2 : index
    %c0_41 = arith.constant 0 : index
    %c0_42 = arith.constant 0 : index
    %44 = vector.load %arg4[%c2_40, %c0_41, %c0_42] : memref<9x128x128xbf16, #tpu.memory_space<vmem>>, vector<1x128x128xbf16>
    %45 = vector.shape_cast %44 : vector<1x128x128xbf16> to vector<128x128xbf16>
    %cst_43 = arith.constant dense<0.000000e+00> : vector<512x128xf32>
    %46 = tpu.matmul %43, %45, %cst_43 {dimension_numbers = #tpu.dot_dimension_numbers<[1], [0], [0], [1], [0, 0, 1, 1], [], []>} : vector<512x128xbf16>, vector<128x128xbf16>, vector<512x128xf32> -> vector<512x128xf32>
    %47 = arith.addf %41, %46 : vector<512x128xf32>
    %c0_44 = arith.constant 0 : index
    %c0_45 = arith.constant 0 : index
    %48 = vector.load %arg7[%c0_44, %c0_45] : memref<512x128xf32, #tpu.memory_space<vmem>>, vector<512x128xf32>
    tpu.vector_store %arg7[%c0_44, %c0_45], %47 {strides = array<i32>} : memref<512x128xf32, #tpu.memory_space<vmem>>, vector<512x128xf32>,
    %c0_46 = arith.constant 0 : index
    %c1_47 = arith.constant 1 : index
    %c0_48 = arith.constant 0 : index
    %c0_49 = arith.constant 0 : index
    %49 = vector.load %arg8[%c0_46, %c1_47, %c0_48, %c0_49] : memref<2x18x24x128xbf16, #tpu.memory_space<vmem>>, vector<2x16x16x128xbf16>
    %50 = vector.shape_cast %49 : vector<2x16x16x128xbf16> to vector<512x128xbf16>
    %c3 = arith.constant 3 : index
    %c0_50 = arith.constant 0 : index
    %c0_51 = arith.constant 0 : index
    %51 = vector.load %arg4[%c3, %c0_50, %c0_51] : memref<9x128x128xbf16, #tpu.memory_space<vmem>>, vector<1x128x128xbf16>
    %52 = vector.shape_cast %51 : vector<1x128x128xbf16> to vector<128x128xbf16>
    %cst_52 = arith.constant dense<0.000000e+00> : vector<512x128xf32>
    %53 = tpu.matmul %50, %52, %cst_52 {dimension_numbers = #tpu.dot_dimension_numbers<[1], [0], [0], [1], [0, 0, 1, 1], [], []>} : vector<512x128xbf16>, vector<128x128xbf16>, vector<512x128xf32> -> vector<512x128xf32>
    %c0_53 = arith.constant 0 : index
    %c1_54 = arith.constant 1 : index
    %c1_55 = arith.constant 1 : index
    %c0_56 = arith.constant 0 : index
    %54 = vector.load %arg8[%c0_53, %c1_54, %c1_55, %c0_56] : memref<2x18x24x128xbf16, #tpu.memory_space<vmem>>, vector<2x16x16x128xbf16>
    %55 = vector.shape_cast %54 : vector<2x16x16x128xbf16> to vector<512x128xbf16>
    %c4 = arith.constant 4 : index
    %c0_57 = arith.constant 0 : index
    %c0_58 = arith.constant 0 : index
    %56 = vector.load %arg4[%c4, %c0_57, %c0_58] : memref<9x128x128xbf16, #tpu.memory_space<vmem>>, vector<1x128x128xbf16>
    %57 = vector.shape_cast %56 : vector<1x128x128xbf16> to vector<128x128xbf16>
    %cst_59 = arith.constant dense<0.000000e+00> : vector<512x128xf32>
    %58 = tpu.matmul %55, %57, %cst_59 {dimension_numbers = #tpu.dot_dimension_numbers<[1], [0], [0], [1], [0, 0, 1, 1], [], []>} : vector<512x128xbf16>, vector<128x128xbf16>, vector<512x128xf32> -> vector<512x128xf32>
    %59 = arith.addf %53, %58 : vector<512x128xf32>
    %c0_60 = arith.constant 0 : index
    %c1_61 = arith.constant 1 : index
    %c2_62 = arith.constant 2 : index
    %c0_63 = arith.constant 0 : index
    %60 = vector.load %arg8[%c0_60, %c1_61, %c2_62, %c0_63] : memref<2x18x24x128xbf16, #tpu.memory_space<vmem>>, vector<2x16x16x128xbf16>
    %61 = vector.shape_cast %60 : vector<2x16x16x128xbf16> to vector<512x128xbf16>
    %c5 = arith.constant 5 : index
    %c0_64 = arith.constant 0 : index
    %c0_65 = arith.constant 0 : index
    %62 = vector.load %arg4[%c5, %c0_64, %c0_65] : memref<9x128x128xbf16, #tpu.memory_space<vmem>>, vector<1x128x128xbf16>
    %63 = vector.shape_cast %62 : vector<1x128x128xbf16> to vector<128x128xbf16>
    %cst_66 = arith.constant dense<0.000000e+00> : vector<512x128xf32>
    %64 = tpu.matmul %61, %63, %cst_66 {dimension_numbers = #tpu.dot_dimension_numbers<[1], [0], [0], [1], [0, 0, 1, 1], [], []>} : vector<512x128xbf16>, vector<128x128xbf16>, vector<512x128xf32> -> vector<512x128xf32>
    %65 = arith.addf %59, %64 : vector<512x128xf32>
    %c0_67 = arith.constant 0 : index
    %c0_68 = arith.constant 0 : index
    %66 = vector.load %arg7[%c0_67, %c0_68] : memref<512x128xf32, #tpu.memory_space<vmem>>, vector<512x128xf32>
    %67 = arith.addf %66, %65 : vector<512x128xf32>
    %c0_69 = arith.constant 0 : index
    %c0_70 = arith.constant 0 : index
    %68 = vector.load %arg7[%c0_69, %c0_70] : memref<512x128xf32, #tpu.memory_space<vmem>>, vector<512x128xf32>
    tpu.vector_store %arg7[%c0_69, %c0_70], %67 {strides = array<i32>} : memref<512x128xf32, #tpu.memory_space<vmem>>, vector<512x128xf32>,
    %c0_71 = arith.constant 0 : index
    %c2_72 = arith.constant 2 : index
    %c0_73 = arith.constant 0 : index
    %c0_74 = arith.constant 0 : index
    %69 = vector.load %arg8[%c0_71, %c2_72, %c0_73, %c0_74] : memref<2x18x24x128xbf16, #tpu.memory_space<vmem>>, vector<2x16x16x128xbf16>
    %70 = vector.shape_cast %69 : vector<2x16x16x128xbf16> to vector<512x128xbf16>
    %c6 = arith.constant 6 : index
    %c0_75 = arith.constant 0 : index
    %c0_76 = arith.constant 0 : index
    %71 = vector.load %arg4[%c6, %c0_75, %c0_76] : memref<9x128x128xbf16, #tpu.memory_space<vmem>>, vector<1x128x128xbf16>
    %72 = vector.shape_cast %71 : vector<1x128x128xbf16> to vector<128x128xbf16>
    %cst_77 = arith.constant dense<0.000000e+00> : vector<512x128xf32>
    %73 = tpu.matmul %70, %72, %cst_77 {dimension_numbers = #tpu.dot_dimension_numbers<[1], [0], [0], [1], [0, 0, 1, 1], [], []>} : vector<512x128xbf16>, vector<128x128xbf16>, vector<512x128xf32> -> vector<512x128xf32>
    %c0_78 = arith.constant 0 : index
    %c2_79 = arith.constant 2 : index
    %c1_80 = arith.constant 1 : index
    %c0_81 = arith.constant 0 : index
    %74 = vector.load %arg8[%c0_78, %c2_79, %c1_80, %c0_81] : memref<2x18x24x128xbf16, #tpu.memory_space<vmem>>, vector<2x16x16x128xbf16>
    %75 = vector.shape_cast %74 : vector<2x16x16x128xbf16> to vector<512x128xbf16>
    %c7 = arith.constant 7 : index
    %c0_82 = arith.constant 0 : index
    %c0_83 = arith.constant 0 : index
    %76 = vector.load %arg4[%c7, %c0_82, %c0_83] : memref<9x128x128xbf16, #tpu.memory_space<vmem>>, vector<1x128x128xbf16>
    %77 = vector.shape_cast %76 : vector<1x128x128xbf16> to vector<128x128xbf16>
    %cst_84 = arith.constant dense<0.000000e+00> : vector<512x128xf32>
    %78 = tpu.matmul %75, %77, %cst_84 {dimension_numbers = #tpu.dot_dimension_numbers<[1], [0], [0], [1], [0, 0, 1, 1], [], []>} : vector<512x128xbf16>, vector<128x128xbf16>, vector<512x128xf32> -> vector<512x128xf32>
    %79 = arith.addf %73, %78 : vector<512x128xf32>
    %c0_85 = arith.constant 0 : index
    %c2_86 = arith.constant 2 : index
    %c2_87 = arith.constant 2 : index
    %c0_88 = arith.constant 0 : index
    %80 = vector.load %arg8[%c0_85, %c2_86, %c2_87, %c0_88] : memref<2x18x24x128xbf16, #tpu.memory_space<vmem>>, vector<2x16x16x128xbf16>
    %81 = vector.shape_cast %80 : vector<2x16x16x128xbf16> to vector<512x128xbf16>
    %c8 = arith.constant 8 : index
    %c0_89 = arith.constant 0 : index
    %c0_90 = arith.constant 0 : index
    %82 = vector.load %arg4[%c8, %c0_89, %c0_90] : memref<9x128x128xbf16, #tpu.memory_space<vmem>>, vector<1x128x128xbf16>
    %83 = vector.shape_cast %82 : vector<1x128x128xbf16> to vector<128x128xbf16>
    %cst_91 = arith.constant dense<0.000000e+00> : vector<512x128xf32>
    %84 = tpu.matmul %81, %83, %cst_91 {dimension_numbers = #tpu.dot_dimension_numbers<[1], [0], [0], [1], [0, 0, 1, 1], [], []>} : vector<512x128xbf16>, vector<128x128xbf16>, vector<512x128xf32> -> vector<512x128xf32>
    %85 = arith.addf %79, %84 : vector<512x128xf32>
    %c0_92 = arith.constant 0 : index
    %c0_93 = arith.constant 0 : index
    %86 = vector.load %arg7[%c0_92, %c0_93] : memref<512x128xf32, #tpu.memory_space<vmem>>, vector<512x128xf32>
    %87 = arith.addf %86, %85 : vector<512x128xf32>
    %c0_94 = arith.constant 0 : index
    %c0_95 = arith.constant 0 : index
    %88 = vector.load %arg7[%c0_94, %c0_95] : memref<512x128xf32, #tpu.memory_space<vmem>>, vector<512x128xf32>
    tpu.vector_store %arg7[%c0_94, %c0_95], %87 {strides = array<i32>} : memref<512x128xf32, #tpu.memory_space<vmem>>, vector<512x128xf32>,
    %c0_96 = arith.constant 0 : index
    %c0_97 = arith.constant 0 : index
    %89 = vector.load %arg7[%c0_96, %c0_97] : memref<512x128xf32, #tpu.memory_space<vmem>>, vector<512x128xf32>
    %cst_98 = arith.constant dense<0.000000e+00> : vector<128xf32>
    %90 = vector.multi_reduction <add>, %89, %cst_98 [0] : vector<512x128xf32> to vector<128xf32>
    %91 = vector.shape_cast %90 : vector<128xf32> to vector<1x128xf32>
    %cst_99 = arith.constant 0.001953125 : f32
    %92 = vector.broadcast %cst_99 : f32 to vector<1x128xf32>
    %93 = arith.mulf %91, %92 : vector<1x128xf32>
    %94 = vector.broadcast %93 : vector<1x128xf32> to vector<512x128xf32>
    %95 = arith.subf %89, %94 : vector<512x128xf32>
    %96 = arith.mulf %95, %95 : vector<512x128xf32>
    %cst_100 = arith.constant dense<0.000000e+00> : vector<128xf32>
    %97 = vector.multi_reduction <add>, %96, %cst_100 [0] : vector<512x128xf32> to vector<128xf32>
    %98 = vector.shape_cast %97 : vector<128xf32> to vector<1x128xf32>
    %cst_101 = arith.constant 0.001953125 : f32
    %99 = vector.broadcast %cst_101 : f32 to vector<1x128xf32>
    %100 = arith.mulf %98, %99 : vector<1x128xf32>
    %c0_102 = arith.constant 0 : index
    %c0_103 = arith.constant 0 : index
    %101 = vector.load %arg5[%c0_102, %c0_103] : memref<1x128xf32, #tpu.memory_space<vmem>>, vector<1x128xf32>
    %cst_104 = arith.constant 9.99999974E-6 : f32
    %102 = vector.broadcast %cst_104 : f32 to vector<1x128xf32>
    %103 = arith.addf %100, %102 : vector<1x128xf32>
    %104 = math.rsqrt %103 : vector<1x128xf32>
    %105 = arith.mulf %101, %104 : vector<1x128xf32>
    %106 = vector.broadcast %105 : vector<1x128xf32> to vector<512x128xf32>
    %107 = arith.mulf %95, %106 : vector<512x128xf32>
    %c0_105 = arith.constant 0 : index
    %c0_106 = arith.constant 0 : index
    %108 = vector.load %arg6[%c0_105, %c0_106] : memref<1x128xf32, #tpu.memory_space<vmem>>, vector<1x128xf32>
    %109 = vector.broadcast %108 : vector<1x128xf32> to vector<512x128xf32>
    %110 = arith.addf %107, %109 : vector<512x128xf32>
    %cst_107 = arith.constant 0.000000e+00 : f32
    %111 = vector.broadcast %cst_107 : f32 to vector<512x128xf32>
    %112 = arith.maximumf %110, %111 : vector<512x128xf32>
    %c0_108 = arith.constant 0 : index
    %c0_109 = arith.constant 0 : index
    %113 = vector.load %arg7[%c0_108, %c0_109] : memref<512x128xf32, #tpu.memory_space<vmem>>, vector<512x128xf32>
    tpu.vector_store %arg7[%c0_108, %c0_109], %112 {strides = array<i32>} : memref<512x128xf32, #tpu.memory_space<vmem>>, vector<512x128xf32>,
    return
  }
}

</mosaic_0001>

<llo_original>
// kernel: vgg_block_forward.1
$region0: #{vgg_block_forward.1}
  #allocation0 [shape = 'u32[]', space=smem, size = 0x4, offset = 0x4, fixed_abs, tag = 'smem constant byte address 0x4 - core index']
  #allocation1 [shape = 'u32[72,128]{1,0:T(1,128)}', space=vmem, size = 0x9000, scoped, tag = 'internal scratch']
  #allocation2 [shape = 'bf16[2,18,24,128]{3,2,1,0:T(8,128)(2,1)}', space=vmem, size = 0x36000, scoped, tag = 'scratch operand']
  %s0 = inlined_call_operand.vmem [shape: bf16[512,128], index: 0, kind: input, shape index: {}]
  %s1 = inlined_call_operand.vmem [shape: bf16[128,128], index: 1, kind: input, shape index: {}]
  %s2 = inlined_call_operand.vmem [shape: f32[1,128], index: 2, kind: input, shape index: {}]
  %s3 = inlined_call_operand.vmem [shape: f32[1,128], index: 3, kind: input, shape index: {}]
  %s4 = inlined_call_operand.vmem [shape: bf16[9,128,128], index: 4, kind: input, shape index: {}]
  %s5 = inlined_call_operand.vmem [shape: f32[1,128], index: 5, kind: input, shape index: {}]
  %s6 = inlined_call_operand.vmem [shape: f32[1,128], index: 6, kind: input, shape index: {}]
  %s7 = inlined_call_operand.hbm [shape: f32[512,128], index: 7, kind: output, shape index: {}]
  %s8 = sld [smem:[#allocation0]]
  $region38: #{vgg_block_forward.1} parent=0
    _
  %s10 = ssub.s32 1, %s8
  %s11 = scalar_select 0, %s10, %s8
  $region1: #{vgg_block_forward.1} parent=0
    #allocation3 [shape = 'u8[262144]{0}', space=vmem, size = 0x40000, scoped, tag = 'output window, operand 0, single buffered']
    #allocation4 [shape = 's32[1]{0}', space=sflag, size = 0x4, scoped, tag = 'scoped memory for vgg_block_forward.1']
    %12 = vsyncpa [#allocation4], 0
    // Predicated region
    $region2: #{vgg_block_forward.1} parent=1 // pred_check
      _
    $region3: #{vgg_block_forward.1} parent=1 // pred_check_branch
      %14 = sbr.rel (0) target = $region5
    $region4: #{vgg_block_forward.1} parent=1 // pred_region
      _
    $region5: #{vgg_block_forward.1} parent=1 // pred_fallthru
      _
    // Predicated region
    $region6: #{vgg_block_forward.1} parent=1 // pred_check
      _
    $region7: #{vgg_block_forward.1} parent=1 // pred_check_branch
      %16 = sbr.rel (0) target = $region9
    $region8: #{vgg_block_forward.1} parent=1 // pred_region
      _
    $region9: #{vgg_block_forward.1} parent=1 // pred_fallthru
      _
    // Predicated region
    $region10: #{vgg_block_forward.1} parent=1 // pred_check
      _
    $region11: #{vgg_block_forward.1} parent=1 // pred_check_branch
      %18 = sbr.rel (0) target = $region13
    $region12: #{vgg_block_forward.1} parent=1 // pred_region
      _
    $region13: #{vgg_block_forward.1} parent=1 // pred_fallthru
      _
    // Predicated region
    $region14: #{vgg_block_forward.1} parent=1 // pred_check
      _
    $region15: #{vgg_block_forward.1} parent=1 // pred_check_branch
      %20 = sbr.rel (0) target = $region17
    $region16: #{vgg_block_forward.1} parent=1 // pred_region
      _
    $region17: #{vgg_block_forward.1} parent=1 // pred_fallthru
      _
    // Predicated region
    $region18: #{vgg_block_forward.1} parent=1 // pred_check
      _
    $region19: #{vgg_block_forward.1} parent=1 // pred_check_branch
      %22 = sbr.rel (0) target = $region21
    $region20: #{vgg_block_forward.1} parent=1 // pred_region
      _
    $region21: #{vgg_block_forward.1} parent=1 // pred_fallthru
      _
    // Predicated region
    $region22: #{vgg_block_forward.1} parent=1 // pred_check
      _
    $region23: #{vgg_block_forward.1} parent=1 // pred_check_branch
      %24 = sbr.rel (0) target = $region25
    $region24: #{vgg_block_forward.1} parent=1 // pred_region
      _
    $region25: #{vgg_block_forward.1} parent=1 // pred_fallthru
      _
    // Predicated region
    $region26: #{vgg_block_forward.1} parent=1 // pred_check
      _
    $region27: #{vgg_block_forward.1} parent=1 // pred_check_branch
      %26 = sbr.rel (0) target = $region29
    $region28: #{vgg_block_forward.1} parent=1 // pred_region
      _
    $region29: #{vgg_block_forward.1} parent=1 // pred_fallthru
      _
    %v28 = vld [vmem:[%s0] sm:$0xf]
    %v29 = vld [vmem:[%s0 + $0x4] sm:$0xf]
    %v30 = vld [vmem:[%s0 + $0x8] sm:$0xf]
    %v31 = vld [vmem:[%s0 + $0xc] sm:$0xf]
    %v32 = vld [vmem:[%s0 + $0x10] sm:$0xf]
    %v33 = vld [vmem:[%s0 + $0x14] sm:$0xf]
    %v34 = vld [vmem:[%s0 + $0x18] sm:$0xf]
    %v35 = vld [vmem:[%s0 + $0x1c] sm:$0xf]
    %v36 = vld [vmem:[%s0 + $0x20] sm:$0xf]
    %v37 = vld [vmem:[%s0 + $0x24] sm:$0xf]
    %v38 = vld [vmem:[%s0 + $0x28] sm:$0xf]
    %v39 = vld [vmem:[%s0 + $0x2c] sm:$0xf]
    %v40 = vld [vmem:[%s0 + $0x30] sm:$0xf]
    %v41 = vld [vmem:[%s0 + $0x34] sm:$0xf]
    %v42 = vld [vmem:[%s0 + $0x38] sm:$0xf]
    %v43 = vld [vmem:[%s0 + $0x3c] sm:$0xf]
    %v44 = vld [vmem:[%s0 + $0x40] sm:$0xf]
    %v45 = vld [vmem:[%s0 + $0x44] sm:$0xf]
    %v46 = vld [vmem:[%s0 + $0x48] sm:$0xf]
    %v47 = vld [vmem:[%s0 + $0x4c] sm:$0xf]
    %v48 = vld [vmem:[%s0 + $0x50] sm:$0xf]
    %v49 = vld [vmem:[%s0 + $0x54] sm:$0xf]
    %v50 = vld [vmem:[%s0 + $0x58] sm:$0xf]
    %v51 = vld [vmem:[%s0 + $0x5c] sm:$0xf]
    %v52 = vld [vmem:[%s0 + $0x60] sm:$0xf]
    %v53 = vld [vmem:[%s0 + $0x64] sm:$0xf]
    %v54 = vld [vmem:[%s0 + $0x68] sm:$0xf]
    %v55 = vld [vmem:[%s0 + $0x6c] sm:$0xf]
    %v56 = vld [vmem:[%s0 + $0x70] sm:$0xf]
    %v57 = vld [vmem:[%s0 + $0x74] sm:$0xf]
    %v58 = vld [vmem:[%s0 + $0x78] sm:$0xf]
    %v59 = vld [vmem:[%s0 + $0x7c] sm:$0xf]
    %v60 = vld [vmem:[%s0 + $0x80] sm:$0xf]
    %v61 = vld [vmem:[%s0 + $0x84] sm:$0xf]
    %v62 = vld [vmem:[%s0 + $0x88] sm:$0xf]
    %v63 = vld [vmem:[%s0 + $0x8c] sm:$0xf]
    %v64 = vld [vmem:[%s0 + $0x90] sm:$0xf]
    %v65 = vld [vmem:[%s0 + $0x94] sm:$0xf]
    %v66 = vld [vmem:[%s0 + $0x98] sm:$0xf]
    %v67 = vld [vmem:[%s0 + $0x9c] sm:$0xf]
    %v68 = vld [vmem:[%s0 + $0xa0] sm:$0xf]
    %v69 = vld [vmem:[%s0 + $0xa4] sm:$0xf]
    %v70 = vld [vmem:[%s0 + $0xa8] sm:$0xf]
    %v71 = vld [vmem:[%s0 + $0xac] sm:$0xf]
    %v72 = vld [vmem:[%s0 + $0xb0] sm:$0xf]
    %v73 = vld [vmem:[%s0 + $0xb4] sm:$0xf]
    %v74 = vld [vmem:[%s0 + $0xb8] sm:$0xf]
    %v75 = vld [vmem:[%s0 + $0xbc] sm:$0xf]
    %v76 = vld [vmem:[%s0 + $0xc0] sm:$0xf]
    %v77 = vld [vmem:[%s0 + $0xc4] sm:$0xf]
    %v78 = vld [vmem:[%s0 + $0xc8] sm:$0xf]
    %v79 = vld [vmem:[%s0 + $0xcc] sm:$0xf]
    %v80 = vld [vmem:[%s0 + $0xd0] sm:$0xf]
    %v81 = vld [vmem:[%s0 + $0xd4] sm:$0xf]
    %v82 = vld [vmem:[%s0 + $0xd8] sm:$0xf]
    %v83 = vld [vmem:[%s0 + $0xdc] sm:$0xf]
    %v84 = vld [vmem:[%s0 + $0xe0] sm:$0xf]
    %v85 = vld [vmem:[%s0 + $0xe4] sm:$0xf]
    %v86 = vld [vmem:[%s0 + $0xe8] sm:$0xf]
    %v87 = vld [vmem:[%s0 + $0xec] sm:$0xf]
    %v88 = vld [vmem:[%s0 + $0xf0] sm:$0xf]
    %v89 = vld [vmem:[%s0 + $0xf4] sm:$0xf]
    %v90 = vld [vmem:[%s0 + $0xf8] sm:$0xf]
    %v91 = vld [vmem:[%s0 + $0xfc] sm:$0xf]
    %v92 = vld [vmem:[%s1] sm:$0xf]
    %v93 = vld [vmem:[%s1 + $0x4] sm:$0xf]
    %v94 = vld [vmem:[%s1 + $0x8] sm:$0xf]
    %v95 = vld [vmem:[%s1 + $0xc] sm:$0xf]
    %v96 = vld [vmem:[%s1 + $0x10] sm:$0xf]
    %v97 = vld [vmem:[%s1 + $0x14] sm:$0xf]
    %v98 = vld [vmem:[%s1 + $0x18] sm:$0xf]
    %v99 = vld [vmem:[%s1 + $0x1c] sm:$0xf]
    %v100 = vld [vmem:[%s1 + $0x20] sm:$0xf]
    %v101 = vld [vmem:[%s1 + $0x24] sm:$0xf]
    %v102 = vld [vmem:[%s1 + $0x28] sm:$0xf]
    %v103 = vld [vmem:[%s1 + $0x2c] sm:$0xf]
    %v104 = vld [vmem:[%s1 + $0x30] sm:$0xf]
    %v105 = vld [vmem:[%s1 + $0x34] sm:$0xf]
    %v106 = vld [vmem:[%s1 + $0x38] sm:$0xf]
    %v107 = vld [vmem:[%s1 + $0x3c] sm:$0xf]
    %v172 = vunpack.c.l.b16 %v28
    %v173 = vunpack.c.l.b16 %v29
    %v174 = vunpack.c.l.b16 %v30
    %v175 = vunpack.c.l.b16 %v31
    %v176 = vunpack.c.l.b16 %v32
    %v177 = vunpack.c.l.b16 %v33
    %v178 = vunpack.c.l.b16 %v34
    %v179 = vunpack.c.l.b16 %v35
    %v180 = vunpack.c.l.b16 %v36
    %v181 = vunpack.c.l.b16 %v37
    %v182 = vunpack.c.l.b16 %v38
    %v183 = vunpack.c.l.b16 %v39
    %v184 = vunpack.c.l.b16 %v40
    %v185 = vunpack.c.l.b16 %v41
    %v186 = vunpack.c.l.b16 %v42
    %v187 = vunpack.c.l.b16 %v43
    %v188 = vunpack.c.l.b16 %v44
    %v189 = vunpack.c.l.b16 %v45
    %v190 = vunpack.c.l.b16 %v46
    %v191 = vunpack.c.l.b16 %v47
    %v192 = vunpack.c.l.b16 %v48
    %v193 = vunpack.c.l.b16 %v49
    %v194 = vunpack.c.l.b16 %v50
    %v195 = vunpack.c.l.b16 %v51
    %v196 = vunpack.c.l.b16 %v52
    %v197 = vunpack.c.l.b16 %v53
    %v198 = vunpack.c.l.b16 %v54
    %v199 = vunpack.c.l.b16 %v55
    %v200 = vunpack.c.l.b16 %v56
    %v201 = vunpack.c.l.b16 %v57
    %v202 = vunpack.c.l.b16 %v58
    %v203 = vunpack.c.l.b16 %v59
    %v204 = vunpack.c.l.b16 %v60
    %v205 = vunpack.c.l.b16 %v61
    %v206 = vunpack.c.l.b16 %v62
    %v207 = vunpack.c.l.b16 %v63
    %v208 = vunpack.c.l.b16 %v64
    %v209 = vunpack.c.l.b16 %v65
    %v210 = vunpack.c.l.b16 %v66
    %v211 = vunpack.c.l.b16 %v67
    %v212 = vunpack.c.l.b16 %v68
    %v213 = vunpack.c.l.b16 %v69
    %v214 = vunpack.c.l.b16 %v70
    %v215 = vunpack.c.l.b16 %v71
    %v216 = vunpack.c.l.b16 %v72
    %v217 = vunpack.c.l.b16 %v73
    %v218 = vunpack.c.l.b16 %v74
    %v219 = vunpack.c.l.b16 %v75
    %v220 = vunpack.c.l.b16 %v76
    %v221 = vunpack.c.l.b16 %v77
    %v222 = vunpack.c.l.b16 %v78
    %v223 = vunpack.c.l.b16 %v79
    %v224 = vunpack.c.l.b16 %v80
    %v225 = vunpack.c.l.b16 %v81
    %v226 = vunpack.c.l.b16 %v82
    %v227 = vunpack.c.l.b16 %v83
    %v228 = vunpack.c.l.b16 %v84
    %v229 = vunpack.c.l.b16 %v85
    %v230 = vunpack.c.l.b16 %v86
    %v231 = vunpack.c.l.b16 %v87
    %v232 = vunpack.c.l.b16 %v88
    %v233 = vunpack.c.l.b16 %v89
    %v234 = vunpack.c.l.b16 %v90
    %v235 = vunpack.c.l.b16 %v91
    %v236 = vpack.c.b16 %v173, %v172
    %v237 = vpack.c.b16 %v175, %v174
    %v238 = vpack.c.b16 %v177, %v176
    %v239 = vpack.c.b16 %v179, %v178
    %v240 = vpack.c.b16 %v181, %v180
    %v241 = vpack.c.b16 %v183, %v182
    %v242 = vpack.c.b16 %v185, %v184
    %v243 = vpack.c.b16 %v187, %v186
    %v244 = vpack.c.b16 %v189, %v188
    %v245 = vpack.c.b16 %v191, %v190
    %v246 = vpack.c.b16 %v193, %v192
    %v247 = vpack.c.b16 %v195, %v194
    %v248 = vpack.c.b16 %v197, %v196
    %v249 = vpack.c.b16 %v199, %v198
    %v250 = vpack.c.b16 %v201, %v200
    %v251 = vpack.c.b16 %v203, %v202
    %v252 = vpack.c.b16 %v205, %v204
    %v253 = vpack.c.b16 %v207, %v206
    %v254 = vpack.c.b16 %v209, %v208
    %v255 = vpack.c.b16 %v211, %v210
    %v256 = vpack.c.b16 %v213, %v212
    %v257 = vpack.c.b16 %v215, %v214
    %v258 = vpack.c.b16 %v217, %v216
    %v259 = vpack.c.b16 %v219, %v218
    %v260 = vpack.c.b16 %v221, %v220
    %v261 = vpack.c.b16 %v223, %v222
    %v262 = vpack.c.b16 %v225, %v224
    %v263 = vpack.c.b16 %v227, %v226
    %v264 = vpack.c.b16 %v229, %v228
    %v265 = vpack.c.b16 %v231, %v230
    %v266 = vpack.c.b16 %v233, %v232
    %v267 = vpack.c.b16 %v235, %v234
    %v316 = vunpack.c.l.b16 %v92
    %v317 = vunpack.c.l.b16 %v93
    %v318 = vunpack.c.l.b16 %v94
    %v319 = vunpack.c.l.b16 %v95
    %v320 = vunpack.c.l.b16 %v96
    %v321 = vunpack.c.l.b16 %v97
    %v322 = vunpack.c.l.b16 %v98
    %v323 = vunpack.c.l.b16 %v99
    %v324 = vunpack.c.l.b16 %v100
    %v325 = vunpack.c.l.b16 %v101
    %v326 = vunpack.c.l.b16 %v102
    %v327 = vunpack.c.l.b16 %v103
    %v328 = vunpack.c.l.b16 %v104
    %v329 = vunpack.c.l.b16 %v105
    %v330 = vunpack.c.l.b16 %v106
    %v331 = vunpack.c.l.b16 %v107
    %v332 = vpack.c.b16 %v317, %v316
    %v333 = vpack.c.b16 %v319, %v318
    %v334 = vpack.c.b16 %v321, %v320
    %v335 = vpack.c.b16 %v323, %v322
    %v336 = vpack.c.b16 %v325, %v324
    %v337 = vpack.c.b16 %v327, %v326
    %v338 = vpack.c.b16 %v329, %v328
    %v339 = vpack.c.b16 %v331, %v330
    %348 = vmatpush.bf16.msra.mxu0 %v339
    %349 = vmatpush.bf16.msra.mxu0 %v338
    %350 = vmatpush.bf16.msra.mxu0 %v337
    %351 = vmatpush.bf16.msra.mxu0 %v336
    %352 = vmatpush.bf16.msra.mxu0 %v335
    %353 = vmatpush.bf16.msra.mxu0 %v334
    %354 = vmatpush.bf16.msra.mxu0 %v333
    %355 = vmatpush.bf16.msra.mxu0 %v332
    %356 = vmatmul.bf16.gmra.mxu0 %v236
    %v357 = vpop.f32.mrf.mxu0
    %v358 = vadd.f32 0.0, %v357
    %v359 = vpop.f32.mrf.mxu0
    %v360 = vadd.f32 0.0, %v359
    %361 = vmatmul.bf16.gmra.mxu0 %v237
    %v362 = vpop.f32.mrf.mxu0
    %v363 = vadd.f32 0.0, %v362
    %v364 = vpop.f32.mrf.mxu0
    %v365 = vadd.f32 0.0, %v364
    %366 = vmatmul.bf16.gmra.mxu0 %v238
    %v367 = vpop.f32.mrf.mxu0
    %v368 = vadd.f32 0.0, %v367
    %v369 = vpop.f32.mrf.mxu0
    %v370 = vadd.f32 0.0, %v369
    %371 = vmatmul.bf16.gmra.mxu0 %v239
    %v372 = vpop.f32.mrf.mxu0
    %v373 = vadd.f32 0.0, %v372
    %v374 = vpop.f32.mrf.mxu0
    %v375 = vadd.f32 0.0, %v374
    %376 = vmatmul.bf16.gmra.mxu0 %v240
    %v377 = vpop.f32.mrf.mxu0
    %v378 = vadd.f32 0.0, %v377
    %v379 = vpop.f32.mrf.mxu0
    %v380 = vadd.f32 0.0, %v379
    %381 = vmatmul.bf16.gmra.mxu0 %v241
    %v382 = vpop.f32.mrf.mxu0
    %v383 = vadd.f32 0.0, %v382
    %v384 = vpop.f32.mrf.mxu0
    %v385 = vadd.f32 0.0, %v384
    %386 = vmatmul.bf16.gmra.mxu0 %v242
    %v387 = vpop.f32.mrf.mxu0
    %v388 = vadd.f32 0.0, %v387
    %v389 = vpop.f32.mrf.mxu0
    %v390 = vadd.f32 0.0, %v389
    %391 = vmatmul.bf16.gmra.mxu0 %v243
    %v392 = vpop.f32.mrf.mxu0
    %v393 = vadd.f32 0.0, %v392
    %v394 = vpop.f32.mrf.mxu0
    %v395 = vadd.f32 0.0, %v394
    %396 = vmatmul.bf16.gmra.mxu0 %v244
    %v397 = vpop.f32.mrf.mxu0
    %v398 = vadd.f32 0.0, %v397
    %v399 = vpop.f32.mrf.mxu0
    %v400 = vadd.f32 0.0, %v399
    %401 = vmatmul.bf16.gmra.mxu0 %v245
    %v402 = vpop.f32.mrf.mxu0
    %v403 = vadd.f32 0.0, %v402
    %v404 = vpop.f32.mrf.mxu0
    %v405 = vadd.f32 0.0, %v404
    %406 = vmatmul.bf16.gmra.mxu0 %v246
    %v407 = vpop.f32.mrf.mxu0
    %v408 = vadd.f32 0.0, %v407
    %v409 = vpop.f32.mrf.mxu0
    %v410 = vadd.f32 0.0, %v409
    %411 = vmatmul.bf16.gmra.mxu0 %v247
    %v412 = vpop.f32.mrf.mxu0
    %v413 = vadd.f32 0.0, %v412
    %v414 = vpop.f32.mrf.mxu0
    %v415 = vadd.f32 0.0, %v414
    %416 = vmatmul.bf16.gmra.mxu0 %v248
    %v417 = vpop.f32.mrf.mxu0
    %v418 = vadd.f32 0.0, %v417
    %v419 = vpop.f32.mrf.mxu0
    %v420 = vadd.f32 0.0, %v419
    %421 = vmatmul.bf16.gmra.mxu0 %v249
    %v422 = vpop.f32.mrf.mxu0
    %v423 = vadd.f32 0.0, %v422
    %v424 = vpop.f32.mrf.mxu0
    %v425 = vadd.f32 0.0, %v424
    %426 = vmatmul.bf16.gmra.mxu0 %v250
    %v427 = vpop.f32.mrf.mxu0
    %v428 = vadd.f32 0.0, %v427
    %v429 = vpop.f32.mrf.mxu0
    %v430 = vadd.f32 0.0, %v429
    %431 = vmatmul.bf16.gmra.mxu0 %v251
    %v432 = vpop.f32.mrf.mxu0
    %v433 = vadd.f32 0.0, %v432
    %v434 = vpop.f32.mrf.mxu0
    %v435 = vadd.f32 0.0, %v434
    %436 = vmatmul.bf16.gmra.mxu0 %v252
    %v437 = vpop.f32.mrf.mxu0
    %v438 = vadd.f32 0.0, %v437
    %v439 = vpop.f32.mrf.mxu0
    %v440 = vadd.f32 0.0, %v439
    %441 = vmatmul.bf16.gmra.mxu0 %v253
    %v442 = vpop.f32.mrf.mxu0
    %v443 = vadd.f32 0.0, %v442
    %v444 = vpop.f32.mrf.mxu0
    %v445 = vadd.f32 0.0, %v444
    %446 = vmatmul.bf16.gmra.mxu0 %v254
    %v447 = vpop.f32.mrf.mxu0
    %v448 = vadd.f32 0.0, %v447
    %v449 = vpop.f32.mrf.mxu0
    %v450 = vadd.f32 0.0, %v449
    %451 = vmatmul.bf16.gmra.mxu0 %v255
    %v452 = vpop.f32.mrf.mxu0
    %v453 = vadd.f32 0.0, %v452
    %v454 = vpop.f32.mrf.mxu0
    %v455 = vadd.f32 0.0, %v454
    %456 = vmatmul.bf16.gmra.mxu0 %v256
    %v457 = vpop.f32.mrf.mxu0
    %v458 = vadd.f32 0.0, %v457
    %v459 = vpop.f32.mrf.mxu0
    %v460 = vadd.f32 0.0, %v459
    %461 = vmatmul.bf16.gmra.mxu0 %v257
    %v462 = vpop.f32.mrf.mxu0
    %v463 = vadd.f32 0.0, %v462
    %v464 = vpop.f32.mrf.mxu0
    %v465 = vadd.f32 0.0, %v464
    %466 = vmatmul.bf16.gmra.mxu0 %v258
    %v467 = vpop.f32.mrf.mxu0
    %v468 = vadd.f32 0.0, %v467
    %v469 = vpop.f32.mrf.mxu0
    %v470 = vadd.f32 0.0, %v469
    %471 = vmatmul.bf16.gmra.mxu0 %v259
    %v472 = vpop.f32.mrf.mxu0
    %v473 = vadd.f32 0.0, %v472
    %v474 = vpop.f32.mrf.mxu0
    %v475 = vadd.f32 0.0, %v474
    %476 = vmatmul.bf16.gmra.mxu0 %v260
    %v477 = vpop.f32.mrf.mxu0
    %v478 = vadd.f32 0.0, %v477
    %v479 = vpop.f32.mrf.mxu0
    %v480 = vadd.f32 0.0, %v479
    %481 = vmatmul.bf16.gmra.mxu0 %v261
    %v482 = vpop.f32.mrf.mxu0
    %v483 = vadd.f32 0.0, %v482
    %v484 = vpop.f32.mrf.mxu0
    %v485 = vadd.f32 0.0, %v484
    %486 = vmatmul.bf16.gmra.mxu0 %v262
    %v487 = vpop.f32.mrf.mxu0
    %v488 = vadd.f32 0.0, %v487
    %v489 = vpop.f32.mrf.mxu0
    %v490 = vadd.f32 0.0, %v489
    %491 = vmatmul.bf16.gmra.mxu0 %v263
    %v492 = vpop.f32.mrf.mxu0
    %v493 = vadd.f32 0.0, %v492
    %v494 = vpop.f32.mrf.mxu0
    %v495 = vadd.f32 0.0, %v494
    %496 = vmatmul.bf16.gmra.mxu0 %v264
    %v497 = vpop.f32.mrf.mxu0
    %v498 = vadd.f32 0.0, %v497
    %v499 = vpop.f32.mrf.mxu0
    %v500 = vadd.f32 0.0, %v499
    %501 = vmatmul.bf16.gmra.mxu0 %v265
    %v502 = vpop.f32.mrf.mxu0
    %v503 = vadd.f32 0.0, %v502
    %v504 = vpop.f32.mrf.mxu0
    %v505 = vadd.f32 0.0, %v504
    %506 = vmatmul.bf16.gmra.mxu0 %v266
    %v507 = vpop.f32.mrf.mxu0
    %v508 = vadd.f32 0.0, %v507
    %v509 = vpop.f32.mrf.mxu0
    %v510 = vadd.f32 0.0, %v509
    %511 = vmatmul.bf16.gmra.mxu0 %v267
    %v512 = vpop.f32.mrf.mxu0
    %v513 = vadd.f32 0.0, %v512
    %v514 = vpop.f32.mrf.mxu0
    %v515 = vadd.f32 0.0, %v514
    %516 = vdwg.mxu0
    %v517 = vadd.f32 %v358, %v360
    %v518 = vadd.f32 %v517, %v363
    %v519 = vadd.f32 %v518, %v365
    %v520 = vadd.f32 %v519, %v368
    %v521 = vadd.f32 %v520, %v370
    %v522 = vadd.f32 %v521, %v373
    %v523 = vadd.f32 %v522, %v375
    %v524 = vadd.f32 %v523, %v378
    %v525 = vadd.f32 %v524, %v380
    %v526 = vadd.f32 %v525, %v383
    %v527 = vadd.f32 %v526, %v385
    %v528 = vadd.f32 %v527, %v388
    %v529 = vadd.f32 %v528, %v390
    %v530 = vadd.f32 %v529, %v393
    %v531 = vadd.f32 %v530, %v395
    %v532 = vadd.f32 %v531, %v398
    %v533 = vadd.f32 %v532, %v400
    %v534 = vadd.f32 %v533, %v403
    %v535 = vadd.f32 %v534, %v405
    %v536 = vadd.f32 %v535, %v408
    %v537 = vadd.f32 %v536, %v410
    %v538 = vadd.f32 %v537, %v413
    %v539 = vadd.f32 %v538, %v415
    %v540 = vadd.f32 %v539, %v418
    %v541 = vadd.f32 %v540, %v420
    %v542 = vadd.f32 %v541, %v423
    %v543 = vadd.f32 %v542, %v425
    %v544 = vadd.f32 %v543, %v428
    %v545 = vadd.f32 %v544, %v430
    %v546 = vadd.f32 %v545, %v433
    %v547 = vadd.f32 %v546, %v435
    %v548 = vadd.f32 %v547, %v438
    %v549 = vadd.f32 %v548, %v440
    %v550 = vadd.f32 %v549, %v443
    %v551 = vadd.f32 %v550, %v445
    %v552 = vadd.f32 %v551, %v448
    %v553 = vadd.f32 %v552, %v450
    %v554 = vadd.f32 %v553, %v453
    %v555 = vadd.f32 %v554, %v455
    %v556 = vadd.f32 %v555, %v458
    %v557 = vadd.f32 %v556, %v460
    %v558 = vadd.f32 %v557, %v463
    %v559 = vadd.f32 %v558, %v465
    %v560 = vadd.f32 %v559, %v468
    %v561 = vadd.f32 %v560, %v470
    %v562 = vadd.f32 %v561, %v473
    %v563 = vadd.f32 %v562, %v475
    %v564 = vadd.f32 %v563, %v478
    %v565 = vadd.f32 %v564, %v480
    %v566 = vadd.f32 %v565, %v483
    %v567 = vadd.f32 %v566, %v485
    %v568 = vadd.f32 %v567, %v488
    %v569 = vadd.f32 %v568, %v490
    %v570 = vadd.f32 %v569, %v493
    %v571 = vadd.f32 %v570, %v495
    %v572 = vadd.f32 %v571, %v498
    %v573 = vadd.f32 %v572, %v500
    %v574 = vadd.f32 %v573, %v503
    %v575 = vadd.f32 %v574, %v505
    %v576 = vadd.f32 %v575, %v508
    %v577 = vadd.f32 %v576, %v510
    %v578 = vadd.f32 %v577, %v513
    %v579 = vadd.f32 %v578, %v515
    %v580 = vrot.slane %v579, 4
    %v581 = vadd.f32 %v579, %v580
    %v582 = vrot.slane %v581, 2
    %v583 = vadd.f32 %v581, %v582
    %v584 = vrot.slane %v583, 1
    %v585 = vadd.f32 %v583, %v584
    %v586 = vmul.f32 %v585, 0.001953125
    %v587 = vsub.f32 %v358, %v586
    %v588 = vsub.f32 %v360, %v586
    %v589 = vsub.f32 %v363, %v586
    %v590 = vsub.f32 %v365, %v586
    %v591 = vsub.f32 %v368, %v586
    %v592 = vsub.f32 %v370, %v586
    %v593 = vsub.f32 %v373, %v586
    %v594 = vsub.f32 %v375, %v586
    %v595 = vsub.f32 %v378, %v586
    %v596 = vsub.f32 %v380, %v586
    %v597 = vsub.f32 %v383, %v586
    %v598 = vsub.f32 %v385, %v586
    %v599 = vsub.f32 %v388, %v586
    %v600 = vsub.f32 %v390, %v586
    %v601 = vsub.f32 %v393, %v586
    %v602 = vsub.f32 %v395, %v586
    %v603 = vsub.f32 %v398, %v586
    %v604 = vsub.f32 %v400, %v586
    %v605 = vsub.f32 %v403, %v586
    %v606 = vsub.f32 %v405, %v586
    %v607 = vsub.f32 %v408, %v586
    %v608 = vsub.f32 %v410, %v586
    %v609 = vsub.f32 %v413, %v586
    %v610 = vsub.f32 %v415, %v586
    %v611 = vsub.f32 %v418, %v586
    %v612 = vsub.f32 %v420, %v586
    %v613 = vsub.f32 %v423, %v586
    %v614 = vsub.f32 %v425, %v586
    %v615 = vsub.f32 %v428, %v586
    %v616 = vsub.f32 %v430, %v586
    %v617 = vsub.f32 %v433, %v586
    %v618 = vsub.f32 %v435, %v586
    %v619 = vsub.f32 %v438, %v586
    %v620 = vsub.f32 %v440, %v586
    %v621 = vsub.f32 %v443, %v586
    %v622 = vsub.f32 %v445, %v586
    %v623 = vsub.f32 %v448, %v586
    %v624 = vsub.f32 %v450, %v586
    %v625 = vsub.f32 %v453, %v586
    %v626 = vsub.f32 %v455, %v586
    %v627 = vsub.f32 %v458, %v586
    %v628 = vsub.f32 %v460, %v586
    %v629 = vsub.f32 %v463, %v586
    %v630 = vsub.f32 %v465, %v586
    %v631 = vsub.f32 %v468, %v586
    %v632 = vsub.f32 %v470, %v586
    %v633 = vsub.f32 %v473, %v586
    %v634 = vsub.f32 %v475, %v586
    %v635 = vsub.f32 %v478, %v586
    %v636 = vsub.f32 %v480, %v586
    %v637 = vsub.f32 %v483, %v586
    %v638 = vsub.f32 %v485, %v586
    %v639 = vsub.f32 %v488, %v586
    %v640 = vsub.f32 %v490, %v586
    %v641 = vsub.f32 %v493, %v586
    %v642 = vsub.f32 %v495, %v586
    %v643 = vsub.f32 %v498, %v586
    %v644 = vsub.f32 %v500, %v586
    %v645 = vsub.f32 %v503, %v586
    %v646 = vsub.f32 %v505, %v586
    %v647 = vsub.f32 %v508, %v586
    %v648 = vsub.f32 %v510, %v586
    %v649 = vsub.f32 %v513, %v586
    %v650 = vsub.f32 %v515, %v586
    %v651 = vmul.f32 %v587, %v587
    %v652 = vmul.f32 %v588, %v588
    %v653 = vmul.f32 %v589, %v589
    %v654 = vmul.f32 %v590, %v590
    %v655 = vmul.f32 %v591, %v591
    %v656 = vmul.f32 %v592, %v592
    %v657 = vmul.f32 %v593, %v593
    %v658 = vmul.f32 %v594, %v594
    %v659 = vmul.f32 %v595, %v595
    %v660 = vmul.f32 %v596, %v596
    %v661 = vmul.f32 %v597, %v597
    %v662 = vmul.f32 %v598, %v598
    %v663 = vmul.f32 %v599, %v599
    %v664 = vmul.f32 %v600, %v600
    %v665 = vmul.f32 %v601, %v601
    %v666 = vmul.f32 %v602, %v602
    %v667 = vmul.f32 %v603, %v603
    %v668 = vmul.f32 %v604, %v604
    %v669 = vmul.f32 %v605, %v605
    %v670 = vmul.f32 %v606, %v606
    %v671 = vmul.f32 %v607, %v607
    %v672 = vmul.f32 %v608, %v608
    %v673 = vmul.f32 %v609, %v609
    %v674 = vmul.f32 %v610, %v610
    %v675 = vmul.f32 %v611, %v611
    %v676 = vmul.f32 %v612, %v612
    %v677 = vmul.f32 %v613, %v613
    %v678 = vmul.f32 %v614, %v614
    %v679 = vmul.f32 %v615, %v615
    %v680 = vmul.f32 %v616, %v616
    %v681 = vmul.f32 %v617, %v617
    %v682 = vmul.f32 %v618, %v618
    %v683 = vmul.f32 %v619, %v619
    %v684 = vmul.f32 %v620, %v620
    %v685 = vmul.f32 %v621, %v621
    %v686 = vmul.f32 %v622, %v622
    %v687 = vmul.f32 %v623, %v623
    %v688 = vmul.f32 %v624, %v624
    %v689 = vmul.f32 %v625, %v625
    %v690 = vmul.f32 %v626, %v626
    %v691 = vmul.f32 %v627, %v627
    %v692 = vmul.f32 %v628, %v628
    %v693 = vmul.f32 %v629, %v629
    %v694 = vmul.f32 %v630, %v630
    %v695 = vmul.f32 %v631, %v631
    %v696 = vmul.f32 %v632, %v632
    %v697 = vmul.f32 %v633, %v633
    %v698 = vmul.f32 %v634, %v634
    %v699 = vmul.f32 %v635, %v635
    %v700 = vmul.f32 %v636, %v636
    %v701 = vmul.f32 %v637, %v637
    %v702 = vmul.f32 %v638, %v638
    %v703 = vmul.f32 %v639, %v639
    %v704 = vmul.f32 %v640, %v640
    %v705 = vmul.f32 %v641, %v641
    %v706 = vmul.f32 %v642, %v642
    %v707 = vmul.f32 %v643, %v643
    %v708 = vmul.f32 %v644, %v644
    %v709 = vmul.f32 %v645, %v645
    %v710 = vmul.f32 %v646, %v646
    %v711 = vmul.f32 %v647, %v647
    %v712 = vmul.f32 %v648, %v648
    %v713 = vmul.f32 %v649, %v649
    %v714 = vmul.f32 %v650, %v650
    %v715 = vadd.f32 %v651, %v652
    %v716 = vadd.f32 %v715, %v653
    %v717 = vadd.f32 %v716, %v654
    %v718 = vadd.f32 %v717, %v655
    %v719 = vadd.f32 %v718, %v656
    %v720 = vadd.f32 %v719, %v657
    %v721 = vadd.f32 %v720, %v658
    %v722 = vadd.f32 %v721, %v659
    %v723 = vadd.f32 %v722, %v660
    %v724 = vadd.f32 %v723, %v661
    %v725 = vadd.f32 %v724, %v662
    %v726 = vadd.f32 %v725, %v663
    %v727 = vadd.f32 %v726, %v664
    %v728 = vadd.f32 %v727, %v665
    %v729 = vadd.f32 %v728, %v666
    %v730 = vadd.f32 %v729, %v667
    %v731 = vadd.f32 %v730, %v668
    %v732 = vadd.f32 %v731, %v669
    %v733 = vadd.f32 %v732, %v670
    %v734 = vadd.f32 %v733, %v671
    %v735 = vadd.f32 %v734, %v672
    %v736 = vadd.f32 %v735, %v673
    %v737 = vadd.f32 %v736, %v674
    %v738 = vadd.f32 %v737, %v675
    %v739 = vadd.f32 %v738, %v676
    %v740 = vadd.f32 %v739, %v677
    %v741 = vadd.f32 %v740, %v678
    %v742 = vadd.f32 %v741, %v679
    %v743 = vadd.f32 %v742, %v680
    %v744 = vadd.f32 %v743, %v681
    %v745 = vadd.f32 %v744, %v682
    %v746 = vadd.f32 %v745, %v683
    %v747 = vadd.f32 %v746, %v684
    %v748 = vadd.f32 %v747, %v685
    %v749 = vadd.f32 %v748, %v686
    %v750 = vadd.f32 %v749, %v687
    %v751 = vadd.f32 %v750, %v688
    %v752 = vadd.f32 %v751, %v689
    %v753 = vadd.f32 %v752, %v690
    %v754 = vadd.f32 %v753, %v691
    %v755 = vadd.f32 %v754, %v692
    %v756 = vadd.f32 %v755, %v693
    %v757 = vadd.f32 %v756, %v694
    %v758 = vadd.f32 %v757, %v695
    %v759 = vadd.f32 %v758, %v696
    %v760 = vadd.f32 %v759, %v697
    %v761 = vadd.f32 %v760, %v698
    %v762 = vadd.f32 %v761, %v699
    %v763 = vadd.f32 %v762, %v700
    %v764 = vadd.f32 %v763, %v701
    %v765 = vadd.f32 %v764, %v702
    %v766 = vadd.f32 %v765, %v703
    %v767 = vadd.f32 %v766, %v704
    %v768 = vadd.f32 %v767, %v705
    %v769 = vadd.f32 %v768, %v706
    %v770 = vadd.f32 %v769, %v707
    %v771 = vadd.f32 %v770, %v708
    %v772 = vadd.f32 %v771, %v709
    %v773 = vadd.f32 %v772, %v710
    %v774 = vadd.f32 %v773, %v711
    %v775 = vadd.f32 %v774, %v712
    %v776 = vadd.f32 %v775, %v713
    %v777 = vadd.f32 %v776, %v714
    %v778 = vrot.slane %v777, 4
    %v779 = vadd.f32 %v777, %v778
    %v780 = vrot.slane %v779, 2
    %v781 = vadd.f32 %v779, %v780
    %v782 = vrot.slane %v781, 1
    %v783 = vadd.f32 %v781, %v782
    %v784 = vmul.f32 %v783, 0.001953125
    %v785 = vld [vmem:[%s2] sm:$0x1]
    %v786 = vadd.f32 %v784, 1e-05
    %v787 = vrsqrt.pop %v786
    %v788 = vmul.f32 %v787, %v786
    %v789 = vmul.f32 %v788, %v787
    %v790 = vmul.f32 0.5, %v789
    %v791 = vsub.f32 1.5, %v790
    %v792 = vmul.f32 %v787, %v791
    %vm793 = vweird.f32 %v786
    %vm794 = vweird.f32 %v787
    %vm795 = vmor %vm793, %vm794
    %v796 = vsel %vm795, %v787, %v792
    %v797 = vmul.f32 %v785, %v796
    %v799 = vperm.slane %v797, 0
    %v801 = vmul.f32 %v587, %v799
    %v802 = vmul.f32 %v588, %v799
    %v803 = vmul.f32 %v589, %v799
    %v804 = vmul.f32 %v590, %v799
    %v805 = vmul.f32 %v591, %v799
    %v806 = vmul.f32 %v592, %v799
    %v807 = vmul.f32 %v593, %v799
    %v808 = vmul.f32 %v594, %v799
    %v809 = vmul.f32 %v595, %v799
    %v810 = vmul.f32 %v596, %v799
    %v811 = vmul.f32 %v597, %v799
    %v812 = vmul.f32 %v598, %v799
    %v813 = vmul.f32 %v599, %v799
    %v814 = vmul.f32 %v600, %v799
    %v815 = vmul.f32 %v601, %v799
    %v816 = vmul.f32 %v602, %v799
    %v817 = vmul.f32 %v603, %v799
    %v818 = vmul.f32 %v604, %v799
    %v819 = vmul.f32 %v605, %v799
    %v820 = vmul.f32 %v606, %v799
    %v821 = vmul.f32 %v607, %v799
    %v822 = vmul.f32 %v608, %v799
    %v823 = vmul.f32 %v609, %v799
    %v824 = vmul.f32 %v610, %v799
    %v825 = vmul.f32 %v611, %v799
    %v826 = vmul.f32 %v612, %v799
    %v827 = vmul.f32 %v613, %v799
    %v828 = vmul.f32 %v614, %v799
    %v829 = vmul.f32 %v615, %v799
    %v830 = vmul.f32 %v616, %v799
    %v831 = vmul.f32 %v617, %v799
    %v832 = vmul.f32 %v618, %v799
    %v833 = vmul.f32 %v619, %v799
    %v834 = vmul.f32 %v620, %v799
    %v835 = vmul.f32 %v621, %v799
    %v836 = vmul.f32 %v622, %v799
    %v837 = vmul.f32 %v623, %v799
    %v838 = vmul.f32 %v624, %v799
    %v839 = vmul.f32 %v625, %v799
    %v840 = vmul.f32 %v626, %v799
    %v841 = vmul.f32 %v627, %v799
    %v842 = vmul.f32 %v628, %v799
    %v843 = vmul.f32 %v629, %v799
    %v844 = vmul.f32 %v630, %v799
    %v845 = vmul.f32 %v631, %v799
    %v846 = vmul.f32 %v632, %v799
    %v847 = vmul.f32 %v633, %v799
    %v848 = vmul.f32 %v634, %v799
    %v849 = vmul.f32 %v635, %v799
    %v850 = vmul.f32 %v636, %v799
    %v851 = vmul.f32 %v637, %v799
    %v852 = vmul.f32 %v638, %v799
    %v853 = vmul.f32 %v639, %v799
    %v854 = vmul.f32 %v640, %v799
    %v855 = vmul.f32 %v641, %v799
    %v856 = vmul.f32 %v642, %v799
    %v857 = vmul.f32 %v643, %v799
    %v858 = vmul.f32 %v644, %v799
    %v859 = vmul.f32 %v645, %v799
    %v860 = vmul.f32 %v646, %v799
    %v861 = vmul.f32 %v647, %v799
    %v862 = vmul.f32 %v648, %v799
    %v863 = vmul.f32 %v649, %v799
    %v864 = vmul.f32 %v650, %v799
    %v865 = vld [vmem:[%s3] sm:$0x1]
    %v867 = vperm.slane %v865, 0
    %v869 = vadd.f32 %v801, %v867
    %v870 = vadd.f32 %v802, %v867
    %v871 = vadd.f32 %v803, %v867
    %v872 = vadd.f32 %v804, %v867
    %v873 = vadd.f32 %v805, %v867
    %v874 = vadd.f32 %v806, %v867
    %v875 = vadd.f32 %v807, %v867
    %v876 = vadd.f32 %v808, %v867
    %v877 = vadd.f32 %v809, %v867
    %v878 = vadd.f32 %v810, %v867
    %v879 = vadd.f32 %v811, %v867
    %v880 = vadd.f32 %v812, %v867
    %v881 = vadd.f32 %v813, %v867
    %v882 = vadd.f32 %v814, %v867
    %v883 = vadd.f32 %v815, %v867
    %v884 = vadd.f32 %v816, %v867
    %v885 = vadd.f32 %v817, %v867
    %v886 = vadd.f32 %v818, %v867
    %v887 = vadd.f32 %v819, %v867
    %v888 = vadd.f32 %v820, %v867
    %v889 = vadd.f32 %v821, %v867
    %v890 = vadd.f32 %v822, %v867
    %v891 = vadd.f32 %v823, %v867
    %v892 = vadd.f32 %v824, %v867
    %v893 = vadd.f32 %v825, %v867
    %v894 = vadd.f32 %v826, %v867
    %v895 = vadd.f32 %v827, %v867
    %v896 = vadd.f32 %v828, %v867
    %v897 = vadd.f32 %v829, %v867
    %v898 = vadd.f32 %v830, %v867
    %v899 = vadd.f32 %v831, %v867
    %v900 = vadd.f32 %v832, %v867
    %v901 = vadd.f32 %v833, %v867
    %v902 = vadd.f32 %v834, %v867
    %v903 = vadd.f32 %v835, %v867
    %v904 = vadd.f32 %v836, %v867
    %v905 = vadd.f32 %v837, %v867
    %v906 = vadd.f32 %v838, %v867
    %v907 = vadd.f32 %v839, %v867
    %v908 = vadd.f32 %v840, %v867
    %v909 = vadd.f32 %v841, %v867
    %v910 = vadd.f32 %v842, %v867
    %v911 = vadd.f32 %v843, %v867
    %v912 = vadd.f32 %v844, %v867
    %v913 = vadd.f32 %v845, %v867
    %v914 = vadd.f32 %v846, %v867
    %v915 = vadd.f32 %v847, %v867
    %v916 = vadd.f32 %v848, %v867
    %v917 = vadd.f32 %v849, %v867
    %v918 = vadd.f32 %v850, %v867
    %v919 = vadd.f32 %v851, %v867
    %v920 = vadd.f32 %v852, %v867
    %v921 = vadd.f32 %v853, %v867
    %v922 = vadd.f32 %v854, %v867
    %v923 = vadd.f32 %v855, %v867
    %v924 = vadd.f32 %v856, %v867
    %v925 = vadd.f32 %v857, %v867
    %v926 = vadd.f32 %v858, %v867
    %v927 = vadd.f32 %v859, %v867
    %v928 = vadd.f32 %v860, %v867
    %v929 = vadd.f32 %v861, %v867
    %v930 = vadd.f32 %v862, %v867
    %v931 = vadd.f32 %v863, %v867
    %v932 = vadd.f32 %v864, %v867
    %v933 = vmax.f32 %v869, 0.0
    %v934 = vmax.f32 %v870, 0.0
    %v935 = vmax.f32 %v871, 0.0
    %v936 = vmax.f32 %v872, 0.0
    %v937 = vmax.f32 %v873, 0.0
    %v938 = vmax.f32 %v874, 0.0
    %v939 = vmax.f32 %v875, 0.0
    %v940 = vmax.f32 %v876, 0.0
    %v941 = vmax.f32 %v877, 0.0
    %v942 = vmax.f32 %v878, 0.0
    %v943 = vmax.f32 %v879, 0.0
    %v944 = vmax.f32 %v880, 0.0
    %v945 = vmax.f32 %v881, 0.0
    %v946 = vmax.f32 %v882, 0.0
    %v947 = vmax.f32 %v883, 0.0
    %v948 = vmax.f32 %v884, 0.0
    %v949 = vmax.f32 %v885, 0.0
    %v950 = vmax.f32 %v886, 0.0
    %v951 = vmax.f32 %v887, 0.0
    %v952 = vmax.f32 %v888, 0.0
    %v953 = vmax.f32 %v889, 0.0
    %v954 = vmax.f32 %v890, 0.0
    %v955 = vmax.f32 %v891, 0.0
    %v956 = vmax.f32 %v892, 0.0
    %v957 = vmax.f32 %v893, 0.0
    %v958 = vmax.f32 %v894, 0.0
    %v959 = vmax.f32 %v895, 0.0
    %v960 = vmax.f32 %v896, 0.0
    %v961 = vmax.f32 %v897, 0.0
    %v962 = vmax.f32 %v898, 0.0
    %v963 = vmax.f32 %v899, 0.0
    %v964 = vmax.f32 %v900, 0.0
    %v965 = vmax.f32 %v901, 0.0
    %v966 = vmax.f32 %v902, 0.0
    %v967 = vmax.f32 %v903, 0.0
    %v968 = vmax.f32 %v904, 0.0
    %v969 = vmax.f32 %v905, 0.0
    %v970 = vmax.f32 %v906, 0.0
    %v971 = vmax.f32 %v907, 0.0
    %v972 = vmax.f32 %v908, 0.0
    %v973 = vmax.f32 %v909, 0.0
    %v974 = vmax.f32 %v910, 0.0
    %v975 = vmax.f32 %v911, 0.0
    %v976 = vmax.f32 %v912, 0.0
    %v977 = vmax.f32 %v913, 0.0
    %v978 = vmax.f32 %v914, 0.0
    %v979 = vmax.f32 %v915, 0.0
    %v980 = vmax.f32 %v916, 0.0
    %v981 = vmax.f32 %v917, 0.0
    %v982 = vmax.f32 %v918, 0.0
    %v983 = vmax.f32 %v919, 0.0
    %v984 = vmax.f32 %v920, 0.0
    %v985 = vmax.f32 %v921, 0.0
    %v986 = vmax.f32 %v922, 0.0
    %v987 = vmax.f32 %v923, 0.0
    %v988 = vmax.f32 %v924, 0.0
    %v989 = vmax.f32 %v925, 0.0
    %v990 = vmax.f32 %v926, 0.0
    %v991 = vmax.f32 %v927, 0.0
    %v992 = vmax.f32 %v928, 0.0
    %v993 = vmax.f32 %v929, 0.0
    %v994 = vmax.f32 %v930, 0.0
    %v995 = vmax.f32 %v931, 0.0
    %v996 = vmax.f32 %v932, 0.0
    %997 = vst [vmem:[#allocation2] sm:$0xf] 0
    %998 = vst [vmem:[#allocation2 + $0x4] sm:$0xf] 0
    %999 = vst [vmem:[#allocation2 + $0x8] sm:$0xf] 0
    %1000 = vst [vmem:[#allocation2 + $0xc] sm:$0xf] 0
    %1001 = vst [vmem:[#allocation2 + $0x10] sm:$0xf] 0
    %1002 = vst [vmem:[#allocation2 + $0x14] sm:$0xf] 0
    %1003 = vst [vmem:[#allocation2 + $0x18] sm:$0xf] 0
    %1004 = vst [vmem:[#allocation2 + $0x1c] sm:$0xf] 0
    %1005 = vst [vmem:[#allocation2 + $0x20] sm:$0xf] 0
    %1006 = vst [vmem:[#allocation2 + $0x24] sm:$0xf] 0
    %1007 = vst [vmem:[#allocation2 + $0x28] sm:$0xf] 0
    %1008 = vst [vmem:[#allocation2 + $0x2c] sm:$0xf] 0
    %1009 = vst [vmem:[#allocation2 + $0x30] sm:$0xf] 0
    %1010 = vst [vmem:[#allocation2 + $0x34] sm:$0xf] 0
    %1011 = vst [vmem:[#allocation2 + $0x38] sm:$0xf] 0
    %1012 = vst [vmem:[#allocation2 + $0x3c] sm:$0xf] 0
    %1013 = vst [vmem:[#allocation2 + $0x40] sm:$0xf] 0
    %1014 = vst [vmem:[#allocation2 + $0x44] sm:$0xf] 0
    %1015 = vst [vmem:[#allocation2 + $0x48] sm:$0xf] 0
    %1016 = vst [vmem:[#allocation2 + $0x4c] sm:$0xf] 0
    %1017 = vst [vmem:[#allocation2 + $0x50] sm:$0xf] 0
    %1018 = vst [vmem:[#allocation2 + $0x54] sm:$0xf] 0
    %1019 = vst [vmem:[#allocation2 + $0x58] sm:$0xf] 0
    %1020 = vst [vmem:[#allocation2 + $0x5c] sm:$0xf] 0
    %1021 = vst [vmem:[#allocation2 + $0x60] sm:$0xf] 0
    %1022 = vst [vmem:[#allocation2 + $0x64] sm:$0xf] 0
    %1023 = vst [vmem:[#allocation2 + $0x68] sm:$0xf] 0
    %1024 = vst [vmem:[#allocation2 + $0x6c] sm:$0xf] 0
    %1025 = vst [vmem:[#allocation2 + $0x70] sm:$0xf] 0
    %1026 = vst [vmem:[#allocation2 + $0x74] sm:$0xf] 0
    %1027 = vst [vmem:[#allocation2 + $0x78] sm:$0xf] 0
    %1028 = vst [vmem:[#allocation2 + $0x7c] sm:$0xf] 0
    %1029 = vst [vmem:[#allocation2 + $0x80] sm:$0xf] 0
    %1030 = vst [vmem:[#allocation2 + $0x84] sm:$0xf] 0
    %1031 = vst [vmem:[#allocation2 + $0x88] sm:$0xf] 0
    %1032 = vst [vmem:[#allocation2 + $0x8c] sm:$0xf] 0
    %1033 = vst [vmem:[#allocation2 + $0x90] sm:$0xf] 0
    %1034 = vst [vmem:[#allocation2 + $0x94] sm:$0xf] 0
    %1035 = vst [vmem:[#allocation2 + $0x98] sm:$0xf] 0
    %1036 = vst [vmem:[#allocation2 + $0x9c] sm:$0xf] 0
    %1037 = vst [vmem:[#allocation2 + $0xa0] sm:$0xf] 0
    %1038 = vst [vmem:[#allocation2 + $0xa4] sm:$0xf] 0
    %1039 = vst [vmem:[#allocation2 + $0xa8] sm:$0xf] 0
    %1040 = vst [vmem:[#allocation2 + $0xac] sm:$0xf] 0
    %1041 = vst [vmem:[#allocation2 + $0xb0] sm:$0xf] 0
    %1042 = vst [vmem:[#allocation2 + $0xb4] sm:$0xf] 0
    %1043 = vst [vmem:[#allocation2 + $0xb8] sm:$0xf] 0
    %1044 = vst [vmem:[#allocation2 + $0xbc] sm:$0xf] 0
    %1045 = vst [vmem:[#allocation2 + $0xc0] sm:$0xf] 0
    %1046 = vst [vmem:[#allocation2 + $0xc4] sm:$0xf] 0
    %1047 = vst [vmem:[#allocation2 + $0xc8] sm:$0xf] 0
    %1048 = vst [vmem:[#allocation2 + $0xcc] sm:$0xf] 0
    %1049 = vst [vmem:[#allocation2 + $0xd0] sm:$0xf] 0
    %1050 = vst [vmem:[#allocation2 + $0xd4] sm:$0xf] 0
    %1051 = vst [vmem:[#allocation2 + $0xd8] sm:$0xf] 0
    %1052 = vst [vmem:[#allocation2 + $0xdc] sm:$0xf] 0
    %1053 = vst [vmem:[#allocation2 + $0xe0] sm:$0xf] 0
    %1054 = vst [vmem:[#allocation2 + $0xe4] sm:$0xf] 0
    %1055 = vst [vmem:[#allocation2 + $0xe8] sm:$0xf] 0
    %1056 = vst [vmem:[#allocation2 + $0xec] sm:$0xf] 0
    %1057 = vst [vmem:[#allocation2 + $0xf0] sm:$0xf] 0
    %1058 = vst [vmem:[#allocation2 + $0xf4] sm:$0xf] 0
    %1059 = vst [vmem:[#allocation2 + $0xf8] sm:$0xf] 0
    %1060 = vst [vmem:[#allocation2 + $0xfc] sm:$0xf] 0
    %1061 = vst [vmem:[#allocation2 + $0x100] sm:$0xf] 0
    %1062 = vst [vmem:[#allocation2 + $0x104] sm:$0xf] 0
    %1063 = vst [vmem:[#allocation2 + $0x108] sm:$0xf] 0
    %1064 = vst [vmem:[#allocation2 + $0x10c] sm:$0xf] 0
    %1065 = vst [vmem:[#allocation2 + $0x110] sm:$0xf] 0
    %1066 = vst [vmem:[#allocation2 + $0x114] sm:$0xf] 0
    %1067 = vst [vmem:[#allocation2 + $0x118] sm:$0xf] 0
    %1068 = vst [vmem:[#allocation2 + $0x11c] sm:$0xf] 0
    %1069 = vst [vmem:[#allocation2 + $0x120] sm:$0xf] 0
    %1070 = vst [vmem:[#allocation2 + $0x124] sm:$0xf] 0
    %1071 = vst [vmem:[#allocation2 + $0x128] sm:$0xf] 0
    %1072 = vst [vmem:[#allocation2 + $0x12c] sm:$0xf] 0
    %1073 = vst [vmem:[#allocation2 + $0x130] sm:$0xf] 0
    %1074 = vst [vmem:[#allocation2 + $0x134] sm:$0xf] 0
    %1075 = vst [vmem:[#allocation2 + $0x138] sm:$0xf] 0
    %1076 = vst [vmem:[#allocation2 + $0x13c] sm:$0xf] 0
    %1077 = vst [vmem:[#allocation2 + $0x140] sm:$0xf] 0
    %1078 = vst [vmem:[#allocation2 + $0x144] sm:$0xf] 0
    %1079 = vst [vmem:[#allocation2 + $0x148] sm:$0xf] 0
    %1080 = vst [vmem:[#allocation2 + $0x14c] sm:$0xf] 0
    %1081 = vst [vmem:[#allocation2 + $0x150] sm:$0xf] 0
    %1082 = vst [vmem:[#allocation2 + $0x154] sm:$0xf] 0
    %1083 = vst [vmem:[#allocation2 + $0x158] sm:$0xf] 0
    %1084 = vst [vmem:[#allocation2 + $0x15c] sm:$0xf] 0
    %1085 = vst [vmem:[#allocation2 + $0x160] sm:$0xf] 0
    %1086 = vst [vmem:[#allocation2 + $0x164] sm:$0xf] 0
    %1087 = vst [vmem:[#allocation2 + $0x168] sm:$0xf] 0
    %1088 = vst [vmem:[#allocation2 + $0x16c] sm:$0xf] 0
    %1089 = vst [vmem:[#allocation2 + $0x170] sm:$0xf] 0
    %1090 = vst [vmem:[#allocation2 + $0x174] sm:$0xf] 0
    %1091 = vst [vmem:[#allocation2 + $0x178] sm:$0xf] 0
    %1092 = vst [vmem:[#allocation2 + $0x17c] sm:$0xf] 0
    %1093 = vst [vmem:[#allocation2 + $0x180] sm:$0xf] 0
    %1094 = vst [vmem:[#allocation2 + $0x184] sm:$0xf] 0
    %1095 = vst [vmem:[#allocation2 + $0x188] sm:$0xf] 0
    %1096 = vst [vmem:[#allocation2 + $0x18c] sm:$0xf] 0
    %1097 = vst [vmem:[#allocation2 + $0x190] sm:$0xf] 0
    %1098 = vst [vmem:[#allocation2 + $0x194] sm:$0xf] 0
    %1099 = vst [vmem:[#allocation2 + $0x198] sm:$0xf] 0
    %1100 = vst [vmem:[#allocation2 + $0x19c] sm:$0xf] 0
    %1101 = vst [vmem:[#allocation2 + $0x1a0] sm:$0xf] 0
    %1102 = vst [vmem:[#allocation2 + $0x1a4] sm:$0xf] 0
    %1103 = vst [vmem:[#allocation2 + $0x1a8] sm:$0xf] 0
    %1104 = vst [vmem:[#allocation2 + $0x1ac] sm:$0xf] 0
    %v1105 = vpack.c.bf16 %v933, %v933
    %v1106 = vpack.c.bf16 %v934, %v934
    %v1107 = vpack.c.bf16 %v935, %v935
    %v1108 = vpack.c.bf16 %v936, %v936
    %v1109 = vpack.c.bf16 %v937, %v937
    %v1110 = vpack.c.bf16 %v938, %v938
    %v1111 = vpack.c.bf16 %v939, %v939
    %v1112 = vpack.c.bf16 %v940, %v940
    %v1113 = vpack.c.bf16 %v941, %v941
    %v1114 = vpack.c.bf16 %v942, %v942
    %v1115 = vpack.c.bf16 %v943, %v943
    %v1116 = vpack.c.bf16 %v944, %v944
    %v1117 = vpack.c.bf16 %v945, %v945
    %v1118 = vpack.c.bf16 %v946, %v946
    %v1119 = vpack.c.bf16 %v947, %v947
    %v1120 = vpack.c.bf16 %v948, %v948
    %v1121 = vpack.c.bf16 %v949, %v949
    %v1122 = vpack.c.bf16 %v950, %v950
    %v1123 = vpack.c.bf16 %v951, %v951
    %v1124 = vpack.c.bf16 %v952, %v952
    %v1125 = vpack.c.bf16 %v953, %v953
    %v1126 = vpack.c.bf16 %v954, %v954
    %v1127 = vpack.c.bf16 %v955, %v955
    %v1128 = vpack.c.bf16 %v956, %v956
    %v1129 = vpack.c.bf16 %v957, %v957
    %v1130 = vpack.c.bf16 %v958, %v958
    %v1131 = vpack.c.bf16 %v959, %v959
    %v1132 = vpack.c.bf16 %v960, %v960
    %v1133 = vpack.c.bf16 %v961, %v961
    %v1134 = vpack.c.bf16 %v962, %v962
    %v1135 = vpack.c.bf16 %v963, %v963
    %v1136 = vpack.c.bf16 %v964, %v964
    %v1137 = vpack.c.bf16 %v965, %v965
    %v1138 = vpack.c.bf16 %v966, %v966
    %v1139 = vpack.c.bf16 %v967, %v967
    %v1140 = vpack.c.bf16 %v968, %v968
    %v1141 = vpack.c.bf16 %v969, %v969
    %v1142 = vpack.c.bf16 %v970, %v970
    %v1143 = vpack.c.bf16 %v971, %v971
    %v1144 = vpack.c.bf16 %v972, %v972
    %v1145 = vpack.c.bf16 %v973, %v973
    %v1146 = vpack.c.bf16 %v974, %v974
    %v1147 = vpack.c.bf16 %v975, %v975
    %v1148 = vpack.c.bf16 %v976, %v976
    %v1149 = vpack.c.bf16 %v977, %v977
    %v1150 = vpack.c.bf16 %v978, %v978
    %v1151 = vpack.c.bf16 %v979, %v979
    %v1152 = vpack.c.bf16 %v980, %v980
    %v1153 = vpack.c.bf16 %v981, %v981
    %v1154 = vpack.c.bf16 %v982, %v982
    %v1155 = vpack.c.bf16 %v983, %v983
    %v1156 = vpack.c.bf16 %v984, %v984
    %v1157 = vpack.c.bf16 %v985, %v985
    %v1158 = vpack.c.bf16 %v986, %v986
    %v1159 = vpack.c.bf16 %v987, %v987
    %v1160 = vpack.c.bf16 %v988, %v988
    %v1161 = vpack.c.bf16 %v989, %v989
    %v1162 = vpack.c.bf16 %v990, %v990
    %v1163 = vpack.c.bf16 %v991, %v991
    %v1164 = vpack.c.bf16 %v992, %v992
    %v1165 = vpack.c.bf16 %v993, %v993
    %v1166 = vpack.c.bf16 %v994, %v994
    %v1167 = vpack.c.bf16 %v995, %v995
    %v1168 = vpack.c.bf16 %v996, %v996
    %vm1169 = vsmask.f32 256
    %vm1170 = vsmask.f32 4368
    %vm1171 = vmor %vm1169, %vm1170
    %v1173 = vshrl.u32 %v1105, 16
    %v1175 = vrot.slane %v1173, 7
    %v1176 = vshll.u32 %v1105, 16
    %v1178 = vor.u32 %v1175, %v1176
    %v1179 = vrot.slane %v1175, 4
    %v1181 = vshrl.u32 %v1106, 16
    %v1183 = vrot.slane %v1181, 7
    %v1184 = vshll.u32 %v1106, 16
    %v1186 = vor.u32 %v1183, %v1184
    %v1187 = vsel %vm1171, %v1179, %v1186
    %v1188 = vrot.slane %v1183, 4
    %v1190 = vshrl.u32 %v1107, 16
    %v1192 = vrot.slane %v1190, 7
    %v1193 = vshll.u32 %v1107, 16
    %v1195 = vor.u32 %v1192, %v1193
    %v1196 = vrot.slane %v1192, 4
    %v1198 = vshrl.u32 %v1108, 16
    %v1200 = vrot.slane %v1198, 7
    %v1201 = vshll.u32 %v1108, 16
    %v1203 = vor.u32 %v1200, %v1201
    %v1204 = vsel %vm1171, %v1196, %v1203
    %v1205 = vrot.slane %v1200, 4
    %v1207 = vshrl.u32 %v1109, 16
    %v1209 = vrot.slane %v1207, 7
    %v1210 = vshll.u32 %v1109, 16
    %v1212 = vor.u32 %v1209, %v1210
    %v1213 = vrot.slane %v1209, 4
    %v1215 = vshrl.u32 %v1110, 16
    %v1217 = vrot.slane %v1215, 7
    %v1218 = vshll.u32 %v1110, 16
    %v1220 = vor.u32 %v1217, %v1218
    %v1221 = vsel %vm1171, %v1213, %v1220
    %v1222 = vrot.slane %v1217, 4
    %v1224 = vshrl.u32 %v1111, 16
    %v1226 = vrot.slane %v1224, 7
    %v1227 = vshll.u32 %v1111, 16
    %v1229 = vor.u32 %v1226, %v1227
    %v1230 = vrot.slane %v1226, 4
    %v1232 = vshrl.u32 %v1112, 16
    %v1234 = vrot.slane %v1232, 7
    %v1235 = vshll.u32 %v1112, 16
    %v1237 = vor.u32 %v1234, %v1235
    %v1238 = vsel %vm1171, %v1230, %v1237
    %v1239 = vrot.slane %v1234, 4
    %v1241 = vshrl.u32 %v1113, 16
    %v1243 = vrot.slane %v1241, 7
    %v1244 = vshll.u32 %v1113, 16
    %v1246 = vor.u32 %v1243, %v1244
    %v1247 = vrot.slane %v1243, 4
    %v1249 = vshrl.u32 %v1114, 16
    %v1251 = vrot.slane %v1249, 7
    %v1252 = vshll.u32 %v1114, 16
    %v1254 = vor.u32 %v1251, %v1252
    %v1255 = vsel %vm1171, %v1247, %v1254
    %v1256 = vrot.slane %v1251, 4
    %v1258 = vshrl.u32 %v1115, 16
    %v1260 = vrot.slane %v1258, 7
    %v1261 = vshll.u32 %v1115, 16
    %v1263 = vor.u32 %v1260, %v1261
    %v1264 = vrot.slane %v1260, 4
    %v1266 = vshrl.u32 %v1116, 16
    %v1268 = vrot.slane %v1266, 7
    %v1269 = vshll.u32 %v1116, 16
    %v1271 = vor.u32 %v1268, %v1269
    %v1272 = vsel %vm1171, %v1264, %v1271
    %v1273 = vrot.slane %v1268, 4
    %v1275 = vshrl.u32 %v1117, 16
    %v1277 = vrot.slane %v1275, 7
    %v1278 = vshll.u32 %v1117, 16
    %v1280 = vor.u32 %v1277, %v1278
    %v1281 = vrot.slane %v1277, 4
    %v1283 = vshrl.u32 %v1118, 16
    %v1285 = vrot.slane %v1283, 7
    %v1286 = vshll.u32 %v1118, 16
    %v1288 = vor.u32 %v1285, %v1286
    %v1289 = vsel %vm1171, %v1281, %v1288
    %v1290 = vrot.slane %v1285, 4
    %v1292 = vshrl.u32 %v1119, 16
    %v1294 = vrot.slane %v1292, 7
    %v1295 = vshll.u32 %v1119, 16
    %v1297 = vor.u32 %v1294, %v1295
    %v1298 = vrot.slane %v1294, 4
    %v1300 = vshrl.u32 %v1120, 16
    %v1302 = vrot.slane %v1300, 7
    %v1303 = vshll.u32 %v1120, 16
    %v1305 = vor.u32 %v1302, %v1303
    %v1306 = vsel %vm1171, %v1298, %v1305
    %v1307 = vrot.slane %v1302, 4
    %v1309 = vshrl.u32 %v1121, 16
    %v1311 = vrot.slane %v1309, 7
    %v1312 = vshll.u32 %v1121, 16
    %v1314 = vor.u32 %v1311, %v1312
    %v1315 = vrot.slane %v1311, 4
    %v1317 = vshrl.u32 %v1122, 16
    %v1319 = vrot.slane %v1317, 7
    %v1320 = vshll.u32 %v1122, 16
    %v1322 = vor.u32 %v1319, %v1320
    %v1323 = vsel %vm1171, %v1315, %v1322
    %v1324 = vrot.slane %v1319, 4
    %v1326 = vshrl.u32 %v1123, 16
    %v1328 = vrot.slane %v1326, 7
    %v1329 = vshll.u32 %v1123, 16
    %v1331 = vor.u32 %v1328, %v1329
    %v1332 = vrot.slane %v1328, 4
    %v1334 = vshrl.u32 %v1124, 16
    %v1336 = vrot.slane %v1334, 7
    %v1337 = vshll.u32 %v1124, 16
    %v1339 = vor.u32 %v1336, %v1337
    %v1340 = vsel %vm1171, %v1332, %v1339
    %v1341 = vrot.slane %v1336, 4
    %v1343 = vshrl.u32 %v1125, 16
    %v1345 = vrot.slane %v1343, 7
    %v1346 = vshll.u32 %v1125, 16
    %v1348 = vor.u32 %v1345, %v1346
    %v1349 = vrot.slane %v1345, 4
    %v1351 = vshrl.u32 %v1126, 16
    %v1353 = vrot.slane %v1351, 7
    %v1354 = vshll.u32 %v1126, 16
    %v1356 = vor.u32 %v1353, %v1354
    %v1357 = vsel %vm1171, %v1349, %v1356
    %v1358 = vrot.slane %v1353, 4
    %v1360 = vshrl.u32 %v1127, 16
    %v1362 = vrot.slane %v1360, 7
    %v1363 = vshll.u32 %v1127, 16
    %v1365 = vor.u32 %v1362, %v1363
    %v1366 = vrot.slane %v1362, 4
    %v1368 = vshrl.u32 %v1128, 16
    %v1370 = vrot.slane %v1368, 7
    %v1371 = vshll.u32 %v1128, 16
    %v1373 = vor.u32 %v1370, %v1371
    %v1374 = vsel %vm1171, %v1366, %v1373
    %v1375 = vrot.slane %v1370, 4
    %v1377 = vshrl.u32 %v1129, 16
    %v1379 = vrot.slane %v1377, 7
    %v1380 = vshll.u32 %v1129, 16
    %v1382 = vor.u32 %v1379, %v1380
    %v1383 = vrot.slane %v1379, 4
    %v1385 = vshrl.u32 %v1130, 16
    %v1387 = vrot.slane %v1385, 7
    %v1388 = vshll.u32 %v1130, 16
    %v1390 = vor.u32 %v1387, %v1388
    %v1391 = vsel %vm1171, %v1383, %v1390
    %v1392 = vrot.slane %v1387, 4
    %v1394 = vshrl.u32 %v1131, 16
    %v1396 = vrot.slane %v1394, 7
    %v1397 = vshll.u32 %v1131, 16
    %v1399 = vor.u32 %v1396, %v1397
    %v1400 = vrot.slane %v1396, 4
    %v1402 = vshrl.u32 %v1132, 16
    %v1404 = vrot.slane %v1402, 7
    %v1405 = vshll.u32 %v1132, 16
    %v1407 = vor.u32 %v1404, %v1405
    %v1408 = vsel %vm1171, %v1400, %v1407
    %v1409 = vrot.slane %v1404, 4
    %v1411 = vshrl.u32 %v1133, 16
    %v1413 = vrot.slane %v1411, 7
    %v1414 = vshll.u32 %v1133, 16
    %v1416 = vor.u32 %v1413, %v1414
    %v1417 = vrot.slane %v1413, 4
    %v1419 = vshrl.u32 %v1134, 16
    %v1421 = vrot.slane %v1419, 7
    %v1422 = vshll.u32 %v1134, 16
    %v1424 = vor.u32 %v1421, %v1422
    %v1425 = vsel %vm1171, %v1417, %v1424
    %v1426 = vrot.slane %v1421, 4
    %v1428 = vshrl.u32 %v1135, 16
    %v1430 = vrot.slane %v1428, 7
    %v1431 = vshll.u32 %v1135, 16
    %v1433 = vor.u32 %v1430, %v1431
    %v1434 = vrot.slane %v1430, 4
    %v1436 = vshrl.u32 %v1136, 16
    %v1438 = vrot.slane %v1436, 7
    %v1439 = vshll.u32 %v1136, 16
    %v1441 = vor.u32 %v1438, %v1439
    %v1442 = vsel %vm1171, %v1434, %v1441
    %v1443 = vrot.slane %v1438, 4
    %v1445 = vshrl.u32 %v1137, 16
    %v1447 = vrot.slane %v1445, 7
    %v1448 = vshll.u32 %v1137, 16
    %v1450 = vor.u32 %v1447, %v1448
    %v1451 = vrot.slane %v1447, 4
    %v1453 = vshrl.u32 %v1138, 16
    %v1455 = vrot.slane %v1453, 7
    %v1456 = vshll.u32 %v1138, 16
    %v1458 = vor.u32 %v1455, %v1456
    %v1459 = vsel %vm1171, %v1451, %v1458
    %v1460 = vrot.slane %v1455, 4
    %v1462 = vshrl.u32 %v1139, 16
    %v1464 = vrot.slane %v1462, 7
    %v1465 = vshll.u32 %v1139, 16
    %v1467 = vor.u32 %v1464, %v1465
    %v1468 = vrot.slane %v1464, 4
    %v1470 = vshrl.u32 %v1140, 16
    %v1472 = vrot.slane %v1470, 7
    %v1473 = vshll.u32 %v1140, 16
    %v1475 = vor.u32 %v1472, %v1473
    %v1476 = vsel %vm1171, %v1468, %v1475
    %v1477 = vrot.slane %v1472, 4
    %v1479 = vshrl.u32 %v1141, 16
    %v1481 = vrot.slane %v1479, 7
    %v1482 = vshll.u32 %v1141, 16
    %v1484 = vor.u32 %v1481, %v1482
    %v1485 = vrot.slane %v1481, 4
    %v1487 = vshrl.u32 %v1142, 16
    %v1489 = vrot.slane %v1487, 7
    %v1490 = vshll.u32 %v1142, 16
    %v1492 = vor.u32 %v1489, %v1490
    %v1493 = vsel %vm1171, %v1485, %v1492
    %v1494 = vrot.slane %v1489, 4
    %v1496 = vshrl.u32 %v1143, 16
    %v1498 = vrot.slane %v1496, 7
    %v1499 = vshll.u32 %v1143, 16
    %v1501 = vor.u32 %v1498, %v1499
    %v1502 = vrot.slane %v1498, 4
    %v1504 = vshrl.u32 %v1144, 16
    %v1506 = vrot.slane %v1504, 7
    %v1507 = vshll.u32 %v1144, 16
    %v1509 = vor.u32 %v1506, %v1507
    %v1510 = vsel %vm1171, %v1502, %v1509
    %v1511 = vrot.slane %v1506, 4
    %v1513 = vshrl.u32 %v1145, 16
    %v1515 = vrot.slane %v1513, 7
    %v1516 = vshll.u32 %v1145, 16
    %v1518 = vor.u32 %v1515, %v1516
    %v1519 = vrot.slane %v1515, 4
    %v1521 = vshrl.u32 %v1146, 16
    %v1523 = vrot.slane %v1521, 7
    %v1524 = vshll.u32 %v1146, 16
    %v1526 = vor.u32 %v1523, %v1524
    %v1527 = vsel %vm1171, %v1519, %v1526
    %v1528 = vrot.slane %v1523, 4
    %v1530 = vshrl.u32 %v1147, 16
    %v1532 = vrot.slane %v1530, 7
    %v1533 = vshll.u32 %v1147, 16
    %v1535 = vor.u32 %v1532, %v1533
    %v1536 = vrot.slane %v1532, 4
    %v1538 = vshrl.u32 %v1148, 16
    %v1540 = vrot.slane %v1538, 7
    %v1541 = vshll.u32 %v1148, 16
    %v1543 = vor.u32 %v1540, %v1541
    %v1544 = vsel %vm1171, %v1536, %v1543
    %v1545 = vrot.slane %v1540, 4
    %v1547 = vshrl.u32 %v1149, 16
    %v1549 = vrot.slane %v1547, 7
    %v1550 = vshll.u32 %v1149, 16
    %v1552 = vor.u32 %v1549, %v1550
    %v1553 = vrot.slane %v1549, 4
    %v1555 = vshrl.u32 %v1150, 16
    %v1557 = vrot.slane %v1555, 7
    %v1558 = vshll.u32 %v1150, 16
    %v1560 = vor.u32 %v1557, %v1558
    %v1561 = vsel %vm1171, %v1553, %v1560
    %v1562 = vrot.slane %v1557, 4
    %v1564 = vshrl.u32 %v1151, 16
    %v1566 = vrot.slane %v1564, 7
    %v1567 = vshll.u32 %v1151, 16
    %v1569 = vor.u32 %v1566, %v1567
    %v1570 = vrot.slane %v1566, 4
    %v1572 = vshrl.u32 %v1152, 16
    %v1574 = vrot.slane %v1572, 7
    %v1575 = vshll.u32 %v1152, 16
    %v1577 = vor.u32 %v1574, %v1575
    %v1578 = vsel %vm1171, %v1570, %v1577
    %v1579 = vrot.slane %v1574, 4
    %v1581 = vshrl.u32 %v1153, 16
    %v1583 = vrot.slane %v1581, 7
    %v1584 = vshll.u32 %v1153, 16
    %v1586 = vor.u32 %v1583, %v1584
    %v1587 = vrot.slane %v1583, 4
    %v1589 = vshrl.u32 %v1154, 16
    %v1591 = vrot.slane %v1589, 7
    %v1592 = vshll.u32 %v1154, 16
    %v1594 = vor.u32 %v1591, %v1592
    %v1595 = vsel %vm1171, %v1587, %v1594
    %v1596 = vrot.slane %v1591, 4
    %v1598 = vshrl.u32 %v1155, 16
    %v1600 = vrot.slane %v1598, 7
    %v1601 = vshll.u32 %v1155, 16
    %v1603 = vor.u32 %v1600, %v1601
    %v1604 = vrot.slane %v1600, 4
    %v1606 = vshrl.u32 %v1156, 16
    %v1608 = vrot.slane %v1606, 7
    %v1609 = vshll.u32 %v1156, 16
    %v1611 = vor.u32 %v1608, %v1609
    %v1612 = vsel %vm1171, %v1604, %v1611
    %v1613 = vrot.slane %v1608, 4
    %v1615 = vshrl.u32 %v1157, 16
    %v1617 = vrot.slane %v1615, 7
    %v1618 = vshll.u32 %v1157, 16
    %v1620 = vor.u32 %v1617, %v1618
    %v1621 = vrot.slane %v1617, 4
    %v1623 = vshrl.u32 %v1158, 16
    %v1625 = vrot.slane %v1623, 7
    %v1626 = vshll.u32 %v1158, 16
    %v1628 = vor.u32 %v1625, %v1626
    %v1629 = vsel %vm1171, %v1621, %v1628
    %v1630 = vrot.slane %v1625, 4
    %v1632 = vshrl.u32 %v1159, 16
    %v1634 = vrot.slane %v1632, 7
    %v1635 = vshll.u32 %v1159, 16
    %v1637 = vor.u32 %v1634, %v1635
    %v1638 = vrot.slane %v1634, 4
    %v1640 = vshrl.u32 %v1160, 16
    %v1642 = vrot.slane %v1640, 7
    %v1643 = vshll.u32 %v1160, 16
    %v1645 = vor.u32 %v1642, %v1643
    %v1646 = vsel %vm1171, %v1638, %v1645
    %v1647 = vrot.slane %v1642, 4
    %v1649 = vshrl.u32 %v1161, 16
    %v1651 = vrot.slane %v1649, 7
    %v1652 = vshll.u32 %v1161, 16
    %v1654 = vor.u32 %v1651, %v1652
    %v1655 = vrot.slane %v1651, 4
    %v1657 = vshrl.u32 %v1162, 16
    %v1659 = vrot.slane %v1657, 7
    %v1660 = vshll.u32 %v1162, 16
    %v1662 = vor.u32 %v1659, %v1660
    %v1663 = vsel %vm1171, %v1655, %v1662
    %v1664 = vrot.slane %v1659, 4
    %v1666 = vshrl.u32 %v1163, 16
    %v1668 = vrot.slane %v1666, 7
    %v1669 = vshll.u32 %v1163, 16
    %v1671 = vor.u32 %v1668, %v1669
    %v1672 = vrot.slane %v1668, 4
    %v1674 = vshrl.u32 %v1164, 16
    %v1676 = vrot.slane %v1674, 7
    %v1677 = vshll.u32 %v1164, 16
    %v1679 = vor.u32 %v1676, %v1677
    %v1680 = vsel %vm1171, %v1672, %v1679
    %v1681 = vrot.slane %v1676, 4
    %v1683 = vshrl.u32 %v1165, 16
    %v1685 = vrot.slane %v1683, 7
    %v1686 = vshll.u32 %v1165, 16
    %v1688 = vor.u32 %v1685, %v1686
    %v1689 = vrot.slane %v1685, 4
    %v1691 = vshrl.u32 %v1166, 16
    %v1693 = vrot.slane %v1691, 7
    %v1694 = vshll.u32 %v1166, 16
    %v1696 = vor.u32 %v1693, %v1694
    %v1697 = vsel %vm1171, %v1689, %v1696
    %v1698 = vrot.slane %v1693, 4
    %v1700 = vshrl.u32 %v1167, 16
    %v1702 = vrot.slane %v1700, 7
    %v1703 = vshll.u32 %v1167, 16
    %v1705 = vor.u32 %v1702, %v1703
    %v1706 = vrot.slane %v1702, 4
    %v1708 = vshrl.u32 %v1168, 16
    %v1710 = vrot.slane %v1708, 7
    %v1711 = vshll.u32 %v1168, 16
    %v1713 = vor.u32 %v1710, %v1711
    %v1714 = vsel %vm1171, %v1706, %v1713
    %v1715 = vrot.slane %v1710, 4
    %s1812 = scalar_lea.vmem [#allocation2], 12
    %vm1813 = vcmask 1043456
    %vm1814 = vsmask.f32 7938
    %vm1815 = vmand %vm1813, %vm1814
    %v1816 = vld [vmem:[%s1812] sm:$0xf]
    %v1817 = vsel %vm1815, %v1178, %v1816
    %1818 = vst [vmem:[%s1812] sm:$0xf] %v1817
    %1819 = vst [vmem:[%s1812 + $0x4] sm:$0xf] %v1187
    %vm1820 = vcmask 1040384
    %vm1821 = vmand %vm1820, %vm1169
    %v1822 = vld [vmem:[%s1812 + $0x8] sm:$0x1]
    %v1823 = vsel %vm1821, %v1188, %v1822
    %1824 = vst [vmem:[%s1812 + $0x8] sm:$0x1] %v1823
    %v1825 = vld [vmem:[%s1812 + $0xc] sm:$0xf]
    %v1826 = vsel %vm1815, %v1195, %v1825
    %1827 = vst [vmem:[%s1812 + $0xc] sm:$0xf] %v1826
    %1828 = vst [vmem:[%s1812 + $0x10] sm:$0xf] %v1204
    %v1829 = vld [vmem:[%s1812 + $0x14] sm:$0x1]
    %v1830 = vsel %vm1821, %v1205, %v1829
    %1831 = vst [vmem:[%s1812 + $0x14] sm:$0x1] %v1830
    %v1832 = vld [vmem:[%s1812 + $0x18] sm:$0xf]
    %v1833 = vsel %vm1815, %v1212, %v1832
    %1834 = vst [vmem:[%s1812 + $0x18] sm:$0xf] %v1833
    %1835 = vst [vmem:[%s1812 + $0x1c] sm:$0xf] %v1221
    %v1836 = vld [vmem:[%s1812 + $0x20] sm:$0x1]
    %v1837 = vsel %vm1821, %v1222, %v1836
    %1838 = vst [vmem:[%s1812 + $0x20] sm:$0x1] %v1837
    %v1839 = vld [vmem:[%s1812 + $0x24] sm:$0xf]
    %v1840 = vsel %vm1815, %v1229, %v1839
    %1841 = vst [vmem:[%s1812 + $0x24] sm:$0xf] %v1840
    %1842 = vst [vmem:[%s1812 + $0x28] sm:$0xf] %v1238
    %v1843 = vld [vmem:[%s1812 + $0x2c] sm:$0x1]
    %v1844 = vsel %vm1821, %v1239, %v1843
    %1845 = vst [vmem:[%s1812 + $0x2c] sm:$0x1] %v1844
    %v1846 = vld [vmem:[%s1812 + $0x30] sm:$0xf]
    %v1847 = vsel %vm1815, %v1246, %v1846
    %1848 = vst [vmem:[%s1812 + $0x30] sm:$0xf] %v1847
    %1849 = vst [vmem:[%s1812 + $0x34] sm:$0xf] %v1255
    %v1850 = vld [vmem:[%s1812 + $0x38] sm:$0x1]
    %v1851 = vsel %vm1821, %v1256, %v1850
    %1852 = vst [vmem:[%s1812 + $0x38] sm:$0x1] %v1851
    %v1853 = vld [vmem:[%s1812 + $0x3c] sm:$0xf]
    %v1854 = vsel %vm1815, %v1263, %v1853
    %1855 = vst [vmem:[%s1812 + $0x3c] sm:$0xf] %v1854
    %1856 = vst [vmem:[%s1812 + $0x40] sm:$0xf] %v1272
    %v1857 = vld [vmem:[%s1812 + $0x44] sm:$0x1]
    %v1858 = vsel %vm1821, %v1273, %v1857
    %1859 = vst [vmem:[%s1812 + $0x44] sm:$0x1] %v1858
    %v1860 = vld [vmem:[%s1812 + $0x48] sm:$0xf]
    %v1861 = vsel %vm1815, %v1280, %v1860
    %1862 = vst [vmem:[%s1812 + $0x48] sm:$0xf] %v1861
    %1863 = vst [vmem:[%s1812 + $0x4c] sm:$0xf] %v1289
    %v1864 = vld [vmem:[%s1812 + $0x50] sm:$0x1]
    %v1865 = vsel %vm1821, %v1290, %v1864
    %1866 = vst [vmem:[%s1812 + $0x50] sm:$0x1] %v1865
    %v1867 = vld [vmem:[%s1812 + $0x54] sm:$0xf]
    %v1868 = vsel %vm1815, %v1297, %v1867
    %1869 = vst [vmem:[%s1812 + $0x54] sm:$0xf] %v1868
    %1870 = vst [vmem:[%s1812 + $0x58] sm:$0xf] %v1306
    %v1871 = vld [vmem:[%s1812 + $0x5c] sm:$0x1]
    %v1872 = vsel %vm1821, %v1307, %v1871
    %1873 = vst [vmem:[%s1812 + $0x5c] sm:$0x1] %v1872
    %v1874 = vld [vmem:[%s1812 + $0x60] sm:$0xf]
    %v1875 = vsel %vm1815, %v1314, %v1874
    %1876 = vst [vmem:[%s1812 + $0x60] sm:$0xf] %v1875
    %1877 = vst [vmem:[%s1812 + $0x64] sm:$0xf] %v1323
    %v1878 = vld [vmem:[%s1812 + $0x68] sm:$0x1]
    %v1879 = vsel %vm1821, %v1324, %v1878
    %1880 = vst [vmem:[%s1812 + $0x68] sm:$0x1] %v1879
    %v1881 = vld [vmem:[%s1812 + $0x6c] sm:$0xf]
    %v1882 = vsel %vm1815, %v1331, %v1881
    %1883 = vst [vmem:[%s1812 + $0x6c] sm:$0xf] %v1882
    %1884 = vst [vmem:[%s1812 + $0x70] sm:$0xf] %v1340
    %v1885 = vld [vmem:[%s1812 + $0x74] sm:$0x1]
    %v1886 = vsel %vm1821, %v1341, %v1885
    %1887 = vst [vmem:[%s1812 + $0x74] sm:$0x1] %v1886
    %v1888 = vld [vmem:[%s1812 + $0x78] sm:$0xf]
    %v1889 = vsel %vm1815, %v1348, %v1888
    %1890 = vst [vmem:[%s1812 + $0x78] sm:$0xf] %v1889
    %1891 = vst [vmem:[%s1812 + $0x7c] sm:$0xf] %v1357
    %v1892 = vld [vmem:[%s1812 + $0x80] sm:$0x1]
    %v1893 = vsel %vm1821, %v1358, %v1892
    %1894 = vst [vmem:[%s1812 + $0x80] sm:$0x1] %v1893
    %v1895 = vld [vmem:[%s1812 + $0x84] sm:$0xf]
    %v1896 = vsel %vm1815, %v1365, %v1895
    %1897 = vst [vmem:[%s1812 + $0x84] sm:$0xf] %v1896
    %1898 = vst [vmem:[%s1812 + $0x88] sm:$0xf] %v1374
    %v1899 = vld [vmem:[%s1812 + $0x8c] sm:$0x1]
    %v1900 = vsel %vm1821, %v1375, %v1899
    %1901 = vst [vmem:[%s1812 + $0x8c] sm:$0x1] %v1900
    %v1902 = vld [vmem:[%s1812 + $0x90] sm:$0xf]
    %v1903 = vsel %vm1815, %v1382, %v1902
    %1904 = vst [vmem:[%s1812 + $0x90] sm:$0xf] %v1903
    %1905 = vst [vmem:[%s1812 + $0x94] sm:$0xf] %v1391
    %v1906 = vld [vmem:[%s1812 + $0x98] sm:$0x1]
    %v1907 = vsel %vm1821, %v1392, %v1906
    %1908 = vst [vmem:[%s1812 + $0x98] sm:$0x1] %v1907
    %v1909 = vld [vmem:[%s1812 + $0x9c] sm:$0xf]
    %v1910 = vsel %vm1815, %v1399, %v1909
    %1911 = vst [vmem:[%s1812 + $0x9c] sm:$0xf] %v1910
    %1912 = vst [vmem:[%s1812 + $0xa0] sm:$0xf] %v1408
    %v1913 = vld [vmem:[%s1812 + $0xa4] sm:$0x1]
    %v1914 = vsel %vm1821, %v1409, %v1913
    %1915 = vst [vmem:[%s1812 + $0xa4] sm:$0x1] %v1914
    %v1916 = vld [vmem:[%s1812 + $0xa8] sm:$0xf]
    %v1917 = vsel %vm1815, %v1416, %v1916
    %1918 = vst [vmem:[%s1812 + $0xa8] sm:$0xf] %v1917
    %1919 = vst [vmem:[%s1812 + $0xac] sm:$0xf] %v1425
    %v1920 = vld [vmem:[%s1812 + $0xb0] sm:$0x1]
    %v1921 = vsel %vm1821, %v1426, %v1920
    %1922 = vst [vmem:[%s1812 + $0xb0] sm:$0x1] %v1921
    %v1923 = vld [vmem:[%s1812 + $0xb4] sm:$0xf]
    %v1924 = vsel %vm1815, %v1433, %v1923
    %1925 = vst [vmem:[%s1812 + $0xb4] sm:$0xf] %v1924
    %1926 = vst [vmem:[%s1812 + $0xb8] sm:$0xf] %v1442
    %v1927 = vld [vmem:[%s1812 + $0xbc] sm:$0x1]
    %v1928 = vsel %vm1821, %v1443, %v1927
    %1929 = vst [vmem:[%s1812 + $0xbc] sm:$0x1] %v1928
    %v1930 = vld [vmem:[%s1812 + $0xd8] sm:$0xf]
    %v1931 = vsel %vm1815, %v1450, %v1930
    %1932 = vst [vmem:[%s1812 + $0xd8] sm:$0xf] %v1931
    %1933 = vst [vmem:[%s1812 + $0xdc] sm:$0xf] %v1459
    %v1934 = vld [vmem:[%s1812 + $0xe0] sm:$0x1]
    %v1935 = vsel %vm1821, %v1460, %v1934
    %1936 = vst [vmem:[%s1812 + $0xe0] sm:$0x1] %v1935
    %v1937 = vld [vmem:[%s1812 + $0xe4] sm:$0xf]
    %v1938 = vsel %vm1815, %v1467, %v1937
    %1939 = vst [vmem:[%s1812 + $0xe4] sm:$0xf] %v1938
    %1940 = vst [vmem:[%s1812 + $0xe8] sm:$0xf] %v1476
    %v1941 = vld [vmem:[%s1812 + $0xec] sm:$0x1]
    %v1942 = vsel %vm1821, %v1477, %v1941
    %1943 = vst [vmem:[%s1812 + $0xec] sm:$0x1] %v1942
    %v1944 = vld [vmem:[%s1812 + $0xf0] sm:$0xf]
    %v1945 = vsel %vm1815, %v1484, %v1944
    %1946 = vst [vmem:[%s1812 + $0xf0] sm:$0xf] %v1945
    %1947 = vst [vmem:[%s1812 + $0xf4] sm:$0xf] %v1493
    %v1948 = vld [vmem:[%s1812 + $0xf8] sm:$0x1]
    %v1949 = vsel %vm1821, %v1494, %v1948
    %1950 = vst [vmem:[%s1812 + $0xf8] sm:$0x1] %v1949
    %v1951 = vld [vmem:[%s1812 + $0xfc] sm:$0xf]
    %v1952 = vsel %vm1815, %v1501, %v1951
    %1953 = vst [vmem:[%s1812 + $0xfc] sm:$0xf] %v1952
    %1954 = vst [vmem:[%s1812 + $0x100] sm:$0xf] %v1510
    %v1955 = vld [vmem:[%s1812 + $0x104] sm:$0x1]
    %v1956 = vsel %vm1821, %v1511, %v1955
    %1957 = vst [vmem:[%s1812 + $0x104] sm:$0x1] %v1956
    %v1958 = vld [vmem:[%s1812 + $0x108] sm:$0xf]
    %v1959 = vsel %vm1815, %v1518, %v1958
    %1960 = vst [vmem:[%s1812 + $0x108] sm:$0xf] %v1959
    %1961 = vst [vmem:[%s1812 + $0x10c] sm:$0xf] %v1527
    %v1962 = vld [vmem:[%s1812 + $0x110] sm:$0x1]
    %v1963 = vsel %vm1821, %v1528, %v1962
    %1964 = vst [vmem:[%s1812 + $0x110] sm:$0x1] %v1963
    %v1965 = vld [vmem:[%s1812 + $0x114] sm:$0xf]
    %v1966 = vsel %vm1815, %v1535, %v1965
    %1967 = vst [vmem:[%s1812 + $0x114] sm:$0xf] %v1966
    %1968 = vst [vmem:[%s1812 + $0x118] sm:$0xf] %v1544
    %v1969 = vld [vmem:[%s1812 + $0x11c] sm:$0x1]
    %v1970 = vsel %vm1821, %v1545, %v1969
    %1971 = vst [vmem:[%s1812 + $0x11c] sm:$0x1] %v1970
    %v1972 = vld [vmem:[%s1812 + $0x120] sm:$0xf]
    %v1973 = vsel %vm1815, %v1552, %v1972
    %1974 = vst [vmem:[%s1812 + $0x120] sm:$0xf] %v1973
    %1975 = vst [vmem:[%s1812 + $0x124] sm:$0xf] %v1561
    %v1976 = vld [vmem:[%s1812 + $0x128] sm:$0x1]
    %v1977 = vsel %vm1821, %v1562, %v1976
    %1978 = vst [vmem:[%s1812 + $0x128] sm:$0x1] %v1977
    %v1979 = vld [vmem:[%s1812 + $0x12c] sm:$0xf]
    %v1980 = vsel %vm1815, %v1569, %v1979
    %1981 = vst [vmem:[%s1812 + $0x12c] sm:$0xf] %v1980
    %1982 = vst [vmem:[%s1812 + $0x130] sm:$0xf] %v1578
    %v1983 = vld [vmem:[%s1812 + $0x134] sm:$0x1]
    %v1984 = vsel %vm1821, %v1579, %v1983
    %1985 = vst [vmem:[%s1812 + $0x134] sm:$0x1] %v1984
    %v1986 = vld [vmem:[%s1812 + $0x138] sm:$0xf]
    %v1987 = vsel %vm1815, %v1586, %v1986
    %1988 = vst [vmem:[%s1812 + $0x138] sm:$0xf] %v1987
    %1989 = vst [vmem:[%s1812 + $0x13c] sm:$0xf] %v1595
    %v1990 = vld [vmem:[%s1812 + $0x140] sm:$0x1]
    %v1991 = vsel %vm1821, %v1596, %v1990
    %1992 = vst [vmem:[%s1812 + $0x140] sm:$0x1] %v1991
    %v1993 = vld [vmem:[%s1812 + $0x144] sm:$0xf]
    %v1994 = vsel %vm1815, %v1603, %v1993
    %1995 = vst [vmem:[%s1812 + $0x144] sm:$0xf] %v1994
    %1996 = vst [vmem:[%s1812 + $0x148] sm:$0xf] %v1612
    %v1997 = vld [vmem:[%s1812 + $0x14c] sm:$0x1]
    %v1998 = vsel %vm1821, %v1613, %v1997
    %1999 = vst [vmem:[%s1812 + $0x14c] sm:$0x1] %v1998
    %v2000 = vld [vmem:[%s1812 + $0x150] sm:$0xf]
    %v2001 = vsel %vm1815, %v1620, %v2000
    %2002 = vst [vmem:[%s1812 + $0x150] sm:$0xf] %v2001
    %2003 = vst [vmem:[%s1812 + $0x154] sm:$0xf] %v1629
    %v2004 = vld [vmem:[%s1812 + $0x158] sm:$0x1]
    %v2005 = vsel %vm1821, %v1630, %v2004
    %2006 = vst [vmem:[%s1812 + $0x158] sm:$0x1] %v2005
    %v2007 = vld [vmem:[%s1812 + $0x15c] sm:$0xf]
    %v2008 = vsel %vm1815, %v1637, %v2007
    %2009 = vst [vmem:[%s1812 + $0x15c] sm:$0xf] %v2008
    %2010 = vst [vmem:[%s1812 + $0x160] sm:$0xf] %v1646
    %v2011 = vld [vmem:[%s1812 + $0x164] sm:$0x1]
    %v2012 = vsel %vm1821, %v1647, %v2011
    %2013 = vst [vmem:[%s1812 + $0x164] sm:$0x1] %v2012
    %v2014 = vld [vmem:[%s1812 + $0x168] sm:$0xf]
    %v2015 = vsel %vm1815, %v1654, %v2014
    %2016 = vst [vmem:[%s1812 + $0x168] sm:$0xf] %v2015
    %2017 = vst [vmem:[%s1812 + $0x16c] sm:$0xf] %v1663
    %v2018 = vld [vmem:[%s1812 + $0x170] sm:$0x1]
    %v2019 = vsel %vm1821, %v1664, %v2018
    %2020 = vst [vmem:[%s1812 + $0x170] sm:$0x1] %v2019
    %v2021 = vld [vmem:[%s1812 + $0x174] sm:$0xf]
    %v2022 = vsel %vm1815, %v1671, %v2021
    %2023 = vst [vmem:[%s1812 + $0x174] sm:$0xf] %v2022
    %2024 = vst [vmem:[%s1812 + $0x178] sm:$0xf] %v1680
    %v2025 = vld [vmem:[%s1812 + $0x17c] sm:$0x1]
    %v2026 = vsel %vm1821, %v1681, %v2025
    %2027 = vst [vmem:[%s1812 + $0x17c] sm:$0x1] %v2026
    %v2028 = vld [vmem:[%s1812 + $0x180] sm:$0xf]
    %v2029 = vsel %vm1815, %v1688, %v2028
    %2030 = vst [vmem:[%s1812 + $0x180] sm:$0xf] %v2029
    %2031 = vst [vmem:[%s1812 + $0x184] sm:$0xf] %v1697
    %v2032 = vld [vmem:[%s1812 + $0x188] sm:$0x1]
    %v2033 = vsel %vm1821, %v1698, %v2032
    %2034 = vst [vmem:[%s1812 + $0x188] sm:$0x1] %v2033
    %v2035 = vld [vmem:[%s1812 + $0x18c] sm:$0xf]
    %v2036 = vsel %vm1815, %v1705, %v2035
    %2037 = vst [vmem:[%s1812 + $0x18c] sm:$0xf] %v2036
    %2038 = vst [vmem:[%s1812 + $0x190] sm:$0xf] %v1714
    %v2039 = vld [vmem:[%s1812 + $0x194] sm:$0x1]
    %v2040 = vsel %vm1821, %v1715, %v2039
    %2041 = vst [vmem:[%s1812 + $0x194] sm:$0x1] %v2040
    %v2042 = vld [vmem:[#allocation2] sm:$0xf]
    %v2043 = vld [vmem:[#allocation2 + $0x4] sm:$0xf]
    %v2044 = vld [vmem:[#allocation2 + $0xc] sm:$0xf]
    %v2045 = vld [vmem:[#allocation2 + $0x10] sm:$0xf]
    %v2046 = vld [vmem:[#allocation2 + $0x18] sm:$0xf]
    %v2047 = vld [vmem:[#allocation2 + $0x1c] sm:$0xf]
    %v2048 = vld [vmem:[#allocation2 + $0x24] sm:$0xf]
    %v2049 = vld [vmem:[#allocation2 + $0x28] sm:$0xf]
    %v2050 = vld [vmem:[#allocation2 + $0x30] sm:$0xf]
    %v2051 = vld [vmem:[#allocation2 + $0x34] sm:$0xf]
    %v2052 = vld [vmem:[#allocation2 + $0x3c] sm:$0xf]
    %v2053 = vld [vmem:[#allocation2 + $0x40] sm:$0xf]
    %v2054 = vld [vmem:[#allocation2 + $0x48] sm:$0xf]
    %v2055 = vld [vmem:[#allocation2 + $0x4c] sm:$0xf]
    %v2056 = vld [vmem:[#allocation2 + $0x54] sm:$0xf]
    %v2057 = vld [vmem:[#allocation2 + $0x58] sm:$0xf]
    %v2058 = vld [vmem:[#allocation2 + $0x60] sm:$0xf]
    %v2059 = vld [vmem:[#allocation2 + $0x64] sm:$0xf]
    %v2060 = vld [vmem:[#allocation2 + $0x6c] sm:$0xf]
    %v2061 = vld [vmem:[#allocation2 + $0x70] sm:$0xf]
    %v2062 = vld [vmem:[#allocation2 + $0x78] sm:$0xf]
    %v2063 = vld [vmem:[#allocation2 + $0x7c] sm:$0xf]
    %v2064 = vld [vmem:[#allocation2 + $0x84] sm:$0xf]
    %v2065 = vld [vmem:[#allocation2 + $0x88] sm:$0xf]
    %v2066 = vld [vmem:[#allocation2 + $0x90] sm:$0xf]
    %v2067 = vld [vmem:[#allocation2 + $0x94] sm:$0xf]
    %v2068 = vld [vmem:[#allocation2 + $0x9c] sm:$0xf]
    %v2069 = vld [vmem:[#allocation2 + $0xa0] sm:$0xf]
    %v2070 = vld [vmem:[#allocation2 + $0xa8] sm:$0xf]
    %v2071 = vld [vmem:[#allocation2 + $0xac] sm:$0xf]
    %v2072 = vld [vmem:[#allocation2 + $0xb4] sm:$0xf]
    %v2073 = vld [vmem:[#allocation2 + $0xb8] sm:$0xf]
    %v2074 = vld [vmem:[#allocation2 + $0xd8] sm:$0xf]
    %v2075 = vld [vmem:[#allocation2 + $0xdc] sm:$0xf]
    %v2076 = vld [vmem:[#allocation2 + $0xe4] sm:$0xf]
    %v2077 = vld [vmem:[#allocation2 + $0xe8] sm:$0xf]
    %v2078 = vld [vmem:[#allocation2 + $0xf0] sm:$0xf]
    %v2079 = vld [vmem:[#allocation2 + $0xf4] sm:$0xf]
    %v2080 = vld [vmem:[#allocation2 + $0xfc] sm:$0xf]
    %v2081 = vld [vmem:[#allocation2 + $0x100] sm:$0xf]
    %v2082 = vld [vmem:[#allocation2 + $0x108] sm:$0xf]
    %v2083 = vld [vmem:[#allocation2 + $0x10c] sm:$0xf]
    %v2084 = vld [vmem:[#allocation2 + $0x114] sm:$0xf]
    %v2085 = vld [vmem:[#allocation2 + $0x118] sm:$0xf]
    %v2086 = vld [vmem:[#allocation2 + $0x120] sm:$0xf]
    %v2087 = vld [vmem:[#allocation2 + $0x124] sm:$0xf]
    %v2088 = vld [vmem:[#allocation2 + $0x12c] sm:$0xf]
    %v2089 = vld [vmem:[#allocation2 + $0x130] sm:$0xf]
    %v2090 = vld [vmem:[#allocation2 + $0x138] sm:$0xf]
    %v2091 = vld [vmem:[#allocation2 + $0x13c] sm:$0xf]
    %v2092 = vld [vmem:[#allocation2 + $0x144] sm:$0xf]
    %v2093 = vld [vmem:[#allocation2 + $0x148] sm:$0xf]
    %v2094 = vld [vmem:[#allocation2 + $0x150] sm:$0xf]
    %v2095 = vld [vmem:[#allocation2 + $0x154] sm:$0xf]
    %v2096 = vld [vmem:[#allocation2 + $0x15c] sm:$0xf]
    %v2097 = vld [vmem:[#allocation2 + $0x160] sm:$0xf]
    %v2098 = vld [vmem:[#allocation2 + $0x168] sm:$0xf]
    %v2099 = vld [vmem:[#allocation2 + $0x16c] sm:$0xf]
    %v2100 = vld [vmem:[#allocation2 + $0x174] sm:$0xf]
    %v2101 = vld [vmem:[#allocation2 + $0x178] sm:$0xf]
    %v2102 = vld [vmem:[#allocation2 + $0x180] sm:$0xf]
    %v2103 = vld [vmem:[#allocation2 + $0x184] sm:$0xf]
    %v2104 = vld [vmem:[#allocation2 + $0x18c] sm:$0xf]
    %v2105 = vld [vmem:[#allocation2 + $0x190] sm:$0xf]
    %v2106 = vld [vmem:[%s4] sm:$0xf]
    %v2107 = vld [vmem:[%s4 + $0x4] sm:$0xf]
    %v2108 = vld [vmem:[%s4 + $0x8] sm:$0xf]
    %v2109 = vld [vmem:[%s4 + $0xc] sm:$0xf]
    %v2110 = vld [vmem:[%s4 + $0x10] sm:$0xf]
    %v2111 = vld [vmem:[%s4 + $0x14] sm:$0xf]
    %v2112 = vld [vmem:[%s4 + $0x18] sm:$0xf]
    %v2113 = vld [vmem:[%s4 + $0x1c] sm:$0xf]
    %v2114 = vld [vmem:[%s4 + $0x20] sm:$0xf]
    %v2115 = vld [vmem:[%s4 + $0x24] sm:$0xf]
    %v2116 = vld [vmem:[%s4 + $0x28] sm:$0xf]
    %v2117 = vld [vmem:[%s4 + $0x2c] sm:$0xf]
    %v2118 = vld [vmem:[%s4 + $0x30] sm:$0xf]
    %v2119 = vld [vmem:[%s4 + $0x34] sm:$0xf]
    %v2120 = vld [vmem:[%s4 + $0x38] sm:$0xf]
    %v2121 = vld [vmem:[%s4 + $0x3c] sm:$0xf]
    %v2122 = vld [vmem:[#allocation2 + $0x8] sm:$0x1]
    %v2123 = vld [vmem:[#allocation2 + $0x14] sm:$0x1]
    %v2124 = vld [vmem:[#allocation2 + $0x20] sm:$0x1]
    %v2125 = vld [vmem:[#allocation2 + $0x2c] sm:$0x1]
    %v2126 = vld [vmem:[#allocation2 + $0x38] sm:$0x1]
    %v2127 = vld [vmem:[#allocation2 + $0x44] sm:$0x1]
    %v2128 = vld [vmem:[#allocation2 + $0x50] sm:$0x1]
    %v2129 = vld [vmem:[#allocation2 + $0x5c] sm:$0x1]
    %v2130 = vld [vmem:[#allocation2 + $0x68] sm:$0x1]
    %v2131 = vld [vmem:[#allocation2 + $0x74] sm:$0x1]
    %v2132 = vld [vmem:[#allocation2 + $0x80] sm:$0x1]
    %v2133 = vld [vmem:[#allocation2 + $0x8c] sm:$0x1]
    %v2134 = vld [vmem:[#allocation2 + $0x98] sm:$0x1]
    %v2135 = vld [vmem:[#allocation2 + $0xa4] sm:$0x1]
    %v2136 = vld [vmem:[#allocation2 + $0xb0] sm:$0x1]
    %v2137 = vld [vmem:[#allocation2 + $0xbc] sm:$0x1]
    %v2138 = vld [vmem:[#allocation2 + $0xe0] sm:$0x1]
    %v2139 = vld [vmem:[#allocation2 + $0xec] sm:$0x1]
    %v2140 = vld [vmem:[#allocation2 + $0xf8] sm:$0x1]
    %v2141 = vld [vmem:[#allocation2 + $0x104] sm:$0x1]
    %v2142 = vld [vmem:[#allocation2 + $0x110] sm:$0x1]
    %v2143 = vld [vmem:[#allocation2 + $0x11c] sm:$0x1]
    %v2144 = vld [vmem:[#allocation2 + $0x128] sm:$0x1]
    %v2145 = vld [vmem:[#allocation2 + $0x134] sm:$0x1]
    %v2146 = vld [vmem:[#allocation2 + $0x140] sm:$0x1]
    %v2147 = vld [vmem:[#allocation2 + $0x14c] sm:$0x1]
    %v2148 = vld [vmem:[#allocation2 + $0x158] sm:$0x1]
    %v2149 = vld [vmem:[#allocation2 + $0x164] sm:$0x1]
    %v2150 = vld [vmem:[#allocation2 + $0x170] sm:$0x1]
    %v2151 = vld [vmem:[#allocation2 + $0x17c] sm:$0x1]
    %v2152 = vld [vmem:[#allocation2 + $0x188] sm:$0x1]
    %v2153 = vld [vmem:[#allocation2 + $0x194] sm:$0x1]
    %vm2154 = vsmask.f32 3328
    %vm2155 = vsmask.f32 7440
    %vm2156 = vmor %vm2154, %vm2155
    %v2158 = vshrl.u32 %v2042, 16
    %v2160 = vrot.slane %v2158, 4
    %v2161 = vshll.u32 %v2042, 16
    %v2163 = vrot.slane %v2161, 5
    %v2164 = vor.u32 %v2160, %v2163
    %v2165 = vrot.slane %v2164, 4
    %v2167 = vshll.u32 %v2043, 16
    %v2169 = vrot.slane %v2167, 5
    %v2170 = vsel %vm2156, %v2165, %v2169
    %v2171 = vshrl.u32 %v2043, 16
    %v2173 = vrot.slane %v2171, 4
    %v2174 = vor.u32 %v2173, %v2169
    %v2175 = vrot.slane %v2174, 4
    %v2177 = vshll.u32 %v2122, 16
    %v2179 = vrot.slane %v2177, 5
    %v2180 = vsel %vm2156, %v2175, %v2179
    %v2182 = vshrl.u32 %v2044, 16
    %v2184 = vrot.slane %v2182, 4
    %v2185 = vshll.u32 %v2044, 16
    %v2187 = vrot.slane %v2185, 5
    %v2188 = vor.u32 %v2184, %v2187
    %v2189 = vrot.slane %v2188, 4
    %v2191 = vshll.u32 %v2045, 16
    %v2193 = vrot.slane %v2191, 5
    %v2194 = vsel %vm2156, %v2189, %v2193
    %v2195 = vshrl.u32 %v2045, 16
    %v2197 = vrot.slane %v2195, 4
    %v2198 = vor.u32 %v2197, %v2193
    %v2199 = vrot.slane %v2198, 4
    %v2201 = vshll.u32 %v2123, 16
    %v2203 = vrot.slane %v2201, 5
    %v2204 = vsel %vm2156, %v2199, %v2203
    %v2206 = vshrl.u32 %v2046, 16
    %v2208 = vrot.slane %v2206, 4
    %v2209 = vshll.u32 %v2046, 16
    %v2211 = vrot.slane %v2209, 5
    %v2212 = vor.u32 %v2208, %v2211
    %v2213 = vrot.slane %v2212, 4
    %v2215 = vshll.u32 %v2047, 16
    %v2217 = vrot.slane %v2215, 5
    %v2218 = vsel %vm2156, %v2213, %v2217
    %v2219 = vshrl.u32 %v2047, 16
    %v2221 = vrot.slane %v2219, 4
    %v2222 = vor.u32 %v2221, %v2217
    %v2223 = vrot.slane %v2222, 4
    %v2225 = vshll.u32 %v2124, 16
    %v2227 = vrot.slane %v2225, 5
    %v2228 = vsel %vm2156, %v2223, %v2227
    %v2230 = vshrl.u32 %v2048, 16
    %v2232 = vrot.slane %v2230, 4
    %v2233 = vshll.u32 %v2048, 16
    %v2235 = vrot.slane %v2233, 5
    %v2236 = vor.u32 %v2232, %v2235
    %v2237 = vrot.slane %v2236, 4
    %v2239 = vshll.u32 %v2049, 16
    %v2241 = vrot.slane %v2239, 5
    %v2242 = vsel %vm2156, %v2237, %v2241
    %v2243 = vshrl.u32 %v2049, 16
    %v2245 = vrot.slane %v2243, 4
    %v2246 = vor.u32 %v2245, %v2241
    %v2247 = vrot.slane %v2246, 4
    %v2249 = vshll.u32 %v2125, 16
    %v2251 = vrot.slane %v2249, 5
    %v2252 = vsel %vm2156, %v2247, %v2251
    %v2254 = vshrl.u32 %v2050, 16
    %v2256 = vrot.slane %v2254, 4
    %v2257 = vshll.u32 %v2050, 16
    %v2259 = vrot.slane %v2257, 5
    %v2260 = vor.u32 %v2256, %v2259
    %v2261 = vrot.slane %v2260, 4
    %v2263 = vshll.u32 %v2051, 16
    %v2265 = vrot.slane %v2263, 5
    %v2266 = vsel %vm2156, %v2261, %v2265
    %v2267 = vshrl.u32 %v2051, 16
    %v2269 = vrot.slane %v2267, 4
    %v2270 = vor.u32 %v2269, %v2265
    %v2271 = vrot.slane %v2270, 4
    %v2273 = vshll.u32 %v2126, 16
    %v2275 = vrot.slane %v2273, 5
    %v2276 = vsel %vm2156, %v2271, %v2275
    %v2278 = vshrl.u32 %v2052, 16
    %v2280 = vrot.slane %v2278, 4
    %v2281 = vshll.u32 %v2052, 16
    %v2283 = vrot.slane %v2281, 5
    %v2284 = vor.u32 %v2280, %v2283
    %v2285 = vrot.slane %v2284, 4
    %v2287 = vshll.u32 %v2053, 16
    %v2289 = vrot.slane %v2287, 5
    %v2290 = vsel %vm2156, %v2285, %v2289
    %v2291 = vshrl.u32 %v2053, 16
    %v2293 = vrot.slane %v2291, 4
    %v2294 = vor.u32 %v2293, %v2289
    %v2295 = vrot.slane %v2294, 4
    %v2297 = vshll.u32 %v2127, 16
    %v2299 = vrot.slane %v2297, 5
    %v2300 = vsel %vm2156, %v2295, %v2299
    %v2302 = vshrl.u32 %v2054, 16
    %v2304 = vrot.slane %v2302, 4
    %v2305 = vshll.u32 %v2054, 16
    %v2307 = vrot.slane %v2305, 5
    %v2308 = vor.u32 %v2304, %v2307
    %v2309 = vrot.slane %v2308, 4
    %v2311 = vshll.u32 %v2055, 16
    %v2313 = vrot.slane %v2311, 5
    %v2314 = vsel %vm2156, %v2309, %v2313
    %v2315 = vshrl.u32 %v2055, 16
    %v2317 = vrot.slane %v2315, 4
    %v2318 = vor.u32 %v2317, %v2313
    %v2319 = vrot.slane %v2318, 4
    %v2321 = vshll.u32 %v2128, 16
    %v2323 = vrot.slane %v2321, 5
    %v2324 = vsel %vm2156, %v2319, %v2323
    %v2326 = vshrl.u32 %v2056, 16
    %v2328 = vrot.slane %v2326, 4
    %v2329 = vshll.u32 %v2056, 16
    %v2331 = vrot.slane %v2329, 5
    %v2332 = vor.u32 %v2328, %v2331
    %v2333 = vrot.slane %v2332, 4
    %v2335 = vshll.u32 %v2057, 16
    %v2337 = vrot.slane %v2335, 5
    %v2338 = vsel %vm2156, %v2333, %v2337
    %v2339 = vshrl.u32 %v2057, 16
    %v2341 = vrot.slane %v2339, 4
    %v2342 = vor.u32 %v2341, %v2337
    %v2343 = vrot.slane %v2342, 4
    %v2345 = vshll.u32 %v2129, 16
    %v2347 = vrot.slane %v2345, 5
    %v2348 = vsel %vm2156, %v2343, %v2347
    %v2350 = vshrl.u32 %v2058, 16
    %v2352 = vrot.slane %v2350, 4
    %v2353 = vshll.u32 %v2058, 16
    %v2355 = vrot.slane %v2353, 5
    %v2356 = vor.u32 %v2352, %v2355
    %v2357 = vrot.slane %v2356, 4
    %v2359 = vshll.u32 %v2059, 16
    %v2361 = vrot.slane %v2359, 5
    %v2362 = vsel %vm2156, %v2357, %v2361
    %v2363 = vshrl.u32 %v2059, 16
    %v2365 = vrot.slane %v2363, 4
    %v2366 = vor.u32 %v2365, %v2361
    %v2367 = vrot.slane %v2366, 4
    %v2369 = vshll.u32 %v2130, 16
    %v2371 = vrot.slane %v2369, 5
    %v2372 = vsel %vm2156, %v2367, %v2371
    %v2374 = vshrl.u32 %v2060, 16
    %v2376 = vrot.slane %v2374, 4
    %v2377 = vshll.u32 %v2060, 16
    %v2379 = vrot.slane %v2377, 5
    %v2380 = vor.u32 %v2376, %v2379
    %v2381 = vrot.slane %v2380, 4
    %v2383 = vshll.u32 %v2061, 16
    %v2385 = vrot.slane %v2383, 5
    %v2386 = vsel %vm2156, %v2381, %v2385
    %v2387 = vshrl.u32 %v2061, 16
    %v2389 = vrot.slane %v2387, 4
    %v2390 = vor.u32 %v2389, %v2385
    %v2391 = vrot.slane %v2390, 4
    %v2393 = vshll.u32 %v2131, 16
    %v2395 = vrot.slane %v2393, 5
    %v2396 = vsel %vm2156, %v2391, %v2395
    %v2398 = vshrl.u32 %v2062, 16
    %v2400 = vrot.slane %v2398, 4
    %v2401 = vshll.u32 %v2062, 16
    %v2403 = vrot.slane %v2401, 5
    %v2404 = vor.u32 %v2400, %v2403
    %v2405 = vrot.slane %v2404, 4
    %v2407 = vshll.u32 %v2063, 16
    %v2409 = vrot.slane %v2407, 5
    %v2410 = vsel %vm2156, %v2405, %v2409
    %v2411 = vshrl.u32 %v2063, 16
    %v2413 = vrot.slane %v2411, 4
    %v2414 = vor.u32 %v2413, %v2409
    %v2415 = vrot.slane %v2414, 4
    %v2417 = vshll.u32 %v2132, 16
    %v2419 = vrot.slane %v2417, 5
    %v2420 = vsel %vm2156, %v2415, %v2419
    %v2422 = vshrl.u32 %v2064, 16
    %v2424 = vrot.slane %v2422, 4
    %v2425 = vshll.u32 %v2064, 16
    %v2427 = vrot.slane %v2425, 5
    %v2428 = vor.u32 %v2424, %v2427
    %v2429 = vrot.slane %v2428, 4
    %v2431 = vshll.u32 %v2065, 16
    %v2433 = vrot.slane %v2431, 5
    %v2434 = vsel %vm2156, %v2429, %v2433
    %v2435 = vshrl.u32 %v2065, 16
    %v2437 = vrot.slane %v2435, 4
    %v2438 = vor.u32 %v2437, %v2433
    %v2439 = vrot.slane %v2438, 4
    %v2441 = vshll.u32 %v2133, 16
    %v2443 = vrot.slane %v2441, 5
    %v2444 = vsel %vm2156, %v2439, %v2443
    %v2446 = vshrl.u32 %v2066, 16
    %v2448 = vrot.slane %v2446, 4
    %v2449 = vshll.u32 %v2066, 16
    %v2451 = vrot.slane %v2449, 5
    %v2452 = vor.u32 %v2448, %v2451
    %v2453 = vrot.slane %v2452, 4
    %v2455 = vshll.u32 %v2067, 16
    %v2457 = vrot.slane %v2455, 5
    %v2458 = vsel %vm2156, %v2453, %v2457
    %v2459 = vshrl.u32 %v2067, 16
    %v2461 = vrot.slane %v2459, 4
    %v2462 = vor.u32 %v2461, %v2457
    %v2463 = vrot.slane %v2462, 4
    %v2465 = vshll.u32 %v2134, 16
    %v2467 = vrot.slane %v2465, 5
    %v2468 = vsel %vm2156, %v2463, %v2467
    %v2470 = vshrl.u32 %v2068, 16
    %v2472 = vrot.slane %v2470, 4
    %v2473 = vshll.u32 %v2068, 16
    %v2475 = vrot.slane %v2473, 5
    %v2476 = vor.u32 %v2472, %v2475
    %v2477 = vrot.slane %v2476, 4
    %v2479 = vshll.u32 %v2069, 16
    %v2481 = vrot.slane %v2479, 5
    %v2482 = vsel %vm2156, %v2477, %v2481
    %v2483 = vshrl.u32 %v2069, 16
    %v2485 = vrot.slane %v2483, 4
    %v2486 = vor.u32 %v2485, %v2481
    %v2487 = vrot.slane %v2486, 4
    %v2489 = vshll.u32 %v2135, 16
    %v2491 = vrot.slane %v2489, 5
    %v2492 = vsel %vm2156, %v2487, %v2491
    %v2494 = vshrl.u32 %v2070, 16
    %v2496 = vrot.slane %v2494, 4
    %v2497 = vshll.u32 %v2070, 16
    %v2499 = vrot.slane %v2497, 5
    %v2500 = vor.u32 %v2496, %v2499
    %v2501 = vrot.slane %v2500, 4
    %v2503 = vshll.u32 %v2071, 16
    %v2505 = vrot.slane %v2503, 5
    %v2506 = vsel %vm2156, %v2501, %v2505
    %v2507 = vshrl.u32 %v2071, 16
    %v2509 = vrot.slane %v2507, 4
    %v2510 = vor.u32 %v2509, %v2505
    %v2511 = vrot.slane %v2510, 4
    %v2513 = vshll.u32 %v2136, 16
    %v2515 = vrot.slane %v2513, 5
    %v2516 = vsel %vm2156, %v2511, %v2515
    %v2518 = vshrl.u32 %v2072, 16
    %v2520 = vrot.slane %v2518, 4
    %v2521 = vshll.u32 %v2072, 16
    %v2523 = vrot.slane %v2521, 5
    %v2524 = vor.u32 %v2520, %v2523
    %v2525 = vrot.slane %v2524, 4
    %v2527 = vshll.u32 %v2073, 16
    %v2529 = vrot.slane %v2527, 5
    %v2530 = vsel %vm2156, %v2525, %v2529
    %v2531 = vshrl.u32 %v2073, 16
    %v2533 = vrot.slane %v2531, 4
    %v2534 = vor.u32 %v2533, %v2529
    %v2535 = vrot.slane %v2534, 4
    %v2537 = vshll.u32 %v2137, 16
    %v2539 = vrot.slane %v2537, 5
    %v2540 = vsel %vm2156, %v2535, %v2539
    %v2542 = vshrl.u32 %v2074, 16
    %v2544 = vrot.slane %v2542, 4
    %v2545 = vshll.u32 %v2074, 16
    %v2547 = vrot.slane %v2545, 5
    %v2548 = vor.u32 %v2544, %v2547
    %v2549 = vrot.slane %v2548, 4
    %v2551 = vshll.u32 %v2075, 16
    %v2553 = vrot.slane %v2551, 5
    %v2554 = vsel %vm2156, %v2549, %v2553
    %v2555 = vshrl.u32 %v2075, 16
    %v2557 = vrot.slane %v2555, 4
    %v2558 = vor.u32 %v2557, %v2553
    %v2559 = vrot.slane %v2558, 4
    %v2561 = vshll.u32 %v2138, 16
    %v2563 = vrot.slane %v2561, 5
    %v2564 = vsel %vm2156, %v2559, %v2563
    %v2566 = vshrl.u32 %v2076, 16
    %v2568 = vrot.slane %v2566, 4
    %v2569 = vshll.u32 %v2076, 16
    %v2571 = vrot.slane %v2569, 5
    %v2572 = vor.u32 %v2568, %v2571
    %v2573 = vrot.slane %v2572, 4
    %v2575 = vshll.u32 %v2077, 16
    %v2577 = vrot.slane %v2575, 5
    %v2578 = vsel %vm2156, %v2573, %v2577
    %v2579 = vshrl.u32 %v2077, 16
    %v2581 = vrot.slane %v2579, 4
    %v2582 = vor.u32 %v2581, %v2577
    %v2583 = vrot.slane %v2582, 4
    %v2585 = vshll.u32 %v2139, 16
    %v2587 = vrot.slane %v2585, 5
    %v2588 = vsel %vm2156, %v2583, %v2587
    %v2590 = vshrl.u32 %v2078, 16
    %v2592 = vrot.slane %v2590, 4
    %v2593 = vshll.u32 %v2078, 16
    %v2595 = vrot.slane %v2593, 5
    %v2596 = vor.u32 %v2592, %v2595
    %v2597 = vrot.slane %v2596, 4
    %v2599 = vshll.u32 %v2079, 16
    %v2601 = vrot.slane %v2599, 5
    %v2602 = vsel %vm2156, %v2597, %v2601
    %v2603 = vshrl.u32 %v2079, 16
    %v2605 = vrot.slane %v2603, 4
    %v2606 = vor.u32 %v2605, %v2601
    %v2607 = vrot.slane %v2606, 4
    %v2609 = vshll.u32 %v2140, 16
    %v2611 = vrot.slane %v2609, 5
    %v2612 = vsel %vm2156, %v2607, %v2611
    %v2614 = vshrl.u32 %v2080, 16
    %v2616 = vrot.slane %v2614, 4
    %v2617 = vshll.u32 %v2080, 16
    %v2619 = vrot.slane %v2617, 5
    %v2620 = vor.u32 %v2616, %v2619
    %v2621 = vrot.slane %v2620, 4
    %v2623 = vshll.u32 %v2081, 16
    %v2625 = vrot.slane %v2623, 5
    %v2626 = vsel %vm2156, %v2621, %v2625
    %v2627 = vshrl.u32 %v2081, 16
    %v2629 = vrot.slane %v2627, 4
    %v2630 = vor.u32 %v2629, %v2625
    %v2631 = vrot.slane %v2630, 4
    %v2633 = vshll.u32 %v2141, 16
    %v2635 = vrot.slane %v2633, 5
    %v2636 = vsel %vm2156, %v2631, %v2635
    %v2638 = vshrl.u32 %v2082, 16
    %v2640 = vrot.slane %v2638, 4
    %v2641 = vshll.u32 %v2082, 16
    %v2643 = vrot.slane %v2641, 5
    %v2644 = vor.u32 %v2640, %v2643
    %v2645 = vrot.slane %v2644, 4
    %v2647 = vshll.u32 %v2083, 16
    %v2649 = vrot.slane %v2647, 5
    %v2650 = vsel %vm2156, %v2645, %v2649
    %v2651 = vshrl.u32 %v2083, 16
    %v2653 = vrot.slane %v2651, 4
    %v2654 = vor.u32 %v2653, %v2649
    %v2655 = vrot.slane %v2654, 4
    %v2657 = vshll.u32 %v2142, 16
    %v2659 = vrot.slane %v2657, 5
    %v2660 = vsel %vm2156, %v2655, %v2659
    %v2662 = vshrl.u32 %v2084, 16
    %v2664 = vrot.slane %v2662, 4
    %v2665 = vshll.u32 %v2084, 16
    %v2667 = vrot.slane %v2665, 5
    %v2668 = vor.u32 %v2664, %v2667
    %v2669 = vrot.slane %v2668, 4
    %v2671 = vshll.u32 %v2085, 16
    %v2673 = vrot.slane %v2671, 5
    %v2674 = vsel %vm2156, %v2669, %v2673
    %v2675 = vshrl.u32 %v2085, 16
    %v2677 = vrot.slane %v2675, 4
    %v2678 = vor.u32 %v2677, %v2673
    %v2679 = vrot.slane %v2678, 4
    %v2681 = vshll.u32 %v2143, 16
    %v2683 = vrot.slane %v2681, 5
    %v2684 = vsel %vm2156, %v2679, %v2683
    %v2686 = vshrl.u32 %v2086, 16
    %v2688 = vrot.slane %v2686, 4
    %v2689 = vshll.u32 %v2086, 16
    %v2691 = vrot.slane %v2689, 5
    %v2692 = vor.u32 %v2688, %v2691
    %v2693 = vrot.slane %v2692, 4
    %v2695 = vshll.u32 %v2087, 16
    %v2697 = vrot.slane %v2695, 5
    %v2698 = vsel %vm2156, %v2693, %v2697
    %v2699 = vshrl.u32 %v2087, 16
    %v2701 = vrot.slane %v2699, 4
    %v2702 = vor.u32 %v2701, %v2697
    %v2703 = vrot.slane %v2702, 4
    %v2705 = vshll.u32 %v2144, 16
    %v2707 = vrot.slane %v2705, 5
    %v2708 = vsel %vm2156, %v2703, %v2707
    %v2710 = vshrl.u32 %v2088, 16
    %v2712 = vrot.slane %v2710, 4
    %v2713 = vshll.u32 %v2088, 16
    %v2715 = vrot.slane %v2713, 5
    %v2716 = vor.u32 %v2712, %v2715
    %v2717 = vrot.slane %v2716, 4
    %v2719 = vshll.u32 %v2089, 16
    %v2721 = vrot.slane %v2719, 5
    %v2722 = vsel %vm2156, %v2717, %v2721
    %v2723 = vshrl.u32 %v2089, 16
    %v2725 = vrot.slane %v2723, 4
    %v2726 = vor.u32 %v2725, %v2721
    %v2727 = vrot.slane %v2726, 4
    %v2729 = vshll.u32 %v2145, 16
    %v2731 = vrot.slane %v2729, 5
    %v2732 = vsel %vm2156, %v2727, %v2731
    %v2734 = vshrl.u32 %v2090, 16
    %v2736 = vrot.slane %v2734, 4
    %v2737 = vshll.u32 %v2090, 16
    %v2739 = vrot.slane %v2737, 5
    %v2740 = vor.u32 %v2736, %v2739
    %v2741 = vrot.slane %v2740, 4
    %v2743 = vshll.u32 %v2091, 16
    %v2745 = vrot.slane %v2743, 5
    %v2746 = vsel %vm2156, %v2741, %v2745
    %v2747 = vshrl.u32 %v2091, 16
    %v2749 = vrot.slane %v2747, 4
    %v2750 = vor.u32 %v2749, %v2745
    %v2751 = vrot.slane %v2750, 4
    %v2753 = vshll.u32 %v2146, 16
    %v2755 = vrot.slane %v2753, 5
    %v2756 = vsel %vm2156, %v2751, %v2755
    %v2758 = vshrl.u32 %v2092, 16
    %v2760 = vrot.slane %v2758, 4
    %v2761 = vshll.u32 %v2092, 16
    %v2763 = vrot.slane %v2761, 5
    %v2764 = vor.u32 %v2760, %v2763
    %v2765 = vrot.slane %v2764, 4
    %v2767 = vshll.u32 %v2093, 16
    %v2769 = vrot.slane %v2767, 5
    %v2770 = vsel %vm2156, %v2765, %v2769
    %v2771 = vshrl.u32 %v2093, 16
    %v2773 = vrot.slane %v2771, 4
    %v2774 = vor.u32 %v2773, %v2769
    %v2775 = vrot.slane %v2774, 4
    %v2777 = vshll.u32 %v2147, 16
    %v2779 = vrot.slane %v2777, 5
    %v2780 = vsel %vm2156, %v2775, %v2779
    %v2782 = vshrl.u32 %v2094, 16
    %v2784 = vrot.slane %v2782, 4
    %v2785 = vshll.u32 %v2094, 16
    %v2787 = vrot.slane %v2785, 5
    %v2788 = vor.u32 %v2784, %v2787
    %v2789 = vrot.slane %v2788, 4
    %v2791 = vshll.u32 %v2095, 16
    %v2793 = vrot.slane %v2791, 5
    %v2794 = vsel %vm2156, %v2789, %v2793
    %v2795 = vshrl.u32 %v2095, 16
    %v2797 = vrot.slane %v2795, 4
    %v2798 = vor.u32 %v2797, %v2793
    %v2799 = vrot.slane %v2798, 4
    %v2801 = vshll.u32 %v2148, 16
    %v2803 = vrot.slane %v2801, 5
    %v2804 = vsel %vm2156, %v2799, %v2803
    %v2806 = vshrl.u32 %v2096, 16
    %v2808 = vrot.slane %v2806, 4
    %v2809 = vshll.u32 %v2096, 16
    %v2811 = vrot.slane %v2809, 5
    %v2812 = vor.u32 %v2808, %v2811
    %v2813 = vrot.slane %v2812, 4
    %v2815 = vshll.u32 %v2097, 16
    %v2817 = vrot.slane %v2815, 5
    %v2818 = vsel %vm2156, %v2813, %v2817
    %v2819 = vshrl.u32 %v2097, 16
    %v2821 = vrot.slane %v2819, 4
    %v2822 = vor.u32 %v2821, %v2817
    %v2823 = vrot.slane %v2822, 4
    %v2825 = vshll.u32 %v2149, 16
    %v2827 = vrot.slane %v2825, 5
    %v2828 = vsel %vm2156, %v2823, %v2827
    %v2830 = vshrl.u32 %v2098, 16
    %v2832 = vrot.slane %v2830, 4
    %v2833 = vshll.u32 %v2098, 16
    %v2835 = vrot.slane %v2833, 5
    %v2836 = vor.u32 %v2832, %v2835
    %v2837 = vrot.slane %v2836, 4
    %v2839 = vshll.u32 %v2099, 16
    %v2841 = vrot.slane %v2839, 5
    %v2842 = vsel %vm2156, %v2837, %v2841
    %v2843 = vshrl.u32 %v2099, 16
    %v2845 = vrot.slane %v2843, 4
    %v2846 = vor.u32 %v2845, %v2841
    %v2847 = vrot.slane %v2846, 4
    %v2849 = vshll.u32 %v2150, 16
    %v2851 = vrot.slane %v2849, 5
    %v2852 = vsel %vm2156, %v2847, %v2851
    %v2854 = vshrl.u32 %v2100, 16
    %v2856 = vrot.slane %v2854, 4
    %v2857 = vshll.u32 %v2100, 16
    %v2859 = vrot.slane %v2857, 5
    %v2860 = vor.u32 %v2856, %v2859
    %v2861 = vrot.slane %v2860, 4
    %v2863 = vshll.u32 %v2101, 16
    %v2865 = vrot.slane %v2863, 5
    %v2866 = vsel %vm2156, %v2861, %v2865
    %v2867 = vshrl.u32 %v2101, 16
    %v2869 = vrot.slane %v2867, 4
    %v2870 = vor.u32 %v2869, %v2865
    %v2871 = vrot.slane %v2870, 4
    %v2873 = vshll.u32 %v2151, 16
    %v2875 = vrot.slane %v2873, 5
    %v2876 = vsel %vm2156, %v2871, %v2875
    %v2878 = vshrl.u32 %v2102, 16
    %v2880 = vrot.slane %v2878, 4
    %v2881 = vshll.u32 %v2102, 16
    %v2883 = vrot.slane %v2881, 5
    %v2884 = vor.u32 %v2880, %v2883
    %v2885 = vrot.slane %v2884, 4
    %v2887 = vshll.u32 %v2103, 16
    %v2889 = vrot.slane %v2887, 5
    %v2890 = vsel %vm2156, %v2885, %v2889
    %v2891 = vshrl.u32 %v2103, 16
    %v2893 = vrot.slane %v2891, 4
    %v2894 = vor.u32 %v2893, %v2889
    %v2895 = vrot.slane %v2894, 4
    %v2897 = vshll.u32 %v2152, 16
    %v2899 = vrot.slane %v2897, 5
    %v2900 = vsel %vm2156, %v2895, %v2899
    %v2902 = vshrl.u32 %v2104, 16
    %v2904 = vrot.slane %v2902, 4
    %v2905 = vshll.u32 %v2104, 16
    %v2907 = vrot.slane %v2905, 5
    %v2908 = vor.u32 %v2904, %v2907
    %v2909 = vrot.slane %v2908, 4
    %v2911 = vshll.u32 %v2105, 16
    %v2913 = vrot.slane %v2911, 5
    %v2914 = vsel %vm2156, %v2909, %v2913
    %v2915 = vshrl.u32 %v2105, 16
    %v2917 = vrot.slane %v2915, 4
    %v2918 = vor.u32 %v2917, %v2913
    %v2919 = vrot.slane %v2918, 4
    %v2921 = vshll.u32 %v2153, 16
    %v2923 = vrot.slane %v2921, 5
    %v2924 = vsel %vm2156, %v2919, %v2923
    %s2925 = scalar_lea.vmem %s4, 64
    %v2926 = vld [vmem:[%s2925] sm:$0xf]
    %v2927 = vld [vmem:[%s2925 + $0x4] sm:$0xf]
    %v2928 = vld [vmem:[%s2925 + $0x8] sm:$0xf]
    %v2929 = vld [vmem:[%s2925 + $0xc] sm:$0xf]
    %v2930 = vld [vmem:[%s2925 + $0x10] sm:$0xf]
    %v2931 = vld [vmem:[%s2925 + $0x14] sm:$0xf]
    %v2932 = vld [vmem:[%s2925 + $0x18] sm:$0xf]
    %v2933 = vld [vmem:[%s2925 + $0x1c] sm:$0xf]
    %v2934 = vld [vmem:[%s2925 + $0x20] sm:$0xf]
    %v2935 = vld [vmem:[%s2925 + $0x24] sm:$0xf]
    %v2936 = vld [vmem:[%s2925 + $0x28] sm:$0xf]
    %v2937 = vld [vmem:[%s2925 + $0x2c] sm:$0xf]
    %v2938 = vld [vmem:[%s2925 + $0x30] sm:$0xf]
    %v2939 = vld [vmem:[%s2925 + $0x34] sm:$0xf]
    %v2940 = vld [vmem:[%s2925 + $0x38] sm:$0xf]
    %v2941 = vld [vmem:[%s2925 + $0x3c] sm:$0xf]
    %v2942 = vunpack.c.l.b16 %v2170
    %v2943 = vunpack.c.l.b16 %v2180
    %v2944 = vunpack.c.l.b16 %v2194
    %v2945 = vunpack.c.l.b16 %v2204
    %v2946 = vunpack.c.l.b16 %v2218
    %v2947 = vunpack.c.l.b16 %v2228
    %v2948 = vunpack.c.l.b16 %v2242
    %v2949 = vunpack.c.l.b16 %v2252
    %v2950 = vunpack.c.l.b16 %v2266
    %v2951 = vunpack.c.l.b16 %v2276
    %v2952 = vunpack.c.l.b16 %v2290
    %v2953 = vunpack.c.l.b16 %v2300
    %v2954 = vunpack.c.l.b16 %v2314
    %v2955 = vunpack.c.l.b16 %v2324
    %v2956 = vunpack.c.l.b16 %v2338
    %v2957 = vunpack.c.l.b16 %v2348
    %v2958 = vunpack.c.l.b16 %v2362
    %v2959 = vunpack.c.l.b16 %v2372
    %v2960 = vunpack.c.l.b16 %v2386
    %v2961 = vunpack.c.l.b16 %v2396
    %v2962 = vunpack.c.l.b16 %v2410
    %v2963 = vunpack.c.l.b16 %v2420
    %v2964 = vunpack.c.l.b16 %v2434
    %v2965 = vunpack.c.l.b16 %v2444
    %v2966 = vunpack.c.l.b16 %v2458
    %v2967 = vunpack.c.l.b16 %v2468
    %v2968 = vunpack.c.l.b16 %v2482
    %v2969 = vunpack.c.l.b16 %v2492
    %v2970 = vunpack.c.l.b16 %v2506
    %v2971 = vunpack.c.l.b16 %v2516
    %v2972 = vunpack.c.l.b16 %v2530
    %v2973 = vunpack.c.l.b16 %v2540
    %v2974 = vunpack.c.l.b16 %v2554
    %v2975 = vunpack.c.l.b16 %v2564
    %v2976 = vunpack.c.l.b16 %v2578
    %v2977 = vunpack.c.l.b16 %v2588
    %v2978 = vunpack.c.l.b16 %v2602
    %v2979 = vunpack.c.l.b16 %v2612
    %v2980 = vunpack.c.l.b16 %v2626
    %v2981 = vunpack.c.l.b16 %v2636
    %v2982 = vunpack.c.l.b16 %v2650
    %v2983 = vunpack.c.l.b16 %v2660
    %v2984 = vunpack.c.l.b16 %v2674
    %v2985 = vunpack.c.l.b16 %v2684
    %v2986 = vunpack.c.l.b16 %v2698
    %v2987 = vunpack.c.l.b16 %v2708
    %v2988 = vunpack.c.l.b16 %v2722
    %v2989 = vunpack.c.l.b16 %v2732
    %v2990 = vunpack.c.l.b16 %v2746
    %v2991 = vunpack.c.l.b16 %v2756
    %v2992 = vunpack.c.l.b16 %v2770
    %v2993 = vunpack.c.l.b16 %v2780
    %v2994 = vunpack.c.l.b16 %v2794
    %v2995 = vunpack.c.l.b16 %v2804
    %v2996 = vunpack.c.l.b16 %v2818
    %v2997 = vunpack.c.l.b16 %v2828
    %v2998 = vunpack.c.l.b16 %v2842
    %v2999 = vunpack.c.l.b16 %v2852
    %v3000 = vunpack.c.l.b16 %v2866
    %v3001 = vunpack.c.l.b16 %v2876
    %v3002 = vunpack.c.l.b16 %v2890
    %v3003 = vunpack.c.l.b16 %v2900
    %v3004 = vunpack.c.l.b16 %v2914
    %v3005 = vunpack.c.l.b16 %v2924
    %v3006 = vpack.c.b16 %v2943, %v2942
    %v3007 = vpack.c.b16 %v2945, %v2944
    %v3008 = vpack.c.b16 %v2947, %v2946
    %v3009 = vpack.c.b16 %v2949, %v2948
    %v3010 = vpack.c.b16 %v2951, %v2950
    %v3011 = vpack.c.b16 %v2953, %v2952
    %v3012 = vpack.c.b16 %v2955, %v2954
    %v3013 = vpack.c.b16 %v2957, %v2956
    %v3014 = vpack.c.b16 %v2959, %v2958
    %v3015 = vpack.c.b16 %v2961, %v2960
    %v3016 = vpack.c.b16 %v2963, %v2962
    %v3017 = vpack.c.b16 %v2965, %v2964
    %v3018 = vpack.c.b16 %v2967, %v2966
    %v3019 = vpack.c.b16 %v2969, %v2968
    %v3020 = vpack.c.b16 %v2971, %v2970
    %v3021 = vpack.c.b16 %v2973, %v2972
    %v3022 = vpack.c.b16 %v2975, %v2974
    %v3023 = vpack.c.b16 %v2977, %v2976
    %v3024 = vpack.c.b16 %v2979, %v2978
    %v3025 = vpack.c.b16 %v2981, %v2980
    %v3026 = vpack.c.b16 %v2983, %v2982
    %v3027 = vpack.c.b16 %v2985, %v2984
    %v3028 = vpack.c.b16 %v2987, %v2986
    %v3029 = vpack.c.b16 %v2989, %v2988
    %v3030 = vpack.c.b16 %v2991, %v2990
    %v3031 = vpack.c.b16 %v2993, %v2992
    %v3032 = vpack.c.b16 %v2995, %v2994
    %v3033 = vpack.c.b16 %v2997, %v2996
    %v3034 = vpack.c.b16 %v2999, %v2998
    %v3035 = vpack.c.b16 %v3001, %v3000
    %v3036 = vpack.c.b16 %v3003, %v3002
    %v3037 = vpack.c.b16 %v3005, %v3004
    %v3086 = vunpack.c.l.b16 %v2926
    %v3087 = vunpack.c.l.b16 %v2927
    %v3088 = vunpack.c.l.b16 %v2928
    %v3089 = vunpack.c.l.b16 %v2929
    %v3090 = vunpack.c.l.b16 %v2930
    %v3091 = vunpack.c.l.b16 %v2931
    %v3092 = vunpack.c.l.b16 %v2932
    %v3093 = vunpack.c.l.b16 %v2933
    %v3094 = vunpack.c.l.b16 %v2934
    %v3095 = vunpack.c.l.b16 %v2935
    %v3096 = vunpack.c.l.b16 %v2936
    %v3097 = vunpack.c.l.b16 %v2937
    %v3098 = vunpack.c.l.b16 %v2938
    %v3099 = vunpack.c.l.b16 %v2939
    %v3100 = vunpack.c.l.b16 %v2940
    %v3101 = vunpack.c.l.b16 %v2941
    %v3102 = vpack.c.b16 %v3087, %v3086
    %v3103 = vpack.c.b16 %v3089, %v3088
    %v3104 = vpack.c.b16 %v3091, %v3090
    %v3105 = vpack.c.b16 %v3093, %v3092
    %v3106 = vpack.c.b16 %v3095, %v3094
    %v3107 = vpack.c.b16 %v3097, %v3096
    %v3108 = vpack.c.b16 %v3099, %v3098
    %v3109 = vpack.c.b16 %v3101, %v3100
    %3118 = vmatpush.bf16.msra.mxu0 %v3109
    %3119 = vmatpush.bf16.msra.mxu0 %v3108
    %3120 = vmatpush.bf16.msra.mxu0 %v3107
    %3121 = vmatpush.bf16.msra.mxu0 %v3106
    %3122 = vmatpush.bf16.msra.mxu0 %v3105
    %3123 = vmatpush.bf16.msra.mxu0 %v3104
    %3124 = vmatpush.bf16.msra.mxu0 %v3103
    %3125 = vmatpush.bf16.msra.mxu0 %v3102
    %3126 = vmatmul.bf16.gmra.mxu0 %v3006
    %v3127 = vpop.f32.mrf.mxu0
    %v3128 = vadd.f32 0.0, %v3127
    %v3129 = vpop.f32.mrf.mxu0
    %v3130 = vadd.f32 0.0, %v3129
    %3131 = vmatmul.bf16.gmra.mxu0 %v3007
    %v3132 = vpop.f32.mrf.mxu0
    %v3133 = vadd.f32 0.0, %v3132
    %v3134 = vpop.f32.mrf.mxu0
    %v3135 = vadd.f32 0.0, %v3134
    %3136 = vmatmul.bf16.gmra.mxu0 %v3008
    %v3137 = vpop.f32.mrf.mxu0
    %v3138 = vadd.f32 0.0, %v3137
    %v3139 = vpop.f32.mrf.mxu0
    %v3140 = vadd.f32 0.0, %v3139
    %3141 = vmatmul.bf16.gmra.mxu0 %v3009
    %v3142 = vpop.f32.mrf.mxu0
    %v3143 = vadd.f32 0.0, %v3142
    %v3144 = vpop.f32.mrf.mxu0
    %v3145 = vadd.f32 0.0, %v3144
    %3146 = vmatmul.bf16.gmra.mxu0 %v3010
    %v3147 = vpop.f32.mrf.mxu0
    %v3148 = vadd.f32 0.0, %v3147
    %v3149 = vpop.f32.mrf.mxu0
    %v3150 = vadd.f32 0.0, %v3149
    %3151 = vmatmul.bf16.gmra.mxu0 %v3011
    %v3152 = vpop.f32.mrf.mxu0
    %v3153 = vadd.f32 0.0, %v3152
    %v3154 = vpop.f32.mrf.mxu0
    %v3155 = vadd.f32 0.0, %v3154
    %3156 = vmatmul.bf16.gmra.mxu0 %v3012
    %v3157 = vpop.f32.mrf.mxu0
    %v3158 = vadd.f32 0.0, %v3157
    %v3159 = vpop.f32.mrf.mxu0
    %v3160 = vadd.f32 0.0, %v3159
    %3161 = vmatmul.bf16.gmra.mxu0 %v3013
    %v3162 = vpop.f32.mrf.mxu0
    %v3163 = vadd.f32 0.0, %v3162
    %v3164 = vpop.f32.mrf.mxu0
    %v3165 = vadd.f32 0.0, %v3164
    %3166 = vmatmul.bf16.gmra.mxu0 %v3014
    %v3167 = vpop.f32.mrf.mxu0
    %v3168 = vadd.f32 0.0, %v3167
    %v3169 = vpop.f32.mrf.mxu0
    %v3170 = vadd.f32 0.0, %v3169
    %3171 = vmatmul.bf16.gmra.mxu0 %v3015
    %v3172 = vpop.f32.mrf.mxu0
    %v3173 = vadd.f32 0.0, %v3172
    %v3174 = vpop.f32.mrf.mxu0
    %v3175 = vadd.f32 0.0, %v3174
    %3176 = vmatmul.bf16.gmra.mxu0 %v3016
    %v3177 = vpop.f32.mrf.mxu0
    %v3178 = vadd.f32 0.0, %v3177
    %v3179 = vpop.f32.mrf.mxu0
    %v3180 = vadd.f32 0.0, %v3179
    %3181 = vmatmul.bf16.gmra.mxu0 %v3017
    %v3182 = vpop.f32.mrf.mxu0
    %v3183 = vadd.f32 0.0, %v3182
    %v3184 = vpop.f32.mrf.mxu0
    %v3185 = vadd.f32 0.0, %v3184
    %3186 = vmatmul.bf16.gmra.mxu0 %v3018
    %v3187 = vpop.f32.mrf.mxu0
    %v3188 = vadd.f32 0.0, %v3187
    %v3189 = vpop.f32.mrf.mxu0
    %v3190 = vadd.f32 0.0, %v3189
    %3191 = vmatmul.bf16.gmra.mxu0 %v3019
    %v3192 = vpop.f32.mrf.mxu0
    %v3193 = vadd.f32 0.0, %v3192
    %v3194 = vpop.f32.mrf.mxu0
    %v3195 = vadd.f32 0.0, %v3194
    %3196 = vmatmul.bf16.gmra.mxu0 %v3020
    %v3197 = vpop.f32.mrf.mxu0
    %v3198 = vadd.f32 0.0, %v3197
    %v3199 = vpop.f32.mrf.mxu0
    %v3200 = vadd.f32 0.0, %v3199
    %3201 = vmatmul.bf16.gmra.mxu0 %v3021
    %v3202 = vpop.f32.mrf.mxu0
    %v3203 = vadd.f32 0.0, %v3202
    %v3204 = vpop.f32.mrf.mxu0
    %v3205 = vadd.f32 0.0, %v3204
    %3206 = vmatmul.bf16.gmra.mxu0 %v3022
    %v3207 = vpop.f32.mrf.mxu0
    %v3208 = vadd.f32 0.0, %v3207
    %v3209 = vpop.f32.mrf.mxu0
    %v3210 = vadd.f32 0.0, %v3209
    %3211 = vmatmul.bf16.gmra.mxu0 %v3023
    %v3212 = vpop.f32.mrf.mxu0
    %v3213 = vadd.f32 0.0, %v3212
    %v3214 = vpop.f32.mrf.mxu0
    %v3215 = vadd.f32 0.0, %v3214
    %3216 = vmatmul.bf16.gmra.mxu0 %v3024
    %v3217 = vpop.f32.mrf.mxu0
    %v3218 = vadd.f32 0.0, %v3217
    %v3219 = vpop.f32.mrf.mxu0
    %v3220 = vadd.f32 0.0, %v3219
    %3221 = vmatmul.bf16.gmra.mxu0 %v3025
    %v3222 = vpop.f32.mrf.mxu0
    %v3223 = vadd.f32 0.0, %v3222
    %v3224 = vpop.f32.mrf.mxu0
    %v3225 = vadd.f32 0.0, %v3224
    %3226 = vmatmul.bf16.gmra.mxu0 %v3026
    %v3227 = vpop.f32.mrf.mxu0
    %v3228 = vadd.f32 0.0, %v3227
    %v3229 = vpop.f32.mrf.mxu0
    %v3230 = vadd.f32 0.0, %v3229
    %3231 = vmatmul.bf16.gmra.mxu0 %v3027
    %v3232 = vpop.f32.mrf.mxu0
    %v3233 = vadd.f32 0.0, %v3232
    %v3234 = vpop.f32.mrf.mxu0
    %v3235 = vadd.f32 0.0, %v3234
    %3236 = vmatmul.bf16.gmra.mxu0 %v3028
    %v3237 = vpop.f32.mrf.mxu0
    %v3238 = vadd.f32 0.0, %v3237
    %v3239 = vpop.f32.mrf.mxu0
    %v3240 = vadd.f32 0.0, %v3239
    %3241 = vmatmul.bf16.gmra.mxu0 %v3029
    %v3242 = vpop.f32.mrf.mxu0
    %v3243 = vadd.f32 0.0, %v3242
    %v3244 = vpop.f32.mrf.mxu0
    %v3245 = vadd.f32 0.0, %v3244
    %3246 = vmatmul.bf16.gmra.mxu0 %v3030
    %v3247 = vpop.f32.mrf.mxu0
    %v3248 = vadd.f32 0.0, %v3247
    %v3249 = vpop.f32.mrf.mxu0
    %v3250 = vadd.f32 0.0, %v3249
    %3251 = vmatmul.bf16.gmra.mxu0 %v3031
    %v3252 = vpop.f32.mrf.mxu0
    %v3253 = vadd.f32 0.0, %v3252
    %v3254 = vpop.f32.mrf.mxu0
    %v3255 = vadd.f32 0.0, %v3254
    %3256 = vmatmul.bf16.gmra.mxu0 %v3032
    %v3257 = vpop.f32.mrf.mxu0
    %v3258 = vadd.f32 0.0, %v3257
    %v3259 = vpop.f32.mrf.mxu0
    %v3260 = vadd.f32 0.0, %v3259
    %3261 = vmatmul.bf16.gmra.mxu0 %v3033
    %v3262 = vpop.f32.mrf.mxu0
    %v3263 = vadd.f32 0.0, %v3262
    %v3264 = vpop.f32.mrf.mxu0
    %v3265 = vadd.f32 0.0, %v3264
    %3266 = vmatmul.bf16.gmra.mxu0 %v3034
    %v3267 = vpop.f32.mrf.mxu0
    %v3268 = vadd.f32 0.0, %v3267
    %v3269 = vpop.f32.mrf.mxu0
    %v3270 = vadd.f32 0.0, %v3269
    %3271 = vmatmul.bf16.gmra.mxu0 %v3035
    %v3272 = vpop.f32.mrf.mxu0
    %v3273 = vadd.f32 0.0, %v3272
    %v3274 = vpop.f32.mrf.mxu0
    %v3275 = vadd.f32 0.0, %v3274
    %3276 = vmatmul.bf16.gmra.mxu0 %v3036
    %v3277 = vpop.f32.mrf.mxu0
    %v3278 = vadd.f32 0.0, %v3277
    %v3279 = vpop.f32.mrf.mxu0
    %v3280 = vadd.f32 0.0, %v3279
    %3281 = vmatmul.bf16.gmra.mxu0 %v3037
    %v3282 = vpop.f32.mrf.mxu0
    %v3283 = vadd.f32 0.0, %v3282
    %v3284 = vpop.f32.mrf.mxu0
    %v3285 = vadd.f32 0.0, %v3284
    %3286 = vdwg.mxu0
    %v3351 = vunpack.c.l.b16 %v2042
    %v3352 = vunpack.c.l.b16 %v2043
    %v3353 = vunpack.c.l.b16 %v2044
    %v3354 = vunpack.c.l.b16 %v2045
    %v3355 = vunpack.c.l.b16 %v2046
    %v3356 = vunpack.c.l.b16 %v2047
    %v3357 = vunpack.c.l.b16 %v2048
    %v3358 = vunpack.c.l.b16 %v2049
    %v3359 = vunpack.c.l.b16 %v2050
    %v3360 = vunpack.c.l.b16 %v2051
    %v3361 = vunpack.c.l.b16 %v2052
    %v3362 = vunpack.c.l.b16 %v2053
    %v3363 = vunpack.c.l.b16 %v2054
    %v3364 = vunpack.c.l.b16 %v2055
    %v3365 = vunpack.c.l.b16 %v2056
    %v3366 = vunpack.c.l.b16 %v2057
    %v3367 = vunpack.c.l.b16 %v2058
    %v3368 = vunpack.c.l.b16 %v2059
    %v3369 = vunpack.c.l.b16 %v2060
    %v3370 = vunpack.c.l.b16 %v2061
    %v3371 = vunpack.c.l.b16 %v2062
    %v3372 = vunpack.c.l.b16 %v2063
    %v3373 = vunpack.c.l.b16 %v2064
    %v3374 = vunpack.c.l.b16 %v2065
    %v3375 = vunpack.c.l.b16 %v2066
    %v3376 = vunpack.c.l.b16 %v2067
    %v3377 = vunpack.c.l.b16 %v2068
    %v3378 = vunpack.c.l.b16 %v2069
    %v3379 = vunpack.c.l.b16 %v2070
    %v3380 = vunpack.c.l.b16 %v2071
    %v3381 = vunpack.c.l.b16 %v2072
    %v3382 = vunpack.c.l.b16 %v2073
    %v3383 = vunpack.c.l.b16 %v2074
    %v3384 = vunpack.c.l.b16 %v2075
    %v3385 = vunpack.c.l.b16 %v2076
    %v3386 = vunpack.c.l.b16 %v2077
    %v3387 = vunpack.c.l.b16 %v2078
    %v3388 = vunpack.c.l.b16 %v2079
    %v3389 = vunpack.c.l.b16 %v2080
    %v3390 = vunpack.c.l.b16 %v2081
    %v3391 = vunpack.c.l.b16 %v2082
    %v3392 = vunpack.c.l.b16 %v2083
    %v3393 = vunpack.c.l.b16 %v2084
    %v3394 = vunpack.c.l.b16 %v2085
    %v3395 = vunpack.c.l.b16 %v2086
    %v3396 = vunpack.c.l.b16 %v2087
    %v3397 = vunpack.c.l.b16 %v2088
    %v3398 = vunpack.c.l.b16 %v2089
    %v3399 = vunpack.c.l.b16 %v2090
    %v3400 = vunpack.c.l.b16 %v2091
    %v3401 = vunpack.c.l.b16 %v2092
    %v3402 = vunpack.c.l.b16 %v2093
    %v3403 = vunpack.c.l.b16 %v2094
    %v3404 = vunpack.c.l.b16 %v2095
    %v3405 = vunpack.c.l.b16 %v2096
    %v3406 = vunpack.c.l.b16 %v2097
    %v3407 = vunpack.c.l.b16 %v2098
    %v3408 = vunpack.c.l.b16 %v2099
    %v3409 = vunpack.c.l.b16 %v2100
    %v3410 = vunpack.c.l.b16 %v2101
    %v3411 = vunpack.c.l.b16 %v2102
    %v3412 = vunpack.c.l.b16 %v2103
    %v3413 = vunpack.c.l.b16 %v2104
    %v3414 = vunpack.c.l.b16 %v2105
    %v3415 = vpack.c.b16 %v3352, %v3351
    %v3416 = vpack.c.b16 %v3354, %v3353
    %v3417 = vpack.c.b16 %v3356, %v3355
    %v3418 = vpack.c.b16 %v3358, %v3357
    %v3419 = vpack.c.b16 %v3360, %v3359
    %v3420 = vpack.c.b16 %v3362, %v3361
    %v3421 = vpack.c.b16 %v3364, %v3363
    %v3422 = vpack.c.b16 %v3366, %v3365
    %v3423 = vpack.c.b16 %v3368, %v3367
    %v3424 = vpack.c.b16 %v3370, %v3369
    %v3425 = vpack.c.b16 %v3372, %v3371
    %v3426 = vpack.c.b16 %v3374, %v3373
    %v3427 = vpack.c.b16 %v3376, %v3375
    %v3428 = vpack.c.b16 %v3378, %v3377
    %v3429 = vpack.c.b16 %v3380, %v3379
    %v3430 = vpack.c.b16 %v3382, %v3381
    %v3431 = vpack.c.b16 %v3384, %v3383
    %v3432 = vpack.c.b16 %v3386, %v3385
    %v3433 = vpack.c.b16 %v3388, %v3387
    %v3434 = vpack.c.b16 %v3390, %v3389
    %v3435 = vpack.c.b16 %v3392, %v3391
    %v3436 = vpack.c.b16 %v3394, %v3393
    %v3437 = vpack.c.b16 %v3396, %v3395
    %v3438 = vpack.c.b16 %v3398, %v3397
    %v3439 = vpack.c.b16 %v3400, %v3399
    %v3440 = vpack.c.b16 %v3402, %v3401
    %v3441 = vpack.c.b16 %v3404, %v3403
    %v3442 = vpack.c.b16 %v3406, %v3405
    %v3443 = vpack.c.b16 %v3408, %v3407
    %v3444 = vpack.c.b16 %v3410, %v3409
    %v3445 = vpack.c.b16 %v3412, %v3411
    %v3446 = vpack.c.b16 %v3414, %v3413
    %v3495 = vunpack.c.l.b16 %v2106
    %v3496 = vunpack.c.l.b16 %v2107
    %v3497 = vunpack.c.l.b16 %v2108
    %v3498 = vunpack.c.l.b16 %v2109
    %v3499 = vunpack.c.l.b16 %v2110
    %v3500 = vunpack.c.l.b16 %v2111
    %v3501 = vunpack.c.l.b16 %v2112
    %v3502 = vunpack.c.l.b16 %v2113
    %v3503 = vunpack.c.l.b16 %v2114
    %v3504 = vunpack.c.l.b16 %v2115
    %v3505 = vunpack.c.l.b16 %v2116
    %v3506 = vunpack.c.l.b16 %v2117
    %v3507 = vunpack.c.l.b16 %v2118
    %v3508 = vunpack.c.l.b16 %v2119
    %v3509 = vunpack.c.l.b16 %v2120
    %v3510 = vunpack.c.l.b16 %v2121
    %v3511 = vpack.c.b16 %v3496, %v3495
    %v3512 = vpack.c.b16 %v3498, %v3497
    %v3513 = vpack.c.b16 %v3500, %v3499
    %v3514 = vpack.c.b16 %v3502, %v3501
    %v3515 = vpack.c.b16 %v3504, %v3503
    %v3516 = vpack.c.b16 %v3506, %v3505
    %v3517 = vpack.c.b16 %v3508, %v3507
    %v3518 = vpack.c.b16 %v3510, %v3509
    %3527 = vmatpush.bf16.msra.mxu0 %v3518
    %3528 = vmatpush.bf16.msra.mxu0 %v3517
    %3529 = vmatpush.bf16.msra.mxu0 %v3516
    %3530 = vmatpush.bf16.msra.mxu0 %v3515
    %3531 = vmatpush.bf16.msra.mxu0 %v3514
    %3532 = vmatpush.bf16.msra.mxu0 %v3513
    %3533 = vmatpush.bf16.msra.mxu0 %v3512
    %3534 = vmatpush.bf16.msra.mxu0 %v3511
    %3535 = vmatmul.bf16.gmra.mxu0 %v3415
    %v3536 = vpop.f32.mrf.mxu0
    %v3537 = vadd.f32 %v3128, %v3536
    %v3538 = vpop.f32.mrf.mxu0
    %v3539 = vadd.f32 %v3130, %v3538
    %3540 = vmatmul.bf16.gmra.mxu0 %v3416
    %v3541 = vpop.f32.mrf.mxu0
    %v3542 = vadd.f32 %v3133, %v3541
    %v3543 = vpop.f32.mrf.mxu0
    %v3544 = vadd.f32 %v3135, %v3543
    %3545 = vmatmul.bf16.gmra.mxu0 %v3417
    %v3546 = vpop.f32.mrf.mxu0
    %v3547 = vadd.f32 %v3138, %v3546
    %v3548 = vpop.f32.mrf.mxu0
    %v3549 = vadd.f32 %v3140, %v3548
    %3550 = vmatmul.bf16.gmra.mxu0 %v3418
    %v3551 = vpop.f32.mrf.mxu0
    %v3552 = vadd.f32 %v3143, %v3551
    %v3553 = vpop.f32.mrf.mxu0
    %v3554 = vadd.f32 %v3145, %v3553
    %3555 = vmatmul.bf16.gmra.mxu0 %v3419
    %v3556 = vpop.f32.mrf.mxu0
    %v3557 = vadd.f32 %v3148, %v3556
    %v3558 = vpop.f32.mrf.mxu0
    %v3559 = vadd.f32 %v3150, %v3558
    %3560 = vmatmul.bf16.gmra.mxu0 %v3420
    %v3561 = vpop.f32.mrf.mxu0
    %v3562 = vadd.f32 %v3153, %v3561
    %v3563 = vpop.f32.mrf.mxu0
    %v3564 = vadd.f32 %v3155, %v3563
    %3565 = vmatmul.bf16.gmra.mxu0 %v3421
    %v3566 = vpop.f32.mrf.mxu0
    %v3567 = vadd.f32 %v3158, %v3566
    %v3568 = vpop.f32.mrf.mxu0
    %v3569 = vadd.f32 %v3160, %v3568
    %3570 = vmatmul.bf16.gmra.mxu0 %v3422
    %v3571 = vpop.f32.mrf.mxu0
    %v3572 = vadd.f32 %v3163, %v3571
    %v3573 = vpop.f32.mrf.mxu0
    %v3574 = vadd.f32 %v3165, %v3573
    %3575 = vmatmul.bf16.gmra.mxu0 %v3423
    %v3576 = vpop.f32.mrf.mxu0
    %v3577 = vadd.f32 %v3168, %v3576
    %v3578 = vpop.f32.mrf.mxu0
    %v3579 = vadd.f32 %v3170, %v3578
    %3580 = vmatmul.bf16.gmra.mxu0 %v3424
    %v3581 = vpop.f32.mrf.mxu0
    %v3582 = vadd.f32 %v3173, %v3581
    %v3583 = vpop.f32.mrf.mxu0
    %v3584 = vadd.f32 %v3175, %v3583
    %3585 = vmatmul.bf16.gmra.mxu0 %v3425
    %v3586 = vpop.f32.mrf.mxu0
    %v3587 = vadd.f32 %v3178, %v3586
    %v3588 = vpop.f32.mrf.mxu0
    %v3589 = vadd.f32 %v3180, %v3588
    %3590 = vmatmul.bf16.gmra.mxu0 %v3426
    %v3591 = vpop.f32.mrf.mxu0
    %v3592 = vadd.f32 %v3183, %v3591
    %v3593 = vpop.f32.mrf.mxu0
    %v3594 = vadd.f32 %v3185, %v3593
    %3595 = vmatmul.bf16.gmra.mxu0 %v3427
    %v3596 = vpop.f32.mrf.mxu0
    %v3597 = vadd.f32 %v3188, %v3596
    %v3598 = vpop.f32.mrf.mxu0
    %v3599 = vadd.f32 %v3190, %v3598
    %3600 = vmatmul.bf16.gmra.mxu0 %v3428
    %v3601 = vpop.f32.mrf.mxu0
    %v3602 = vadd.f32 %v3193, %v3601
    %v3603 = vpop.f32.mrf.mxu0
    %v3604 = vadd.f32 %v3195, %v3603
    %3605 = vmatmul.bf16.gmra.mxu0 %v3429
    %v3606 = vpop.f32.mrf.mxu0
    %v3607 = vadd.f32 %v3198, %v3606
    %v3608 = vpop.f32.mrf.mxu0
    %v3609 = vadd.f32 %v3200, %v3608
    %3610 = vmatmul.bf16.gmra.mxu0 %v3430
    %v3611 = vpop.f32.mrf.mxu0
    %v3612 = vadd.f32 %v3203, %v3611
    %v3613 = vpop.f32.mrf.mxu0
    %v3614 = vadd.f32 %v3205, %v3613
    %3615 = vmatmul.bf16.gmra.mxu0 %v3431
    %v3616 = vpop.f32.mrf.mxu0
    %v3617 = vadd.f32 %v3208, %v3616
    %v3618 = vpop.f32.mrf.mxu0
    %v3619 = vadd.f32 %v3210, %v3618
    %3620 = vmatmul.bf16.gmra.mxu0 %v3432
    %v3621 = vpop.f32.mrf.mxu0
    %v3622 = vadd.f32 %v3213, %v3621
    %v3623 = vpop.f32.mrf.mxu0
    %v3624 = vadd.f32 %v3215, %v3623
    %3625 = vmatmul.bf16.gmra.mxu0 %v3433
    %v3626 = vpop.f32.mrf.mxu0
    %v3627 = vadd.f32 %v3218, %v3626
    %v3628 = vpop.f32.mrf.mxu0
    %v3629 = vadd.f32 %v3220, %v3628
    %3630 = vmatmul.bf16.gmra.mxu0 %v3434
    %v3631 = vpop.f32.mrf.mxu0
    %v3632 = vadd.f32 %v3223, %v3631
    %v3633 = vpop.f32.mrf.mxu0
    %v3634 = vadd.f32 %v3225, %v3633
    %3635 = vmatmul.bf16.gmra.mxu0 %v3435
    %v3636 = vpop.f32.mrf.mxu0
    %v3637 = vadd.f32 %v3228, %v3636
    %v3638 = vpop.f32.mrf.mxu0
    %v3639 = vadd.f32 %v3230, %v3638
    %3640 = vmatmul.bf16.gmra.mxu0 %v3436
    %v3641 = vpop.f32.mrf.mxu0
    %v3642 = vadd.f32 %v3233, %v3641
    %v3643 = vpop.f32.mrf.mxu0
    %v3644 = vadd.f32 %v3235, %v3643
    %3645 = vmatmul.bf16.gmra.mxu0 %v3437
    %v3646 = vpop.f32.mrf.mxu0
    %v3647 = vadd.f32 %v3238, %v3646
    %v3648 = vpop.f32.mrf.mxu0
    %v3649 = vadd.f32 %v3240, %v3648
    %3650 = vmatmul.bf16.gmra.mxu0 %v3438
    %v3651 = vpop.f32.mrf.mxu0
    %v3652 = vadd.f32 %v3243, %v3651
    %v3653 = vpop.f32.mrf.mxu0
    %v3654 = vadd.f32 %v3245, %v3653
    %3655 = vmatmul.bf16.gmra.mxu0 %v3439
    %v3656 = vpop.f32.mrf.mxu0
    %v3657 = vadd.f32 %v3248, %v3656
    %v3658 = vpop.f32.mrf.mxu0
    %v3659 = vadd.f32 %v3250, %v3658
    %3660 = vmatmul.bf16.gmra.mxu0 %v3440
    %v3661 = vpop.f32.mrf.mxu0
    %v3662 = vadd.f32 %v3253, %v3661
    %v3663 = vpop.f32.mrf.mxu0
    %v3664 = vadd.f32 %v3255, %v3663
    %3665 = vmatmul.bf16.gmra.mxu0 %v3441
    %v3666 = vpop.f32.mrf.mxu0
    %v3667 = vadd.f32 %v3258, %v3666
    %v3668 = vpop.f32.mrf.mxu0
    %v3669 = vadd.f32 %v3260, %v3668
    %3670 = vmatmul.bf16.gmra.mxu0 %v3442
    %v3671 = vpop.f32.mrf.mxu0
    %v3672 = vadd.f32 %v3263, %v3671
    %v3673 = vpop.f32.mrf.mxu0
    %v3674 = vadd.f32 %v3265, %v3673
    %3675 = vmatmul.bf16.gmra.mxu0 %v3443
    %v3676 = vpop.f32.mrf.mxu0
    %v3677 = vadd.f32 %v3268, %v3676
    %v3678 = vpop.f32.mrf.mxu0
    %v3679 = vadd.f32 %v3270, %v3678
    %3680 = vmatmul.bf16.gmra.mxu0 %v3444
    %v3681 = vpop.f32.mrf.mxu0
    %v3682 = vadd.f32 %v3273, %v3681
    %v3683 = vpop.f32.mrf.mxu0
    %v3684 = vadd.f32 %v3275, %v3683
    %3685 = vmatmul.bf16.gmra.mxu0 %v3445
    %v3686 = vpop.f32.mrf.mxu0
    %v3687 = vadd.f32 %v3278, %v3686
    %v3688 = vpop.f32.mrf.mxu0
    %v3689 = vadd.f32 %v3280, %v3688
    %3690 = vmatmul.bf16.gmra.mxu0 %v3446
    %v3691 = vpop.f32.mrf.mxu0
    %v3692 = vadd.f32 %v3283, %v3691
    %v3693 = vpop.f32.mrf.mxu0
    %v3694 = vadd.f32 %v3285, %v3693
    %3695 = vdwg.mxu0
    %v3696 = vld [vmem:[#allocation2] sm:$0xe]
    %v3697 = vld [vmem:[#allocation2 + $0xc] sm:$0xe]
    %v3698 = vld [vmem:[#allocation2 + $0x18] sm:$0xe]
    %v3699 = vld [vmem:[#allocation2 + $0x24] sm:$0xe]
    %v3700 = vld [vmem:[#allocation2 + $0x30] sm:$0xe]
    %v3701 = vld [vmem:[#allocation2 + $0x3c] sm:$0xe]
    %v3702 = vld [vmem:[#allocation2 + $0x48] sm:$0xe]
    %v3703 = vld [vmem:[#allocation2 + $0x54] sm:$0xe]
    %v3704 = vld [vmem:[#allocation2 + $0x60] sm:$0xe]
    %v3705 = vld [vmem:[#allocation2 + $0x6c] sm:$0xe]
    %v3706 = vld [vmem:[#allocation2 + $0x78] sm:$0xe]
    %v3707 = vld [vmem:[#allocation2 + $0x84] sm:$0xe]
    %v3708 = vld [vmem:[#allocation2 + $0x90] sm:$0xe]
    %v3709 = vld [vmem:[#allocation2 + $0x9c] sm:$0xe]
    %v3710 = vld [vmem:[#allocation2 + $0xa8] sm:$0xe]
    %v3711 = vld [vmem:[#allocation2 + $0xb4] sm:$0xe]
    %v3712 = vld [vmem:[#allocation2 + $0xd8] sm:$0xe]
    %v3713 = vld [vmem:[#allocation2 + $0xe4] sm:$0xe]
    %v3714 = vld [vmem:[#allocation2 + $0xf0] sm:$0xe]
    %v3715 = vld [vmem:[#allocation2 + $0xfc] sm:$0xe]
    %v3716 = vld [vmem:[#allocation2 + $0x108] sm:$0xe]
    %v3717 = vld [vmem:[#allocation2 + $0x114] sm:$0xe]
    %v3718 = vld [vmem:[#allocation2 + $0x120] sm:$0xe]
    %v3719 = vld [vmem:[#allocation2 + $0x12c] sm:$0xe]
    %v3720 = vld [vmem:[#allocation2 + $0x138] sm:$0xe]
    %v3721 = vld [vmem:[#allocation2 + $0x144] sm:$0xe]
    %v3722 = vld [vmem:[#allocation2 + $0x150] sm:$0xe]
    %v3723 = vld [vmem:[#allocation2 + $0x15c] sm:$0xe]
    %v3724 = vld [vmem:[#allocation2 + $0x168] sm:$0xe]
    %v3725 = vld [vmem:[#allocation2 + $0x174] sm:$0xe]
    %v3726 = vld [vmem:[#allocation2 + $0x180] sm:$0xe]
    %v3727 = vld [vmem:[#allocation2 + $0x18c] sm:$0xe]
    %vm3792 = vcmask 1042432
    %vm3793 = vcmask 1046532
    %vm3794 = vmor %vm3792, %vm3793
    %v3795 = vrot.slane %v3696, 5
    %v3796 = vrot.slane %v3795, 4
    %v3797 = vrot.slane %v2043, 5
    %v3798 = vsel %vm3794, %v3796, %v3797
    %v3799 = vrot.slane %v3797, 4
    %v3800 = vrot.slane %v2122, 5
    %v3801 = vsel %vm3794, %v3799, %v3800
    %v3802 = vrot.slane %v3697, 5
    %v3803 = vrot.slane %v3802, 4
    %v3804 = vrot.slane %v2045, 5
    %v3805 = vsel %vm3794, %v3803, %v3804
    %v3806 = vrot.slane %v3804, 4
    %v3807 = vrot.slane %v2123, 5
    %v3808 = vsel %vm3794, %v3806, %v3807
    %v3809 = vrot.slane %v3698, 5
    %v3810 = vrot.slane %v3809, 4
    %v3811 = vrot.slane %v2047, 5
    %v3812 = vsel %vm3794, %v3810, %v3811
    %v3813 = vrot.slane %v3811, 4
    %v3814 = vrot.slane %v2124, 5
    %v3815 = vsel %vm3794, %v3813, %v3814
    %v3816 = vrot.slane %v3699, 5
    %v3817 = vrot.slane %v3816, 4
    %v3818 = vrot.slane %v2049, 5
    %v3819 = vsel %vm3794, %v3817, %v3818
    %v3820 = vrot.slane %v3818, 4
    %v3821 = vrot.slane %v2125, 5
    %v3822 = vsel %vm3794, %v3820, %v3821
    %v3823 = vrot.slane %v3700, 5
    %v3824 = vrot.slane %v3823, 4
    %v3825 = vrot.slane %v2051, 5
    %v3826 = vsel %vm3794, %v3824, %v3825
    %v3827 = vrot.slane %v3825, 4
    %v3828 = vrot.slane %v2126, 5
    %v3829 = vsel %vm3794, %v3827, %v3828
    %v3830 = vrot.slane %v3701, 5
    %v3831 = vrot.slane %v3830, 4
    %v3832 = vrot.slane %v2053, 5
    %v3833 = vsel %vm3794, %v3831, %v3832
    %v3834 = vrot.slane %v3832, 4
    %v3835 = vrot.slane %v2127, 5
    %v3836 = vsel %vm3794, %v3834, %v3835
    %v3837 = vrot.slane %v3702, 5
    %v3838 = vrot.slane %v3837, 4
    %v3839 = vrot.slane %v2055, 5
    %v3840 = vsel %vm3794, %v3838, %v3839
    %v3841 = vrot.slane %v3839, 4
    %v3842 = vrot.slane %v2128, 5
    %v3843 = vsel %vm3794, %v3841, %v3842
    %v3844 = vrot.slane %v3703, 5
    %v3845 = vrot.slane %v3844, 4
    %v3846 = vrot.slane %v2057, 5
    %v3847 = vsel %vm3794, %v3845, %v3846
    %v3848 = vrot.slane %v3846, 4
    %v3849 = vrot.slane %v2129, 5
    %v3850 = vsel %vm3794, %v3848, %v3849
    %v3851 = vrot.slane %v3704, 5
    %v3852 = vrot.slane %v3851, 4
    %v3853 = vrot.slane %v2059, 5
    %v3854 = vsel %vm3794, %v3852, %v3853
    %v3855 = vrot.slane %v3853, 4
    %v3856 = vrot.slane %v2130, 5
    %v3857 = vsel %vm3794, %v3855, %v3856
    %v3858 = vrot.slane %v3705, 5
    %v3859 = vrot.slane %v3858, 4
    %v3860 = vrot.slane %v2061, 5
    %v3861 = vsel %vm3794, %v3859, %v3860
    %v3862 = vrot.slane %v3860, 4
    %v3863 = vrot.slane %v2131, 5
    %v3864 = vsel %vm3794, %v3862, %v3863
    %v3865 = vrot.slane %v3706, 5
    %v3866 = vrot.slane %v3865, 4
    %v3867 = vrot.slane %v2063, 5
    %v3868 = vsel %vm3794, %v3866, %v3867
    %v3869 = vrot.slane %v3867, 4
    %v3870 = vrot.slane %v2132, 5
    %v3871 = vsel %vm3794, %v3869, %v3870
    %v3872 = vrot.slane %v3707, 5
    %v3873 = vrot.slane %v3872, 4
    %v3874 = vrot.slane %v2065, 5
    %v3875 = vsel %vm3794, %v3873, %v3874
    %v3876 = vrot.slane %v3874, 4
    %v3877 = vrot.slane %v2133, 5
    %v3878 = vsel %vm3794, %v3876, %v3877
    %v3879 = vrot.slane %v3708, 5
    %v3880 = vrot.slane %v3879, 4
    %v3881 = vrot.slane %v2067, 5
    %v3882 = vsel %vm3794, %v3880, %v3881
    %v3883 = vrot.slane %v3881, 4
    %v3884 = vrot.slane %v2134, 5
    %v3885 = vsel %vm3794, %v3883, %v3884
    %v3886 = vrot.slane %v3709, 5
    %v3887 = vrot.slane %v3886, 4
    %v3888 = vrot.slane %v2069, 5
    %v3889 = vsel %vm3794, %v3887, %v3888
    %v3890 = vrot.slane %v3888, 4
    %v3891 = vrot.slane %v2135, 5
    %v3892 = vsel %vm3794, %v3890, %v3891
    %v3893 = vrot.slane %v3710, 5
    %v3894 = vrot.slane %v3893, 4
    %v3895 = vrot.slane %v2071, 5
    %v3896 = vsel %vm3794, %v3894, %v3895
    %v3897 = vrot.slane %v3895, 4
    %v3898 = vrot.slane %v2136, 5
    %v3899 = vsel %vm3794, %v3897, %v3898
    %v3900 = vrot.slane %v3711, 5
    %v3901 = vrot.slane %v3900, 4
    %v3902 = vrot.slane %v2073, 5
    %v3903 = vsel %vm3794, %v3901, %v3902
    %v3904 = vrot.slane %v3902, 4
    %v3905 = vrot.slane %v2137, 5
    %v3906 = vsel %vm3794, %v3904, %v3905
    %v3907 = vrot.slane %v3712, 5
    %v3908 = vrot.slane %v3907, 4
    %v3909 = vrot.slane %v2075, 5
    %v3910 = vsel %vm3794, %v3908, %v3909
    %v3911 = vrot.slane %v3909, 4
    %v3912 = vrot.slane %v2138, 5
    %v3913 = vsel %vm3794, %v3911, %v3912
    %v3914 = vrot.slane %v3713, 5
    %v3915 = vrot.slane %v3914, 4
    %v3916 = vrot.slane %v2077, 5
    %v3917 = vsel %vm3794, %v3915, %v3916
    %v3918 = vrot.slane %v3916, 4
    %v3919 = vrot.slane %v2139, 5
    %v3920 = vsel %vm3794, %v3918, %v3919
    %v3921 = vrot.slane %v3714, 5
    %v3922 = vrot.slane %v3921, 4
    %v3923 = vrot.slane %v2079, 5
    %v3924 = vsel %vm3794, %v3922, %v3923
    %v3925 = vrot.slane %v3923, 4
    %v3926 = vrot.slane %v2140, 5
    %v3927 = vsel %vm3794, %v3925, %v3926
    %v3928 = vrot.slane %v3715, 5
    %v3929 = vrot.slane %v3928, 4
    %v3930 = vrot.slane %v2081, 5
    %v3931 = vsel %vm3794, %v3929, %v3930
    %v3932 = vrot.slane %v3930, 4
    %v3933 = vrot.slane %v2141, 5
    %v3934 = vsel %vm3794, %v3932, %v3933
    %v3935 = vrot.slane %v3716, 5
    %v3936 = vrot.slane %v3935, 4
    %v3937 = vrot.slane %v2083, 5
    %v3938 = vsel %vm3794, %v3936, %v3937
    %v3939 = vrot.slane %v3937, 4
    %v3940 = vrot.slane %v2142, 5
    %v3941 = vsel %vm3794, %v3939, %v3940
    %v3942 = vrot.slane %v3717, 5
    %v3943 = vrot.slane %v3942, 4
    %v3944 = vrot.slane %v2085, 5
    %v3945 = vsel %vm3794, %v3943, %v3944
    %v3946 = vrot.slane %v3944, 4
    %v3947 = vrot.slane %v2143, 5
    %v3948 = vsel %vm3794, %v3946, %v3947
    %v3949 = vrot.slane %v3718, 5
    %v3950 = vrot.slane %v3949, 4
    %v3951 = vrot.slane %v2087, 5
    %v3952 = vsel %vm3794, %v3950, %v3951
    %v3953 = vrot.slane %v3951, 4
    %v3954 = vrot.slane %v2144, 5
    %v3955 = vsel %vm3794, %v3953, %v3954
    %v3956 = vrot.slane %v3719, 5
    %v3957 = vrot.slane %v3956, 4
    %v3958 = vrot.slane %v2089, 5
    %v3959 = vsel %vm3794, %v3957, %v3958
    %v3960 = vrot.slane %v3958, 4
    %v3961 = vrot.slane %v2145, 5
    %v3962 = vsel %vm3794, %v3960, %v3961
    %v3963 = vrot.slane %v3720, 5
    %v3964 = vrot.slane %v3963, 4
    %v3965 = vrot.slane %v2091, 5
    %v3966 = vsel %vm3794, %v3964, %v3965
    %v3967 = vrot.slane %v3965, 4
    %v3968 = vrot.slane %v2146, 5
    %v3969 = vsel %vm3794, %v3967, %v3968
    %v3970 = vrot.slane %v3721, 5
    %v3971 = vrot.slane %v3970, 4
    %v3972 = vrot.slane %v2093, 5
    %v3973 = vsel %vm3794, %v3971, %v3972
    %v3974 = vrot.slane %v3972, 4
    %v3975 = vrot.slane %v2147, 5
    %v3976 = vsel %vm3794, %v3974, %v3975
    %v3977 = vrot.slane %v3722, 5
    %v3978 = vrot.slane %v3977, 4
    %v3979 = vrot.slane %v2095, 5
    %v3980 = vsel %vm3794, %v3978, %v3979
    %v3981 = vrot.slane %v3979, 4
    %v3982 = vrot.slane %v2148, 5
    %v3983 = vsel %vm3794, %v3981, %v3982
    %v3984 = vrot.slane %v3723, 5
    %v3985 = vrot.slane %v3984, 4
    %v3986 = vrot.slane %v2097, 5
    %v3987 = vsel %vm3794, %v3985, %v3986
    %v3988 = vrot.slane %v3986, 4
    %v3989 = vrot.slane %v2149, 5
    %v3990 = vsel %vm3794, %v3988, %v3989
    %v3991 = vrot.slane %v3724, 5
    %v3992 = vrot.slane %v3991, 4
    %v3993 = vrot.slane %v2099, 5
    %v3994 = vsel %vm3794, %v3992, %v3993
    %v3995 = vrot.slane %v3993, 4
    %v3996 = vrot.slane %v2150, 5
    %v3997 = vsel %vm3794, %v3995, %v3996
    %v3998 = vrot.slane %v3725, 5
    %v3999 = vrot.slane %v3998, 4
    %v4000 = vrot.slane %v2101, 5
    %v4001 = vsel %vm3794, %v3999, %v4000
    %v4002 = vrot.slane %v4000, 4
    %v4003 = vrot.slane %v2151, 5
    %v4004 = vsel %vm3794, %v4002, %v4003
    %v4005 = vrot.slane %v3726, 5
    %v4006 = vrot.slane %v4005, 4
    %v4007 = vrot.slane %v2103, 5
    %v4008 = vsel %vm3794, %v4006, %v4007
    %v4009 = vrot.slane %v4007, 4
    %v4010 = vrot.slane %v2152, 5
    %v4011 = vsel %vm3794, %v4009, %v4010
    %v4012 = vrot.slane %v3727, 5
    %v4013 = vrot.slane %v4012, 4
    %v4014 = vrot.slane %v2105, 5
    %v4015 = vsel %vm3794, %v4013, %v4014
    %v4016 = vrot.slane %v4014, 4
    %v4017 = vrot.slane %v2153, 5
    %v4018 = vsel %vm3794, %v4016, %v4017
    %s4019 = scalar_lea.vmem %s4, 128
    %v4020 = vld [vmem:[%s4019] sm:$0xf]
    %v4021 = vld [vmem:[%s4019 + $0x4] sm:$0xf]
    %v4022 = vld [vmem:[%s4019 + $0x8] sm:$0xf]
    %v4023 = vld [vmem:[%s4019 + $0xc] sm:$0xf]
    %v4024 = vld [vmem:[%s4019 + $0x10] sm:$0xf]
    %v4025 = vld [vmem:[%s4019 + $0x14] sm:$0xf]
    %v4026 = vld [vmem:[%s4019 + $0x18] sm:$0xf]
    %v4027 = vld [vmem:[%s4019 + $0x1c] sm:$0xf]
    %v4028 = vld [vmem:[%s4019 + $0x20] sm:$0xf]
    %v4029 = vld [vmem:[%s4019 + $0x24] sm:$0xf]
    %v4030 = vld [vmem:[%s4019 + $0x28] sm:$0xf]
    %v4031 = vld [vmem:[%s4019 + $0x2c] sm:$0xf]
    %v4032 = vld [vmem:[%s4019 + $0x30] sm:$0xf]
    %v4033 = vld [vmem:[%s4019 + $0x34] sm:$0xf]
    %v4034 = vld [vmem:[%s4019 + $0x38] sm:$0xf]
    %v4035 = vld [vmem:[%s4019 + $0x3c] sm:$0xf]
    %v4036 = vunpack.c.l.b16 %v3798
    %v4037 = vunpack.c.l.b16 %v3801
    %v4038 = vunpack.c.l.b16 %v3805
    %v4039 = vunpack.c.l.b16 %v3808
    %v4040 = vunpack.c.l.b16 %v3812
    %v4041 = vunpack.c.l.b16 %v3815
    %v4042 = vunpack.c.l.b16 %v3819
    %v4043 = vunpack.c.l.b16 %v3822
    %v4044 = vunpack.c.l.b16 %v3826
    %v4045 = vunpack.c.l.b16 %v3829
    %v4046 = vunpack.c.l.b16 %v3833
    %v4047 = vunpack.c.l.b16 %v3836
    %v4048 = vunpack.c.l.b16 %v3840
    %v4049 = vunpack.c.l.b16 %v3843
    %v4050 = vunpack.c.l.b16 %v3847
    %v4051 = vunpack.c.l.b16 %v3850
    %v4052 = vunpack.c.l.b16 %v3854
    %v4053 = vunpack.c.l.b16 %v3857
    %v4054 = vunpack.c.l.b16 %v3861
    %v4055 = vunpack.c.l.b16 %v3864
    %v4056 = vunpack.c.l.b16 %v3868
    %v4057 = vunpack.c.l.b16 %v3871
    %v4058 = vunpack.c.l.b16 %v3875
    %v4059 = vunpack.c.l.b16 %v3878
    %v4060 = vunpack.c.l.b16 %v3882
    %v4061 = vunpack.c.l.b16 %v3885
    %v4062 = vunpack.c.l.b16 %v3889
    %v4063 = vunpack.c.l.b16 %v3892
    %v4064 = vunpack.c.l.b16 %v3896
    %v4065 = vunpack.c.l.b16 %v3899
    %v4066 = vunpack.c.l.b16 %v3903
    %v4067 = vunpack.c.l.b16 %v3906
    %v4068 = vunpack.c.l.b16 %v3910
    %v4069 = vunpack.c.l.b16 %v3913
    %v4070 = vunpack.c.l.b16 %v3917
    %v4071 = vunpack.c.l.b16 %v3920
    %v4072 = vunpack.c.l.b16 %v3924
    %v4073 = vunpack.c.l.b16 %v3927
    %v4074 = vunpack.c.l.b16 %v3931
    %v4075 = vunpack.c.l.b16 %v3934
    %v4076 = vunpack.c.l.b16 %v3938
    %v4077 = vunpack.c.l.b16 %v3941
    %v4078 = vunpack.c.l.b16 %v3945
    %v4079 = vunpack.c.l.b16 %v3948
    %v4080 = vunpack.c.l.b16 %v3952
    %v4081 = vunpack.c.l.b16 %v3955
    %v4082 = vunpack.c.l.b16 %v3959
    %v4083 = vunpack.c.l.b16 %v3962
    %v4084 = vunpack.c.l.b16 %v3966
    %v4085 = vunpack.c.l.b16 %v3969
    %v4086 = vunpack.c.l.b16 %v3973
    %v4087 = vunpack.c.l.b16 %v3976
    %v4088 = vunpack.c.l.b16 %v3980
    %v4089 = vunpack.c.l.b16 %v3983
    %v4090 = vunpack.c.l.b16 %v3987
    %v4091 = vunpack.c.l.b16 %v3990
    %v4092 = vunpack.c.l.b16 %v3994
    %v4093 = vunpack.c.l.b16 %v3997
    %v4094 = vunpack.c.l.b16 %v4001
    %v4095 = vunpack.c.l.b16 %v4004
    %v4096 = vunpack.c.l.b16 %v4008
    %v4097 = vunpack.c.l.b16 %v4011
    %v4098 = vunpack.c.l.b16 %v4015
    %v4099 = vunpack.c.l.b16 %v4018
    %v4100 = vpack.c.b16 %v4037, %v4036
    %v4101 = vpack.c.b16 %v4039, %v4038
    %v4102 = vpack.c.b16 %v4041, %v4040
    %v4103 = vpack.c.b16 %v4043, %v4042
    %v4104 = vpack.c.b16 %v4045, %v4044
    %v4105 = vpack.c.b16 %v4047, %v4046
    %v4106 = vpack.c.b16 %v4049, %v4048
    %v4107 = vpack.c.b16 %v4051, %v4050
    %v4108 = vpack.c.b16 %v4053, %v4052
    %v4109 = vpack.c.b16 %v4055, %v4054
    %v4110 = vpack.c.b16 %v4057, %v4056
    %v4111 = vpack.c.b16 %v4059, %v4058
    %v4112 = vpack.c.b16 %v4061, %v4060
    %v4113 = vpack.c.b16 %v4063, %v4062
    %v4114 = vpack.c.b16 %v4065, %v4064
    %v4115 = vpack.c.b16 %v4067, %v4066
    %v4116 = vpack.c.b16 %v4069, %v4068
    %v4117 = vpack.c.b16 %v4071, %v4070
    %v4118 = vpack.c.b16 %v4073, %v4072
    %v4119 = vpack.c.b16 %v4075, %v4074
    %v4120 = vpack.c.b16 %v4077, %v4076
    %v4121 = vpack.c.b16 %v4079, %v4078
    %v4122 = vpack.c.b16 %v4081, %v4080
    %v4123 = vpack.c.b16 %v4083, %v4082
    %v4124 = vpack.c.b16 %v4085, %v4084
    %v4125 = vpack.c.b16 %v4087, %v4086
    %v4126 = vpack.c.b16 %v4089, %v4088
    %v4127 = vpack.c.b16 %v4091, %v4090
    %v4128 = vpack.c.b16 %v4093, %v4092
    %v4129 = vpack.c.b16 %v4095, %v4094
    %v4130 = vpack.c.b16 %v4097, %v4096
    %v4131 = vpack.c.b16 %v4099, %v4098
    %v4180 = vunpack.c.l.b16 %v4020
    %v4181 = vunpack.c.l.b16 %v4021
    %v4182 = vunpack.c.l.b16 %v4022
    %v4183 = vunpack.c.l.b16 %v4023
    %v4184 = vunpack.c.l.b16 %v4024
    %v4185 = vunpack.c.l.b16 %v4025
    %v4186 = vunpack.c.l.b16 %v4026
    %v4187 = vunpack.c.l.b16 %v4027
    %v4188 = vunpack.c.l.b16 %v4028
    %v4189 = vunpack.c.l.b16 %v4029
    %v4190 = vunpack.c.l.b16 %v4030
    %v4191 = vunpack.c.l.b16 %v4031
    %v4192 = vunpack.c.l.b16 %v4032
    %v4193 = vunpack.c.l.b16 %v4033
    %v4194 = vunpack.c.l.b16 %v4034
    %v4195 = vunpack.c.l.b16 %v4035
    %v4196 = vpack.c.b16 %v4181, %v4180
    %v4197 = vpack.c.b16 %v4183, %v4182
    %v4198 = vpack.c.b16 %v4185, %v4184
    %v4199 = vpack.c.b16 %v4187, %v4186
    %v4200 = vpack.c.b16 %v4189, %v4188
    %v4201 = vpack.c.b16 %v4191, %v4190
    %v4202 = vpack.c.b16 %v4193, %v4192
    %v4203 = vpack.c.b16 %v4195, %v4194
    %4212 = vmatpush.bf16.msra.mxu0 %v4203
    %4213 = vmatpush.bf16.msra.mxu0 %v4202
    %4214 = vmatpush.bf16.msra.mxu0 %v4201
    %4215 = vmatpush.bf16.msra.mxu0 %v4200
    %4216 = vmatpush.bf16.msra.mxu0 %v4199
    %4217 = vmatpush.bf16.msra.mxu0 %v4198
    %4218 = vmatpush.bf16.msra.mxu0 %v4197
    %4219 = vmatpush.bf16.msra.mxu0 %v4196
    %4220 = vmatmul.bf16.gmra.mxu0 %v4100
    %v4221 = vpop.f32.mrf.mxu0
    %v4222 = vadd.f32 0.0, %v4221
    %v4223 = vpop.f32.mrf.mxu0
    %v4224 = vadd.f32 0.0, %v4223
    %4225 = vmatmul.bf16.gmra.mxu0 %v4101
    %v4226 = vpop.f32.mrf.mxu0
    %v4227 = vadd.f32 0.0, %v4226
    %v4228 = vpop.f32.mrf.mxu0
    %v4229 = vadd.f32 0.0, %v4228
    %4230 = vmatmul.bf16.gmra.mxu0 %v4102
    %v4231 = vpop.f32.mrf.mxu0
    %v4232 = vadd.f32 0.0, %v4231
    %v4233 = vpop.f32.mrf.mxu0
    %v4234 = vadd.f32 0.0, %v4233
    %4235 = vmatmul.bf16.gmra.mxu0 %v4103
    %v4236 = vpop.f32.mrf.mxu0
    %v4237 = vadd.f32 0.0, %v4236
    %v4238 = vpop.f32.mrf.mxu0
    %v4239 = vadd.f32 0.0, %v4238
    %4240 = vmatmul.bf16.gmra.mxu0 %v4104
    %v4241 = vpop.f32.mrf.mxu0
    %v4242 = vadd.f32 0.0, %v4241
    %v4243 = vpop.f32.mrf.mxu0
    %v4244 = vadd.f32 0.0, %v4243
    %4245 = vmatmul.bf16.gmra.mxu0 %v4105
    %v4246 = vpop.f32.mrf.mxu0
    %v4247 = vadd.f32 0.0, %v4246
    %v4248 = vpop.f32.mrf.mxu0
    %v4249 = vadd.f32 0.0, %v4248
    %4250 = vmatmul.bf16.gmra.mxu0 %v4106
    %v4251 = vpop.f32.mrf.mxu0
    %v4252 = vadd.f32 0.0, %v4251
    %v4253 = vpop.f32.mrf.mxu0
    %v4254 = vadd.f32 0.0, %v4253
    %4255 = vmatmul.bf16.gmra.mxu0 %v4107
    %v4256 = vpop.f32.mrf.mxu0
    %v4257 = vadd.f32 0.0, %v4256
    %v4258 = vpop.f32.mrf.mxu0
    %v4259 = vadd.f32 0.0, %v4258
    %4260 = vmatmul.bf16.gmra.mxu0 %v4108
    %v4261 = vpop.f32.mrf.mxu0
    %v4262 = vadd.f32 0.0, %v4261
    %v4263 = vpop.f32.mrf.mxu0
    %v4264 = vadd.f32 0.0, %v4263
    %4265 = vmatmul.bf16.gmra.mxu0 %v4109
    %v4266 = vpop.f32.mrf.mxu0
    %v4267 = vadd.f32 0.0, %v4266
    %v4268 = vpop.f32.mrf.mxu0
    %v4269 = vadd.f32 0.0, %v4268
    %4270 = vmatmul.bf16.gmra.mxu0 %v4110
    %v4271 = vpop.f32.mrf.mxu0
    %v4272 = vadd.f32 0.0, %v4271
    %v4273 = vpop.f32.mrf.mxu0
    %v4274 = vadd.f32 0.0, %v4273
    %4275 = vmatmul.bf16.gmra.mxu0 %v4111
    %v4276 = vpop.f32.mrf.mxu0
    %v4277 = vadd.f32 0.0, %v4276
    %v4278 = vpop.f32.mrf.mxu0
    %v4279 = vadd.f32 0.0, %v4278
    %4280 = vmatmul.bf16.gmra.mxu0 %v4112
    %v4281 = vpop.f32.mrf.mxu0
    %v4282 = vadd.f32 0.0, %v4281
    %v4283 = vpop.f32.mrf.mxu0
    %v4284 = vadd.f32 0.0, %v4283
    %4285 = vmatmul.bf16.gmra.mxu0 %v4113
    %v4286 = vpop.f32.mrf.mxu0
    %v4287 = vadd.f32 0.0, %v4286
    %v4288 = vpop.f32.mrf.mxu0
    %v4289 = vadd.f32 0.0, %v4288
    %4290 = vmatmul.bf16.gmra.mxu0 %v4114
    %v4291 = vpop.f32.mrf.mxu0
    %v4292 = vadd.f32 0.0, %v4291
    %v4293 = vpop.f32.mrf.mxu0
    %v4294 = vadd.f32 0.0, %v4293
    %4295 = vmatmul.bf16.gmra.mxu0 %v4115
    %v4296 = vpop.f32.mrf.mxu0
    %v4297 = vadd.f32 0.0, %v4296
    %v4298 = vpop.f32.mrf.mxu0
    %v4299 = vadd.f32 0.0, %v4298
    %4300 = vmatmul.bf16.gmra.mxu0 %v4116
    %v4301 = vpop.f32.mrf.mxu0
    %v4302 = vadd.f32 0.0, %v4301
    %v4303 = vpop.f32.mrf.mxu0
    %v4304 = vadd.f32 0.0, %v4303
    %4305 = vmatmul.bf16.gmra.mxu0 %v4117
    %v4306 = vpop.f32.mrf.mxu0
    %v4307 = vadd.f32 0.0, %v4306
    %v4308 = vpop.f32.mrf.mxu0
    %v4309 = vadd.f32 0.0, %v4308
    %4310 = vmatmul.bf16.gmra.mxu0 %v4118
    %v4311 = vpop.f32.mrf.mxu0
    %v4312 = vadd.f32 0.0, %v4311
    %v4313 = vpop.f32.mrf.mxu0
    %v4314 = vadd.f32 0.0, %v4313
    %4315 = vmatmul.bf16.gmra.mxu0 %v4119
    %v4316 = vpop.f32.mrf.mxu0
    %v4317 = vadd.f32 0.0, %v4316
    %v4318 = vpop.f32.mrf.mxu0
    %v4319 = vadd.f32 0.0, %v4318
    %4320 = vmatmul.bf16.gmra.mxu0 %v4120
    %v4321 = vpop.f32.mrf.mxu0
    %v4322 = vadd.f32 0.0, %v4321
    %v4323 = vpop.f32.mrf.mxu0
    %v4324 = vadd.f32 0.0, %v4323
    %4325 = vmatmul.bf16.gmra.mxu0 %v4121
    %v4326 = vpop.f32.mrf.mxu0
    %v4327 = vadd.f32 0.0, %v4326
    %v4328 = vpop.f32.mrf.mxu0
    %v4329 = vadd.f32 0.0, %v4328
    %4330 = vmatmul.bf16.gmra.mxu0 %v4122
    %v4331 = vpop.f32.mrf.mxu0
    %v4332 = vadd.f32 0.0, %v4331
    %v4333 = vpop.f32.mrf.mxu0
    %v4334 = vadd.f32 0.0, %v4333
    %4335 = vmatmul.bf16.gmra.mxu0 %v4123
    %v4336 = vpop.f32.mrf.mxu0
    %v4337 = vadd.f32 0.0, %v4336
    %v4338 = vpop.f32.mrf.mxu0
    %v4339 = vadd.f32 0.0, %v4338
    %4340 = vmatmul.bf16.gmra.mxu0 %v4124
    %v4341 = vpop.f32.mrf.mxu0
    %v4342 = vadd.f32 0.0, %v4341
    %v4343 = vpop.f32.mrf.mxu0
    %v4344 = vadd.f32 0.0, %v4343
    %4345 = vmatmul.bf16.gmra.mxu0 %v4125
    %v4346 = vpop.f32.mrf.mxu0
    %v4347 = vadd.f32 0.0, %v4346
    %v4348 = vpop.f32.mrf.mxu0
    %v4349 = vadd.f32 0.0, %v4348
    %4350 = vmatmul.bf16.gmra.mxu0 %v4126
    %v4351 = vpop.f32.mrf.mxu0
    %v4352 = vadd.f32 0.0, %v4351
    %v4353 = vpop.f32.mrf.mxu0
    %v4354 = vadd.f32 0.0, %v4353
    %4355 = vmatmul.bf16.gmra.mxu0 %v4127
    %v4356 = vpop.f32.mrf.mxu0
    %v4357 = vadd.f32 0.0, %v4356
    %v4358 = vpop.f32.mrf.mxu0
    %v4359 = vadd.f32 0.0, %v4358
    %4360 = vmatmul.bf16.gmra.mxu0 %v4128
    %v4361 = vpop.f32.mrf.mxu0
    %v4362 = vadd.f32 0.0, %v4361
    %v4363 = vpop.f32.mrf.mxu0
    %v4364 = vadd.f32 0.0, %v4363
    %4365 = vmatmul.bf16.gmra.mxu0 %v4129
    %v4366 = vpop.f32.mrf.mxu0
    %v4367 = vadd.f32 0.0, %v4366
    %v4368 = vpop.f32.mrf.mxu0
    %v4369 = vadd.f32 0.0, %v4368
    %4370 = vmatmul.bf16.gmra.mxu0 %v4130
    %v4371 = vpop.f32.mrf.mxu0
    %v4372 = vadd.f32 0.0, %v4371
    %v4373 = vpop.f32.mrf.mxu0
    %v4374 = vadd.f32 0.0, %v4373
    %4375 = vmatmul.bf16.gmra.mxu0 %v4131
    %v4376 = vpop.f32.mrf.mxu0
    %v4377 = vadd.f32 0.0, %v4376
    %v4378 = vpop.f32.mrf.mxu0
    %v4379 = vadd.f32 0.0, %v4378
    %4380 = vdwg.mxu0
    %v4381 = vadd.f32 %v3537, %v4222
    %v4382 = vadd.f32 %v3539, %v4224
    %v4383 = vadd.f32 %v3542, %v4227
    %v4384 = vadd.f32 %v3544, %v4229
    %v4385 = vadd.f32 %v3547, %v4232
    %v4386 = vadd.f32 %v3549, %v4234
    %v4387 = vadd.f32 %v3552, %v4237
    %v4388 = vadd.f32 %v3554, %v4239
    %v4389 = vadd.f32 %v3557, %v4242
    %v4390 = vadd.f32 %v3559, %v4244
    %v4391 = vadd.f32 %v3562, %v4247
    %v4392 = vadd.f32 %v3564, %v4249
    %v4393 = vadd.f32 %v3567, %v4252
    %v4394 = vadd.f32 %v3569, %v4254
    %v4395 = vadd.f32 %v3572, %v4257
    %v4396 = vadd.f32 %v3574, %v4259
    %v4397 = vadd.f32 %v3577, %v4262
    %v4398 = vadd.f32 %v3579, %v4264
    %v4399 = vadd.f32 %v3582, %v4267
    %v4400 = vadd.f32 %v3584, %v4269
    %v4401 = vadd.f32 %v3587, %v4272
    %v4402 = vadd.f32 %v3589, %v4274
    %v4403 = vadd.f32 %v3592, %v4277
    %v4404 = vadd.f32 %v3594, %v4279
    %v4405 = vadd.f32 %v3597, %v4282
    %v4406 = vadd.f32 %v3599, %v4284
    %v4407 = vadd.f32 %v3602, %v4287
    %v4408 = vadd.f32 %v3604, %v4289
    %v4409 = vadd.f32 %v3607, %v4292
    %v4410 = vadd.f32 %v3609, %v4294
    %v4411 = vadd.f32 %v3612, %v4297
    %v4412 = vadd.f32 %v3614, %v4299
    %v4413 = vadd.f32 %v3617, %v4302
    %v4414 = vadd.f32 %v3619, %v4304
    %v4415 = vadd.f32 %v3622, %v4307
    %v4416 = vadd.f32 %v3624, %v4309
    %v4417 = vadd.f32 %v3627, %v4312
    %v4418 = vadd.f32 %v3629, %v4314
    %v4419 = vadd.f32 %v3632, %v4317
    %v4420 = vadd.f32 %v3634, %v4319
    %v4421 = vadd.f32 %v3637, %v4322
    %v4422 = vadd.f32 %v3639, %v4324
    %v4423 = vadd.f32 %v3642, %v4327
    %v4424 = vadd.f32 %v3644, %v4329
    %v4425 = vadd.f32 %v3647, %v4332
    %v4426 = vadd.f32 %v3649, %v4334
    %v4427 = vadd.f32 %v3652, %v4337
    %v4428 = vadd.f32 %v3654, %v4339
    %v4429 = vadd.f32 %v3657, %v4342
    %v4430 = vadd.f32 %v3659, %v4344
    %v4431 = vadd.f32 %v3662, %v4347
    %v4432 = vadd.f32 %v3664, %v4349
    %v4433 = vadd.f32 %v3667, %v4352
    %v4434 = vadd.f32 %v3669, %v4354
    %v4435 = vadd.f32 %v3672, %v4357
    %v4436 = vadd.f32 %v3674, %v4359
    %v4437 = vadd.f32 %v3677, %v4362
    %v4438 = vadd.f32 %v3679, %v4364
    %v4439 = vadd.f32 %v3682, %v4367
    %v4440 = vadd.f32 %v3684, %v4369
    %v4441 = vadd.f32 %v3687, %v4372
    %v4442 = vadd.f32 %v3689, %v4374
    %v4443 = vadd.f32 %v3692, %v4377
    %v4444 = vadd.f32 %v3694, %v4379
    %4445 = vst [vmem:[#allocation3] sm:$0xff] %v4381
    %4446 = vst [vmem:[#allocation3 + $0x8] sm:$0xff] %v4382
    %4447 = vst [vmem:[#allocation3 + $0x10] sm:$0xff] %v4383
    %4448 = vst [vmem:[#allocation3 + $0x18] sm:$0xff] %v4384
    %4449 = vst [vmem:[#allocation3 + $0x20] sm:$0xff] %v4385
    %4450 = vst [vmem:[#allocation3 + $0x28] sm:$0xff] %v4386
    %4451 = vst [vmem:[#allocation3 + $0x30] sm:$0xff] %v4387
    %4452 = vst [vmem:[#allocation3 + $0x38] sm:$0xff] %v4388
    %4453 = vst [vmem:[#allocation3 + $0x40] sm:$0xff] %v4389
    %4454 = vst [vmem:[#allocation3 + $0x48] sm:$0xff] %v4390
    %4455 = vst [vmem:[#allocation3 + $0x50] sm:$0xff] %v4391
    %4456 = vst [vmem:[#allocation3 + $0x58] sm:$0xff] %v4392
    %4457 = vst [vmem:[#allocation3 + $0x60] sm:$0xff] %v4393
    %4458 = vst [vmem:[#allocation3 + $0x68] sm:$0xff] %v4394
    %4459 = vst [vmem:[#allocation3 + $0x70] sm:$0xff] %v4395
    %4460 = vst [vmem:[#allocation3 + $0x78] sm:$0xff] %v4396
    %4461 = vst [vmem:[#allocation3 + $0x80] sm:$0xff] %v4397
    %4462 = vst [vmem:[#allocation3 + $0x88] sm:$0xff] %v4398
    %4463 = vst [vmem:[#allocation3 + $0x90] sm:$0xff] %v4399
    %4464 = vst [vmem:[#allocation3 + $0x98] sm:$0xff] %v4400
    %4465 = vst [vmem:[#allocation3 + $0xa0] sm:$0xff] %v4401
    %4466 = vst [vmem:[#allocation3 + $0xa8] sm:$0xff] %v4402
    %4467 = vst [vmem:[#allocation3 + $0xb0] sm:$0xff] %v4403
    %4468 = vst [vmem:[#allocation3 + $0xb8] sm:$0xff] %v4404
    %4469 = vst [vmem:[#allocation3 + $0xc0] sm:$0xff] %v4405
    %4470 = vst [vmem:[#allocation3 + $0xc8] sm:$0xff] %v4406
    %4471 = vst [vmem:[#allocation3 + $0xd0] sm:$0xff] %v4407
    %4472 = vst [vmem:[#allocation3 + $0xd8] sm:$0xff] %v4408
    %4473 = vst [vmem:[#allocation3 + $0xe0] sm:$0xff] %v4409
    %4474 = vst [vmem:[#allocation3 + $0xe8] sm:$0xff] %v4410
    %4475 = vst [vmem:[#allocation3 + $0xf0] sm:$0xff] %v4411
    %4476 = vst [vmem:[#allocation3 + $0xf8] sm:$0xff] %v4412
    %4477 = vst [vmem:[#allocation3 + $0x100] sm:$0xff] %v4413
    %4478 = vst [vmem:[#allocation3 + $0x108] sm:$0xff] %v4414
    %4479 = vst [vmem:[#allocation3 + $0x110] sm:$0xff] %v4415
    %4480 = vst [vmem:[#allocation3 + $0x118] sm:$0xff] %v4416
    %4481 = vst [vmem:[#allocation3 + $0x120] sm:$0xff] %v4417
    %4482 = vst [vmem:[#allocation3 + $0x128] sm:$0xff] %v4418
    %4483 = vst [vmem:[#allocation3 + $0x130] sm:$0xff] %v4419
    %4484 = vst [vmem:[#allocation3 + $0x138] sm:$0xff] %v4420
    %4485 = vst [vmem:[#allocation3 + $0x140] sm:$0xff] %v4421
    %4486 = vst [vmem:[#allocation3 + $0x148] sm:$0xff] %v4422
    %4487 = vst [vmem:[#allocation3 + $0x150] sm:$0xff] %v4423
    %4488 = vst [vmem:[#allocation3 + $0x158] sm:$0xff] %v4424
    %4489 = vst [vmem:[#allocation3 + $0x160] sm:$0xff] %v4425
    %4490 = vst [vmem:[#allocation3 + $0x168] sm:$0xff] %v4426
    %4491 = vst [vmem:[#allocation3 + $0x170] sm:$0xff] %v4427
    %4492 = vst [vmem:[#allocation3 + $0x178] sm:$0xff] %v4428
    %4493 = vst [vmem:[#allocation3 + $0x180] sm:$0xff] %v4429
    %4494 = vst [vmem:[#allocation3 + $0x188] sm:$0xff] %v4430
    %4495 = vst [vmem:[#allocation3 + $0x190] sm:$0xff] %v4431
    %4496 = vst [vmem:[#allocation3 + $0x198] sm:$0xff] %v4432
    %4497 = vst [vmem:[#allocation3 + $0x1a0] sm:$0xff] %v4433
    %4498 = vst [vmem:[#allocation3 + $0x1a8] sm:$0xff] %v4434
    %4499 = vst [vmem:[#allocation3 + $0x1b0] sm:$0xff] %v4435
    %4500 = vst [vmem:[#allocation3 + $0x1b8] sm:$0xff] %v4436
    %4501 = vst [vmem:[#allocation3 + $0x1c0] sm:$0xff] %v4437
    %4502 = vst [vmem:[#allocation3 + $0x1c8] sm:$0xff] %v4438
    %4503 = vst [vmem:[#allocation3 + $0x1d0] sm:$0xff] %v4439
    %4504 = vst [vmem:[#allocation3 + $0x1d8] sm:$0xff] %v4440
    %4505 = vst [vmem:[#allocation3 + $0x1e0] sm:$0xff] %v4441
    %4506 = vst [vmem:[#allocation3 + $0x1e8] sm:$0xff] %v4442
    %4507 = vst [vmem:[#allocation3 + $0x1f0] sm:$0xff] %v4443
    %4508 = vst [vmem:[#allocation3 + $0x1f8] sm:$0xff] %v4444
    %v4509 = vld [vmem:[%s1812] sm:$0xf]
    %v4510 = vld [vmem:[%s1812 + $0x4] sm:$0xf]
    %v4511 = vld [vmem:[%s1812 + $0xc] sm:$0xf]
    %v4512 = vld [vmem:[%s1812 + $0x10] sm:$0xf]
    %v4513 = vld [vmem:[%s1812 + $0x18] sm:$0xf]
    %v4514 = vld [vmem:[%s1812 + $0x1c] sm:$0xf]
    %v4515 = vld [vmem:[%s1812 + $0x24] sm:$0xf]
    %v4516 = vld [vmem:[%s1812 + $0x28] sm:$0xf]
    %v4517 = vld [vmem:[%s1812 + $0x30] sm:$0xf]
    %v4518 = vld [vmem:[%s1812 + $0x34] sm:$0xf]
    %v4519 = vld [vmem:[%s1812 + $0x3c] sm:$0xf]
    %v4520 = vld [vmem:[%s1812 + $0x40] sm:$0xf]
    %v4521 = vld [vmem:[%s1812 + $0x48] sm:$0xf]
    %v4522 = vld [vmem:[%s1812 + $0x4c] sm:$0xf]
    %v4523 = vld [vmem:[%s1812 + $0x54] sm:$0xf]
    %v4524 = vld [vmem:[%s1812 + $0x58] sm:$0xf]
    %v4525 = vld [vmem:[%s1812 + $0x60] sm:$0xf]
    %v4526 = vld [vmem:[%s1812 + $0x64] sm:$0xf]
    %v4527 = vld [vmem:[%s1812 + $0x6c] sm:$0xf]
    %v4528 = vld [vmem:[%s1812 + $0x70] sm:$0xf]
    %v4529 = vld [vmem:[%s1812 + $0x78] sm:$0xf]
    %v4530 = vld [vmem:[%s1812 + $0x7c] sm:$0xf]
    %v4531 = vld [vmem:[%s1812 + $0x84] sm:$0xf]
    %v4532 = vld [vmem:[%s1812 + $0x88] sm:$0xf]
    %v4533 = vld [vmem:[%s1812 + $0x90] sm:$0xf]
    %v4534 = vld [vmem:[%s1812 + $0x94] sm:$0xf]
    %v4535 = vld [vmem:[%s1812 + $0x9c] sm:$0xf]
    %v4536 = vld [vmem:[%s1812 + $0xa0] sm:$0xf]
    %v4537 = vld [vmem:[%s1812 + $0xa8] sm:$0xf]
    %v4538 = vld [vmem:[%s1812 + $0xac] sm:$0xf]
    %v4539 = vld [vmem:[%s1812 + $0xb4] sm:$0xf]
    %v4540 = vld [vmem:[%s1812 + $0xb8] sm:$0xf]
    %v4541 = vld [vmem:[%s1812 + $0xd8] sm:$0xf]
    %v4542 = vld [vmem:[%s1812 + $0xdc] sm:$0xf]
    %v4543 = vld [vmem:[%s1812 + $0xe4] sm:$0xf]
    %v4544 = vld [vmem:[%s1812 + $0xe8] sm:$0xf]
    %v4545 = vld [vmem:[%s1812 + $0xf0] sm:$0xf]
    %v4546 = vld [vmem:[%s1812 + $0xf4] sm:$0xf]
    %v4547 = vld [vmem:[%s1812 + $0xfc] sm:$0xf]
    %v4548 = vld [vmem:[%s1812 + $0x100] sm:$0xf]
    %v4549 = vld [vmem:[%s1812 + $0x108] sm:$0xf]
    %v4550 = vld [vmem:[%s1812 + $0x10c] sm:$0xf]
    %v4551 = vld [vmem:[%s1812 + $0x114] sm:$0xf]
    %v4552 = vld [vmem:[%s1812 + $0x118] sm:$0xf]
    %v4553 = vld [vmem:[%s1812 + $0x120] sm:$0xf]
    %v4554 = vld [vmem:[%s1812 + $0x124] sm:$0xf]
    %v4555 = vld [vmem:[%s1812 + $0x12c] sm:$0xf]
    %v4556 = vld [vmem:[%s1812 + $0x130] sm:$0xf]
    %v4557 = vld [vmem:[%s1812 + $0x138] sm:$0xf]
    %v4558 = vld [vmem:[%s1812 + $0x13c] sm:$0xf]
    %v4559 = vld [vmem:[%s1812 + $0x144] sm:$0xf]
    %v4560 = vld [vmem:[%s1812 + $0x148] sm:$0xf]
    %v4561 = vld [vmem:[%s1812 + $0x150] sm:$0xf]
    %v4562 = vld [vmem:[%s1812 + $0x154] sm:$0xf]
    %v4563 = vld [vmem:[%s1812 + $0x15c] sm:$0xf]
    %v4564 = vld [vmem:[%s1812 + $0x160] sm:$0xf]
    %v4565 = vld [vmem:[%s1812 + $0x168] sm:$0xf]
    %v4566 = vld [vmem:[%s1812 + $0x16c] sm:$0xf]
    %v4567 = vld [vmem:[%s1812 + $0x174] sm:$0xf]
    %v4568 = vld [vmem:[%s1812 + $0x178] sm:$0xf]
    %v4569 = vld [vmem:[%s1812 + $0x180] sm:$0xf]
    %v4570 = vld [vmem:[%s1812 + $0x184] sm:$0xf]
    %v4571 = vld [vmem:[%s1812 + $0x18c] sm:$0xf]
    %v4572 = vld [vmem:[%s1812 + $0x190] sm:$0xf]
    %s4573 = scalar_lea.vmem %s4, 192
    %v4574 = vld [vmem:[%s4573] sm:$0xf]
    %v4575 = vld [vmem:[%s4573 + $0x4] sm:$0xf]
    %v4576 = vld [vmem:[%s4573 + $0x8] sm:$0xf]
    %v4577 = vld [vmem:[%s4573 + $0xc] sm:$0xf]
    %v4578 = vld [vmem:[%s4573 + $0x10] sm:$0xf]
    %v4579 = vld [vmem:[%s4573 + $0x14] sm:$0xf]
    %v4580 = vld [vmem:[%s4573 + $0x18] sm:$0xf]
    %v4581 = vld [vmem:[%s4573 + $0x1c] sm:$0xf]
    %v4582 = vld [vmem:[%s4573 + $0x20] sm:$0xf]
    %v4583 = vld [vmem:[%s4573 + $0x24] sm:$0xf]
    %v4584 = vld [vmem:[%s4573 + $0x28] sm:$0xf]
    %v4585 = vld [vmem:[%s4573 + $0x2c] sm:$0xf]
    %v4586 = vld [vmem:[%s4573 + $0x30] sm:$0xf]
    %v4587 = vld [vmem:[%s4573 + $0x34] sm:$0xf]
    %v4588 = vld [vmem:[%s4573 + $0x38] sm:$0xf]
    %v4589 = vld [vmem:[%s4573 + $0x3c] sm:$0xf]
    %v4590 = vld [vmem:[%s1812 + $0x8] sm:$0x1]
    %v4591 = vld [vmem:[%s1812 + $0x14] sm:$0x1]
    %v4592 = vld [vmem:[%s1812 + $0x20] sm:$0x1]
    %v4593 = vld [vmem:[%s1812 + $0x2c] sm:$0x1]
    %v4594 = vld [vmem:[%s1812 + $0x38] sm:$0x1]
    %v4595 = vld [vmem:[%s1812 + $0x44] sm:$0x1]
    %v4596 = vld [vmem:[%s1812 + $0x50] sm:$0x1]
    %v4597 = vld [vmem:[%s1812 + $0x5c] sm:$0x1]
    %v4598 = vld [vmem:[%s1812 + $0x68] sm:$0x1]
    %v4599 = vld [vmem:[%s1812 + $0x74] sm:$0x1]
    %v4600 = vld [vmem:[%s1812 + $0x80] sm:$0x1]
    %v4601 = vld [vmem:[%s1812 + $0x8c] sm:$0x1]
    %v4602 = vld [vmem:[%s1812 + $0x98] sm:$0x1]
    %v4603 = vld [vmem:[%s1812 + $0xa4] sm:$0x1]
    %v4604 = vld [vmem:[%s1812 + $0xb0] sm:$0x1]
    %v4605 = vld [vmem:[%s1812 + $0xbc] sm:$0x1]
    %v4606 = vld [vmem:[%s1812 + $0xe0] sm:$0x1]
    %v4607 = vld [vmem:[%s1812 + $0xec] sm:$0x1]
    %v4608 = vld [vmem:[%s1812 + $0xf8] sm:$0x1]
    %v4609 = vld [vmem:[%s1812 + $0x104] sm:$0x1]
    %v4610 = vld [vmem:[%s1812 + $0x110] sm:$0x1]
    %v4611 = vld [vmem:[%s1812 + $0x11c] sm:$0x1]
    %v4612 = vld [vmem:[%s1812 + $0x128] sm:$0x1]
    %v4613 = vld [vmem:[%s1812 + $0x134] sm:$0x1]
    %v4614 = vld [vmem:[%s1812 + $0x140] sm:$0x1]
    %v4615 = vld [vmem:[%s1812 + $0x14c] sm:$0x1]
    %v4616 = vld [vmem:[%s1812 + $0x158] sm:$0x1]
    %v4617 = vld [vmem:[%s1812 + $0x164] sm:$0x1]
    %v4618 = vld [vmem:[%s1812 + $0x170] sm:$0x1]
    %v4619 = vld [vmem:[%s1812 + $0x17c] sm:$0x1]
    %v4620 = vld [vmem:[%s1812 + $0x188] sm:$0x1]
    %v4621 = vld [vmem:[%s1812 + $0x194] sm:$0x1]
    %v4623 = vshrl.u32 %v4509, 16
    %v4625 = vrot.slane %v4623, 4
    %v4626 = vshll.u32 %v4509, 16
    %v4628 = vrot.slane %v4626, 5
    %v4629 = vor.u32 %v4625, %v4628
    %v4630 = vrot.slane %v4629, 4
    %v4632 = vshll.u32 %v4510, 16
    %v4634 = vrot.slane %v4632, 5
    %v4635 = vsel %vm2156, %v4630, %v4634
    %v4636 = vshrl.u32 %v4510, 16
    %v4638 = vrot.slane %v4636, 4
    %v4639 = vor.u32 %v4638, %v4634
    %v4640 = vrot.slane %v4639, 4
    %v4642 = vshll.u32 %v4590, 16
    %v4644 = vrot.slane %v4642, 5
    %v4645 = vsel %vm2156, %v4640, %v4644
    %v4647 = vshrl.u32 %v4511, 16
    %v4649 = vrot.slane %v4647, 4
    %v4650 = vshll.u32 %v4511, 16
    %v4652 = vrot.slane %v4650, 5
    %v4653 = vor.u32 %v4649, %v4652
    %v4654 = vrot.slane %v4653, 4
    %v4656 = vshll.u32 %v4512, 16
    %v4658 = vrot.slane %v4656, 5
    %v4659 = vsel %vm2156, %v4654, %v4658
    %v4660 = vshrl.u32 %v4512, 16
    %v4662 = vrot.slane %v4660, 4
    %v4663 = vor.u32 %v4662, %v4658
    %v4664 = vrot.slane %v4663, 4
    %v4666 = vshll.u32 %v4591, 16
    %v4668 = vrot.slane %v4666, 5
    %v4669 = vsel %vm2156, %v4664, %v4668
    %v4671 = vshrl.u32 %v4513, 16
    %v4673 = vrot.slane %v4671, 4
    %v4674 = vshll.u32 %v4513, 16
    %v4676 = vrot.slane %v4674, 5
    %v4677 = vor.u32 %v4673, %v4676
    %v4678 = vrot.slane %v4677, 4
    %v4680 = vshll.u32 %v4514, 16
    %v4682 = vrot.slane %v4680, 5
    %v4683 = vsel %vm2156, %v4678, %v4682
    %v4684 = vshrl.u32 %v4514, 16
    %v4686 = vrot.slane %v4684, 4
    %v4687 = vor.u32 %v4686, %v4682
    %v4688 = vrot.slane %v4687, 4
    %v4690 = vshll.u32 %v4592, 16
    %v4692 = vrot.slane %v4690, 5
    %v4693 = vsel %vm2156, %v4688, %v4692
    %v4695 = vshrl.u32 %v4515, 16
    %v4697 = vrot.slane %v4695, 4
    %v4698 = vshll.u32 %v4515, 16
    %v4700 = vrot.slane %v4698, 5
    %v4701 = vor.u32 %v4697, %v4700
    %v4702 = vrot.slane %v4701, 4
    %v4704 = vshll.u32 %v4516, 16
    %v4706 = vrot.slane %v4704, 5
    %v4707 = vsel %vm2156, %v4702, %v4706
    %v4708 = vshrl.u32 %v4516, 16
    %v4710 = vrot.slane %v4708, 4
    %v4711 = vor.u32 %v4710, %v4706
    %v4712 = vrot.slane %v4711, 4
    %v4714 = vshll.u32 %v4593, 16
    %v4716 = vrot.slane %v4714, 5
    %v4717 = vsel %vm2156, %v4712, %v4716
    %v4719 = vshrl.u32 %v4517, 16
    %v4721 = vrot.slane %v4719, 4
    %v4722 = vshll.u32 %v4517, 16
    %v4724 = vrot.slane %v4722, 5
    %v4725 = vor.u32 %v4721, %v4724
    %v4726 = vrot.slane %v4725, 4
    %v4728 = vshll.u32 %v4518, 16
    %v4730 = vrot.slane %v4728, 5
    %v4731 = vsel %vm2156, %v4726, %v4730
    %v4732 = vshrl.u32 %v4518, 16
    %v4734 = vrot.slane %v4732, 4
    %v4735 = vor.u32 %v4734, %v4730
    %v4736 = vrot.slane %v4735, 4
    %v4738 = vshll.u32 %v4594, 16
    %v4740 = vrot.slane %v4738, 5
    %v4741 = vsel %vm2156, %v4736, %v4740
    %v4743 = vshrl.u32 %v4519, 16
    %v4745 = vrot.slane %v4743, 4
    %v4746 = vshll.u32 %v4519, 16
    %v4748 = vrot.slane %v4746, 5
    %v4749 = vor.u32 %v4745, %v4748
    %v4750 = vrot.slane %v4749, 4
    %v4752 = vshll.u32 %v4520, 16
    %v4754 = vrot.slane %v4752, 5
    %v4755 = vsel %vm2156, %v4750, %v4754
    %v4756 = vshrl.u32 %v4520, 16
    %v4758 = vrot.slane %v4756, 4
    %v4759 = vor.u32 %v4758, %v4754
    %v4760 = vrot.slane %v4759, 4
    %v4762 = vshll.u32 %v4595, 16
    %v4764 = vrot.slane %v4762, 5
    %v4765 = vsel %vm2156, %v4760, %v4764
    %v4767 = vshrl.u32 %v4521, 16
    %v4769 = vrot.slane %v4767, 4
    %v4770 = vshll.u32 %v4521, 16
    %v4772 = vrot.slane %v4770, 5
    %v4773 = vor.u32 %v4769, %v4772
    %v4774 = vrot.slane %v4773, 4
    %v4776 = vshll.u32 %v4522, 16
    %v4778 = vrot.slane %v4776, 5
    %v4779 = vsel %vm2156, %v4774, %v4778
    %v4780 = vshrl.u32 %v4522, 16
    %v4782 = vrot.slane %v4780, 4
    %v4783 = vor.u32 %v4782, %v4778
    %v4784 = vrot.slane %v4783, 4
    %v4786 = vshll.u32 %v4596, 16
    %v4788 = vrot.slane %v4786, 5
    %v4789 = vsel %vm2156, %v4784, %v4788
    %v4791 = vshrl.u32 %v4523, 16
    %v4793 = vrot.slane %v4791, 4
    %v4794 = vshll.u32 %v4523, 16
    %v4796 = vrot.slane %v4794, 5
    %v4797 = vor.u32 %v4793, %v4796
    %v4798 = vrot.slane %v4797, 4
    %v4800 = vshll.u32 %v4524, 16
    %v4802 = vrot.slane %v4800, 5
    %v4803 = vsel %vm2156, %v4798, %v4802
    %v4804 = vshrl.u32 %v4524, 16
    %v4806 = vrot.slane %v4804, 4
    %v4807 = vor.u32 %v4806, %v4802
    %v4808 = vrot.slane %v4807, 4
    %v4810 = vshll.u32 %v4597, 16
    %v4812 = vrot.slane %v4810, 5
    %v4813 = vsel %vm2156, %v4808, %v4812
    %v4815 = vshrl.u32 %v4525, 16
    %v4817 = vrot.slane %v4815, 4
    %v4818 = vshll.u32 %v4525, 16
    %v4820 = vrot.slane %v4818, 5
    %v4821 = vor.u32 %v4817, %v4820
    %v4822 = vrot.slane %v4821, 4
    %v4824 = vshll.u32 %v4526, 16
    %v4826 = vrot.slane %v4824, 5
    %v4827 = vsel %vm2156, %v4822, %v4826
    %v4828 = vshrl.u32 %v4526, 16
    %v4830 = vrot.slane %v4828, 4
    %v4831 = vor.u32 %v4830, %v4826
    %v4832 = vrot.slane %v4831, 4
    %v4834 = vshll.u32 %v4598, 16
    %v4836 = vrot.slane %v4834, 5
    %v4837 = vsel %vm2156, %v4832, %v4836
    %v4839 = vshrl.u32 %v4527, 16
    %v4841 = vrot.slane %v4839, 4
    %v4842 = vshll.u32 %v4527, 16
    %v4844 = vrot.slane %v4842, 5
    %v4845 = vor.u32 %v4841, %v4844
    %v4846 = vrot.slane %v4845, 4
    %v4848 = vshll.u32 %v4528, 16
    %v4850 = vrot.slane %v4848, 5
    %v4851 = vsel %vm2156, %v4846, %v4850
    %v4852 = vshrl.u32 %v4528, 16
    %v4854 = vrot.slane %v4852, 4
    %v4855 = vor.u32 %v4854, %v4850
    %v4856 = vrot.slane %v4855, 4
    %v4858 = vshll.u32 %v4599, 16
    %v4860 = vrot.slane %v4858, 5
    %v4861 = vsel %vm2156, %v4856, %v4860
    %v4863 = vshrl.u32 %v4529, 16
    %v4865 = vrot.slane %v4863, 4
    %v4866 = vshll.u32 %v4529, 16
    %v4868 = vrot.slane %v4866, 5
    %v4869 = vor.u32 %v4865, %v4868
    %v4870 = vrot.slane %v4869, 4
    %v4872 = vshll.u32 %v4530, 16
    %v4874 = vrot.slane %v4872, 5
    %v4875 = vsel %vm2156, %v4870, %v4874
    %v4876 = vshrl.u32 %v4530, 16
    %v4878 = vrot.slane %v4876, 4
    %v4879 = vor.u32 %v4878, %v4874
    %v4880 = vrot.slane %v4879, 4
    %v4882 = vshll.u32 %v4600, 16
    %v4884 = vrot.slane %v4882, 5
    %v4885 = vsel %vm2156, %v4880, %v4884
    %v4887 = vshrl.u32 %v4531, 16
    %v4889 = vrot.slane %v4887, 4
    %v4890 = vshll.u32 %v4531, 16
    %v4892 = vrot.slane %v4890, 5
    %v4893 = vor.u32 %v4889, %v4892
    %v4894 = vrot.slane %v4893, 4
    %v4896 = vshll.u32 %v4532, 16
    %v4898 = vrot.slane %v4896, 5
    %v4899 = vsel %vm2156, %v4894, %v4898
    %v4900 = vshrl.u32 %v4532, 16
    %v4902 = vrot.slane %v4900, 4
    %v4903 = vor.u32 %v4902, %v4898
    %v4904 = vrot.slane %v4903, 4
    %v4906 = vshll.u32 %v4601, 16
    %v4908 = vrot.slane %v4906, 5
    %v4909 = vsel %vm2156, %v4904, %v4908
    %v4911 = vshrl.u32 %v4533, 16
    %v4913 = vrot.slane %v4911, 4
    %v4914 = vshll.u32 %v4533, 16
    %v4916 = vrot.slane %v4914, 5
    %v4917 = vor.u32 %v4913, %v4916
    %v4918 = vrot.slane %v4917, 4
    %v4920 = vshll.u32 %v4534, 16
    %v4922 = vrot.slane %v4920, 5
    %v4923 = vsel %vm2156, %v4918, %v4922
    %v4924 = vshrl.u32 %v4534, 16
    %v4926 = vrot.slane %v4924, 4
    %v4927 = vor.u32 %v4926, %v4922
    %v4928 = vrot.slane %v4927, 4
    %v4930 = vshll.u32 %v4602, 16
    %v4932 = vrot.slane %v4930, 5
    %v4933 = vsel %vm2156, %v4928, %v4932
    %v4935 = vshrl.u32 %v4535, 16
    %v4937 = vrot.slane %v4935, 4
    %v4938 = vshll.u32 %v4535, 16
    %v4940 = vrot.slane %v4938, 5
    %v4941 = vor.u32 %v4937, %v4940
    %v4942 = vrot.slane %v4941, 4
    %v4944 = vshll.u32 %v4536, 16
    %v4946 = vrot.slane %v4944, 5
    %v4947 = vsel %vm2156, %v4942, %v4946
    %v4948 = vshrl.u32 %v4536, 16
    %v4950 = vrot.slane %v4948, 4
    %v4951 = vor.u32 %v4950, %v4946
    %v4952 = vrot.slane %v4951, 4
    %v4954 = vshll.u32 %v4603, 16
    %v4956 = vrot.slane %v4954, 5
    %v4957 = vsel %vm2156, %v4952, %v4956
    %v4959 = vshrl.u32 %v4537, 16
    %v4961 = vrot.slane %v4959, 4
    %v4962 = vshll.u32 %v4537, 16
    %v4964 = vrot.slane %v4962, 5
    %v4965 = vor.u32 %v4961, %v4964
    %v4966 = vrot.slane %v4965, 4
    %v4968 = vshll.u32 %v4538, 16
    %v4970 = vrot.slane %v4968, 5
    %v4971 = vsel %vm2156, %v4966, %v4970
    %v4972 = vshrl.u32 %v4538, 16
    %v4974 = vrot.slane %v4972, 4
    %v4975 = vor.u32 %v4974, %v4970
    %v4976 = vrot.slane %v4975, 4
    %v4978 = vshll.u32 %v4604, 16
    %v4980 = vrot.slane %v4978, 5
    %v4981 = vsel %vm2156, %v4976, %v4980
    %v4983 = vshrl.u32 %v4539, 16
    %v4985 = vrot.slane %v4983, 4
    %v4986 = vshll.u32 %v4539, 16
    %v4988 = vrot.slane %v4986, 5
    %v4989 = vor.u32 %v4985, %v4988
    %v4990 = vrot.slane %v4989, 4
    %v4992 = vshll.u32 %v4540, 16
    %v4994 = vrot.slane %v4992, 5
    %v4995 = vsel %vm2156, %v4990, %v4994
    %v4996 = vshrl.u32 %v4540, 16
    %v4998 = vrot.slane %v4996, 4
    %v4999 = vor.u32 %v4998, %v4994
    %v5000 = vrot.slane %v4999, 4
    %v5002 = vshll.u32 %v4605, 16
    %v5004 = vrot.slane %v5002, 5
    %v5005 = vsel %vm2156, %v5000, %v5004
    %v5007 = vshrl.u32 %v4541, 16
    %v5009 = vrot.slane %v5007, 4
    %v5010 = vshll.u32 %v4541, 16
    %v5012 = vrot.slane %v5010, 5
    %v5013 = vor.u32 %v5009, %v5012
    %v5014 = vrot.slane %v5013, 4
    %v5016 = vshll.u32 %v4542, 16
    %v5018 = vrot.slane %v5016, 5
    %v5019 = vsel %vm2156, %v5014, %v5018
    %v5020 = vshrl.u32 %v4542, 16
    %v5022 = vrot.slane %v5020, 4
    %v5023 = vor.u32 %v5022, %v5018
    %v5024 = vrot.slane %v5023, 4
    %v5026 = vshll.u32 %v4606, 16
    %v5028 = vrot.slane %v5026, 5
    %v5029 = vsel %vm2156, %v5024, %v5028
    %v5031 = vshrl.u32 %v4543, 16
    %v5033 = vrot.slane %v5031, 4
    %v5034 = vshll.u32 %v4543, 16
    %v5036 = vrot.slane %v5034, 5
    %v5037 = vor.u32 %v5033, %v5036
    %v5038 = vrot.slane %v5037, 4
    %v5040 = vshll.u32 %v4544, 16
    %v5042 = vrot.slane %v5040, 5
    %v5043 = vsel %vm2156, %v5038, %v5042
    %v5044 = vshrl.u32 %v4544, 16
    %v5046 = vrot.slane %v5044, 4
    %v5047 = vor.u32 %v5046, %v5042
    %v5048 = vrot.slane %v5047, 4
    %v5050 = vshll.u32 %v4607, 16
    %v5052 = vrot.slane %v5050, 5
    %v5053 = vsel %vm2156, %v5048, %v5052
    %v5055 = vshrl.u32 %v4545, 16
    %v5057 = vrot.slane %v5055, 4
    %v5058 = vshll.u32 %v4545, 16
    %v5060 = vrot.slane %v5058, 5
    %v5061 = vor.u32 %v5057, %v5060
    %v5062 = vrot.slane %v5061, 4
    %v5064 = vshll.u32 %v4546, 16
    %v5066 = vrot.slane %v5064, 5
    %v5067 = vsel %vm2156, %v5062, %v5066
    %v5068 = vshrl.u32 %v4546, 16
    %v5070 = vrot.slane %v5068, 4
    %v5071 = vor.u32 %v5070, %v5066
    %v5072 = vrot.slane %v5071, 4
    %v5074 = vshll.u32 %v4608, 16
    %v5076 = vrot.slane %v5074, 5
    %v5077 = vsel %vm2156, %v5072, %v5076
    %v5079 = vshrl.u32 %v4547, 16
    %v5081 = vrot.slane %v5079, 4
    %v5082 = vshll.u32 %v4547, 16
    %v5084 = vrot.slane %v5082, 5
    %v5085 = vor.u32 %v5081, %v5084
    %v5086 = vrot.slane %v5085, 4
    %v5088 = vshll.u32 %v4548, 16
    %v5090 = vrot.slane %v5088, 5
    %v5091 = vsel %vm2156, %v5086, %v5090
    %v5092 = vshrl.u32 %v4548, 16
    %v5094 = vrot.slane %v5092, 4
    %v5095 = vor.u32 %v5094, %v5090
    %v5096 = vrot.slane %v5095, 4
    %v5098 = vshll.u32 %v4609, 16
    %v5100 = vrot.slane %v5098, 5
    %v5101 = vsel %vm2156, %v5096, %v5100
    %v5103 = vshrl.u32 %v4549, 16
    %v5105 = vrot.slane %v5103, 4
    %v5106 = vshll.u32 %v4549, 16
    %v5108 = vrot.slane %v5106, 5
    %v5109 = vor.u32 %v5105, %v5108
    %v5110 = vrot.slane %v5109, 4
    %v5112 = vshll.u32 %v4550, 16
    %v5114 = vrot.slane %v5112, 5
    %v5115 = vsel %vm2156, %v5110, %v5114
    %v5116 = vshrl.u32 %v4550, 16
    %v5118 = vrot.slane %v5116, 4
    %v5119 = vor.u32 %v5118, %v5114
    %v5120 = vrot.slane %v5119, 4
    %v5122 = vshll.u32 %v4610, 16
    %v5124 = vrot.slane %v5122, 5
    %v5125 = vsel %vm2156, %v5120, %v5124
    %v5127 = vshrl.u32 %v4551, 16
    %v5129 = vrot.slane %v5127, 4
    %v5130 = vshll.u32 %v4551, 16
    %v5132 = vrot.slane %v5130, 5
    %v5133 = vor.u32 %v5129, %v5132
    %v5134 = vrot.slane %v5133, 4
    %v5136 = vshll.u32 %v4552, 16
    %v5138 = vrot.slane %v5136, 5
    %v5139 = vsel %vm2156, %v5134, %v5138
    %v5140 = vshrl.u32 %v4552, 16
    %v5142 = vrot.slane %v5140, 4
    %v5143 = vor.u32 %v5142, %v5138
    %v5144 = vrot.slane %v5143, 4
    %v5146 = vshll.u32 %v4611, 16
    %v5148 = vrot.slane %v5146, 5
    %v5149 = vsel %vm2156, %v5144, %v5148
    %v5151 = vshrl.u32 %v4553, 16
    %v5153 = vrot.slane %v5151, 4
    %v5154 = vshll.u32 %v4553, 16
    %v5156 = vrot.slane %v5154, 5
    %v5157 = vor.u32 %v5153, %v5156
    %v5158 = vrot.slane %v5157, 4
    %v5160 = vshll.u32 %v4554, 16
    %v5162 = vrot.slane %v5160, 5
    %v5163 = vsel %vm2156, %v5158, %v5162
    %v5164 = vshrl.u32 %v4554, 16
    %v5166 = vrot.slane %v5164, 4
    %v5167 = vor.u32 %v5166, %v5162
    %v5168 = vrot.slane %v5167, 4
    %v5170 = vshll.u32 %v4612, 16
    %v5172 = vrot.slane %v5170, 5
    %v5173 = vsel %vm2156, %v5168, %v5172
    %v5175 = vshrl.u32 %v4555, 16
    %v5177 = vrot.slane %v5175, 4
    %v5178 = vshll.u32 %v4555, 16
    %v5180 = vrot.slane %v5178, 5
    %v5181 = vor.u32 %v5177, %v5180
    %v5182 = vrot.slane %v5181, 4
    %v5184 = vshll.u32 %v4556, 16
    %v5186 = vrot.slane %v5184, 5
    %v5187 = vsel %vm2156, %v5182, %v5186
    %v5188 = vshrl.u32 %v4556, 16
    %v5190 = vrot.slane %v5188, 4
    %v5191 = vor.u32 %v5190, %v5186
    %v5192 = vrot.slane %v5191, 4
    %v5194 = vshll.u32 %v4613, 16
    %v5196 = vrot.slane %v5194, 5
    %v5197 = vsel %vm2156, %v5192, %v5196
    %v5199 = vshrl.u32 %v4557, 16
    %v5201 = vrot.slane %v5199, 4
    %v5202 = vshll.u32 %v4557, 16
    %v5204 = vrot.slane %v5202, 5
    %v5205 = vor.u32 %v5201, %v5204
    %v5206 = vrot.slane %v5205, 4
    %v5208 = vshll.u32 %v4558, 16
    %v5210 = vrot.slane %v5208, 5
    %v5211 = vsel %vm2156, %v5206, %v5210
    %v5212 = vshrl.u32 %v4558, 16
    %v5214 = vrot.slane %v5212, 4
    %v5215 = vor.u32 %v5214, %v5210
    %v5216 = vrot.slane %v5215, 4
    %v5218 = vshll.u32 %v4614, 16
    %v5220 = vrot.slane %v5218, 5
    %v5221 = vsel %vm2156, %v5216, %v5220
    %v5223 = vshrl.u32 %v4559, 16
    %v5225 = vrot.slane %v5223, 4
    %v5226 = vshll.u32 %v4559, 16
    %v5228 = vrot.slane %v5226, 5
    %v5229 = vor.u32 %v5225, %v5228
    %v5230 = vrot.slane %v5229, 4
    %v5232 = vshll.u32 %v4560, 16
    %v5234 = vrot.slane %v5232, 5
    %v5235 = vsel %vm2156, %v5230, %v5234
    %v5236 = vshrl.u32 %v4560, 16
    %v5238 = vrot.slane %v5236, 4
    %v5239 = vor.u32 %v5238, %v5234
    %v5240 = vrot.slane %v5239, 4
    %v5242 = vshll.u32 %v4615, 16
    %v5244 = vrot.slane %v5242, 5
    %v5245 = vsel %vm2156, %v5240, %v5244
    %v5247 = vshrl.u32 %v4561, 16
    %v5249 = vrot.slane %v5247, 4
    %v5250 = vshll.u32 %v4561, 16
    %v5252 = vrot.slane %v5250, 5
    %v5253 = vor.u32 %v5249, %v5252
    %v5254 = vrot.slane %v5253, 4
    %v5256 = vshll.u32 %v4562, 16
    %v5258 = vrot.slane %v5256, 5
    %v5259 = vsel %vm2156, %v5254, %v5258
    %v5260 = vshrl.u32 %v4562, 16
    %v5262 = vrot.slane %v5260, 4
    %v5263 = vor.u32 %v5262, %v5258
    %v5264 = vrot.slane %v5263, 4
    %v5266 = vshll.u32 %v4616, 16
    %v5268 = vrot.slane %v5266, 5
    %v5269 = vsel %vm2156, %v5264, %v5268
    %v5271 = vshrl.u32 %v4563, 16
    %v5273 = vrot.slane %v5271, 4
    %v5274 = vshll.u32 %v4563, 16
    %v5276 = vrot.slane %v5274, 5
    %v5277 = vor.u32 %v5273, %v5276
    %v5278 = vrot.slane %v5277, 4
    %v5280 = vshll.u32 %v4564, 16
    %v5282 = vrot.slane %v5280, 5
    %v5283 = vsel %vm2156, %v5278, %v5282
    %v5284 = vshrl.u32 %v4564, 16
    %v5286 = vrot.slane %v5284, 4
    %v5287 = vor.u32 %v5286, %v5282
    %v5288 = vrot.slane %v5287, 4
    %v5290 = vshll.u32 %v4617, 16
    %v5292 = vrot.slane %v5290, 5
    %v5293 = vsel %vm2156, %v5288, %v5292
    %v5295 = vshrl.u32 %v4565, 16
    %v5297 = vrot.slane %v5295, 4
    %v5298 = vshll.u32 %v4565, 16
    %v5300 = vrot.slane %v5298, 5
    %v5301 = vor.u32 %v5297, %v5300
    %v5302 = vrot.slane %v5301, 4
    %v5304 = vshll.u32 %v4566, 16
    %v5306 = vrot.slane %v5304, 5
    %v5307 = vsel %vm2156, %v5302, %v5306
    %v5308 = vshrl.u32 %v4566, 16
    %v5310 = vrot.slane %v5308, 4
    %v5311 = vor.u32 %v5310, %v5306
    %v5312 = vrot.slane %v5311, 4
    %v5314 = vshll.u32 %v4618, 16
    %v5316 = vrot.slane %v5314, 5
    %v5317 = vsel %vm2156, %v5312, %v5316
    %v5319 = vshrl.u32 %v4567, 16
    %v5321 = vrot.slane %v5319, 4
    %v5322 = vshll.u32 %v4567, 16
    %v5324 = vrot.slane %v5322, 5
    %v5325 = vor.u32 %v5321, %v5324
    %v5326 = vrot.slane %v5325, 4
    %v5328 = vshll.u32 %v4568, 16
    %v5330 = vrot.slane %v5328, 5
    %v5331 = vsel %vm2156, %v5326, %v5330
    %v5332 = vshrl.u32 %v4568, 16
    %v5334 = vrot.slane %v5332, 4
    %v5335 = vor.u32 %v5334, %v5330
    %v5336 = vrot.slane %v5335, 4
    %v5338 = vshll.u32 %v4619, 16
    %v5340 = vrot.slane %v5338, 5
    %v5341 = vsel %vm2156, %v5336, %v5340
    %v5343 = vshrl.u32 %v4569, 16
    %v5345 = vrot.slane %v5343, 4
    %v5346 = vshll.u32 %v4569, 16
    %v5348 = vrot.slane %v5346, 5
    %v5349 = vor.u32 %v5345, %v5348
    %v5350 = vrot.slane %v5349, 4
    %v5352 = vshll.u32 %v4570, 16
    %v5354 = vrot.slane %v5352, 5
    %v5355 = vsel %vm2156, %v5350, %v5354
    %v5356 = vshrl.u32 %v4570, 16
    %v5358 = vrot.slane %v5356, 4
    %v5359 = vor.u32 %v5358, %v5354
    %v5360 = vrot.slane %v5359, 4
    %v5362 = vshll.u32 %v4620, 16
    %v5364 = vrot.slane %v5362, 5
    %v5365 = vsel %vm2156, %v5360, %v5364
    %v5367 = vshrl.u32 %v4571, 16
    %v5369 = vrot.slane %v5367, 4
    %v5370 = vshll.u32 %v4571, 16
    %v5372 = vrot.slane %v5370, 5
    %v5373 = vor.u32 %v5369, %v5372
    %v5374 = vrot.slane %v5373, 4
    %v5376 = vshll.u32 %v4572, 16
    %v5378 = vrot.slane %v5376, 5
    %v5379 = vsel %vm2156, %v5374, %v5378
    %v5380 = vshrl.u32 %v4572, 16
    %v5382 = vrot.slane %v5380, 4
    %v5383 = vor.u32 %v5382, %v5378
    %v5384 = vrot.slane %v5383, 4
    %v5386 = vshll.u32 %v4621, 16
    %v5388 = vrot.slane %v5386, 5
    %v5389 = vsel %vm2156, %v5384, %v5388
    %s5390 = scalar_lea.vmem %s4, 256
    %v5391 = vld [vmem:[%s5390] sm:$0xf]
    %v5392 = vld [vmem:[%s5390 + $0x4] sm:$0xf]
    %v5393 = vld [vmem:[%s5390 + $0x8] sm:$0xf]
    %v5394 = vld [vmem:[%s5390 + $0xc] sm:$0xf]
    %v5395 = vld [vmem:[%s5390 + $0x10] sm:$0xf]
    %v5396 = vld [vmem:[%s5390 + $0x14] sm:$0xf]
    %v5397 = vld [vmem:[%s5390 + $0x18] sm:$0xf]
    %v5398 = vld [vmem:[%s5390 + $0x1c] sm:$0xf]
    %v5399 = vld [vmem:[%s5390 + $0x20] sm:$0xf]
    %v5400 = vld [vmem:[%s5390 + $0x24] sm:$0xf]
    %v5401 = vld [vmem:[%s5390 + $0x28] sm:$0xf]
    %v5402 = vld [vmem:[%s5390 + $0x2c] sm:$0xf]
    %v5403 = vld [vmem:[%s5390 + $0x30] sm:$0xf]
    %v5404 = vld [vmem:[%s5390 + $0x34] sm:$0xf]
    %v5405 = vld [vmem:[%s5390 + $0x38] sm:$0xf]
    %v5406 = vld [vmem:[%s5390 + $0x3c] sm:$0xf]
    %v5407 = vunpack.c.l.b16 %v4635
    %v5408 = vunpack.c.l.b16 %v4645
    %v5409 = vunpack.c.l.b16 %v4659
    %v5410 = vunpack.c.l.b16 %v4669
    %v5411 = vunpack.c.l.b16 %v4683
    %v5412 = vunpack.c.l.b16 %v4693
    %v5413 = vunpack.c.l.b16 %v4707
    %v5414 = vunpack.c.l.b16 %v4717
    %v5415 = vunpack.c.l.b16 %v4731
    %v5416 = vunpack.c.l.b16 %v4741
    %v5417 = vunpack.c.l.b16 %v4755
    %v5418 = vunpack.c.l.b16 %v4765
    %v5419 = vunpack.c.l.b16 %v4779
    %v5420 = vunpack.c.l.b16 %v4789
    %v5421 = vunpack.c.l.b16 %v4803
    %v5422 = vunpack.c.l.b16 %v4813
    %v5423 = vunpack.c.l.b16 %v4827
    %v5424 = vunpack.c.l.b16 %v4837
    %v5425 = vunpack.c.l.b16 %v4851
    %v5426 = vunpack.c.l.b16 %v4861
    %v5427 = vunpack.c.l.b16 %v4875
    %v5428 = vunpack.c.l.b16 %v4885
    %v5429 = vunpack.c.l.b16 %v4899
    %v5430 = vunpack.c.l.b16 %v4909
    %v5431 = vunpack.c.l.b16 %v4923
    %v5432 = vunpack.c.l.b16 %v4933
    %v5433 = vunpack.c.l.b16 %v4947
    %v5434 = vunpack.c.l.b16 %v4957
    %v5435 = vunpack.c.l.b16 %v4971
    %v5436 = vunpack.c.l.b16 %v4981
    %v5437 = vunpack.c.l.b16 %v4995
    %v5438 = vunpack.c.l.b16 %v5005
    %v5439 = vunpack.c.l.b16 %v5019
    %v5440 = vunpack.c.l.b16 %v5029
    %v5441 = vunpack.c.l.b16 %v5043
    %v5442 = vunpack.c.l.b16 %v5053
    %v5443 = vunpack.c.l.b16 %v5067
    %v5444 = vunpack.c.l.b16 %v5077
    %v5445 = vunpack.c.l.b16 %v5091
    %v5446 = vunpack.c.l.b16 %v5101
    %v5447 = vunpack.c.l.b16 %v5115
    %v5448 = vunpack.c.l.b16 %v5125
    %v5449 = vunpack.c.l.b16 %v5139
    %v5450 = vunpack.c.l.b16 %v5149
    %v5451 = vunpack.c.l.b16 %v5163
    %v5452 = vunpack.c.l.b16 %v5173
    %v5453 = vunpack.c.l.b16 %v5187
    %v5454 = vunpack.c.l.b16 %v5197
    %v5455 = vunpack.c.l.b16 %v5211
    %v5456 = vunpack.c.l.b16 %v5221
    %v5457 = vunpack.c.l.b16 %v5235
    %v5458 = vunpack.c.l.b16 %v5245
    %v5459 = vunpack.c.l.b16 %v5259
    %v5460 = vunpack.c.l.b16 %v5269
    %v5461 = vunpack.c.l.b16 %v5283
    %v5462 = vunpack.c.l.b16 %v5293
    %v5463 = vunpack.c.l.b16 %v5307
    %v5464 = vunpack.c.l.b16 %v5317
    %v5465 = vunpack.c.l.b16 %v5331
    %v5466 = vunpack.c.l.b16 %v5341
    %v5467 = vunpack.c.l.b16 %v5355
    %v5468 = vunpack.c.l.b16 %v5365
    %v5469 = vunpack.c.l.b16 %v5379
    %v5470 = vunpack.c.l.b16 %v5389
    %v5471 = vpack.c.b16 %v5408, %v5407
    %v5472 = vpack.c.b16 %v5410, %v5409
    %v5473 = vpack.c.b16 %v5412, %v5411
    %v5474 = vpack.c.b16 %v5414, %v5413
    %v5475 = vpack.c.b16 %v5416, %v5415
    %v5476 = vpack.c.b16 %v5418, %v5417
    %v5477 = vpack.c.b16 %v5420, %v5419
    %v5478 = vpack.c.b16 %v5422, %v5421
    %v5479 = vpack.c.b16 %v5424, %v5423
    %v5480 = vpack.c.b16 %v5426, %v5425
    %v5481 = vpack.c.b16 %v5428, %v5427
    %v5482 = vpack.c.b16 %v5430, %v5429
    %v5483 = vpack.c.b16 %v5432, %v5431
    %v5484 = vpack.c.b16 %v5434, %v5433
    %v5485 = vpack.c.b16 %v5436, %v5435
    %v5486 = vpack.c.b16 %v5438, %v5437
    %v5487 = vpack.c.b16 %v5440, %v5439
    %v5488 = vpack.c.b16 %v5442, %v5441
    %v5489 = vpack.c.b16 %v5444, %v5443
    %v5490 = vpack.c.b16 %v5446, %v5445
    %v5491 = vpack.c.b16 %v5448, %v5447
    %v5492 = vpack.c.b16 %v5450, %v5449
    %v5493 = vpack.c.b16 %v5452, %v5451
    %v5494 = vpack.c.b16 %v5454, %v5453
    %v5495 = vpack.c.b16 %v5456, %v5455
    %v5496 = vpack.c.b16 %v5458, %v5457
    %v5497 = vpack.c.b16 %v5460, %v5459
    %v5498 = vpack.c.b16 %v5462, %v5461
    %v5499 = vpack.c.b16 %v5464, %v5463
    %v5500 = vpack.c.b16 %v5466, %v5465
    %v5501 = vpack.c.b16 %v5468, %v5467
    %v5502 = vpack.c.b16 %v5470, %v5469
    %v5551 = vunpack.c.l.b16 %v5391
    %v5552 = vunpack.c.l.b16 %v5392
    %v5553 = vunpack.c.l.b16 %v5393
    %v5554 = vunpack.c.l.b16 %v5394
    %v5555 = vunpack.c.l.b16 %v5395
    %v5556 = vunpack.c.l.b16 %v5396
    %v5557 = vunpack.c.l.b16 %v5397
    %v5558 = vunpack.c.l.b16 %v5398
    %v5559 = vunpack.c.l.b16 %v5399
    %v5560 = vunpack.c.l.b16 %v5400
    %v5561 = vunpack.c.l.b16 %v5401
    %v5562 = vunpack.c.l.b16 %v5402
    %v5563 = vunpack.c.l.b16 %v5403
    %v5564 = vunpack.c.l.b16 %v5404
    %v5565 = vunpack.c.l.b16 %v5405
    %v5566 = vunpack.c.l.b16 %v5406
    %v5567 = vpack.c.b16 %v5552, %v5551
    %v5568 = vpack.c.b16 %v5554, %v5553
    %v5569 = vpack.c.b16 %v5556, %v5555
    %v5570 = vpack.c.b16 %v5558, %v5557
    %v5571 = vpack.c.b16 %v5560, %v5559
    %v5572 = vpack.c.b16 %v5562, %v5561
    %v5573 = vpack.c.b16 %v5564, %v5563
    %v5574 = vpack.c.b16 %v5566, %v5565
    %5583 = vmatpush.bf16.msra.mxu0 %v5574
    %5584 = vmatpush.bf16.msra.mxu0 %v5573
    %5585 = vmatpush.bf16.msra.mxu0 %v5572
    %5586 = vmatpush.bf16.msra.mxu0 %v5571
    %5587 = vmatpush.bf16.msra.mxu0 %v5570
    %5588 = vmatpush.bf16.msra.mxu0 %v5569
    %5589 = vmatpush.bf16.msra.mxu0 %v5568
    %5590 = vmatpush.bf16.msra.mxu0 %v5567
    %5591 = vmatmul.bf16.gmra.mxu0 %v5471
    %v5592 = vpop.f32.mrf.mxu0
    %v5593 = vadd.f32 0.0, %v5592
    %v5594 = vpop.f32.mrf.mxu0
    %v5595 = vadd.f32 0.0, %v5594
    %5596 = vmatmul.bf16.gmra.mxu0 %v5472
    %v5597 = vpop.f32.mrf.mxu0
    %v5598 = vadd.f32 0.0, %v5597
    %v5599 = vpop.f32.mrf.mxu0
    %v5600 = vadd.f32 0.0, %v5599
    %5601 = vmatmul.bf16.gmra.mxu0 %v5473
    %v5602 = vpop.f32.mrf.mxu0
    %v5603 = vadd.f32 0.0, %v5602
    %v5604 = vpop.f32.mrf.mxu0
    %v5605 = vadd.f32 0.0, %v5604
    %5606 = vmatmul.bf16.gmra.mxu0 %v5474
    %v5607 = vpop.f32.mrf.mxu0
    %v5608 = vadd.f32 0.0, %v5607
    %v5609 = vpop.f32.mrf.mxu0
    %v5610 = vadd.f32 0.0, %v5609
    %5611 = vmatmul.bf16.gmra.mxu0 %v5475
    %v5612 = vpop.f32.mrf.mxu0
    %v5613 = vadd.f32 0.0, %v5612
    %v5614 = vpop.f32.mrf.mxu0
    %v5615 = vadd.f32 0.0, %v5614
    %5616 = vmatmul.bf16.gmra.mxu0 %v5476
    %v5617 = vpop.f32.mrf.mxu0
    %v5618 = vadd.f32 0.0, %v5617
    %v5619 = vpop.f32.mrf.mxu0
    %v5620 = vadd.f32 0.0, %v5619
    %5621 = vmatmul.bf16.gmra.mxu0 %v5477
    %v5622 = vpop.f32.mrf.mxu0
    %v5623 = vadd.f32 0.0, %v5622
    %v5624 = vpop.f32.mrf.mxu0
    %v5625 = vadd.f32 0.0, %v5624
    %5626 = vmatmul.bf16.gmra.mxu0 %v5478
    %v5627 = vpop.f32.mrf.mxu0
    %v5628 = vadd.f32 0.0, %v5627
    %v5629 = vpop.f32.mrf.mxu0
    %v5630 = vadd.f32 0.0, %v5629
    %5631 = vmatmul.bf16.gmra.mxu0 %v5479
    %v5632 = vpop.f32.mrf.mxu0
    %v5633 = vadd.f32 0.0, %v5632
    %v5634 = vpop.f32.mrf.mxu0
    %v5635 = vadd.f32 0.0, %v5634
    %5636 = vmatmul.bf16.gmra.mxu0 %v5480
    %v5637 = vpop.f32.mrf.mxu0
    %v5638 = vadd.f32 0.0, %v5637
    %v5639 = vpop.f32.mrf.mxu0
    %v5640 = vadd.f32 0.0, %v5639
    %5641 = vmatmul.bf16.gmra.mxu0 %v5481
    %v5642 = vpop.f32.mrf.mxu0
    %v5643 = vadd.f32 0.0, %v5642
    %v5644 = vpop.f32.mrf.mxu0
    %v5645 = vadd.f32 0.0, %v5644
    %5646 = vmatmul.bf16.gmra.mxu0 %v5482
    %v5647 = vpop.f32.mrf.mxu0
    %v5648 = vadd.f32 0.0, %v5647
    %v5649 = vpop.f32.mrf.mxu0
    %v5650 = vadd.f32 0.0, %v5649
    %5651 = vmatmul.bf16.gmra.mxu0 %v5483
    %v5652 = vpop.f32.mrf.mxu0
    %v5653 = vadd.f32 0.0, %v5652
    %v5654 = vpop.f32.mrf.mxu0
    %v5655 = vadd.f32 0.0, %v5654
    %5656 = vmatmul.bf16.gmra.mxu0 %v5484
    %v5657 = vpop.f32.mrf.mxu0
    %v5658 = vadd.f32 0.0, %v5657
    %v5659 = vpop.f32.mrf.mxu0
    %v5660 = vadd.f32 0.0, %v5659
    %5661 = vmatmul.bf16.gmra.mxu0 %v5485
    %v5662 = vpop.f32.mrf.mxu0
    %v5663 = vadd.f32 0.0, %v5662
    %v5664 = vpop.f32.mrf.mxu0
    %v5665 = vadd.f32 0.0, %v5664
    %5666 = vmatmul.bf16.gmra.mxu0 %v5486
    %v5667 = vpop.f32.mrf.mxu0
    %v5668 = vadd.f32 0.0, %v5667
    %v5669 = vpop.f32.mrf.mxu0
    %v5670 = vadd.f32 0.0, %v5669
    %5671 = vmatmul.bf16.gmra.mxu0 %v5487
    %v5672 = vpop.f32.mrf.mxu0
    %v5673 = vadd.f32 0.0, %v5672
    %v5674 = vpop.f32.mrf.mxu0
    %v5675 = vadd.f32 0.0, %v5674
    %5676 = vmatmul.bf16.gmra.mxu0 %v5488
    %v5677 = vpop.f32.mrf.mxu0
    %v5678 = vadd.f32 0.0, %v5677
    %v5679 = vpop.f32.mrf.mxu0
    %v5680 = vadd.f32 0.0, %v5679
    %5681 = vmatmul.bf16.gmra.mxu0 %v5489
    %v5682 = vpop.f32.mrf.mxu0
    %v5683 = vadd.f32 0.0, %v5682
    %v5684 = vpop.f32.mrf.mxu0
    %v5685 = vadd.f32 0.0, %v5684
    %5686 = vmatmul.bf16.gmra.mxu0 %v5490
    %v5687 = vpop.f32.mrf.mxu0
    %v5688 = vadd.f32 0.0, %v5687
    %v5689 = vpop.f32.mrf.mxu0
    %v5690 = vadd.f32 0.0, %v5689
    %5691 = vmatmul.bf16.gmra.mxu0 %v5491
    %v5692 = vpop.f32.mrf.mxu0
    %v5693 = vadd.f32 0.0, %v5692
    %v5694 = vpop.f32.mrf.mxu0
    %v5695 = vadd.f32 0.0, %v5694
    %5696 = vmatmul.bf16.gmra.mxu0 %v5492
    %v5697 = vpop.f32.mrf.mxu0
    %v5698 = vadd.f32 0.0, %v5697
    %v5699 = vpop.f32.mrf.mxu0
    %v5700 = vadd.f32 0.0, %v5699
    %5701 = vmatmul.bf16.gmra.mxu0 %v5493
    %v5702 = vpop.f32.mrf.mxu0
    %v5703 = vadd.f32 0.0, %v5702
    %v5704 = vpop.f32.mrf.mxu0
    %v5705 = vadd.f32 0.0, %v5704
    %5706 = vmatmul.bf16.gmra.mxu0 %v5494
    %v5707 = vpop.f32.mrf.mxu0
    %v5708 = vadd.f32 0.0, %v5707
    %v5709 = vpop.f32.mrf.mxu0
    %v5710 = vadd.f32 0.0, %v5709
    %5711 = vmatmul.bf16.gmra.mxu0 %v5495
    %v5712 = vpop.f32.mrf.mxu0
    %v5713 = vadd.f32 0.0, %v5712
    %v5714 = vpop.f32.mrf.mxu0
    %v5715 = vadd.f32 0.0, %v5714
    %5716 = vmatmul.bf16.gmra.mxu0 %v5496
    %v5717 = vpop.f32.mrf.mxu0
    %v5718 = vadd.f32 0.0, %v5717
    %v5719 = vpop.f32.mrf.mxu0
    %v5720 = vadd.f32 0.0, %v5719
    %5721 = vmatmul.bf16.gmra.mxu0 %v5497
    %v5722 = vpop.f32.mrf.mxu0
    %v5723 = vadd.f32 0.0, %v5722
    %v5724 = vpop.f32.mrf.mxu0
    %v5725 = vadd.f32 0.0, %v5724
    %5726 = vmatmul.bf16.gmra.mxu0 %v5498
    %v5727 = vpop.f32.mrf.mxu0
    %v5728 = vadd.f32 0.0, %v5727
    %v5729 = vpop.f32.mrf.mxu0
    %v5730 = vadd.f32 0.0, %v5729
    %5731 = vmatmul.bf16.gmra.mxu0 %v5499
    %v5732 = vpop.f32.mrf.mxu0
    %v5733 = vadd.f32 0.0, %v5732
    %v5734 = vpop.f32.mrf.mxu0
    %v5735 = vadd.f32 0.0, %v5734
    %5736 = vmatmul.bf16.gmra.mxu0 %v5500
    %v5737 = vpop.f32.mrf.mxu0
    %v5738 = vadd.f32 0.0, %v5737
    %v5739 = vpop.f32.mrf.mxu0
    %v5740 = vadd.f32 0.0, %v5739
    %5741 = vmatmul.bf16.gmra.mxu0 %v5501
    %v5742 = vpop.f32.mrf.mxu0
    %v5743 = vadd.f32 0.0, %v5742
    %v5744 = vpop.f32.mrf.mxu0
    %v5745 = vadd.f32 0.0, %v5744
    %5746 = vmatmul.bf16.gmra.mxu0 %v5502
    %v5747 = vpop.f32.mrf.mxu0
    %v5748 = vadd.f32 0.0, %v5747
    %v5749 = vpop.f32.mrf.mxu0
    %v5750 = vadd.f32 0.0, %v5749
    %5751 = vdwg.mxu0
    %v5816 = vunpack.c.l.b16 %v4509
    %v5817 = vunpack.c.l.b16 %v4510
    %v5818 = vunpack.c.l.b16 %v4511
    %v5819 = vunpack.c.l.b16 %v4512
    %v5820 = vunpack.c.l.b16 %v4513
    %v5821 = vunpack.c.l.b16 %v4514
    %v5822 = vunpack.c.l.b16 %v4515
    %v5823 = vunpack.c.l.b16 %v4516
    %v5824 = vunpack.c.l.b16 %v4517
    %v5825 = vunpack.c.l.b16 %v4518
    %v5826 = vunpack.c.l.b16 %v4519
    %v5827 = vunpack.c.l.b16 %v4520
    %v5828 = vunpack.c.l.b16 %v4521
    %v5829 = vunpack.c.l.b16 %v4522
    %v5830 = vunpack.c.l.b16 %v4523
    %v5831 = vunpack.c.l.b16 %v4524
    %v5832 = vunpack.c.l.b16 %v4525
    %v5833 = vunpack.c.l.b16 %v4526
    %v5834 = vunpack.c.l.b16 %v4527
    %v5835 = vunpack.c.l.b16 %v4528
    %v5836 = vunpack.c.l.b16 %v4529
    %v5837 = vunpack.c.l.b16 %v4530
    %v5838 = vunpack.c.l.b16 %v4531
    %v5839 = vunpack.c.l.b16 %v4532
    %v5840 = vunpack.c.l.b16 %v4533
    %v5841 = vunpack.c.l.b16 %v4534
    %v5842 = vunpack.c.l.b16 %v4535
    %v5843 = vunpack.c.l.b16 %v4536
    %v5844 = vunpack.c.l.b16 %v4537
    %v5845 = vunpack.c.l.b16 %v4538
    %v5846 = vunpack.c.l.b16 %v4539
    %v5847 = vunpack.c.l.b16 %v4540
    %v5848 = vunpack.c.l.b16 %v4541
    %v5849 = vunpack.c.l.b16 %v4542
    %v5850 = vunpack.c.l.b16 %v4543
    %v5851 = vunpack.c.l.b16 %v4544
    %v5852 = vunpack.c.l.b16 %v4545
    %v5853 = vunpack.c.l.b16 %v4546
    %v5854 = vunpack.c.l.b16 %v4547
    %v5855 = vunpack.c.l.b16 %v4548
    %v5856 = vunpack.c.l.b16 %v4549
    %v5857 = vunpack.c.l.b16 %v4550
    %v5858 = vunpack.c.l.b16 %v4551
    %v5859 = vunpack.c.l.b16 %v4552
    %v5860 = vunpack.c.l.b16 %v4553
    %v5861 = vunpack.c.l.b16 %v4554
    %v5862 = vunpack.c.l.b16 %v4555
    %v5863 = vunpack.c.l.b16 %v4556
    %v5864 = vunpack.c.l.b16 %v4557
    %v5865 = vunpack.c.l.b16 %v4558
    %v5866 = vunpack.c.l.b16 %v4559
    %v5867 = vunpack.c.l.b16 %v4560
    %v5868 = vunpack.c.l.b16 %v4561
    %v5869 = vunpack.c.l.b16 %v4562
    %v5870 = vunpack.c.l.b16 %v4563
    %v5871 = vunpack.c.l.b16 %v4564
    %v5872 = vunpack.c.l.b16 %v4565
    %v5873 = vunpack.c.l.b16 %v4566
    %v5874 = vunpack.c.l.b16 %v4567
    %v5875 = vunpack.c.l.b16 %v4568
    %v5876 = vunpack.c.l.b16 %v4569
    %v5877 = vunpack.c.l.b16 %v4570
    %v5878 = vunpack.c.l.b16 %v4571
    %v5879 = vunpack.c.l.b16 %v4572
    %v5880 = vpack.c.b16 %v5817, %v5816
    %v5881 = vpack.c.b16 %v5819, %v5818
    %v5882 = vpack.c.b16 %v5821, %v5820
    %v5883 = vpack.c.b16 %v5823, %v5822
    %v5884 = vpack.c.b16 %v5825, %v5824
    %v5885 = vpack.c.b16 %v5827, %v5826
    %v5886 = vpack.c.b16 %v5829, %v5828
    %v5887 = vpack.c.b16 %v5831, %v5830
    %v5888 = vpack.c.b16 %v5833, %v5832
    %v5889 = vpack.c.b16 %v5835, %v5834
    %v5890 = vpack.c.b16 %v5837, %v5836
    %v5891 = vpack.c.b16 %v5839, %v5838
    %v5892 = vpack.c.b16 %v5841, %v5840
    %v5893 = vpack.c.b16 %v5843, %v5842
    %v5894 = vpack.c.b16 %v5845, %v5844
    %v5895 = vpack.c.b16 %v5847, %v5846
    %v5896 = vpack.c.b16 %v5849, %v5848
    %v5897 = vpack.c.b16 %v5851, %v5850
    %v5898 = vpack.c.b16 %v5853, %v5852
    %v5899 = vpack.c.b16 %v5855, %v5854
    %v5900 = vpack.c.b16 %v5857, %v5856
    %v5901 = vpack.c.b16 %v5859, %v5858
    %v5902 = vpack.c.b16 %v5861, %v5860
    %v5903 = vpack.c.b16 %v5863, %v5862
    %v5904 = vpack.c.b16 %v5865, %v5864
    %v5905 = vpack.c.b16 %v5867, %v5866
    %v5906 = vpack.c.b16 %v5869, %v5868
    %v5907 = vpack.c.b16 %v5871, %v5870
    %v5908 = vpack.c.b16 %v5873, %v5872
    %v5909 = vpack.c.b16 %v5875, %v5874
    %v5910 = vpack.c.b16 %v5877, %v5876
    %v5911 = vpack.c.b16 %v5879, %v5878
    %v5960 = vunpack.c.l.b16 %v4574
    %v5961 = vunpack.c.l.b16 %v4575
    %v5962 = vunpack.c.l.b16 %v4576
    %v5963 = vunpack.c.l.b16 %v4577
    %v5964 = vunpack.c.l.b16 %v4578
    %v5965 = vunpack.c.l.b16 %v4579
    %v5966 = vunpack.c.l.b16 %v4580
    %v5967 = vunpack.c.l.b16 %v4581
    %v5968 = vunpack.c.l.b16 %v4582
    %v5969 = vunpack.c.l.b16 %v4583
    %v5970 = vunpack.c.l.b16 %v4584
    %v5971 = vunpack.c.l.b16 %v4585
    %v5972 = vunpack.c.l.b16 %v4586
    %v5973 = vunpack.c.l.b16 %v4587
    %v5974 = vunpack.c.l.b16 %v4588
    %v5975 = vunpack.c.l.b16 %v4589
    %v5976 = vpack.c.b16 %v5961, %v5960
    %v5977 = vpack.c.b16 %v5963, %v5962
    %v5978 = vpack.c.b16 %v5965, %v5964
    %v5979 = vpack.c.b16 %v5967, %v5966
    %v5980 = vpack.c.b16 %v5969, %v5968
    %v5981 = vpack.c.b16 %v5971, %v5970
    %v5982 = vpack.c.b16 %v5973, %v5972
    %v5983 = vpack.c.b16 %v5975, %v5974
    %5992 = vmatpush.bf16.msra.mxu0 %v5983
    %5993 = vmatpush.bf16.msra.mxu0 %v5982
    %5994 = vmatpush.bf16.msra.mxu0 %v5981
    %5995 = vmatpush.bf16.msra.mxu0 %v5980
    %5996 = vmatpush.bf16.msra.mxu0 %v5979
    %5997 = vmatpush.bf16.msra.mxu0 %v5978
    %5998 = vmatpush.bf16.msra.mxu0 %v5977
    %5999 = vmatpush.bf16.msra.mxu0 %v5976
    %6000 = vmatmul.bf16.gmra.mxu0 %v5880
    %v6001 = vpop.f32.mrf.mxu0
    %v6002 = vadd.f32 %v5593, %v6001
    %v6003 = vpop.f32.mrf.mxu0
    %v6004 = vadd.f32 %v5595, %v6003
    %6005 = vmatmul.bf16.gmra.mxu0 %v5881
    %v6006 = vpop.f32.mrf.mxu0
    %v6007 = vadd.f32 %v5598, %v6006
    %v6008 = vpop.f32.mrf.mxu0
    %v6009 = vadd.f32 %v5600, %v6008
    %6010 = vmatmul.bf16.gmra.mxu0 %v5882
    %v6011 = vpop.f32.mrf.mxu0
    %v6012 = vadd.f32 %v5603, %v6011
    %v6013 = vpop.f32.mrf.mxu0
    %v6014 = vadd.f32 %v5605, %v6013
    %6015 = vmatmul.bf16.gmra.mxu0 %v5883
    %v6016 = vpop.f32.mrf.mxu0
    %v6017 = vadd.f32 %v5608, %v6016
    %v6018 = vpop.f32.mrf.mxu0
    %v6019 = vadd.f32 %v5610, %v6018
    %6020 = vmatmul.bf16.gmra.mxu0 %v5884
    %v6021 = vpop.f32.mrf.mxu0
    %v6022 = vadd.f32 %v5613, %v6021
    %v6023 = vpop.f32.mrf.mxu0
    %v6024 = vadd.f32 %v5615, %v6023
    %6025 = vmatmul.bf16.gmra.mxu0 %v5885
    %v6026 = vpop.f32.mrf.mxu0
    %v6027 = vadd.f32 %v5618, %v6026
    %v6028 = vpop.f32.mrf.mxu0
    %v6029 = vadd.f32 %v5620, %v6028
    %6030 = vmatmul.bf16.gmra.mxu0 %v5886
    %v6031 = vpop.f32.mrf.mxu0
    %v6032 = vadd.f32 %v5623, %v6031
    %v6033 = vpop.f32.mrf.mxu0
    %v6034 = vadd.f32 %v5625, %v6033
    %6035 = vmatmul.bf16.gmra.mxu0 %v5887
    %v6036 = vpop.f32.mrf.mxu0
    %v6037 = vadd.f32 %v5628, %v6036
    %v6038 = vpop.f32.mrf.mxu0
    %v6039 = vadd.f32 %v5630, %v6038
    %6040 = vmatmul.bf16.gmra.mxu0 %v5888
    %v6041 = vpop.f32.mrf.mxu0
    %v6042 = vadd.f32 %v5633, %v6041
    %v6043 = vpop.f32.mrf.mxu0
    %v6044 = vadd.f32 %v5635, %v6043
    %6045 = vmatmul.bf16.gmra.mxu0 %v5889
    %v6046 = vpop.f32.mrf.mxu0
    %v6047 = vadd.f32 %v5638, %v6046
    %v6048 = vpop.f32.mrf.mxu0
    %v6049 = vadd.f32 %v5640, %v6048
    %6050 = vmatmul.bf16.gmra.mxu0 %v5890
    %v6051 = vpop.f32.mrf.mxu0
    %v6052 = vadd.f32 %v5643, %v6051
    %v6053 = vpop.f32.mrf.mxu0
    %v6054 = vadd.f32 %v5645, %v6053
    %6055 = vmatmul.bf16.gmra.mxu0 %v5891
    %v6056 = vpop.f32.mrf.mxu0
    %v6057 = vadd.f32 %v5648, %v6056
    %v6058 = vpop.f32.mrf.mxu0
    %v6059 = vadd.f32 %v5650, %v6058
    %6060 = vmatmul.bf16.gmra.mxu0 %v5892
    %v6061 = vpop.f32.mrf.mxu0
    %v6062 = vadd.f32 %v5653, %v6061
    %v6063 = vpop.f32.mrf.mxu0
    %v6064 = vadd.f32 %v5655, %v6063
    %6065 = vmatmul.bf16.gmra.mxu0 %v5893
    %v6066 = vpop.f32.mrf.mxu0
    %v6067 = vadd.f32 %v5658, %v6066
    %v6068 = vpop.f32.mrf.mxu0
    %v6069 = vadd.f32 %v5660, %v6068
    %6070 = vmatmul.bf16.gmra.mxu0 %v5894
    %v6071 = vpop.f32.mrf.mxu0
    %v6072 = vadd.f32 %v5663, %v6071
    %v6073 = vpop.f32.mrf.mxu0
    %v6074 = vadd.f32 %v5665, %v6073
    %6075 = vmatmul.bf16.gmra.mxu0 %v5895
    %v6076 = vpop.f32.mrf.mxu0
    %v6077 = vadd.f32 %v5668, %v6076
    %v6078 = vpop.f32.mrf.mxu0
    %v6079 = vadd.f32 %v5670, %v6078
    %6080 = vmatmul.bf16.gmra.mxu0 %v5896
    %v6081 = vpop.f32.mrf.mxu0
    %v6082 = vadd.f32 %v5673, %v6081
    %v6083 = vpop.f32.mrf.mxu0
    %v6084 = vadd.f32 %v5675, %v6083
    %6085 = vmatmul.bf16.gmra.mxu0 %v5897
    %v6086 = vpop.f32.mrf.mxu0
    %v6087 = vadd.f32 %v5678, %v6086
    %v6088 = vpop.f32.mrf.mxu0
    %v6089 = vadd.f32 %v5680, %v6088
    %6090 = vmatmul.bf16.gmra.mxu0 %v5898
    %v6091 = vpop.f32.mrf.mxu0
    %v6092 = vadd.f32 %v5683, %v6091
    %v6093 = vpop.f32.mrf.mxu0
    %v6094 = vadd.f32 %v5685, %v6093
    %6095 = vmatmul.bf16.gmra.mxu0 %v5899
    %v6096 = vpop.f32.mrf.mxu0
    %v6097 = vadd.f32 %v5688, %v6096
    %v6098 = vpop.f32.mrf.mxu0
    %v6099 = vadd.f32 %v5690, %v6098
    %6100 = vmatmul.bf16.gmra.mxu0 %v5900
    %v6101 = vpop.f32.mrf.mxu0
    %v6102 = vadd.f32 %v5693, %v6101
    %v6103 = vpop.f32.mrf.mxu0
    %v6104 = vadd.f32 %v5695, %v6103
    %6105 = vmatmul.bf16.gmra.mxu0 %v5901
    %v6106 = vpop.f32.mrf.mxu0
    %v6107 = vadd.f32 %v5698, %v6106
    %v6108 = vpop.f32.mrf.mxu0
    %v6109 = vadd.f32 %v5700, %v6108
    %6110 = vmatmul.bf16.gmra.mxu0 %v5902
    %v6111 = vpop.f32.mrf.mxu0
    %v6112 = vadd.f32 %v5703, %v6111
    %v6113 = vpop.f32.mrf.mxu0
    %v6114 = vadd.f32 %v5705, %v6113
    %6115 = vmatmul.bf16.gmra.mxu0 %v5903
    %v6116 = vpop.f32.mrf.mxu0
    %v6117 = vadd.f32 %v5708, %v6116
    %v6118 = vpop.f32.mrf.mxu0
    %v6119 = vadd.f32 %v5710, %v6118
    %6120 = vmatmul.bf16.gmra.mxu0 %v5904
    %v6121 = vpop.f32.mrf.mxu0
    %v6122 = vadd.f32 %v5713, %v6121
    %v6123 = vpop.f32.mrf.mxu0
    %v6124 = vadd.f32 %v5715, %v6123
    %6125 = vmatmul.bf16.gmra.mxu0 %v5905
    %v6126 = vpop.f32.mrf.mxu0
    %v6127 = vadd.f32 %v5718, %v6126
    %v6128 = vpop.f32.mrf.mxu0
    %v6129 = vadd.f32 %v5720, %v6128
    %6130 = vmatmul.bf16.gmra.mxu0 %v5906
    %v6131 = vpop.f32.mrf.mxu0
    %v6132 = vadd.f32 %v5723, %v6131
    %v6133 = vpop.f32.mrf.mxu0
    %v6134 = vadd.f32 %v5725, %v6133
    %6135 = vmatmul.bf16.gmra.mxu0 %v5907
    %v6136 = vpop.f32.mrf.mxu0
    %v6137 = vadd.f32 %v5728, %v6136
    %v6138 = vpop.f32.mrf.mxu0
    %v6139 = vadd.f32 %v5730, %v6138
    %6140 = vmatmul.bf16.gmra.mxu0 %v5908
    %v6141 = vpop.f32.mrf.mxu0
    %v6142 = vadd.f32 %v5733, %v6141
    %v6143 = vpop.f32.mrf.mxu0
    %v6144 = vadd.f32 %v5735, %v6143
    %6145 = vmatmul.bf16.gmra.mxu0 %v5909
    %v6146 = vpop.f32.mrf.mxu0
    %v6147 = vadd.f32 %v5738, %v6146
    %v6148 = vpop.f32.mrf.mxu0
    %v6149 = vadd.f32 %v5740, %v6148
    %6150 = vmatmul.bf16.gmra.mxu0 %v5910
    %v6151 = vpop.f32.mrf.mxu0
    %v6152 = vadd.f32 %v5743, %v6151
    %v6153 = vpop.f32.mrf.mxu0
    %v6154 = vadd.f32 %v5745, %v6153
    %6155 = vmatmul.bf16.gmra.mxu0 %v5911
    %v6156 = vpop.f32.mrf.mxu0
    %v6157 = vadd.f32 %v5748, %v6156
    %v6158 = vpop.f32.mrf.mxu0
    %v6159 = vadd.f32 %v5750, %v6158
    %6160 = vdwg.mxu0
    %v6161 = vld [vmem:[%s1812] sm:$0xe]
    %v6162 = vld [vmem:[%s1812 + $0xc] sm:$0xe]
    %v6163 = vld [vmem:[%s1812 + $0x18] sm:$0xe]
    %v6164 = vld [vmem:[%s1812 + $0x24] sm:$0xe]
    %v6165 = vld [vmem:[%s1812 + $0x30] sm:$0xe]
    %v6166 = vld [vmem:[%s1812 + $0x3c] sm:$0xe]
    %v6167 = vld [vmem:[%s1812 + $0x48] sm:$0xe]
    %v6168 = vld [vmem:[%s1812 + $0x54] sm:$0xe]
    %v6169 = vld [vmem:[%s1812 + $0x60] sm:$0xe]
    %v6170 = vld [vmem:[%s1812 + $0x6c] sm:$0xe]
    %v6171 = vld [vmem:[%s1812 + $0x78] sm:$0xe]
    %v6172 = vld [vmem:[%s1812 + $0x84] sm:$0xe]
    %v6173 = vld [vmem:[%s1812 + $0x90] sm:$0xe]
    %v6174 = vld [vmem:[%s1812 + $0x9c] sm:$0xe]
    %v6175 = vld [vmem:[%s1812 + $0xa8] sm:$0xe]
    %v6176 = vld [vmem:[%s1812 + $0xb4] sm:$0xe]
    %v6177 = vld [vmem:[%s1812 + $0xd8] sm:$0xe]
    %v6178 = vld [vmem:[%s1812 + $0xe4] sm:$0xe]
    %v6179 = vld [vmem:[%s1812 + $0xf0] sm:$0xe]
    %v6180 = vld [vmem:[%s1812 + $0xfc] sm:$0xe]
    %v6181 = vld [vmem:[%s1812 + $0x108] sm:$0xe]
    %v6182 = vld [vmem:[%s1812 + $0x114] sm:$0xe]
    %v6183 = vld [vmem:[%s1812 + $0x120] sm:$0xe]
    %v6184 = vld [vmem:[%s1812 + $0x12c] sm:$0xe]
    %v6185 = vld [vmem:[%s1812 + $0x138] sm:$0xe]
    %v6186 = vld [vmem:[%s1812 + $0x144] sm:$0xe]
    %v6187 = vld [vmem:[%s1812 + $0x150] sm:$0xe]
    %v6188 = vld [vmem:[%s1812 + $0x15c] sm:$0xe]
    %v6189 = vld [vmem:[%s1812 + $0x168] sm:$0xe]
    %v6190 = vld [vmem:[%s1812 + $0x174] sm:$0xe]
    %v6191 = vld [vmem:[%s1812 + $0x180] sm:$0xe]
    %v6192 = vld [vmem:[%s1812 + $0x18c] sm:$0xe]
    %v6257 = vrot.slane %v6161, 5
    %v6258 = vrot.slane %v6257, 4
    %v6259 = vrot.slane %v4510, 5
    %v6260 = vsel %vm3794, %v6258, %v6259
    %v6261 = vrot.slane %v6259, 4
    %v6262 = vrot.slane %v4590, 5
    %v6263 = vsel %vm3794, %v6261, %v6262
    %v6264 = vrot.slane %v6162, 5
    %v6265 = vrot.slane %v6264, 4
    %v6266 = vrot.slane %v4512, 5
    %v6267 = vsel %vm3794, %v6265, %v6266
    %v6268 = vrot.slane %v6266, 4
    %v6269 = vrot.slane %v4591, 5
    %v6270 = vsel %vm3794, %v6268, %v6269
    %v6271 = vrot.slane %v6163, 5
    %v6272 = vrot.slane %v6271, 4
    %v6273 = vrot.slane %v4514, 5
    %v6274 = vsel %vm3794, %v6272, %v6273
    %v6275 = vrot.slane %v6273, 4
    %v6276 = vrot.slane %v4592, 5
    %v6277 = vsel %vm3794, %v6275, %v6276
    %v6278 = vrot.slane %v6164, 5
    %v6279 = vrot.slane %v6278, 4
    %v6280 = vrot.slane %v4516, 5
    %v6281 = vsel %vm3794, %v6279, %v6280
    %v6282 = vrot.slane %v6280, 4
    %v6283 = vrot.slane %v4593, 5
    %v6284 = vsel %vm3794, %v6282, %v6283
    %v6285 = vrot.slane %v6165, 5
    %v6286 = vrot.slane %v6285, 4
    %v6287 = vrot.slane %v4518, 5
    %v6288 = vsel %vm3794, %v6286, %v6287
    %v6289 = vrot.slane %v6287, 4
    %v6290 = vrot.slane %v4594, 5
    %v6291 = vsel %vm3794, %v6289, %v6290
    %v6292 = vrot.slane %v6166, 5
    %v6293 = vrot.slane %v6292, 4
    %v6294 = vrot.slane %v4520, 5
    %v6295 = vsel %vm3794, %v6293, %v6294
    %v6296 = vrot.slane %v6294, 4
    %v6297 = vrot.slane %v4595, 5
    %v6298 = vsel %vm3794, %v6296, %v6297
    %v6299 = vrot.slane %v6167, 5
    %v6300 = vrot.slane %v6299, 4
    %v6301 = vrot.slane %v4522, 5
    %v6302 = vsel %vm3794, %v6300, %v6301
    %v6303 = vrot.slane %v6301, 4
    %v6304 = vrot.slane %v4596, 5
    %v6305 = vsel %vm3794, %v6303, %v6304
    %v6306 = vrot.slane %v6168, 5
    %v6307 = vrot.slane %v6306, 4
    %v6308 = vrot.slane %v4524, 5
    %v6309 = vsel %vm3794, %v6307, %v6308
    %v6310 = vrot.slane %v6308, 4
    %v6311 = vrot.slane %v4597, 5
    %v6312 = vsel %vm3794, %v6310, %v6311
    %v6313 = vrot.slane %v6169, 5
    %v6314 = vrot.slane %v6313, 4
    %v6315 = vrot.slane %v4526, 5
    %v6316 = vsel %vm3794, %v6314, %v6315
    %v6317 = vrot.slane %v6315, 4
    %v6318 = vrot.slane %v4598, 5
    %v6319 = vsel %vm3794, %v6317, %v6318
    %v6320 = vrot.slane %v6170, 5
    %v6321 = vrot.slane %v6320, 4
    %v6322 = vrot.slane %v4528, 5
    %v6323 = vsel %vm3794, %v6321, %v6322
    %v6324 = vrot.slane %v6322, 4
    %v6325 = vrot.slane %v4599, 5
    %v6326 = vsel %vm3794, %v6324, %v6325
    %v6327 = vrot.slane %v6171, 5
    %v6328 = vrot.slane %v6327, 4
    %v6329 = vrot.slane %v4530, 5
    %v6330 = vsel %vm3794, %v6328, %v6329
    %v6331 = vrot.slane %v6329, 4
    %v6332 = vrot.slane %v4600, 5
    %v6333 = vsel %vm3794, %v6331, %v6332
    %v6334 = vrot.slane %v6172, 5
    %v6335 = vrot.slane %v6334, 4
    %v6336 = vrot.slane %v4532, 5
    %v6337 = vsel %vm3794, %v6335, %v6336
    %v6338 = vrot.slane %v6336, 4
    %v6339 = vrot.slane %v4601, 5
    %v6340 = vsel %vm3794, %v6338, %v6339
    %v6341 = vrot.slane %v6173, 5
    %v6342 = vrot.slane %v6341, 4
    %v6343 = vrot.slane %v4534, 5
    %v6344 = vsel %vm3794, %v6342, %v6343
    %v6345 = vrot.slane %v6343, 4
    %v6346 = vrot.slane %v4602, 5
    %v6347 = vsel %vm3794, %v6345, %v6346
    %v6348 = vrot.slane %v6174, 5
    %v6349 = vrot.slane %v6348, 4
    %v6350 = vrot.slane %v4536, 5
    %v6351 = vsel %vm3794, %v6349, %v6350
    %v6352 = vrot.slane %v6350, 4
    %v6353 = vrot.slane %v4603, 5
    %v6354 = vsel %vm3794, %v6352, %v6353
    %v6355 = vrot.slane %v6175, 5
    %v6356 = vrot.slane %v6355, 4
    %v6357 = vrot.slane %v4538, 5
    %v6358 = vsel %vm3794, %v6356, %v6357
    %v6359 = vrot.slane %v6357, 4
    %v6360 = vrot.slane %v4604, 5
    %v6361 = vsel %vm3794, %v6359, %v6360
    %v6362 = vrot.slane %v6176, 5
    %v6363 = vrot.slane %v6362, 4
    %v6364 = vrot.slane %v4540, 5
    %v6365 = vsel %vm3794, %v6363, %v6364
    %v6366 = vrot.slane %v6364, 4
    %v6367 = vrot.slane %v4605, 5
    %v6368 = vsel %vm3794, %v6366, %v6367
    %v6369 = vrot.slane %v6177, 5
    %v6370 = vrot.slane %v6369, 4
    %v6371 = vrot.slane %v4542, 5
    %v6372 = vsel %vm3794, %v6370, %v6371
    %v6373 = vrot.slane %v6371, 4
    %v6374 = vrot.slane %v4606, 5
    %v6375 = vsel %vm3794, %v6373, %v6374
    %v6376 = vrot.slane %v6178, 5
    %v6377 = vrot.slane %v6376, 4
    %v6378 = vrot.slane %v4544, 5
    %v6379 = vsel %vm3794, %v6377, %v6378
    %v6380 = vrot.slane %v6378, 4
    %v6381 = vrot.slane %v4607, 5
    %v6382 = vsel %vm3794, %v6380, %v6381
    %v6383 = vrot.slane %v6179, 5
    %v6384 = vrot.slane %v6383, 4
    %v6385 = vrot.slane %v4546, 5
    %v6386 = vsel %vm3794, %v6384, %v6385
    %v6387 = vrot.slane %v6385, 4
    %v6388 = vrot.slane %v4608, 5
    %v6389 = vsel %vm3794, %v6387, %v6388
    %v6390 = vrot.slane %v6180, 5
    %v6391 = vrot.slane %v6390, 4
    %v6392 = vrot.slane %v4548, 5
    %v6393 = vsel %vm3794, %v6391, %v6392
    %v6394 = vrot.slane %v6392, 4
    %v6395 = vrot.slane %v4609, 5
    %v6396 = vsel %vm3794, %v6394, %v6395
    %v6397 = vrot.slane %v6181, 5
    %v6398 = vrot.slane %v6397, 4
    %v6399 = vrot.slane %v4550, 5
    %v6400 = vsel %vm3794, %v6398, %v6399
    %v6401 = vrot.slane %v6399, 4
    %v6402 = vrot.slane %v4610, 5
    %v6403 = vsel %vm3794, %v6401, %v6402
    %v6404 = vrot.slane %v6182, 5
    %v6405 = vrot.slane %v6404, 4
    %v6406 = vrot.slane %v4552, 5
    %v6407 = vsel %vm3794, %v6405, %v6406
    %v6408 = vrot.slane %v6406, 4
    %v6409 = vrot.slane %v4611, 5
    %v6410 = vsel %vm3794, %v6408, %v6409
    %v6411 = vrot.slane %v6183, 5
    %v6412 = vrot.slane %v6411, 4
    %v6413 = vrot.slane %v4554, 5
    %v6414 = vsel %vm3794, %v6412, %v6413
    %v6415 = vrot.slane %v6413, 4
    %v6416 = vrot.slane %v4612, 5
    %v6417 = vsel %vm3794, %v6415, %v6416
    %v6418 = vrot.slane %v6184, 5
    %v6419 = vrot.slane %v6418, 4
    %v6420 = vrot.slane %v4556, 5
    %v6421 = vsel %vm3794, %v6419, %v6420
    %v6422 = vrot.slane %v6420, 4
    %v6423 = vrot.slane %v4613, 5
    %v6424 = vsel %vm3794, %v6422, %v6423
    %v6425 = vrot.slane %v6185, 5
    %v6426 = vrot.slane %v6425, 4
    %v6427 = vrot.slane %v4558, 5
    %v6428 = vsel %vm3794, %v6426, %v6427
    %v6429 = vrot.slane %v6427, 4
    %v6430 = vrot.slane %v4614, 5
    %v6431 = vsel %vm3794, %v6429, %v6430
    %v6432 = vrot.slane %v6186, 5
    %v6433 = vrot.slane %v6432, 4
    %v6434 = vrot.slane %v4560, 5
    %v6435 = vsel %vm3794, %v6433, %v6434
    %v6436 = vrot.slane %v6434, 4
    %v6437 = vrot.slane %v4615, 5
    %v6438 = vsel %vm3794, %v6436, %v6437
    %v6439 = vrot.slane %v6187, 5
    %v6440 = vrot.slane %v6439, 4
    %v6441 = vrot.slane %v4562, 5
    %v6442 = vsel %vm3794, %v6440, %v6441
    %v6443 = vrot.slane %v6441, 4
    %v6444 = vrot.slane %v4616, 5
    %v6445 = vsel %vm3794, %v6443, %v6444
    %v6446 = vrot.slane %v6188, 5
    %v6447 = vrot.slane %v6446, 4
    %v6448 = vrot.slane %v4564, 5
    %v6449 = vsel %vm3794, %v6447, %v6448
    %v6450 = vrot.slane %v6448, 4
    %v6451 = vrot.slane %v4617, 5
    %v6452 = vsel %vm3794, %v6450, %v6451
    %v6453 = vrot.slane %v6189, 5
    %v6454 = vrot.slane %v6453, 4
    %v6455 = vrot.slane %v4566, 5
    %v6456 = vsel %vm3794, %v6454, %v6455
    %v6457 = vrot.slane %v6455, 4
    %v6458 = vrot.slane %v4618, 5
    %v6459 = vsel %vm3794, %v6457, %v6458
    %v6460 = vrot.slane %v6190, 5
    %v6461 = vrot.slane %v6460, 4
    %v6462 = vrot.slane %v4568, 5
    %v6463 = vsel %vm3794, %v6461, %v6462
    %v6464 = vrot.slane %v6462, 4
    %v6465 = vrot.slane %v4619, 5
    %v6466 = vsel %vm3794, %v6464, %v6465
    %v6467 = vrot.slane %v6191, 5
    %v6468 = vrot.slane %v6467, 4
    %v6469 = vrot.slane %v4570, 5
    %v6470 = vsel %vm3794, %v6468, %v6469
    %v6471 = vrot.slane %v6469, 4
    %v6472 = vrot.slane %v4620, 5
    %v6473 = vsel %vm3794, %v6471, %v6472
    %v6474 = vrot.slane %v6192, 5
    %v6475 = vrot.slane %v6474, 4
    %v6476 = vrot.slane %v4572, 5
    %v6477 = vsel %vm3794, %v6475, %v6476
    %v6478 = vrot.slane %v6476, 4
    %v6479 = vrot.slane %v4621, 5
    %v6480 = vsel %vm3794, %v6478, %v6479
    %s6481 = scalar_lea.vmem %s4, 320
    %v6482 = vld [vmem:[%s6481] sm:$0xf]
    %v6483 = vld [vmem:[%s6481 + $0x4] sm:$0xf]
    %v6484 = vld [vmem:[%s6481 + $0x8] sm:$0xf]
    %v6485 = vld [vmem:[%s6481 + $0xc] sm:$0xf]
    %v6486 = vld [vmem:[%s6481 + $0x10] sm:$0xf]
    %v6487 = vld [vmem:[%s6481 + $0x14] sm:$0xf]
    %v6488 = vld [vmem:[%s6481 + $0x18] sm:$0xf]
    %v6489 = vld [vmem:[%s6481 + $0x1c] sm:$0xf]
    %v6490 = vld [vmem:[%s6481 + $0x20] sm:$0xf]
    %v6491 = vld [vmem:[%s6481 + $0x24] sm:$0xf]
    %v6492 = vld [vmem:[%s6481 + $0x28] sm:$0xf]
    %v6493 = vld [vmem:[%s6481 + $0x2c] sm:$0xf]
    %v6494 = vld [vmem:[%s6481 + $0x30] sm:$0xf]
    %v6495 = vld [vmem:[%s6481 + $0x34] sm:$0xf]
    %v6496 = vld [vmem:[%s6481 + $0x38] sm:$0xf]
    %v6497 = vld [vmem:[%s6481 + $0x3c] sm:$0xf]
    %v6498 = vunpack.c.l.b16 %v6260
    %v6499 = vunpack.c.l.b16 %v6263
    %v6500 = vunpack.c.l.b16 %v6267
    %v6501 = vunpack.c.l.b16 %v6270
    %v6502 = vunpack.c.l.b16 %v6274
    %v6503 = vunpack.c.l.b16 %v6277
    %v6504 = vunpack.c.l.b16 %v6281
    %v6505 = vunpack.c.l.b16 %v6284
    %v6506 = vunpack.c.l.b16 %v6288
    %v6507 = vunpack.c.l.b16 %v6291
    %v6508 = vunpack.c.l.b16 %v6295
    %v6509 = vunpack.c.l.b16 %v6298
    %v6510 = vunpack.c.l.b16 %v6302
    %v6511 = vunpack.c.l.b16 %v6305
    %v6512 = vunpack.c.l.b16 %v6309
    %v6513 = vunpack.c.l.b16 %v6312
    %v6514 = vunpack.c.l.b16 %v6316
    %v6515 = vunpack.c.l.b16 %v6319
    %v6516 = vunpack.c.l.b16 %v6323
    %v6517 = vunpack.c.l.b16 %v6326
    %v6518 = vunpack.c.l.b16 %v6330
    %v6519 = vunpack.c.l.b16 %v6333
    %v6520 = vunpack.c.l.b16 %v6337
    %v6521 = vunpack.c.l.b16 %v6340
    %v6522 = vunpack.c.l.b16 %v6344
    %v6523 = vunpack.c.l.b16 %v6347
    %v6524 = vunpack.c.l.b16 %v6351
    %v6525 = vunpack.c.l.b16 %v6354
    %v6526 = vunpack.c.l.b16 %v6358
    %v6527 = vunpack.c.l.b16 %v6361
    %v6528 = vunpack.c.l.b16 %v6365
    %v6529 = vunpack.c.l.b16 %v6368
    %v6530 = vunpack.c.l.b16 %v6372
    %v6531 = vunpack.c.l.b16 %v6375
    %v6532 = vunpack.c.l.b16 %v6379
    %v6533 = vunpack.c.l.b16 %v6382
    %v6534 = vunpack.c.l.b16 %v6386
    %v6535 = vunpack.c.l.b16 %v6389
    %v6536 = vunpack.c.l.b16 %v6393
    %v6537 = vunpack.c.l.b16 %v6396
    %v6538 = vunpack.c.l.b16 %v6400
    %v6539 = vunpack.c.l.b16 %v6403
    %v6540 = vunpack.c.l.b16 %v6407
    %v6541 = vunpack.c.l.b16 %v6410
    %v6542 = vunpack.c.l.b16 %v6414
    %v6543 = vunpack.c.l.b16 %v6417
    %v6544 = vunpack.c.l.b16 %v6421
    %v6545 = vunpack.c.l.b16 %v6424
    %v6546 = vunpack.c.l.b16 %v6428
    %v6547 = vunpack.c.l.b16 %v6431
    %v6548 = vunpack.c.l.b16 %v6435
    %v6549 = vunpack.c.l.b16 %v6438
    %v6550 = vunpack.c.l.b16 %v6442
    %v6551 = vunpack.c.l.b16 %v6445
    %v6552 = vunpack.c.l.b16 %v6449
    %v6553 = vunpack.c.l.b16 %v6452
    %v6554 = vunpack.c.l.b16 %v6456
    %v6555 = vunpack.c.l.b16 %v6459
    %v6556 = vunpack.c.l.b16 %v6463
    %v6557 = vunpack.c.l.b16 %v6466
    %v6558 = vunpack.c.l.b16 %v6470
    %v6559 = vunpack.c.l.b16 %v6473
    %v6560 = vunpack.c.l.b16 %v6477
    %v6561 = vunpack.c.l.b16 %v6480
    %v6562 = vpack.c.b16 %v6499, %v6498
    %v6563 = vpack.c.b16 %v6501, %v6500
    %v6564 = vpack.c.b16 %v6503, %v6502
    %v6565 = vpack.c.b16 %v6505, %v6504
    %v6566 = vpack.c.b16 %v6507, %v6506
    %v6567 = vpack.c.b16 %v6509, %v6508
    %v6568 = vpack.c.b16 %v6511, %v6510
    %v6569 = vpack.c.b16 %v6513, %v6512
    %v6570 = vpack.c.b16 %v6515, %v6514
    %v6571 = vpack.c.b16 %v6517, %v6516
    %v6572 = vpack.c.b16 %v6519, %v6518
    %v6573 = vpack.c.b16 %v6521, %v6520
    %v6574 = vpack.c.b16 %v6523, %v6522
    %v6575 = vpack.c.b16 %v6525, %v6524
    %v6576 = vpack.c.b16 %v6527, %v6526
    %v6577 = vpack.c.b16 %v6529, %v6528
    %v6578 = vpack.c.b16 %v6531, %v6530
    %v6579 = vpack.c.b16 %v6533, %v6532
    %v6580 = vpack.c.b16 %v6535, %v6534
    %v6581 = vpack.c.b16 %v6537, %v6536
    %v6582 = vpack.c.b16 %v6539, %v6538
    %v6583 = vpack.c.b16 %v6541, %v6540
    %v6584 = vpack.c.b16 %v6543, %v6542
    %v6585 = vpack.c.b16 %v6545, %v6544
    %v6586 = vpack.c.b16 %v6547, %v6546
    %v6587 = vpack.c.b16 %v6549, %v6548
    %v6588 = vpack.c.b16 %v6551, %v6550
    %v6589 = vpack.c.b16 %v6553, %v6552
    %v6590 = vpack.c.b16 %v6555, %v6554
    %v6591 = vpack.c.b16 %v6557, %v6556
    %v6592 = vpack.c.b16 %v6559, %v6558
    %v6593 = vpack.c.b16 %v6561, %v6560
    %v6642 = vunpack.c.l.b16 %v6482
    %v6643 = vunpack.c.l.b16 %v6483
    %v6644 = vunpack.c.l.b16 %v6484
    %v6645 = vunpack.c.l.b16 %v6485
    %v6646 = vunpack.c.l.b16 %v6486
    %v6647 = vunpack.c.l.b16 %v6487
    %v6648 = vunpack.c.l.b16 %v6488
    %v6649 = vunpack.c.l.b16 %v6489
    %v6650 = vunpack.c.l.b16 %v6490
    %v6651 = vunpack.c.l.b16 %v6491
    %v6652 = vunpack.c.l.b16 %v6492
    %v6653 = vunpack.c.l.b16 %v6493
    %v6654 = vunpack.c.l.b16 %v6494
    %v6655 = vunpack.c.l.b16 %v6495
    %v6656 = vunpack.c.l.b16 %v6496
    %v6657 = vunpack.c.l.b16 %v6497
    %v6658 = vpack.c.b16 %v6643, %v6642
    %v6659 = vpack.c.b16 %v6645, %v6644
    %v6660 = vpack.c.b16 %v6647, %v6646
    %v6661 = vpack.c.b16 %v6649, %v6648
    %v6662 = vpack.c.b16 %v6651, %v6650
    %v6663 = vpack.c.b16 %v6653, %v6652
    %v6664 = vpack.c.b16 %v6655, %v6654
    %v6665 = vpack.c.b16 %v6657, %v6656
    %6674 = vmatpush.bf16.msra.mxu0 %v6665
    %6675 = vmatpush.bf16.msra.mxu0 %v6664
    %6676 = vmatpush.bf16.msra.mxu0 %v6663
    %6677 = vmatpush.bf16.msra.mxu0 %v6662
    %6678 = vmatpush.bf16.msra.mxu0 %v6661
    %6679 = vmatpush.bf16.msra.mxu0 %v6660
    %6680 = vmatpush.bf16.msra.mxu0 %v6659
    %6681 = vmatpush.bf16.msra.mxu0 %v6658
    %6682 = vmatmul.bf16.gmra.mxu0 %v6562
    %v6683 = vpop.f32.mrf.mxu0
    %v6684 = vadd.f32 0.0, %v6683
    %v6685 = vpop.f32.mrf.mxu0
    %v6686 = vadd.f32 0.0, %v6685
    %6687 = vmatmul.bf16.gmra.mxu0 %v6563
    %v6688 = vpop.f32.mrf.mxu0
    %v6689 = vadd.f32 0.0, %v6688
    %v6690 = vpop.f32.mrf.mxu0
    %v6691 = vadd.f32 0.0, %v6690
    %6692 = vmatmul.bf16.gmra.mxu0 %v6564
    %v6693 = vpop.f32.mrf.mxu0
    %v6694 = vadd.f32 0.0, %v6693
    %v6695 = vpop.f32.mrf.mxu0
    %v6696 = vadd.f32 0.0, %v6695
    %6697 = vmatmul.bf16.gmra.mxu0 %v6565
    %v6698 = vpop.f32.mrf.mxu0
    %v6699 = vadd.f32 0.0, %v6698
    %v6700 = vpop.f32.mrf.mxu0
    %v6701 = vadd.f32 0.0, %v6700
    %6702 = vmatmul.bf16.gmra.mxu0 %v6566
    %v6703 = vpop.f32.mrf.mxu0
    %v6704 = vadd.f32 0.0, %v6703
    %v6705 = vpop.f32.mrf.mxu0
    %v6706 = vadd.f32 0.0, %v6705
    %6707 = vmatmul.bf16.gmra.mxu0 %v6567
    %v6708 = vpop.f32.mrf.mxu0
    %v6709 = vadd.f32 0.0, %v6708
    %v6710 = vpop.f32.mrf.mxu0
    %v6711 = vadd.f32 0.0, %v6710
    %6712 = vmatmul.bf16.gmra.mxu0 %v6568
    %v6713 = vpop.f32.mrf.mxu0
    %v6714 = vadd.f32 0.0, %v6713
    %v6715 = vpop.f32.mrf.mxu0
    %v6716 = vadd.f32 0.0, %v6715
    %6717 = vmatmul.bf16.gmra.mxu0 %v6569
    %v6718 = vpop.f32.mrf.mxu0
    %v6719 = vadd.f32 0.0, %v6718
    %v6720 = vpop.f32.mrf.mxu0
    %v6721 = vadd.f32 0.0, %v6720
    %6722 = vmatmul.bf16.gmra.mxu0 %v6570
    %v6723 = vpop.f32.mrf.mxu0
    %v6724 = vadd.f32 0.0, %v6723
    %v6725 = vpop.f32.mrf.mxu0
    %v6726 = vadd.f32 0.0, %v6725
    %6727 = vmatmul.bf16.gmra.mxu0 %v6571
    %v6728 = vpop.f32.mrf.mxu0
    %v6729 = vadd.f32 0.0, %v6728
    %v6730 = vpop.f32.mrf.mxu0
    %v6731 = vadd.f32 0.0, %v6730
    %6732 = vmatmul.bf16.gmra.mxu0 %v6572
    %v6733 = vpop.f32.mrf.mxu0
    %v6734 = vadd.f32 0.0, %v6733
    %v6735 = vpop.f32.mrf.mxu0
    %v6736 = vadd.f32 0.0, %v6735
    %6737 = vmatmul.bf16.gmra.mxu0 %v6573
    %v6738 = vpop.f32.mrf.mxu0
    %v6739 = vadd.f32 0.0, %v6738
    %v6740 = vpop.f32.mrf.mxu0
    %v6741 = vadd.f32 0.0, %v6740
    %6742 = vmatmul.bf16.gmra.mxu0 %v6574
    %v6743 = vpop.f32.mrf.mxu0
    %v6744 = vadd.f32 0.0, %v6743
    %v6745 = vpop.f32.mrf.mxu0
    %v6746 = vadd.f32 0.0, %v6745
    %6747 = vmatmul.bf16.gmra.mxu0 %v6575
    %v6748 = vpop.f32.mrf.mxu0
    %v6749 = vadd.f32 0.0, %v6748
    %v6750 = vpop.f32.mrf.mxu0
    %v6751 = vadd.f32 0.0, %v6750
    %6752 = vmatmul.bf16.gmra.mxu0 %v6576
    %v6753 = vpop.f32.mrf.mxu0
    %v6754 = vadd.f32 0.0, %v6753
    %v6755 = vpop.f32.mrf.mxu0
    %v6756 = vadd.f32 0.0, %v6755
    %6757 = vmatmul.bf16.gmra.mxu0 %v6577
    %v6758 = vpop.f32.mrf.mxu0
    %v6759 = vadd.f32 0.0, %v6758
    %v6760 = vpop.f32.mrf.mxu0
    %v6761 = vadd.f32 0.0, %v6760
    %6762 = vmatmul.bf16.gmra.mxu0 %v6578
    %v6763 = vpop.f32.mrf.mxu0
    %v6764 = vadd.f32 0.0, %v6763
    %v6765 = vpop.f32.mrf.mxu0
    %v6766 = vadd.f32 0.0, %v6765
    %6767 = vmatmul.bf16.gmra.mxu0 %v6579
    %v6768 = vpop.f32.mrf.mxu0
    %v6769 = vadd.f32 0.0, %v6768
    %v6770 = vpop.f32.mrf.mxu0
    %v6771 = vadd.f32 0.0, %v6770
    %6772 = vmatmul.bf16.gmra.mxu0 %v6580
    %v6773 = vpop.f32.mrf.mxu0
    %v6774 = vadd.f32 0.0, %v6773
    %v6775 = vpop.f32.mrf.mxu0
    %v6776 = vadd.f32 0.0, %v6775
    %6777 = vmatmul.bf16.gmra.mxu0 %v6581
    %v6778 = vpop.f32.mrf.mxu0
    %v6779 = vadd.f32 0.0, %v6778
    %v6780 = vpop.f32.mrf.mxu0
    %v6781 = vadd.f32 0.0, %v6780
    %6782 = vmatmul.bf16.gmra.mxu0 %v6582
    %v6783 = vpop.f32.mrf.mxu0
    %v6784 = vadd.f32 0.0, %v6783
    %v6785 = vpop.f32.mrf.mxu0
    %v6786 = vadd.f32 0.0, %v6785
    %6787 = vmatmul.bf16.gmra.mxu0 %v6583
    %v6788 = vpop.f32.mrf.mxu0
    %v6789 = vadd.f32 0.0, %v6788
    %v6790 = vpop.f32.mrf.mxu0
    %v6791 = vadd.f32 0.0, %v6790
    %6792 = vmatmul.bf16.gmra.mxu0 %v6584
    %v6793 = vpop.f32.mrf.mxu0
    %v6794 = vadd.f32 0.0, %v6793
    %v6795 = vpop.f32.mrf.mxu0
    %v6796 = vadd.f32 0.0, %v6795
    %6797 = vmatmul.bf16.gmra.mxu0 %v6585
    %v6798 = vpop.f32.mrf.mxu0
    %v6799 = vadd.f32 0.0, %v6798
    %v6800 = vpop.f32.mrf.mxu0
    %v6801 = vadd.f32 0.0, %v6800
    %6802 = vmatmul.bf16.gmra.mxu0 %v6586
    %v6803 = vpop.f32.mrf.mxu0
    %v6804 = vadd.f32 0.0, %v6803
    %v6805 = vpop.f32.mrf.mxu0
    %v6806 = vadd.f32 0.0, %v6805
    %6807 = vmatmul.bf16.gmra.mxu0 %v6587
    %v6808 = vpop.f32.mrf.mxu0
    %v6809 = vadd.f32 0.0, %v6808
    %v6810 = vpop.f32.mrf.mxu0
    %v6811 = vadd.f32 0.0, %v6810
    %6812 = vmatmul.bf16.gmra.mxu0 %v6588
    %v6813 = vpop.f32.mrf.mxu0
    %v6814 = vadd.f32 0.0, %v6813
    %v6815 = vpop.f32.mrf.mxu0
    %v6816 = vadd.f32 0.0, %v6815
    %6817 = vmatmul.bf16.gmra.mxu0 %v6589
    %v6818 = vpop.f32.mrf.mxu0
    %v6819 = vadd.f32 0.0, %v6818
    %v6820 = vpop.f32.mrf.mxu0
    %v6821 = vadd.f32 0.0, %v6820
    %6822 = vmatmul.bf16.gmra.mxu0 %v6590
    %v6823 = vpop.f32.mrf.mxu0
    %v6824 = vadd.f32 0.0, %v6823
    %v6825 = vpop.f32.mrf.mxu0
    %v6826 = vadd.f32 0.0, %v6825
    %6827 = vmatmul.bf16.gmra.mxu0 %v6591
    %v6828 = vpop.f32.mrf.mxu0
    %v6829 = vadd.f32 0.0, %v6828
    %v6830 = vpop.f32.mrf.mxu0
    %v6831 = vadd.f32 0.0, %v6830
    %6832 = vmatmul.bf16.gmra.mxu0 %v6592
    %v6833 = vpop.f32.mrf.mxu0
    %v6834 = vadd.f32 0.0, %v6833
    %v6835 = vpop.f32.mrf.mxu0
    %v6836 = vadd.f32 0.0, %v6835
    %6837 = vmatmul.bf16.gmra.mxu0 %v6593
    %v6838 = vpop.f32.mrf.mxu0
    %v6839 = vadd.f32 0.0, %v6838
    %v6840 = vpop.f32.mrf.mxu0
    %v6841 = vadd.f32 0.0, %v6840
    %6842 = vdwg.mxu0
    %v6843 = vadd.f32 %v6002, %v6684
    %v6844 = vadd.f32 %v6004, %v6686
    %v6845 = vadd.f32 %v6007, %v6689
    %v6846 = vadd.f32 %v6009, %v6691
    %v6847 = vadd.f32 %v6012, %v6694
    %v6848 = vadd.f32 %v6014, %v6696
    %v6849 = vadd.f32 %v6017, %v6699
    %v6850 = vadd.f32 %v6019, %v6701
    %v6851 = vadd.f32 %v6022, %v6704
    %v6852 = vadd.f32 %v6024, %v6706
    %v6853 = vadd.f32 %v6027, %v6709
    %v6854 = vadd.f32 %v6029, %v6711
    %v6855 = vadd.f32 %v6032, %v6714
    %v6856 = vadd.f32 %v6034, %v6716
    %v6857 = vadd.f32 %v6037, %v6719
    %v6858 = vadd.f32 %v6039, %v6721
    %v6859 = vadd.f32 %v6042, %v6724
    %v6860 = vadd.f32 %v6044, %v6726
    %v6861 = vadd.f32 %v6047, %v6729
    %v6862 = vadd.f32 %v6049, %v6731
    %v6863 = vadd.f32 %v6052, %v6734
    %v6864 = vadd.f32 %v6054, %v6736
    %v6865 = vadd.f32 %v6057, %v6739
    %v6866 = vadd.f32 %v6059, %v6741
    %v6867 = vadd.f32 %v6062, %v6744
    %v6868 = vadd.f32 %v6064, %v6746
    %v6869 = vadd.f32 %v6067, %v6749
    %v6870 = vadd.f32 %v6069, %v6751
    %v6871 = vadd.f32 %v6072, %v6754
    %v6872 = vadd.f32 %v6074, %v6756
    %v6873 = vadd.f32 %v6077, %v6759
    %v6874 = vadd.f32 %v6079, %v6761
    %v6875 = vadd.f32 %v6082, %v6764
    %v6876 = vadd.f32 %v6084, %v6766
    %v6877 = vadd.f32 %v6087, %v6769
    %v6878 = vadd.f32 %v6089, %v6771
    %v6879 = vadd.f32 %v6092, %v6774
    %v6880 = vadd.f32 %v6094, %v6776
    %v6881 = vadd.f32 %v6097, %v6779
    %v6882 = vadd.f32 %v6099, %v6781
    %v6883 = vadd.f32 %v6102, %v6784
    %v6884 = vadd.f32 %v6104, %v6786
    %v6885 = vadd.f32 %v6107, %v6789
    %v6886 = vadd.f32 %v6109, %v6791
    %v6887 = vadd.f32 %v6112, %v6794
    %v6888 = vadd.f32 %v6114, %v6796
    %v6889 = vadd.f32 %v6117, %v6799
    %v6890 = vadd.f32 %v6119, %v6801
    %v6891 = vadd.f32 %v6122, %v6804
    %v6892 = vadd.f32 %v6124, %v6806
    %v6893 = vadd.f32 %v6127, %v6809
    %v6894 = vadd.f32 %v6129, %v6811
    %v6895 = vadd.f32 %v6132, %v6814
    %v6896 = vadd.f32 %v6134, %v6816
    %v6897 = vadd.f32 %v6137, %v6819
    %v6898 = vadd.f32 %v6139, %v6821
    %v6899 = vadd.f32 %v6142, %v6824
    %v6900 = vadd.f32 %v6144, %v6826
    %v6901 = vadd.f32 %v6147, %v6829
    %v6902 = vadd.f32 %v6149, %v6831
    %v6903 = vadd.f32 %v6152, %v6834
    %v6904 = vadd.f32 %v6154, %v6836
    %v6905 = vadd.f32 %v6157, %v6839
    %v6906 = vadd.f32 %v6159, %v6841
    %v6907 = vld [vmem:[#allocation3] sm:$0xff]
    %v6908 = vld [vmem:[#allocation3 + $0x8] sm:$0xff]
    %v6909 = vld [vmem:[#allocation3 + $0x10] sm:$0xff]
    %v6910 = vld [vmem:[#allocation3 + $0x18] sm:$0xff]
    %v6911 = vld [vmem:[#allocation3 + $0x20] sm:$0xff]
    %v6912 = vld [vmem:[#allocation3 + $0x28] sm:$0xff]
    %v6913 = vld [vmem:[#allocation3 + $0x30] sm:$0xff]
    %v6914 = vld [vmem:[#allocation3 + $0x38] sm:$0xff]
    %v6915 = vld [vmem:[#allocation3 + $0x40] sm:$0xff]
    %v6916 = vld [vmem:[#allocation3 + $0x48] sm:$0xff]
    %v6917 = vld [vmem:[#allocation3 + $0x50] sm:$0xff]
    %v6918 = vld [vmem:[#allocation3 + $0x58] sm:$0xff]
    %v6919 = vld [vmem:[#allocation3 + $0x60] sm:$0xff]
    %v6920 = vld [vmem:[#allocation3 + $0x68] sm:$0xff]
    %v6921 = vld [vmem:[#allocation3 + $0x70] sm:$0xff]
    %v6922 = vld [vmem:[#allocation3 + $0x78] sm:$0xff]
    %v6923 = vld [vmem:[#allocation3 + $0x80] sm:$0xff]
    %v6924 = vld [vmem:[#allocation3 + $0x88] sm:$0xff]
    %v6925 = vld [vmem:[#allocation3 + $0x90] sm:$0xff]
    %v6926 = vld [vmem:[#allocation3 + $0x98] sm:$0xff]
    %v6927 = vld [vmem:[#allocation3 + $0xa0] sm:$0xff]
    %v6928 = vld [vmem:[#allocation3 + $0xa8] sm:$0xff]
    %v6929 = vld [vmem:[#allocation3 + $0xb0] sm:$0xff]
    %v6930 = vld [vmem:[#allocation3 + $0xb8] sm:$0xff]
    %v6931 = vld [vmem:[#allocation3 + $0xc0] sm:$0xff]
    %v6932 = vld [vmem:[#allocation3 + $0xc8] sm:$0xff]
    %v6933 = vld [vmem:[#allocation3 + $0xd0] sm:$0xff]
    %v6934 = vld [vmem:[#allocation3 + $0xd8] sm:$0xff]
    %v6935 = vld [vmem:[#allocation3 + $0xe0] sm:$0xff]
    %v6936 = vld [vmem:[#allocation3 + $0xe8] sm:$0xff]
    %v6937 = vld [vmem:[#allocation3 + $0xf0] sm:$0xff]
    %v6938 = vld [vmem:[#allocation3 + $0xf8] sm:$0xff]
    %v6939 = vld [vmem:[#allocation3 + $0x100] sm:$0xff]
    %v6940 = vld [vmem:[#allocation3 + $0x108] sm:$0xff]
    %v6941 = vld [vmem:[#allocation3 + $0x110] sm:$0xff]
    %v6942 = vld [vmem:[#allocation3 + $0x118] sm:$0xff]
    %v6943 = vld [vmem:[#allocation3 + $0x120] sm:$0xff]
    %v6944 = vld [vmem:[#allocation3 + $0x128] sm:$0xff]
    %v6945 = vld [vmem:[#allocation3 + $0x130] sm:$0xff]
    %v6946 = vld [vmem:[#allocation3 + $0x138] sm:$0xff]
    %v6947 = vld [vmem:[#allocation3 + $0x140] sm:$0xff]
    %v6948 = vld [vmem:[#allocation3 + $0x148] sm:$0xff]
    %v6949 = vld [vmem:[#allocation3 + $0x150] sm:$0xff]
    %v6950 = vld [vmem:[#allocation3 + $0x158] sm:$0xff]
    %v6951 = vld [vmem:[#allocation3 + $0x160] sm:$0xff]
    %v6952 = vld [vmem:[#allocation3 + $0x168] sm:$0xff]
    %v6953 = vld [vmem:[#allocation3 + $0x170] sm:$0xff]
    %v6954 = vld [vmem:[#allocation3 + $0x178] sm:$0xff]
    %v6955 = vld [vmem:[#allocation3 + $0x180] sm:$0xff]
    %v6956 = vld [vmem:[#allocation3 + $0x188] sm:$0xff]
    %v6957 = vld [vmem:[#allocation3 + $0x190] sm:$0xff]
    %v6958 = vld [vmem:[#allocation3 + $0x198] sm:$0xff]
    %v6959 = vld [vmem:[#allocation3 + $0x1a0] sm:$0xff]
    %v6960 = vld [vmem:[#allocation3 + $0x1a8] sm:$0xff]
    %v6961 = vld [vmem:[#allocation3 + $0x1b0] sm:$0xff]
    %v6962 = vld [vmem:[#allocation3 + $0x1b8] sm:$0xff]
    %v6963 = vld [vmem:[#allocation3 + $0x1c0] sm:$0xff]
    %v6964 = vld [vmem:[#allocation3 + $0x1c8] sm:$0xff]
    %v6965 = vld [vmem:[#allocation3 + $0x1d0] sm:$0xff]
    %v6966 = vld [vmem:[#allocation3 + $0x1d8] sm:$0xff]
    %v6967 = vld [vmem:[#allocation3 + $0x1e0] sm:$0xff]
    %v6968 = vld [vmem:[#allocation3 + $0x1e8] sm:$0xff]
    %v6969 = vld [vmem:[#allocation3 + $0x1f0] sm:$0xff]
    %v6970 = vld [vmem:[#allocation3 + $0x1f8] sm:$0xff]
    %v6971 = vadd.f32 %v6907, %v6843
    %v6972 = vadd.f32 %v6908, %v6844
    %v6973 = vadd.f32 %v6909, %v6845
    %v6974 = vadd.f32 %v6910, %v6846
    %v6975 = vadd.f32 %v6911, %v6847
    %v6976 = vadd.f32 %v6912, %v6848
    %v6977 = vadd.f32 %v6913, %v6849
    %v6978 = vadd.f32 %v6914, %v6850
    %v6979 = vadd.f32 %v6915, %v6851
    %v6980 = vadd.f32 %v6916, %v6852
    %v6981 = vadd.f32 %v6917, %v6853
    %v6982 = vadd.f32 %v6918, %v6854
    %v6983 = vadd.f32 %v6919, %v6855
    %v6984 = vadd.f32 %v6920, %v6856
    %v6985 = vadd.f32 %v6921, %v6857
    %v6986 = vadd.f32 %v6922, %v6858
    %v6987 = vadd.f32 %v6923, %v6859
    %v6988 = vadd.f32 %v6924, %v6860
    %v6989 = vadd.f32 %v6925, %v6861
    %v6990 = vadd.f32 %v6926, %v6862
    %v6991 = vadd.f32 %v6927, %v6863
    %v6992 = vadd.f32 %v6928, %v6864
    %v6993 = vadd.f32 %v6929, %v6865
    %v6994 = vadd.f32 %v6930, %v6866
    %v6995 = vadd.f32 %v6931, %v6867
    %v6996 = vadd.f32 %v6932, %v6868
    %v6997 = vadd.f32 %v6933, %v6869
    %v6998 = vadd.f32 %v6934, %v6870
    %v6999 = vadd.f32 %v6935, %v6871
    %v7000 = vadd.f32 %v6936, %v6872
    %v7001 = vadd.f32 %v6937, %v6873
    %v7002 = vadd.f32 %v6938, %v6874
    %v7003 = vadd.f32 %v6939, %v6875
    %v7004 = vadd.f32 %v6940, %v6876
    %v7005 = vadd.f32 %v6941, %v6877
    %v7006 = vadd.f32 %v6942, %v6878
    %v7007 = vadd.f32 %v6943, %v6879
    %v7008 = vadd.f32 %v6944, %v6880
    %v7009 = vadd.f32 %v6945, %v6881
    %v7010 = vadd.f32 %v6946, %v6882
    %v7011 = vadd.f32 %v6947, %v6883
    %v7012 = vadd.f32 %v6948, %v6884
    %v7013 = vadd.f32 %v6949, %v6885
    %v7014 = vadd.f32 %v6950, %v6886
    %v7015 = vadd.f32 %v6951, %v6887
    %v7016 = vadd.f32 %v6952, %v6888
    %v7017 = vadd.f32 %v6953, %v6889
    %v7018 = vadd.f32 %v6954, %v6890
    %v7019 = vadd.f32 %v6955, %v6891
    %v7020 = vadd.f32 %v6956, %v6892
    %v7021 = vadd.f32 %v6957, %v6893
    %v7022 = vadd.f32 %v6958, %v6894
    %v7023 = vadd.f32 %v6959, %v6895
    %v7024 = vadd.f32 %v6960, %v6896
    %v7025 = vadd.f32 %v6961, %v6897
    %v7026 = vadd.f32 %v6962, %v6898
    %v7027 = vadd.f32 %v6963, %v6899
    %v7028 = vadd.f32 %v6964, %v6900
    %v7029 = vadd.f32 %v6965, %v6901
    %v7030 = vadd.f32 %v6966, %v6902
    %v7031 = vadd.f32 %v6967, %v6903
    %v7032 = vadd.f32 %v6968, %v6904
    %v7033 = vadd.f32 %v6969, %v6905
    %v7034 = vadd.f32 %v6970, %v6906
    %7035 = vst [vmem:[#allocation3] sm:$0xff] %v6971
    %7036 = vst [vmem:[#allocation3 + $0x8] sm:$0xff] %v6972
    %7037 = vst [vmem:[#allocation3 + $0x10] sm:$0xff] %v6973
    %7038 = vst [vmem:[#allocation3 + $0x18] sm:$0xff] %v6974
    %7039 = vst [vmem:[#allocation3 + $0x20] sm:$0xff] %v6975
    %7040 = vst [vmem:[#allocation3 + $0x28] sm:$0xff] %v6976
    %7041 = vst [vmem:[#allocation3 + $0x30] sm:$0xff] %v6977
    %7042 = vst [vmem:[#allocation3 + $0x38] sm:$0xff] %v6978
    %7043 = vst [vmem:[#allocation3 + $0x40] sm:$0xff] %v6979
    %7044 = vst [vmem:[#allocation3 + $0x48] sm:$0xff] %v6980
    %7045 = vst [vmem:[#allocation3 + $0x50] sm:$0xff] %v6981
    %7046 = vst [vmem:[#allocation3 + $0x58] sm:$0xff] %v6982
    %7047 = vst [vmem:[#allocation3 + $0x60] sm:$0xff] %v6983
    %7048 = vst [vmem:[#allocation3 + $0x68] sm:$0xff] %v6984
    %7049 = vst [vmem:[#allocation3 + $0x70] sm:$0xff] %v6985
    %7050 = vst [vmem:[#allocation3 + $0x78] sm:$0xff] %v6986
    %7051 = vst [vmem:[#allocation3 + $0x80] sm:$0xff] %v6987
    %7052 = vst [vmem:[#allocation3 + $0x88] sm:$0xff] %v6988
    %7053 = vst [vmem:[#allocation3 + $0x90] sm:$0xff] %v6989
    %7054 = vst [vmem:[#allocation3 + $0x98] sm:$0xff] %v6990
    %7055 = vst [vmem:[#allocation3 + $0xa0] sm:$0xff] %v6991
    %7056 = vst [vmem:[#allocation3 + $0xa8] sm:$0xff] %v6992
    %7057 = vst [vmem:[#allocation3 + $0xb0] sm:$0xff] %v6993
    %7058 = vst [vmem:[#allocation3 + $0xb8] sm:$0xff] %v6994
    %7059 = vst [vmem:[#allocation3 + $0xc0] sm:$0xff] %v6995
    %7060 = vst [vmem:[#allocation3 + $0xc8] sm:$0xff] %v6996
    %7061 = vst [vmem:[#allocation3 + $0xd0] sm:$0xff] %v6997
    %7062 = vst [vmem:[#allocation3 + $0xd8] sm:$0xff] %v6998
    %7063 = vst [vmem:[#allocation3 + $0xe0] sm:$0xff] %v6999
    %7064 = vst [vmem:[#allocation3 + $0xe8] sm:$0xff] %v7000
    %7065 = vst [vmem:[#allocation3 + $0xf0] sm:$0xff] %v7001
    %7066 = vst [vmem:[#allocation3 + $0xf8] sm:$0xff] %v7002
    %7067 = vst [vmem:[#allocation3 + $0x100] sm:$0xff] %v7003
    %7068 = vst [vmem:[#allocation3 + $0x108] sm:$0xff] %v7004
    %7069 = vst [vmem:[#allocation3 + $0x110] sm:$0xff] %v7005
    %7070 = vst [vmem:[#allocation3 + $0x118] sm:$0xff] %v7006
    %7071 = vst [vmem:[#allocation3 + $0x120] sm:$0xff] %v7007
    %7072 = vst [vmem:[#allocation3 + $0x128] sm:$0xff] %v7008
    %7073 = vst [vmem:[#allocation3 + $0x130] sm:$0xff] %v7009
    %7074 = vst [vmem:[#allocation3 + $0x138] sm:$0xff] %v7010
    %7075 = vst [vmem:[#allocation3 + $0x140] sm:$0xff] %v7011
    %7076 = vst [vmem:[#allocation3 + $0x148] sm:$0xff] %v7012
    %7077 = vst [vmem:[#allocation3 + $0x150] sm:$0xff] %v7013
    %7078 = vst [vmem:[#allocation3 + $0x158] sm:$0xff] %v7014
    %7079 = vst [vmem:[#allocation3 + $0x160] sm:$0xff] %v7015
    %7080 = vst [vmem:[#allocation3 + $0x168] sm:$0xff] %v7016
    %7081 = vst [vmem:[#allocation3 + $0x170] sm:$0xff] %v7017
    %7082 = vst [vmem:[#allocation3 + $0x178] sm:$0xff] %v7018
    %7083 = vst [vmem:[#allocation3 + $0x180] sm:$0xff] %v7019
    %7084 = vst [vmem:[#allocation3 + $0x188] sm:$0xff] %v7020
    %7085 = vst [vmem:[#allocation3 + $0x190] sm:$0xff] %v7021
    %7086 = vst [vmem:[#allocation3 + $0x198] sm:$0xff] %v7022
    %7087 = vst [vmem:[#allocation3 + $0x1a0] sm:$0xff] %v7023
    %7088 = vst [vmem:[#allocation3 + $0x1a8] sm:$0xff] %v7024
    %7089 = vst [vmem:[#allocation3 + $0x1b0] sm:$0xff] %v7025
    %7090 = vst [vmem:[#allocation3 + $0x1b8] sm:$0xff] %v7026
    %7091 = vst [vmem:[#allocation3 + $0x1c0] sm:$0xff] %v7027
    %7092 = vst [vmem:[#allocation3 + $0x1c8] sm:$0xff] %v7028
    %7093 = vst [vmem:[#allocation3 + $0x1d0] sm:$0xff] %v7029
    %7094 = vst [vmem:[#allocation3 + $0x1d8] sm:$0xff] %v7030
    %7095 = vst [vmem:[#allocation3 + $0x1e0] sm:$0xff] %v7031
    %7096 = vst [vmem:[#allocation3 + $0x1e8] sm:$0xff] %v7032
    %7097 = vst [vmem:[#allocation3 + $0x1f0] sm:$0xff] %v7033
    %7098 = vst [vmem:[#allocation3 + $0x1f8] sm:$0xff] %v7034
    %s7099 = scalar_lea.vmem [#allocation2], 24
    %v7100 = vld [vmem:[%s7099] sm:$0xf]
    %v7101 = vld [vmem:[%s7099 + $0x4] sm:$0xf]
    %v7102 = vld [vmem:[%s7099 + $0xc] sm:$0xf]
    %v7103 = vld [vmem:[%s7099 + $0x10] sm:$0xf]
    %v7104 = vld [vmem:[%s7099 + $0x18] sm:$0xf]
    %v7105 = vld [vmem:[%s7099 + $0x1c] sm:$0xf]
    %v7106 = vld [vmem:[%s7099 + $0x24] sm:$0xf]
    %v7107 = vld [vmem:[%s7099 + $0x28] sm:$0xf]
    %v7108 = vld [vmem:[%s7099 + $0x30] sm:$0xf]
    %v7109 = vld [vmem:[%s7099 + $0x34] sm:$0xf]
    %v7110 = vld [vmem:[%s7099 + $0x3c] sm:$0xf]
    %v7111 = vld [vmem:[%s7099 + $0x40] sm:$0xf]
    %v7112 = vld [vmem:[%s7099 + $0x48] sm:$0xf]
    %v7113 = vld [vmem:[%s7099 + $0x4c] sm:$0xf]
    %v7114 = vld [vmem:[%s7099 + $0x54] sm:$0xf]
    %v7115 = vld [vmem:[%s7099 + $0x58] sm:$0xf]
    %v7116 = vld [vmem:[%s7099 + $0x60] sm:$0xf]
    %v7117 = vld [vmem:[%s7099 + $0x64] sm:$0xf]
    %v7118 = vld [vmem:[%s7099 + $0x6c] sm:$0xf]
    %v7119 = vld [vmem:[%s7099 + $0x70] sm:$0xf]
    %v7120 = vld [vmem:[%s7099 + $0x78] sm:$0xf]
    %v7121 = vld [vmem:[%s7099 + $0x7c] sm:$0xf]
    %v7122 = vld [vmem:[%s7099 + $0x84] sm:$0xf]
    %v7123 = vld [vmem:[%s7099 + $0x88] sm:$0xf]
    %v7124 = vld [vmem:[%s7099 + $0x90] sm:$0xf]
    %v7125 = vld [vmem:[%s7099 + $0x94] sm:$0xf]
    %v7126 = vld [vmem:[%s7099 + $0x9c] sm:$0xf]
    %v7127 = vld [vmem:[%s7099 + $0xa0] sm:$0xf]
    %v7128 = vld [vmem:[%s7099 + $0xa8] sm:$0xf]
    %v7129 = vld [vmem:[%s7099 + $0xac] sm:$0xf]
    %v7130 = vld [vmem:[%s7099 + $0xb4] sm:$0xf]
    %v7131 = vld [vmem:[%s7099 + $0xb8] sm:$0xf]
    %v7132 = vld [vmem:[%s7099 + $0xd8] sm:$0xf]
    %v7133 = vld [vmem:[%s7099 + $0xdc] sm:$0xf]
    %v7134 = vld [vmem:[%s7099 + $0xe4] sm:$0xf]
    %v7135 = vld [vmem:[%s7099 + $0xe8] sm:$0xf]
    %v7136 = vld [vmem:[%s7099 + $0xf0] sm:$0xf]
    %v7137 = vld [vmem:[%s7099 + $0xf4] sm:$0xf]
    %v7138 = vld [vmem:[%s7099 + $0xfc] sm:$0xf]
    %v7139 = vld [vmem:[%s7099 + $0x100] sm:$0xf]
    %v7140 = vld [vmem:[%s7099 + $0x108] sm:$0xf]
    %v7141 = vld [vmem:[%s7099 + $0x10c] sm:$0xf]
    %v7142 = vld [vmem:[%s7099 + $0x114] sm:$0xf]
    %v7143 = vld [vmem:[%s7099 + $0x118] sm:$0xf]
    %v7144 = vld [vmem:[%s7099 + $0x120] sm:$0xf]
    %v7145 = vld [vmem:[%s7099 + $0x124] sm:$0xf]
    %v7146 = vld [vmem:[%s7099 + $0x12c] sm:$0xf]
    %v7147 = vld [vmem:[%s7099 + $0x130] sm:$0xf]
    %v7148 = vld [vmem:[%s7099 + $0x138] sm:$0xf]
    %v7149 = vld [vmem:[%s7099 + $0x13c] sm:$0xf]
    %v7150 = vld [vmem:[%s7099 + $0x144] sm:$0xf]
    %v7151 = vld [vmem:[%s7099 + $0x148] sm:$0xf]
    %v7152 = vld [vmem:[%s7099 + $0x150] sm:$0xf]
    %v7153 = vld [vmem:[%s7099 + $0x154] sm:$0xf]
    %v7154 = vld [vmem:[%s7099 + $0x15c] sm:$0xf]
    %v7155 = vld [vmem:[%s7099 + $0x160] sm:$0xf]
    %v7156 = vld [vmem:[%s7099 + $0x168] sm:$0xf]
    %v7157 = vld [vmem:[%s7099 + $0x16c] sm:$0xf]
    %v7158 = vld [vmem:[%s7099 + $0x174] sm:$0xf]
    %v7159 = vld [vmem:[%s7099 + $0x178] sm:$0xf]
    %v7160 = vld [vmem:[%s7099 + $0x180] sm:$0xf]
    %v7161 = vld [vmem:[%s7099 + $0x184] sm:$0xf]
    %v7162 = vld [vmem:[%s7099 + $0x18c] sm:$0xf]
    %v7163 = vld [vmem:[%s7099 + $0x190] sm:$0xf]
    %s7164 = scalar_lea.vmem %s4, 384
    %v7165 = vld [vmem:[%s7164] sm:$0xf]
    %v7166 = vld [vmem:[%s7164 + $0x4] sm:$0xf]
    %v7167 = vld [vmem:[%s7164 + $0x8] sm:$0xf]
    %v7168 = vld [vmem:[%s7164 + $0xc] sm:$0xf]
    %v7169 = vld [vmem:[%s7164 + $0x10] sm:$0xf]
    %v7170 = vld [vmem:[%s7164 + $0x14] sm:$0xf]
    %v7171 = vld [vmem:[%s7164 + $0x18] sm:$0xf]
    %v7172 = vld [vmem:[%s7164 + $0x1c] sm:$0xf]
    %v7173 = vld [vmem:[%s7164 + $0x20] sm:$0xf]
    %v7174 = vld [vmem:[%s7164 + $0x24] sm:$0xf]
    %v7175 = vld [vmem:[%s7164 + $0x28] sm:$0xf]
    %v7176 = vld [vmem:[%s7164 + $0x2c] sm:$0xf]
    %v7177 = vld [vmem:[%s7164 + $0x30] sm:$0xf]
    %v7178 = vld [vmem:[%s7164 + $0x34] sm:$0xf]
    %v7179 = vld [vmem:[%s7164 + $0x38] sm:$0xf]
    %v7180 = vld [vmem:[%s7164 + $0x3c] sm:$0xf]
    %v7181 = vld [vmem:[%s7099 + $0x8] sm:$0x1]
    %v7182 = vld [vmem:[%s7099 + $0x14] sm:$0x1]
    %v7183 = vld [vmem:[%s7099 + $0x20] sm:$0x1]
    %v7184 = vld [vmem:[%s7099 + $0x2c] sm:$0x1]
    %v7185 = vld [vmem:[%s7099 + $0x38] sm:$0x1]
    %v7186 = vld [vmem:[%s7099 + $0x44] sm:$0x1]
    %v7187 = vld [vmem:[%s7099 + $0x50] sm:$0x1]
    %v7188 = vld [vmem:[%s7099 + $0x5c] sm:$0x1]
    %v7189 = vld [vmem:[%s7099 + $0x68] sm:$0x1]
    %v7190 = vld [vmem:[%s7099 + $0x74] sm:$0x1]
    %v7191 = vld [vmem:[%s7099 + $0x80] sm:$0x1]
    %v7192 = vld [vmem:[%s7099 + $0x8c] sm:$0x1]
    %v7193 = vld [vmem:[%s7099 + $0x98] sm:$0x1]
    %v7194 = vld [vmem:[%s7099 + $0xa4] sm:$0x1]
    %v7195 = vld [vmem:[%s7099 + $0xb0] sm:$0x1]
    %v7196 = vld [vmem:[%s7099 + $0xbc] sm:$0x1]
    %v7197 = vld [vmem:[%s7099 + $0xe0] sm:$0x1]
    %v7198 = vld [vmem:[%s7099 + $0xec] sm:$0x1]
    %v7199 = vld [vmem:[%s7099 + $0xf8] sm:$0x1]
    %v7200 = vld [vmem:[%s7099 + $0x104] sm:$0x1]
    %v7201 = vld [vmem:[%s7099 + $0x110] sm:$0x1]
    %v7202 = vld [vmem:[%s7099 + $0x11c] sm:$0x1]
    %v7203 = vld [vmem:[%s7099 + $0x128] sm:$0x1]
    %v7204 = vld [vmem:[%s7099 + $0x134] sm:$0x1]
    %v7205 = vld [vmem:[%s7099 + $0x140] sm:$0x1]
    %v7206 = vld [vmem:[%s7099 + $0x14c] sm:$0x1]
    %v7207 = vld [vmem:[%s7099 + $0x158] sm:$0x1]
    %v7208 = vld [vmem:[%s7099 + $0x164] sm:$0x1]
    %v7209 = vld [vmem:[%s7099 + $0x170] sm:$0x1]
    %v7210 = vld [vmem:[%s7099 + $0x17c] sm:$0x1]
    %v7211 = vld [vmem:[%s7099 + $0x188] sm:$0x1]
    %v7212 = vld [vmem:[%s7099 + $0x194] sm:$0x1]
    %v7214 = vshrl.u32 %v7100, 16
    %v7216 = vrot.slane %v7214, 4
    %v7217 = vshll.u32 %v7100, 16
    %v7219 = vrot.slane %v7217, 5
    %v7220 = vor.u32 %v7216, %v7219
    %v7221 = vrot.slane %v7220, 4
    %v7223 = vshll.u32 %v7101, 16
    %v7225 = vrot.slane %v7223, 5
    %v7226 = vsel %vm2156, %v7221, %v7225
    %v7227 = vshrl.u32 %v7101, 16
    %v7229 = vrot.slane %v7227, 4
    %v7230 = vor.u32 %v7229, %v7225
    %v7231 = vrot.slane %v7230, 4
    %v7233 = vshll.u32 %v7181, 16
    %v7235 = vrot.slane %v7233, 5
    %v7236 = vsel %vm2156, %v7231, %v7235
    %v7238 = vshrl.u32 %v7102, 16
    %v7240 = vrot.slane %v7238, 4
    %v7241 = vshll.u32 %v7102, 16
    %v7243 = vrot.slane %v7241, 5
    %v7244 = vor.u32 %v7240, %v7243
    %v7245 = vrot.slane %v7244, 4
    %v7247 = vshll.u32 %v7103, 16
    %v7249 = vrot.slane %v7247, 5
    %v7250 = vsel %vm2156, %v7245, %v7249
    %v7251 = vshrl.u32 %v7103, 16
    %v7253 = vrot.slane %v7251, 4
    %v7254 = vor.u32 %v7253, %v7249
    %v7255 = vrot.slane %v7254, 4
    %v7257 = vshll.u32 %v7182, 16
    %v7259 = vrot.slane %v7257, 5
    %v7260 = vsel %vm2156, %v7255, %v7259
    %v7262 = vshrl.u32 %v7104, 16
    %v7264 = vrot.slane %v7262, 4
    %v7265 = vshll.u32 %v7104, 16
    %v7267 = vrot.slane %v7265, 5
    %v7268 = vor.u32 %v7264, %v7267
    %v7269 = vrot.slane %v7268, 4
    %v7271 = vshll.u32 %v7105, 16
    %v7273 = vrot.slane %v7271, 5
    %v7274 = vsel %vm2156, %v7269, %v7273
    %v7275 = vshrl.u32 %v7105, 16
    %v7277 = vrot.slane %v7275, 4
    %v7278 = vor.u32 %v7277, %v7273
    %v7279 = vrot.slane %v7278, 4
    %v7281 = vshll.u32 %v7183, 16
    %v7283 = vrot.slane %v7281, 5
    %v7284 = vsel %vm2156, %v7279, %v7283
    %v7286 = vshrl.u32 %v7106, 16
    %v7288 = vrot.slane %v7286, 4
    %v7289 = vshll.u32 %v7106, 16
    %v7291 = vrot.slane %v7289, 5
    %v7292 = vor.u32 %v7288, %v7291
    %v7293 = vrot.slane %v7292, 4
    %v7295 = vshll.u32 %v7107, 16
    %v7297 = vrot.slane %v7295, 5
    %v7298 = vsel %vm2156, %v7293, %v7297
    %v7299 = vshrl.u32 %v7107, 16
    %v7301 = vrot.slane %v7299, 4
    %v7302 = vor.u32 %v7301, %v7297
    %v7303 = vrot.slane %v7302, 4
    %v7305 = vshll.u32 %v7184, 16
    %v7307 = vrot.slane %v7305, 5
    %v7308 = vsel %vm2156, %v7303, %v7307
    %v7310 = vshrl.u32 %v7108, 16
    %v7312 = vrot.slane %v7310, 4
    %v7313 = vshll.u32 %v7108, 16
    %v7315 = vrot.slane %v7313, 5
    %v7316 = vor.u32 %v7312, %v7315
    %v7317 = vrot.slane %v7316, 4
    %v7319 = vshll.u32 %v7109, 16
    %v7321 = vrot.slane %v7319, 5
    %v7322 = vsel %vm2156, %v7317, %v7321
    %v7323 = vshrl.u32 %v7109, 16
    %v7325 = vrot.slane %v7323, 4
    %v7326 = vor.u32 %v7325, %v7321
    %v7327 = vrot.slane %v7326, 4
    %v7329 = vshll.u32 %v7185, 16
    %v7331 = vrot.slane %v7329, 5
    %v7332 = vsel %vm2156, %v7327, %v7331
    %v7334 = vshrl.u32 %v7110, 16
    %v7336 = vrot.slane %v7334, 4
    %v7337 = vshll.u32 %v7110, 16
    %v7339 = vrot.slane %v7337, 5
    %v7340 = vor.u32 %v7336, %v7339
    %v7341 = vrot.slane %v7340, 4
    %v7343 = vshll.u32 %v7111, 16
    %v7345 = vrot.slane %v7343, 5
    %v7346 = vsel %vm2156, %v7341, %v7345
    %v7347 = vshrl.u32 %v7111, 16
    %v7349 = vrot.slane %v7347, 4
    %v7350 = vor.u32 %v7349, %v7345
    %v7351 = vrot.slane %v7350, 4
    %v7353 = vshll.u32 %v7186, 16
    %v7355 = vrot.slane %v7353, 5
    %v7356 = vsel %vm2156, %v7351, %v7355
    %v7358 = vshrl.u32 %v7112, 16
    %v7360 = vrot.slane %v7358, 4
    %v7361 = vshll.u32 %v7112, 16
    %v7363 = vrot.slane %v7361, 5
    %v7364 = vor.u32 %v7360, %v7363
    %v7365 = vrot.slane %v7364, 4
    %v7367 = vshll.u32 %v7113, 16
    %v7369 = vrot.slane %v7367, 5
    %v7370 = vsel %vm2156, %v7365, %v7369
    %v7371 = vshrl.u32 %v7113, 16
    %v7373 = vrot.slane %v7371, 4
    %v7374 = vor.u32 %v7373, %v7369
    %v7375 = vrot.slane %v7374, 4
    %v7377 = vshll.u32 %v7187, 16
    %v7379 = vrot.slane %v7377, 5
    %v7380 = vsel %vm2156, %v7375, %v7379
    %v7382 = vshrl.u32 %v7114, 16
    %v7384 = vrot.slane %v7382, 4
    %v7385 = vshll.u32 %v7114, 16
    %v7387 = vrot.slane %v7385, 5
    %v7388 = vor.u32 %v7384, %v7387
    %v7389 = vrot.slane %v7388, 4
    %v7391 = vshll.u32 %v7115, 16
    %v7393 = vrot.slane %v7391, 5
    %v7394 = vsel %vm2156, %v7389, %v7393
    %v7395 = vshrl.u32 %v7115, 16
    %v7397 = vrot.slane %v7395, 4
    %v7398 = vor.u32 %v7397, %v7393
    %v7399 = vrot.slane %v7398, 4
    %v7401 = vshll.u32 %v7188, 16
    %v7403 = vrot.slane %v7401, 5
    %v7404 = vsel %vm2156, %v7399, %v7403
    %v7406 = vshrl.u32 %v7116, 16
    %v7408 = vrot.slane %v7406, 4
    %v7409 = vshll.u32 %v7116, 16
    %v7411 = vrot.slane %v7409, 5
    %v7412 = vor.u32 %v7408, %v7411
    %v7413 = vrot.slane %v7412, 4
    %v7415 = vshll.u32 %v7117, 16
    %v7417 = vrot.slane %v7415, 5
    %v7418 = vsel %vm2156, %v7413, %v7417
    %v7419 = vshrl.u32 %v7117, 16
    %v7421 = vrot.slane %v7419, 4
    %v7422 = vor.u32 %v7421, %v7417
    %v7423 = vrot.slane %v7422, 4
    %v7425 = vshll.u32 %v7189, 16
    %v7427 = vrot.slane %v7425, 5
    %v7428 = vsel %vm2156, %v7423, %v7427
    %v7430 = vshrl.u32 %v7118, 16
    %v7432 = vrot.slane %v7430, 4
    %v7433 = vshll.u32 %v7118, 16
    %v7435 = vrot.slane %v7433, 5
    %v7436 = vor.u32 %v7432, %v7435
    %v7437 = vrot.slane %v7436, 4
    %v7439 = vshll.u32 %v7119, 16
    %v7441 = vrot.slane %v7439, 5
    %v7442 = vsel %vm2156, %v7437, %v7441
    %v7443 = vshrl.u32 %v7119, 16
    %v7445 = vrot.slane %v7443, 4
    %v7446 = vor.u32 %v7445, %v7441
    %v7447 = vrot.slane %v7446, 4
    %v7449 = vshll.u32 %v7190, 16
    %v7451 = vrot.slane %v7449, 5
    %v7452 = vsel %vm2156, %v7447, %v7451
    %v7454 = vshrl.u32 %v7120, 16
    %v7456 = vrot.slane %v7454, 4
    %v7457 = vshll.u32 %v7120, 16
    %v7459 = vrot.slane %v7457, 5
    %v7460 = vor.u32 %v7456, %v7459
    %v7461 = vrot.slane %v7460, 4
    %v7463 = vshll.u32 %v7121, 16
    %v7465 = vrot.slane %v7463, 5
    %v7466 = vsel %vm2156, %v7461, %v7465
    %v7467 = vshrl.u32 %v7121, 16
    %v7469 = vrot.slane %v7467, 4
    %v7470 = vor.u32 %v7469, %v7465
    %v7471 = vrot.slane %v7470, 4
    %v7473 = vshll.u32 %v7191, 16
    %v7475 = vrot.slane %v7473, 5
    %v7476 = vsel %vm2156, %v7471, %v7475
    %v7478 = vshrl.u32 %v7122, 16
    %v7480 = vrot.slane %v7478, 4
    %v7481 = vshll.u32 %v7122, 16
    %v7483 = vrot.slane %v7481, 5
    %v7484 = vor.u32 %v7480, %v7483
    %v7485 = vrot.slane %v7484, 4
    %v7487 = vshll.u32 %v7123, 16
    %v7489 = vrot.slane %v7487, 5
    %v7490 = vsel %vm2156, %v7485, %v7489
    %v7491 = vshrl.u32 %v7123, 16
    %v7493 = vrot.slane %v7491, 4
    %v7494 = vor.u32 %v7493, %v7489
    %v7495 = vrot.slane %v7494, 4
    %v7497 = vshll.u32 %v7192, 16
    %v7499 = vrot.slane %v7497, 5
    %v7500 = vsel %vm2156, %v7495, %v7499
    %v7502 = vshrl.u32 %v7124, 16
    %v7504 = vrot.slane %v7502, 4
    %v7505 = vshll.u32 %v7124, 16
    %v7507 = vrot.slane %v7505, 5
    %v7508 = vor.u32 %v7504, %v7507
    %v7509 = vrot.slane %v7508, 4
    %v7511 = vshll.u32 %v7125, 16
    %v7513 = vrot.slane %v7511, 5
    %v7514 = vsel %vm2156, %v7509, %v7513
    %v7515 = vshrl.u32 %v7125, 16
    %v7517 = vrot.slane %v7515, 4
    %v7518 = vor.u32 %v7517, %v7513
    %v7519 = vrot.slane %v7518, 4
    %v7521 = vshll.u32 %v7193, 16
    %v7523 = vrot.slane %v7521, 5
    %v7524 = vsel %vm2156, %v7519, %v7523
    %v7526 = vshrl.u32 %v7126, 16
    %v7528 = vrot.slane %v7526, 4
    %v7529 = vshll.u32 %v7126, 16
    %v7531 = vrot.slane %v7529, 5
    %v7532 = vor.u32 %v7528, %v7531
    %v7533 = vrot.slane %v7532, 4
    %v7535 = vshll.u32 %v7127, 16
    %v7537 = vrot.slane %v7535, 5
    %v7538 = vsel %vm2156, %v7533, %v7537
    %v7539 = vshrl.u32 %v7127, 16
    %v7541 = vrot.slane %v7539, 4
    %v7542 = vor.u32 %v7541, %v7537
    %v7543 = vrot.slane %v7542, 4
    %v7545 = vshll.u32 %v7194, 16
    %v7547 = vrot.slane %v7545, 5
    %v7548 = vsel %vm2156, %v7543, %v7547
    %v7550 = vshrl.u32 %v7128, 16
    %v7552 = vrot.slane %v7550, 4
    %v7553 = vshll.u32 %v7128, 16
    %v7555 = vrot.slane %v7553, 5
    %v7556 = vor.u32 %v7552, %v7555
    %v7557 = vrot.slane %v7556, 4
    %v7559 = vshll.u32 %v7129, 16
    %v7561 = vrot.slane %v7559, 5
    %v7562 = vsel %vm2156, %v7557, %v7561
    %v7563 = vshrl.u32 %v7129, 16
    %v7565 = vrot.slane %v7563, 4
    %v7566 = vor.u32 %v7565, %v7561
    %v7567 = vrot.slane %v7566, 4
    %v7569 = vshll.u32 %v7195, 16
    %v7571 = vrot.slane %v7569, 5
    %v7572 = vsel %vm2156, %v7567, %v7571
    %v7574 = vshrl.u32 %v7130, 16
    %v7576 = vrot.slane %v7574, 4
    %v7577 = vshll.u32 %v7130, 16
    %v7579 = vrot.slane %v7577, 5
    %v7580 = vor.u32 %v7576, %v7579
    %v7581 = vrot.slane %v7580, 4
    %v7583 = vshll.u32 %v7131, 16
    %v7585 = vrot.slane %v7583, 5
    %v7586 = vsel %vm2156, %v7581, %v7585
    %v7587 = vshrl.u32 %v7131, 16
    %v7589 = vrot.slane %v7587, 4
    %v7590 = vor.u32 %v7589, %v7585
    %v7591 = vrot.slane %v7590, 4
    %v7593 = vshll.u32 %v7196, 16
    %v7595 = vrot.slane %v7593, 5
    %v7596 = vsel %vm2156, %v7591, %v7595
    %v7598 = vshrl.u32 %v7132, 16
    %v7600 = vrot.slane %v7598, 4
    %v7601 = vshll.u32 %v7132, 16
    %v7603 = vrot.slane %v7601, 5
    %v7604 = vor.u32 %v7600, %v7603
    %v7605 = vrot.slane %v7604, 4
    %v7607 = vshll.u32 %v7133, 16
    %v7609 = vrot.slane %v7607, 5
    %v7610 = vsel %vm2156, %v7605, %v7609
    %v7611 = vshrl.u32 %v7133, 16
    %v7613 = vrot.slane %v7611, 4
    %v7614 = vor.u32 %v7613, %v7609
    %v7615 = vrot.slane %v7614, 4
    %v7617 = vshll.u32 %v7197, 16
    %v7619 = vrot.slane %v7617, 5
    %v7620 = vsel %vm2156, %v7615, %v7619
    %v7622 = vshrl.u32 %v7134, 16
    %v7624 = vrot.slane %v7622, 4
    %v7625 = vshll.u32 %v7134, 16
    %v7627 = vrot.slane %v7625, 5
    %v7628 = vor.u32 %v7624, %v7627
    %v7629 = vrot.slane %v7628, 4
    %v7631 = vshll.u32 %v7135, 16
    %v7633 = vrot.slane %v7631, 5
    %v7634 = vsel %vm2156, %v7629, %v7633
    %v7635 = vshrl.u32 %v7135, 16
    %v7637 = vrot.slane %v7635, 4
    %v7638 = vor.u32 %v7637, %v7633
    %v7639 = vrot.slane %v7638, 4
    %v7641 = vshll.u32 %v7198, 16
    %v7643 = vrot.slane %v7641, 5
    %v7644 = vsel %vm2156, %v7639, %v7643
    %v7646 = vshrl.u32 %v7136, 16
    %v7648 = vrot.slane %v7646, 4
    %v7649 = vshll.u32 %v7136, 16
    %v7651 = vrot.slane %v7649, 5
    %v7652 = vor.u32 %v7648, %v7651
    %v7653 = vrot.slane %v7652, 4
    %v7655 = vshll.u32 %v7137, 16
    %v7657 = vrot.slane %v7655, 5
    %v7658 = vsel %vm2156, %v7653, %v7657
    %v7659 = vshrl.u32 %v7137, 16
    %v7661 = vrot.slane %v7659, 4
    %v7662 = vor.u32 %v7661, %v7657
    %v7663 = vrot.slane %v7662, 4
    %v7665 = vshll.u32 %v7199, 16
    %v7667 = vrot.slane %v7665, 5
    %v7668 = vsel %vm2156, %v7663, %v7667
    %v7670 = vshrl.u32 %v7138, 16
    %v7672 = vrot.slane %v7670, 4
    %v7673 = vshll.u32 %v7138, 16
    %v7675 = vrot.slane %v7673, 5
    %v7676 = vor.u32 %v7672, %v7675
    %v7677 = vrot.slane %v7676, 4
    %v7679 = vshll.u32 %v7139, 16
    %v7681 = vrot.slane %v7679, 5
    %v7682 = vsel %vm2156, %v7677, %v7681
    %v7683 = vshrl.u32 %v7139, 16
    %v7685 = vrot.slane %v7683, 4
    %v7686 = vor.u32 %v7685, %v7681
    %v7687 = vrot.slane %v7686, 4
    %v7689 = vshll.u32 %v7200, 16
    %v7691 = vrot.slane %v7689, 5
    %v7692 = vsel %vm2156, %v7687, %v7691
    %v7694 = vshrl.u32 %v7140, 16
    %v7696 = vrot.slane %v7694, 4
    %v7697 = vshll.u32 %v7140, 16
    %v7699 = vrot.slane %v7697, 5
    %v7700 = vor.u32 %v7696, %v7699
    %v7701 = vrot.slane %v7700, 4
    %v7703 = vshll.u32 %v7141, 16
    %v7705 = vrot.slane %v7703, 5
    %v7706 = vsel %vm2156, %v7701, %v7705
    %v7707 = vshrl.u32 %v7141, 16
    %v7709 = vrot.slane %v7707, 4
    %v7710 = vor.u32 %v7709, %v7705
    %v7711 = vrot.slane %v7710, 4
    %v7713 = vshll.u32 %v7201, 16
    %v7715 = vrot.slane %v7713, 5
    %v7716 = vsel %vm2156, %v7711, %v7715
    %v7718 = vshrl.u32 %v7142, 16
    %v7720 = vrot.slane %v7718, 4
    %v7721 = vshll.u32 %v7142, 16
    %v7723 = vrot.slane %v7721, 5
    %v7724 = vor.u32 %v7720, %v7723
    %v7725 = vrot.slane %v7724, 4
    %v7727 = vshll.u32 %v7143, 16
    %v7729 = vrot.slane %v7727, 5
    %v7730 = vsel %vm2156, %v7725, %v7729
    %v7731 = vshrl.u32 %v7143, 16
    %v7733 = vrot.slane %v7731, 4
    %v7734 = vor.u32 %v7733, %v7729
    %v7735 = vrot.slane %v7734, 4
    %v7737 = vshll.u32 %v7202, 16
    %v7739 = vrot.slane %v7737, 5
    %v7740 = vsel %vm2156, %v7735, %v7739
    %v7742 = vshrl.u32 %v7144, 16
    %v7744 = vrot.slane %v7742, 4
    %v7745 = vshll.u32 %v7144, 16
    %v7747 = vrot.slane %v7745, 5
    %v7748 = vor.u32 %v7744, %v7747
    %v7749 = vrot.slane %v7748, 4
    %v7751 = vshll.u32 %v7145, 16
    %v7753 = vrot.slane %v7751, 5
    %v7754 = vsel %vm2156, %v7749, %v7753
    %v7755 = vshrl.u32 %v7145, 16
    %v7757 = vrot.slane %v7755, 4
    %v7758 = vor.u32 %v7757, %v7753
    %v7759 = vrot.slane %v7758, 4
    %v7761 = vshll.u32 %v7203, 16
    %v7763 = vrot.slane %v7761, 5
    %v7764 = vsel %vm2156, %v7759, %v7763
    %v7766 = vshrl.u32 %v7146, 16
    %v7768 = vrot.slane %v7766, 4
    %v7769 = vshll.u32 %v7146, 16
    %v7771 = vrot.slane %v7769, 5
    %v7772 = vor.u32 %v7768, %v7771
    %v7773 = vrot.slane %v7772, 4
    %v7775 = vshll.u32 %v7147, 16
    %v7777 = vrot.slane %v7775, 5
    %v7778 = vsel %vm2156, %v7773, %v7777
    %v7779 = vshrl.u32 %v7147, 16
    %v7781 = vrot.slane %v7779, 4
    %v7782 = vor.u32 %v7781, %v7777
    %v7783 = vrot.slane %v7782, 4
    %v7785 = vshll.u32 %v7204, 16
    %v7787 = vrot.slane %v7785, 5
    %v7788 = vsel %vm2156, %v7783, %v7787
    %v7790 = vshrl.u32 %v7148, 16
    %v7792 = vrot.slane %v7790, 4
    %v7793 = vshll.u32 %v7148, 16
    %v7795 = vrot.slane %v7793, 5
    %v7796 = vor.u32 %v7792, %v7795
    %v7797 = vrot.slane %v7796, 4
    %v7799 = vshll.u32 %v7149, 16
    %v7801 = vrot.slane %v7799, 5
    %v7802 = vsel %vm2156, %v7797, %v7801
    %v7803 = vshrl.u32 %v7149, 16
    %v7805 = vrot.slane %v7803, 4
    %v7806 = vor.u32 %v7805, %v7801
    %v7807 = vrot.slane %v7806, 4
    %v7809 = vshll.u32 %v7205, 16
    %v7811 = vrot.slane %v7809, 5
    %v7812 = vsel %vm2156, %v7807, %v7811
    %v7814 = vshrl.u32 %v7150, 16
    %v7816 = vrot.slane %v7814, 4
    %v7817 = vshll.u32 %v7150, 16
    %v7819 = vrot.slane %v7817, 5
    %v7820 = vor.u32 %v7816, %v7819
    %v7821 = vrot.slane %v7820, 4
    %v7823 = vshll.u32 %v7151, 16
    %v7825 = vrot.slane %v7823, 5
    %v7826 = vsel %vm2156, %v7821, %v7825
    %v7827 = vshrl.u32 %v7151, 16
    %v7829 = vrot.slane %v7827, 4
    %v7830 = vor.u32 %v7829, %v7825
    %v7831 = vrot.slane %v7830, 4
    %v7833 = vshll.u32 %v7206, 16
    %v7835 = vrot.slane %v7833, 5
    %v7836 = vsel %vm2156, %v7831, %v7835
    %v7838 = vshrl.u32 %v7152, 16
    %v7840 = vrot.slane %v7838, 4
    %v7841 = vshll.u32 %v7152, 16
    %v7843 = vrot.slane %v7841, 5
    %v7844 = vor.u32 %v7840, %v7843
    %v7845 = vrot.slane %v7844, 4
    %v7847 = vshll.u32 %v7153, 16
    %v7849 = vrot.slane %v7847, 5
    %v7850 = vsel %vm2156, %v7845, %v7849
    %v7851 = vshrl.u32 %v7153, 16
    %v7853 = vrot.slane %v7851, 4
    %v7854 = vor.u32 %v7853, %v7849
    %v7855 = vrot.slane %v7854, 4
    %v7857 = vshll.u32 %v7207, 16
    %v7859 = vrot.slane %v7857, 5
    %v7860 = vsel %vm2156, %v7855, %v7859
    %v7862 = vshrl.u32 %v7154, 16
    %v7864 = vrot.slane %v7862, 4
    %v7865 = vshll.u32 %v7154, 16
    %v7867 = vrot.slane %v7865, 5
    %v7868 = vor.u32 %v7864, %v7867
    %v7869 = vrot.slane %v7868, 4
    %v7871 = vshll.u32 %v7155, 16
    %v7873 = vrot.slane %v7871, 5
    %v7874 = vsel %vm2156, %v7869, %v7873
    %v7875 = vshrl.u32 %v7155, 16
    %v7877 = vrot.slane %v7875, 4
    %v7878 = vor.u32 %v7877, %v7873
    %v7879 = vrot.slane %v7878, 4
    %v7881 = vshll.u32 %v7208, 16
    %v7883 = vrot.slane %v7881, 5
    %v7884 = vsel %vm2156, %v7879, %v7883
    %v7886 = vshrl.u32 %v7156, 16
    %v7888 = vrot.slane %v7886, 4
    %v7889 = vshll.u32 %v7156, 16
    %v7891 = vrot.slane %v7889, 5
    %v7892 = vor.u32 %v7888, %v7891
    %v7893 = vrot.slane %v7892, 4
    %v7895 = vshll.u32 %v7157, 16
    %v7897 = vrot.slane %v7895, 5
    %v7898 = vsel %vm2156, %v7893, %v7897
    %v7899 = vshrl.u32 %v7157, 16
    %v7901 = vrot.slane %v7899, 4
    %v7902 = vor.u32 %v7901, %v7897
    %v7903 = vrot.slane %v7902, 4
    %v7905 = vshll.u32 %v7209, 16
    %v7907 = vrot.slane %v7905, 5
    %v7908 = vsel %vm2156, %v7903, %v7907
    %v7910 = vshrl.u32 %v7158, 16
    %v7912 = vrot.slane %v7910, 4
    %v7913 = vshll.u32 %v7158, 16
    %v7915 = vrot.slane %v7913, 5
    %v7916 = vor.u32 %v7912, %v7915
    %v7917 = vrot.slane %v7916, 4
    %v7919 = vshll.u32 %v7159, 16
    %v7921 = vrot.slane %v7919, 5
    %v7922 = vsel %vm2156, %v7917, %v7921
    %v7923 = vshrl.u32 %v7159, 16
    %v7925 = vrot.slane %v7923, 4
    %v7926 = vor.u32 %v7925, %v7921
    %v7927 = vrot.slane %v7926, 4
    %v7929 = vshll.u32 %v7210, 16
    %v7931 = vrot.slane %v7929, 5
    %v7932 = vsel %vm2156, %v7927, %v7931
    %v7934 = vshrl.u32 %v7160, 16
    %v7936 = vrot.slane %v7934, 4
    %v7937 = vshll.u32 %v7160, 16
    %v7939 = vrot.slane %v7937, 5
    %v7940 = vor.u32 %v7936, %v7939
    %v7941 = vrot.slane %v7940, 4
    %v7943 = vshll.u32 %v7161, 16
    %v7945 = vrot.slane %v7943, 5
    %v7946 = vsel %vm2156, %v7941, %v7945
    %v7947 = vshrl.u32 %v7161, 16
    %v7949 = vrot.slane %v7947, 4
    %v7950 = vor.u32 %v7949, %v7945
    %v7951 = vrot.slane %v7950, 4
    %v7953 = vshll.u32 %v7211, 16
    %v7955 = vrot.slane %v7953, 5
    %v7956 = vsel %vm2156, %v7951, %v7955
    %v7958 = vshrl.u32 %v7162, 16
    %v7960 = vrot.slane %v7958, 4
    %v7961 = vshll.u32 %v7162, 16
    %v7963 = vrot.slane %v7961, 5
    %v7964 = vor.u32 %v7960, %v7963
    %v7965 = vrot.slane %v7964, 4
    %v7967 = vshll.u32 %v7163, 16
    %v7969 = vrot.slane %v7967, 5
    %v7970 = vsel %vm2156, %v7965, %v7969
    %v7971 = vshrl.u32 %v7163, 16
    %v7973 = vrot.slane %v7971, 4
    %v7974 = vor.u32 %v7973, %v7969
    %v7975 = vrot.slane %v7974, 4
    %v7977 = vshll.u32 %v7212, 16
    %v7979 = vrot.slane %v7977, 5
    %v7980 = vsel %vm2156, %v7975, %v7979
    %s7981 = scalar_lea.vmem %s4, 448
    %v7982 = vld [vmem:[%s7981] sm:$0xf]
    %v7983 = vld [vmem:[%s7981 + $0x4] sm:$0xf]
    %v7984 = vld [vmem:[%s7981 + $0x8] sm:$0xf]
    %v7985 = vld [vmem:[%s7981 + $0xc] sm:$0xf]
    %v7986 = vld [vmem:[%s7981 + $0x10] sm:$0xf]
    %v7987 = vld [vmem:[%s7981 + $0x14] sm:$0xf]
    %v7988 = vld [vmem:[%s7981 + $0x18] sm:$0xf]
    %v7989 = vld [vmem:[%s7981 + $0x1c] sm:$0xf]
    %v7990 = vld [vmem:[%s7981 + $0x20] sm:$0xf]
    %v7991 = vld [vmem:[%s7981 + $0x24] sm:$0xf]
    %v7992 = vld [vmem:[%s7981 + $0x28] sm:$0xf]
    %v7993 = vld [vmem:[%s7981 + $0x2c] sm:$0xf]
    %v7994 = vld [vmem:[%s7981 + $0x30] sm:$0xf]
    %v7995 = vld [vmem:[%s7981 + $0x34] sm:$0xf]
    %v7996 = vld [vmem:[%s7981 + $0x38] sm:$0xf]
    %v7997 = vld [vmem:[%s7981 + $0x3c] sm:$0xf]
    %v7998 = vunpack.c.l.b16 %v7226
    %v7999 = vunpack.c.l.b16 %v7236
    %v8000 = vunpack.c.l.b16 %v7250
    %v8001 = vunpack.c.l.b16 %v7260
    %v8002 = vunpack.c.l.b16 %v7274
    %v8003 = vunpack.c.l.b16 %v7284
    %v8004 = vunpack.c.l.b16 %v7298
    %v8005 = vunpack.c.l.b16 %v7308
    %v8006 = vunpack.c.l.b16 %v7322
    %v8007 = vunpack.c.l.b16 %v7332
    %v8008 = vunpack.c.l.b16 %v7346
    %v8009 = vunpack.c.l.b16 %v7356
    %v8010 = vunpack.c.l.b16 %v7370
    %v8011 = vunpack.c.l.b16 %v7380
    %v8012 = vunpack.c.l.b16 %v7394
    %v8013 = vunpack.c.l.b16 %v7404
    %v8014 = vunpack.c.l.b16 %v7418
    %v8015 = vunpack.c.l.b16 %v7428
    %v8016 = vunpack.c.l.b16 %v7442
    %v8017 = vunpack.c.l.b16 %v7452
    %v8018 = vunpack.c.l.b16 %v7466
    %v8019 = vunpack.c.l.b16 %v7476
    %v8020 = vunpack.c.l.b16 %v7490
    %v8021 = vunpack.c.l.b16 %v7500
    %v8022 = vunpack.c.l.b16 %v7514
    %v8023 = vunpack.c.l.b16 %v7524
    %v8024 = vunpack.c.l.b16 %v7538
    %v8025 = vunpack.c.l.b16 %v7548
    %v8026 = vunpack.c.l.b16 %v7562
    %v8027 = vunpack.c.l.b16 %v7572
    %v8028 = vunpack.c.l.b16 %v7586
    %v8029 = vunpack.c.l.b16 %v7596
    %v8030 = vunpack.c.l.b16 %v7610
    %v8031 = vunpack.c.l.b16 %v7620
    %v8032 = vunpack.c.l.b16 %v7634
    %v8033 = vunpack.c.l.b16 %v7644
    %v8034 = vunpack.c.l.b16 %v7658
    %v8035 = vunpack.c.l.b16 %v7668
    %v8036 = vunpack.c.l.b16 %v7682
    %v8037 = vunpack.c.l.b16 %v7692
    %v8038 = vunpack.c.l.b16 %v7706
    %v8039 = vunpack.c.l.b16 %v7716
    %v8040 = vunpack.c.l.b16 %v7730
    %v8041 = vunpack.c.l.b16 %v7740
    %v8042 = vunpack.c.l.b16 %v7754
    %v8043 = vunpack.c.l.b16 %v7764
    %v8044 = vunpack.c.l.b16 %v7778
    %v8045 = vunpack.c.l.b16 %v7788
    %v8046 = vunpack.c.l.b16 %v7802
    %v8047 = vunpack.c.l.b16 %v7812
    %v8048 = vunpack.c.l.b16 %v7826
    %v8049 = vunpack.c.l.b16 %v7836
    %v8050 = vunpack.c.l.b16 %v7850
    %v8051 = vunpack.c.l.b16 %v7860
    %v8052 = vunpack.c.l.b16 %v7874
    %v8053 = vunpack.c.l.b16 %v7884
    %v8054 = vunpack.c.l.b16 %v7898
    %v8055 = vunpack.c.l.b16 %v7908
    %v8056 = vunpack.c.l.b16 %v7922
    %v8057 = vunpack.c.l.b16 %v7932
    %v8058 = vunpack.c.l.b16 %v7946
    %v8059 = vunpack.c.l.b16 %v7956
    %v8060 = vunpack.c.l.b16 %v7970
    %v8061 = vunpack.c.l.b16 %v7980
    %v8062 = vpack.c.b16 %v7999, %v7998
    %v8063 = vpack.c.b16 %v8001, %v8000
    %v8064 = vpack.c.b16 %v8003, %v8002
    %v8065 = vpack.c.b16 %v8005, %v8004
    %v8066 = vpack.c.b16 %v8007, %v8006
    %v8067 = vpack.c.b16 %v8009, %v8008
    %v8068 = vpack.c.b16 %v8011, %v8010
    %v8069 = vpack.c.b16 %v8013, %v8012
    %v8070 = vpack.c.b16 %v8015, %v8014
    %v8071 = vpack.c.b16 %v8017, %v8016
    %v8072 = vpack.c.b16 %v8019, %v8018
    %v8073 = vpack.c.b16 %v8021, %v8020
    %v8074 = vpack.c.b16 %v8023, %v8022
    %v8075 = vpack.c.b16 %v8025, %v8024
    %v8076 = vpack.c.b16 %v8027, %v8026
    %v8077 = vpack.c.b16 %v8029, %v8028
    %v8078 = vpack.c.b16 %v8031, %v8030
    %v8079 = vpack.c.b16 %v8033, %v8032
    %v8080 = vpack.c.b16 %v8035, %v8034
    %v8081 = vpack.c.b16 %v8037, %v8036
    %v8082 = vpack.c.b16 %v8039, %v8038
    %v8083 = vpack.c.b16 %v8041, %v8040
    %v8084 = vpack.c.b16 %v8043, %v8042
    %v8085 = vpack.c.b16 %v8045, %v8044
    %v8086 = vpack.c.b16 %v8047, %v8046
    %v8087 = vpack.c.b16 %v8049, %v8048
    %v8088 = vpack.c.b16 %v8051, %v8050
    %v8089 = vpack.c.b16 %v8053, %v8052
    %v8090 = vpack.c.b16 %v8055, %v8054
    %v8091 = vpack.c.b16 %v8057, %v8056
    %v8092 = vpack.c.b16 %v8059, %v8058
    %v8093 = vpack.c.b16 %v8061, %v8060
    %v8142 = vunpack.c.l.b16 %v7982
    %v8143 = vunpack.c.l.b16 %v7983
    %v8144 = vunpack.c.l.b16 %v7984
    %v8145 = vunpack.c.l.b16 %v7985
    %v8146 = vunpack.c.l.b16 %v7986
    %v8147 = vunpack.c.l.b16 %v7987
    %v8148 = vunpack.c.l.b16 %v7988
    %v8149 = vunpack.c.l.b16 %v7989
    %v8150 = vunpack.c.l.b16 %v7990
    %v8151 = vunpack.c.l.b16 %v7991
    %v8152 = vunpack.c.l.b16 %v7992
    %v8153 = vunpack.c.l.b16 %v7993
    %v8154 = vunpack.c.l.b16 %v7994
    %v8155 = vunpack.c.l.b16 %v7995
    %v8156 = vunpack.c.l.b16 %v7996
    %v8157 = vunpack.c.l.b16 %v7997
    %v8158 = vpack.c.b16 %v8143, %v8142
    %v8159 = vpack.c.b16 %v8145, %v8144
    %v8160 = vpack.c.b16 %v8147, %v8146
    %v8161 = vpack.c.b16 %v8149, %v8148
    %v8162 = vpack.c.b16 %v8151, %v8150
    %v8163 = vpack.c.b16 %v8153, %v8152
    %v8164 = vpack.c.b16 %v8155, %v8154
    %v8165 = vpack.c.b16 %v8157, %v8156
    %8174 = vmatpush.bf16.msra.mxu0 %v8165
    %8175 = vmatpush.bf16.msra.mxu0 %v8164
    %8176 = vmatpush.bf16.msra.mxu0 %v8163
    %8177 = vmatpush.bf16.msra.mxu0 %v8162
    %8178 = vmatpush.bf16.msra.mxu0 %v8161
    %8179 = vmatpush.bf16.msra.mxu0 %v8160
    %8180 = vmatpush.bf16.msra.mxu0 %v8159
    %8181 = vmatpush.bf16.msra.mxu0 %v8158
    %8182 = vmatmul.bf16.gmra.mxu0 %v8062
    %v8183 = vpop.f32.mrf.mxu0
    %v8184 = vadd.f32 0.0, %v8183
    %v8185 = vpop.f32.mrf.mxu0
    %v8186 = vadd.f32 0.0, %v8185
    %8187 = vmatmul.bf16.gmra.mxu0 %v8063
    %v8188 = vpop.f32.mrf.mxu0
    %v8189 = vadd.f32 0.0, %v8188
    %v8190 = vpop.f32.mrf.mxu0
    %v8191 = vadd.f32 0.0, %v8190
    %8192 = vmatmul.bf16.gmra.mxu0 %v8064
    %v8193 = vpop.f32.mrf.mxu0
    %v8194 = vadd.f32 0.0, %v8193
    %v8195 = vpop.f32.mrf.mxu0
    %v8196 = vadd.f32 0.0, %v8195
    %8197 = vmatmul.bf16.gmra.mxu0 %v8065
    %v8198 = vpop.f32.mrf.mxu0
    %v8199 = vadd.f32 0.0, %v8198
    %v8200 = vpop.f32.mrf.mxu0
    %v8201 = vadd.f32 0.0, %v8200
    %8202 = vmatmul.bf16.gmra.mxu0 %v8066
    %v8203 = vpop.f32.mrf.mxu0
    %v8204 = vadd.f32 0.0, %v8203
    %v8205 = vpop.f32.mrf.mxu0
    %v8206 = vadd.f32 0.0, %v8205
    %8207 = vmatmul.bf16.gmra.mxu0 %v8067
    %v8208 = vpop.f32.mrf.mxu0
    %v8209 = vadd.f32 0.0, %v8208
    %v8210 = vpop.f32.mrf.mxu0
    %v8211 = vadd.f32 0.0, %v8210
    %8212 = vmatmul.bf16.gmra.mxu0 %v8068
    %v8213 = vpop.f32.mrf.mxu0
    %v8214 = vadd.f32 0.0, %v8213
    %v8215 = vpop.f32.mrf.mxu0
    %v8216 = vadd.f32 0.0, %v8215
    %8217 = vmatmul.bf16.gmra.mxu0 %v8069
    %v8218 = vpop.f32.mrf.mxu0
    %v8219 = vadd.f32 0.0, %v8218
    %v8220 = vpop.f32.mrf.mxu0
    %v8221 = vadd.f32 0.0, %v8220
    %8222 = vmatmul.bf16.gmra.mxu0 %v8070
    %v8223 = vpop.f32.mrf.mxu0
    %v8224 = vadd.f32 0.0, %v8223
    %v8225 = vpop.f32.mrf.mxu0
    %v8226 = vadd.f32 0.0, %v8225
    %8227 = vmatmul.bf16.gmra.mxu0 %v8071
    %v8228 = vpop.f32.mrf.mxu0
    %v8229 = vadd.f32 0.0, %v8228
    %v8230 = vpop.f32.mrf.mxu0
    %v8231 = vadd.f32 0.0, %v8230
    %8232 = vmatmul.bf16.gmra.mxu0 %v8072
    %v8233 = vpop.f32.mrf.mxu0
    %v8234 = vadd.f32 0.0, %v8233
    %v8235 = vpop.f32.mrf.mxu0
    %v8236 = vadd.f32 0.0, %v8235
    %8237 = vmatmul.bf16.gmra.mxu0 %v8073
    %v8238 = vpop.f32.mrf.mxu0
    %v8239 = vadd.f32 0.0, %v8238
    %v8240 = vpop.f32.mrf.mxu0
    %v8241 = vadd.f32 0.0, %v8240
    %8242 = vmatmul.bf16.gmra.mxu0 %v8074
    %v8243 = vpop.f32.mrf.mxu0
    %v8244 = vadd.f32 0.0, %v8243
    %v8245 = vpop.f32.mrf.mxu0
    %v8246 = vadd.f32 0.0, %v8245
    %8247 = vmatmul.bf16.gmra.mxu0 %v8075
    %v8248 = vpop.f32.mrf.mxu0
    %v8249 = vadd.f32 0.0, %v8248
    %v8250 = vpop.f32.mrf.mxu0
    %v8251 = vadd.f32 0.0, %v8250
    %8252 = vmatmul.bf16.gmra.mxu0 %v8076
    %v8253 = vpop.f32.mrf.mxu0
    %v8254 = vadd.f32 0.0, %v8253
    %v8255 = vpop.f32.mrf.mxu0
    %v8256 = vadd.f32 0.0, %v8255
    %8257 = vmatmul.bf16.gmra.mxu0 %v8077
    %v8258 = vpop.f32.mrf.mxu0
    %v8259 = vadd.f32 0.0, %v8258
    %v8260 = vpop.f32.mrf.mxu0
    %v8261 = vadd.f32 0.0, %v8260
    %8262 = vmatmul.bf16.gmra.mxu0 %v8078
    %v8263 = vpop.f32.mrf.mxu0
    %v8264 = vadd.f32 0.0, %v8263
    %v8265 = vpop.f32.mrf.mxu0
    %v8266 = vadd.f32 0.0, %v8265
    %8267 = vmatmul.bf16.gmra.mxu0 %v8079
    %v8268 = vpop.f32.mrf.mxu0
    %v8269 = vadd.f32 0.0, %v8268
    %v8270 = vpop.f32.mrf.mxu0
    %v8271 = vadd.f32 0.0, %v8270
    %8272 = vmatmul.bf16.gmra.mxu0 %v8080
    %v8273 = vpop.f32.mrf.mxu0
    %v8274 = vadd.f32 0.0, %v8273
    %v8275 = vpop.f32.mrf.mxu0
    %v8276 = vadd.f32 0.0, %v8275
    %8277 = vmatmul.bf16.gmra.mxu0 %v8081
    %v8278 = vpop.f32.mrf.mxu0
    %v8279 = vadd.f32 0.0, %v8278
    %v8280 = vpop.f32.mrf.mxu0
    %v8281 = vadd.f32 0.0, %v8280
    %8282 = vmatmul.bf16.gmra.mxu0 %v8082
    %v8283 = vpop.f32.mrf.mxu0
    %v8284 = vadd.f32 0.0, %v8283
    %v8285 = vpop.f32.mrf.mxu0
    %v8286 = vadd.f32 0.0, %v8285
    %8287 = vmatmul.bf16.gmra.mxu0 %v8083
    %v8288 = vpop.f32.mrf.mxu0
    %v8289 = vadd.f32 0.0, %v8288
    %v8290 = vpop.f32.mrf.mxu0
    %v8291 = vadd.f32 0.0, %v8290
    %8292 = vmatmul.bf16.gmra.mxu0 %v8084
    %v8293 = vpop.f32.mrf.mxu0
    %v8294 = vadd.f32 0.0, %v8293
    %v8295 = vpop.f32.mrf.mxu0
    %v8296 = vadd.f32 0.0, %v8295
    %8297 = vmatmul.bf16.gmra.mxu0 %v8085
    %v8298 = vpop.f32.mrf.mxu0
    %v8299 = vadd.f32 0.0, %v8298
    %v8300 = vpop.f32.mrf.mxu0
    %v8301 = vadd.f32 0.0, %v8300
    %8302 = vmatmul.bf16.gmra.mxu0 %v8086
    %v8303 = vpop.f32.mrf.mxu0
    %v8304 = vadd.f32 0.0, %v8303
    %v8305 = vpop.f32.mrf.mxu0
    %v8306 = vadd.f32 0.0, %v8305
    %8307 = vmatmul.bf16.gmra.mxu0 %v8087
    %v8308 = vpop.f32.mrf.mxu0
    %v8309 = vadd.f32 0.0, %v8308
    %v8310 = vpop.f32.mrf.mxu0
    %v8311 = vadd.f32 0.0, %v8310
    %8312 = vmatmul.bf16.gmra.mxu0 %v8088
    %v8313 = vpop.f32.mrf.mxu0
    %v8314 = vadd.f32 0.0, %v8313
    %v8315 = vpop.f32.mrf.mxu0
    %v8316 = vadd.f32 0.0, %v8315
    %8317 = vmatmul.bf16.gmra.mxu0 %v8089
    %v8318 = vpop.f32.mrf.mxu0
    %v8319 = vadd.f32 0.0, %v8318
    %v8320 = vpop.f32.mrf.mxu0
    %v8321 = vadd.f32 0.0, %v8320
    %8322 = vmatmul.bf16.gmra.mxu0 %v8090
    %v8323 = vpop.f32.mrf.mxu0
    %v8324 = vadd.f32 0.0, %v8323
    %v8325 = vpop.f32.mrf.mxu0
    %v8326 = vadd.f32 0.0, %v8325
    %8327 = vmatmul.bf16.gmra.mxu0 %v8091
    %v8328 = vpop.f32.mrf.mxu0
    %v8329 = vadd.f32 0.0, %v8328
    %v8330 = vpop.f32.mrf.mxu0
    %v8331 = vadd.f32 0.0, %v8330
    %8332 = vmatmul.bf16.gmra.mxu0 %v8092
    %v8333 = vpop.f32.mrf.mxu0
    %v8334 = vadd.f32 0.0, %v8333
    %v8335 = vpop.f32.mrf.mxu0
    %v8336 = vadd.f32 0.0, %v8335
    %8337 = vmatmul.bf16.gmra.mxu0 %v8093
    %v8338 = vpop.f32.mrf.mxu0
    %v8339 = vadd.f32 0.0, %v8338
    %v8340 = vpop.f32.mrf.mxu0
    %v8341 = vadd.f32 0.0, %v8340
    %8342 = vdwg.mxu0
    %v8407 = vunpack.c.l.b16 %v7100
    %v8408 = vunpack.c.l.b16 %v7101
    %v8409 = vunpack.c.l.b16 %v7102
    %v8410 = vunpack.c.l.b16 %v7103
    %v8411 = vunpack.c.l.b16 %v7104
    %v8412 = vunpack.c.l.b16 %v7105
    %v8413 = vunpack.c.l.b16 %v7106
    %v8414 = vunpack.c.l.b16 %v7107
    %v8415 = vunpack.c.l.b16 %v7108
    %v8416 = vunpack.c.l.b16 %v7109
    %v8417 = vunpack.c.l.b16 %v7110
    %v8418 = vunpack.c.l.b16 %v7111
    %v8419 = vunpack.c.l.b16 %v7112
    %v8420 = vunpack.c.l.b16 %v7113
    %v8421 = vunpack.c.l.b16 %v7114
    %v8422 = vunpack.c.l.b16 %v7115
    %v8423 = vunpack.c.l.b16 %v7116
    %v8424 = vunpack.c.l.b16 %v7117
    %v8425 = vunpack.c.l.b16 %v7118
    %v8426 = vunpack.c.l.b16 %v7119
    %v8427 = vunpack.c.l.b16 %v7120
    %v8428 = vunpack.c.l.b16 %v7121
    %v8429 = vunpack.c.l.b16 %v7122
    %v8430 = vunpack.c.l.b16 %v7123
    %v8431 = vunpack.c.l.b16 %v7124
    %v8432 = vunpack.c.l.b16 %v7125
    %v8433 = vunpack.c.l.b16 %v7126
    %v8434 = vunpack.c.l.b16 %v7127
    %v8435 = vunpack.c.l.b16 %v7128
    %v8436 = vunpack.c.l.b16 %v7129
    %v8437 = vunpack.c.l.b16 %v7130
    %v8438 = vunpack.c.l.b16 %v7131
    %v8439 = vunpack.c.l.b16 %v7132
    %v8440 = vunpack.c.l.b16 %v7133
    %v8441 = vunpack.c.l.b16 %v7134
    %v8442 = vunpack.c.l.b16 %v7135
    %v8443 = vunpack.c.l.b16 %v7136
    %v8444 = vunpack.c.l.b16 %v7137
    %v8445 = vunpack.c.l.b16 %v7138
    %v8446 = vunpack.c.l.b16 %v7139
    %v8447 = vunpack.c.l.b16 %v7140
    %v8448 = vunpack.c.l.b16 %v7141
    %v8449 = vunpack.c.l.b16 %v7142
    %v8450 = vunpack.c.l.b16 %v7143
    %v8451 = vunpack.c.l.b16 %v7144
    %v8452 = vunpack.c.l.b16 %v7145
    %v8453 = vunpack.c.l.b16 %v7146
    %v8454 = vunpack.c.l.b16 %v7147
    %v8455 = vunpack.c.l.b16 %v7148
    %v8456 = vunpack.c.l.b16 %v7149
    %v8457 = vunpack.c.l.b16 %v7150
    %v8458 = vunpack.c.l.b16 %v7151
    %v8459 = vunpack.c.l.b16 %v7152
    %v8460 = vunpack.c.l.b16 %v7153
    %v8461 = vunpack.c.l.b16 %v7154
    %v8462 = vunpack.c.l.b16 %v7155
    %v8463 = vunpack.c.l.b16 %v7156
    %v8464 = vunpack.c.l.b16 %v7157
    %v8465 = vunpack.c.l.b16 %v7158
    %v8466 = vunpack.c.l.b16 %v7159
    %v8467 = vunpack.c.l.b16 %v7160
    %v8468 = vunpack.c.l.b16 %v7161
    %v8469 = vunpack.c.l.b16 %v7162
    %v8470 = vunpack.c.l.b16 %v7163
    %v8471 = vpack.c.b16 %v8408, %v8407
    %v8472 = vpack.c.b16 %v8410, %v8409
    %v8473 = vpack.c.b16 %v8412, %v8411
    %v8474 = vpack.c.b16 %v8414, %v8413
    %v8475 = vpack.c.b16 %v8416, %v8415
    %v8476 = vpack.c.b16 %v8418, %v8417
    %v8477 = vpack.c.b16 %v8420, %v8419
    %v8478 = vpack.c.b16 %v8422, %v8421
    %v8479 = vpack.c.b16 %v8424, %v8423
    %v8480 = vpack.c.b16 %v8426, %v8425
    %v8481 = vpack.c.b16 %v8428, %v8427
    %v8482 = vpack.c.b16 %v8430, %v8429
    %v8483 = vpack.c.b16 %v8432, %v8431
    %v8484 = vpack.c.b16 %v8434, %v8433
    %v8485 = vpack.c.b16 %v8436, %v8435
    %v8486 = vpack.c.b16 %v8438, %v8437
    %v8487 = vpack.c.b16 %v8440, %v8439
    %v8488 = vpack.c.b16 %v8442, %v8441
    %v8489 = vpack.c.b16 %v8444, %v8443
    %v8490 = vpack.c.b16 %v8446, %v8445
    %v8491 = vpack.c.b16 %v8448, %v8447
    %v8492 = vpack.c.b16 %v8450, %v8449
    %v8493 = vpack.c.b16 %v8452, %v8451
    %v8494 = vpack.c.b16 %v8454, %v8453
    %v8495 = vpack.c.b16 %v8456, %v8455
    %v8496 = vpack.c.b16 %v8458, %v8457
    %v8497 = vpack.c.b16 %v8460, %v8459
    %v8498 = vpack.c.b16 %v8462, %v8461
    %v8499 = vpack.c.b16 %v8464, %v8463
    %v8500 = vpack.c.b16 %v8466, %v8465
    %v8501 = vpack.c.b16 %v8468, %v8467
    %v8502 = vpack.c.b16 %v8470, %v8469
    %v8551 = vunpack.c.l.b16 %v7165
    %v8552 = vunpack.c.l.b16 %v7166
    %v8553 = vunpack.c.l.b16 %v7167
    %v8554 = vunpack.c.l.b16 %v7168
    %v8555 = vunpack.c.l.b16 %v7169
    %v8556 = vunpack.c.l.b16 %v7170
    %v8557 = vunpack.c.l.b16 %v7171
    %v8558 = vunpack.c.l.b16 %v7172
    %v8559 = vunpack.c.l.b16 %v7173
    %v8560 = vunpack.c.l.b16 %v7174
    %v8561 = vunpack.c.l.b16 %v7175
    %v8562 = vunpack.c.l.b16 %v7176
    %v8563 = vunpack.c.l.b16 %v7177
    %v8564 = vunpack.c.l.b16 %v7178
    %v8565 = vunpack.c.l.b16 %v7179
    %v8566 = vunpack.c.l.b16 %v7180
    %v8567 = vpack.c.b16 %v8552, %v8551
    %v8568 = vpack.c.b16 %v8554, %v8553
    %v8569 = vpack.c.b16 %v8556, %v8555
    %v8570 = vpack.c.b16 %v8558, %v8557
    %v8571 = vpack.c.b16 %v8560, %v8559
    %v8572 = vpack.c.b16 %v8562, %v8561
    %v8573 = vpack.c.b16 %v8564, %v8563
    %v8574 = vpack.c.b16 %v8566, %v8565
    %8583 = vmatpush.bf16.msra.mxu0 %v8574
    %8584 = vmatpush.bf16.msra.mxu0 %v8573
    %8585 = vmatpush.bf16.msra.mxu0 %v8572
    %8586 = vmatpush.bf16.msra.mxu0 %v8571
    %8587 = vmatpush.bf16.msra.mxu0 %v8570
    %8588 = vmatpush.bf16.msra.mxu0 %v8569
    %8589 = vmatpush.bf16.msra.mxu0 %v8568
    %8590 = vmatpush.bf16.msra.mxu0 %v8567
    %8591 = vmatmul.bf16.gmra.mxu0 %v8471
    %v8592 = vpop.f32.mrf.mxu0
    %v8593 = vadd.f32 %v8184, %v8592
    %v8594 = vpop.f32.mrf.mxu0
    %v8595 = vadd.f32 %v8186, %v8594
    %8596 = vmatmul.bf16.gmra.mxu0 %v8472
    %v8597 = vpop.f32.mrf.mxu0
    %v8598 = vadd.f32 %v8189, %v8597
    %v8599 = vpop.f32.mrf.mxu0
    %v8600 = vadd.f32 %v8191, %v8599
    %8601 = vmatmul.bf16.gmra.mxu0 %v8473
    %v8602 = vpop.f32.mrf.mxu0
    %v8603 = vadd.f32 %v8194, %v8602
    %v8604 = vpop.f32.mrf.mxu0
    %v8605 = vadd.f32 %v8196, %v8604
    %8606 = vmatmul.bf16.gmra.mxu0 %v8474
    %v8607 = vpop.f32.mrf.mxu0
    %v8608 = vadd.f32 %v8199, %v8607
    %v8609 = vpop.f32.mrf.mxu0
    %v8610 = vadd.f32 %v8201, %v8609
    %8611 = vmatmul.bf16.gmra.mxu0 %v8475
    %v8612 = vpop.f32.mrf.mxu0
    %v8613 = vadd.f32 %v8204, %v8612
    %v8614 = vpop.f32.mrf.mxu0
    %v8615 = vadd.f32 %v8206, %v8614
    %8616 = vmatmul.bf16.gmra.mxu0 %v8476
    %v8617 = vpop.f32.mrf.mxu0
    %v8618 = vadd.f32 %v8209, %v8617
    %v8619 = vpop.f32.mrf.mxu0
    %v8620 = vadd.f32 %v8211, %v8619
    %8621 = vmatmul.bf16.gmra.mxu0 %v8477
    %v8622 = vpop.f32.mrf.mxu0
    %v8623 = vadd.f32 %v8214, %v8622
    %v8624 = vpop.f32.mrf.mxu0
    %v8625 = vadd.f32 %v8216, %v8624
    %8626 = vmatmul.bf16.gmra.mxu0 %v8478
    %v8627 = vpop.f32.mrf.mxu0
    %v8628 = vadd.f32 %v8219, %v8627
    %v8629 = vpop.f32.mrf.mxu0
    %v8630 = vadd.f32 %v8221, %v8629
    %8631 = vmatmul.bf16.gmra.mxu0 %v8479
    %v8632 = vpop.f32.mrf.mxu0
    %v8633 = vadd.f32 %v8224, %v8632
    %v8634 = vpop.f32.mrf.mxu0
    %v8635 = vadd.f32 %v8226, %v8634
    %8636 = vmatmul.bf16.gmra.mxu0 %v8480
    %v8637 = vpop.f32.mrf.mxu0
    %v8638 = vadd.f32 %v8229, %v8637
    %v8639 = vpop.f32.mrf.mxu0
    %v8640 = vadd.f32 %v8231, %v8639
    %8641 = vmatmul.bf16.gmra.mxu0 %v8481
    %v8642 = vpop.f32.mrf.mxu0
    %v8643 = vadd.f32 %v8234, %v8642
    %v8644 = vpop.f32.mrf.mxu0
    %v8645 = vadd.f32 %v8236, %v8644
    %8646 = vmatmul.bf16.gmra.mxu0 %v8482
    %v8647 = vpop.f32.mrf.mxu0
    %v8648 = vadd.f32 %v8239, %v8647
    %v8649 = vpop.f32.mrf.mxu0
    %v8650 = vadd.f32 %v8241, %v8649
    %8651 = vmatmul.bf16.gmra.mxu0 %v8483
    %v8652 = vpop.f32.mrf.mxu0
    %v8653 = vadd.f32 %v8244, %v8652
    %v8654 = vpop.f32.mrf.mxu0
    %v8655 = vadd.f32 %v8246, %v8654
    %8656 = vmatmul.bf16.gmra.mxu0 %v8484
    %v8657 = vpop.f32.mrf.mxu0
    %v8658 = vadd.f32 %v8249, %v8657
    %v8659 = vpop.f32.mrf.mxu0
    %v8660 = vadd.f32 %v8251, %v8659
    %8661 = vmatmul.bf16.gmra.mxu0 %v8485
    %v8662 = vpop.f32.mrf.mxu0
    %v8663 = vadd.f32 %v8254, %v8662
    %v8664 = vpop.f32.mrf.mxu0
    %v8665 = vadd.f32 %v8256, %v8664
    %8666 = vmatmul.bf16.gmra.mxu0 %v8486
    %v8667 = vpop.f32.mrf.mxu0
    %v8668 = vadd.f32 %v8259, %v8667
    %v8669 = vpop.f32.mrf.mxu0
    %v8670 = vadd.f32 %v8261, %v8669
    %8671 = vmatmul.bf16.gmra.mxu0 %v8487
    %v8672 = vpop.f32.mrf.mxu0
    %v8673 = vadd.f32 %v8264, %v8672
    %v8674 = vpop.f32.mrf.mxu0
    %v8675 = vadd.f32 %v8266, %v8674
    %8676 = vmatmul.bf16.gmra.mxu0 %v8488
    %v8677 = vpop.f32.mrf.mxu0
    %v8678 = vadd.f32 %v8269, %v8677
    %v8679 = vpop.f32.mrf.mxu0
    %v8680 = vadd.f32 %v8271, %v8679
    %8681 = vmatmul.bf16.gmra.mxu0 %v8489
    %v8682 = vpop.f32.mrf.mxu0
    %v8683 = vadd.f32 %v8274, %v8682
    %v8684 = vpop.f32.mrf.mxu0
    %v8685 = vadd.f32 %v8276, %v8684
    %8686 = vmatmul.bf16.gmra.mxu0 %v8490
    %v8687 = vpop.f32.mrf.mxu0
    %v8688 = vadd.f32 %v8279, %v8687
    %v8689 = vpop.f32.mrf.mxu0
    %v8690 = vadd.f32 %v8281, %v8689
    %8691 = vmatmul.bf16.gmra.mxu0 %v8491
    %v8692 = vpop.f32.mrf.mxu0
    %v8693 = vadd.f32 %v8284, %v8692
    %v8694 = vpop.f32.mrf.mxu0
    %v8695 = vadd.f32 %v8286, %v8694
    %8696 = vmatmul.bf16.gmra.mxu0 %v8492
    %v8697 = vpop.f32.mrf.mxu0
    %v8698 = vadd.f32 %v8289, %v8697
    %v8699 = vpop.f32.mrf.mxu0
    %v8700 = vadd.f32 %v8291, %v8699
    %8701 = vmatmul.bf16.gmra.mxu0 %v8493
    %v8702 = vpop.f32.mrf.mxu0
    %v8703 = vadd.f32 %v8294, %v8702
    %v8704 = vpop.f32.mrf.mxu0
    %v8705 = vadd.f32 %v8296, %v8704
    %8706 = vmatmul.bf16.gmra.mxu0 %v8494
    %v8707 = vpop.f32.mrf.mxu0
    %v8708 = vadd.f32 %v8299, %v8707
    %v8709 = vpop.f32.mrf.mxu0
    %v8710 = vadd.f32 %v8301, %v8709
    %8711 = vmatmul.bf16.gmra.mxu0 %v8495
    %v8712 = vpop.f32.mrf.mxu0
    %v8713 = vadd.f32 %v8304, %v8712
    %v8714 = vpop.f32.mrf.mxu0
    %v8715 = vadd.f32 %v8306, %v8714
    %8716 = vmatmul.bf16.gmra.mxu0 %v8496
    %v8717 = vpop.f32.mrf.mxu0
    %v8718 = vadd.f32 %v8309, %v8717
    %v8719 = vpop.f32.mrf.mxu0
    %v8720 = vadd.f32 %v8311, %v8719
    %8721 = vmatmul.bf16.gmra.mxu0 %v8497
    %v8722 = vpop.f32.mrf.mxu0
    %v8723 = vadd.f32 %v8314, %v8722
    %v8724 = vpop.f32.mrf.mxu0
    %v8725 = vadd.f32 %v8316, %v8724
    %8726 = vmatmul.bf16.gmra.mxu0 %v8498
    %v8727 = vpop.f32.mrf.mxu0
    %v8728 = vadd.f32 %v8319, %v8727
    %v8729 = vpop.f32.mrf.mxu0
    %v8730 = vadd.f32 %v8321, %v8729
    %8731 = vmatmul.bf16.gmra.mxu0 %v8499
    %v8732 = vpop.f32.mrf.mxu0
    %v8733 = vadd.f32 %v8324, %v8732
    %v8734 = vpop.f32.mrf.mxu0
    %v8735 = vadd.f32 %v8326, %v8734
    %8736 = vmatmul.bf16.gmra.mxu0 %v8500
    %v8737 = vpop.f32.mrf.mxu0
    %v8738 = vadd.f32 %v8329, %v8737
    %v8739 = vpop.f32.mrf.mxu0
    %v8740 = vadd.f32 %v8331, %v8739
    %8741 = vmatmul.bf16.gmra.mxu0 %v8501
    %v8742 = vpop.f32.mrf.mxu0
    %v8743 = vadd.f32 %v8334, %v8742
    %v8744 = vpop.f32.mrf.mxu0
    %v8745 = vadd.f32 %v8336, %v8744
    %8746 = vmatmul.bf16.gmra.mxu0 %v8502
    %v8747 = vpop.f32.mrf.mxu0
    %v8748 = vadd.f32 %v8339, %v8747
    %v8749 = vpop.f32.mrf.mxu0
    %v8750 = vadd.f32 %v8341, %v8749
    %8751 = vdwg.mxu0
    %v8752 = vld [vmem:[%s7099] sm:$0xe]
    %v8753 = vld [vmem:[%s7099 + $0xc] sm:$0xe]
    %v8754 = vld [vmem:[%s7099 + $0x18] sm:$0xe]
    %v8755 = vld [vmem:[%s7099 + $0x24] sm:$0xe]
    %v8756 = vld [vmem:[%s7099 + $0x30] sm:$0xe]
    %v8757 = vld [vmem:[%s7099 + $0x3c] sm:$0xe]
    %v8758 = vld [vmem:[%s7099 + $0x48] sm:$0xe]
    %v8759 = vld [vmem:[%s7099 + $0x54] sm:$0xe]
    %v8760 = vld [vmem:[%s7099 + $0x60] sm:$0xe]
    %v8761 = vld [vmem:[%s7099 + $0x6c] sm:$0xe]
    %v8762 = vld [vmem:[%s7099 + $0x78] sm:$0xe]
    %v8763 = vld [vmem:[%s7099 + $0x84] sm:$0xe]
    %v8764 = vld [vmem:[%s7099 + $0x90] sm:$0xe]
    %v8765 = vld [vmem:[%s7099 + $0x9c] sm:$0xe]
    %v8766 = vld [vmem:[%s7099 + $0xa8] sm:$0xe]
    %v8767 = vld [vmem:[%s7099 + $0xb4] sm:$0xe]
    %v8768 = vld [vmem:[%s7099 + $0xd8] sm:$0xe]
    %v8769 = vld [vmem:[%s7099 + $0xe4] sm:$0xe]
    %v8770 = vld [vmem:[%s7099 + $0xf0] sm:$0xe]
    %v8771 = vld [vmem:[%s7099 + $0xfc] sm:$0xe]
    %v8772 = vld [vmem:[%s7099 + $0x108] sm:$0xe]
    %v8773 = vld [vmem:[%s7099 + $0x114] sm:$0xe]
    %v8774 = vld [vmem:[%s7099 + $0x120] sm:$0xe]
    %v8775 = vld [vmem:[%s7099 + $0x12c] sm:$0xe]
    %v8776 = vld [vmem:[%s7099 + $0x138] sm:$0xe]
    %v8777 = vld [vmem:[%s7099 + $0x144] sm:$0xe]
    %v8778 = vld [vmem:[%s7099 + $0x150] sm:$0xe]
    %v8779 = vld [vmem:[%s7099 + $0x15c] sm:$0xe]
    %v8780 = vld [vmem:[%s7099 + $0x168] sm:$0xe]
    %v8781 = vld [vmem:[%s7099 + $0x174] sm:$0xe]
    %v8782 = vld [vmem:[%s7099 + $0x180] sm:$0xe]
    %v8783 = vld [vmem:[%s7099 + $0x18c] sm:$0xe]
    %v8848 = vrot.slane %v8752, 5
    %v8849 = vrot.slane %v8848, 4
    %v8850 = vrot.slane %v7101, 5
    %v8851 = vsel %vm3794, %v8849, %v8850
    %v8852 = vrot.slane %v8850, 4
    %v8853 = vrot.slane %v7181, 5
    %v8854 = vsel %vm3794, %v8852, %v8853
    %v8855 = vrot.slane %v8753, 5
    %v8856 = vrot.slane %v8855, 4
    %v8857 = vrot.slane %v7103, 5
    %v8858 = vsel %vm3794, %v8856, %v8857
    %v8859 = vrot.slane %v8857, 4
    %v8860 = vrot.slane %v7182, 5
    %v8861 = vsel %vm3794, %v8859, %v8860
    %v8862 = vrot.slane %v8754, 5
    %v8863 = vrot.slane %v8862, 4
    %v8864 = vrot.slane %v7105, 5
    %v8865 = vsel %vm3794, %v8863, %v8864
    %v8866 = vrot.slane %v8864, 4
    %v8867 = vrot.slane %v7183, 5
    %v8868 = vsel %vm3794, %v8866, %v8867
    %v8869 = vrot.slane %v8755, 5
    %v8870 = vrot.slane %v8869, 4
    %v8871 = vrot.slane %v7107, 5
    %v8872 = vsel %vm3794, %v8870, %v8871
    %v8873 = vrot.slane %v8871, 4
    %v8874 = vrot.slane %v7184, 5
    %v8875 = vsel %vm3794, %v8873, %v8874
    %v8876 = vrot.slane %v8756, 5
    %v8877 = vrot.slane %v8876, 4
    %v8878 = vrot.slane %v7109, 5
    %v8879 = vsel %vm3794, %v8877, %v8878
    %v8880 = vrot.slane %v8878, 4
    %v8881 = vrot.slane %v7185, 5
    %v8882 = vsel %vm3794, %v8880, %v8881
    %v8883 = vrot.slane %v8757, 5
    %v8884 = vrot.slane %v8883, 4
    %v8885 = vrot.slane %v7111, 5
    %v8886 = vsel %vm3794, %v8884, %v8885
    %v8887 = vrot.slane %v8885, 4
    %v8888 = vrot.slane %v7186, 5
    %v8889 = vsel %vm3794, %v8887, %v8888
    %v8890 = vrot.slane %v8758, 5
    %v8891 = vrot.slane %v8890, 4
    %v8892 = vrot.slane %v7113, 5
    %v8893 = vsel %vm3794, %v8891, %v8892
    %v8894 = vrot.slane %v8892, 4
    %v8895 = vrot.slane %v7187, 5
    %v8896 = vsel %vm3794, %v8894, %v8895
    %v8897 = vrot.slane %v8759, 5
    %v8898 = vrot.slane %v8897, 4
    %v8899 = vrot.slane %v7115, 5
    %v8900 = vsel %vm3794, %v8898, %v8899
    %v8901 = vrot.slane %v8899, 4
    %v8902 = vrot.slane %v7188, 5
    %v8903 = vsel %vm3794, %v8901, %v8902
    %v8904 = vrot.slane %v8760, 5
    %v8905 = vrot.slane %v8904, 4
    %v8906 = vrot.slane %v7117, 5
    %v8907 = vsel %vm3794, %v8905, %v8906
    %v8908 = vrot.slane %v8906, 4
    %v8909 = vrot.slane %v7189, 5
    %v8910 = vsel %vm3794, %v8908, %v8909
    %v8911 = vrot.slane %v8761, 5
    %v8912 = vrot.slane %v8911, 4
    %v8913 = vrot.slane %v7119, 5
    %v8914 = vsel %vm3794, %v8912, %v8913
    %v8915 = vrot.slane %v8913, 4
    %v8916 = vrot.slane %v7190, 5
    %v8917 = vsel %vm3794, %v8915, %v8916
    %v8918 = vrot.slane %v8762, 5
    %v8919 = vrot.slane %v8918, 4
    %v8920 = vrot.slane %v7121, 5
    %v8921 = vsel %vm3794, %v8919, %v8920
    %v8922 = vrot.slane %v8920, 4
    %v8923 = vrot.slane %v7191, 5
    %v8924 = vsel %vm3794, %v8922, %v8923
    %v8925 = vrot.slane %v8763, 5
    %v8926 = vrot.slane %v8925, 4
    %v8927 = vrot.slane %v7123, 5
    %v8928 = vsel %vm3794, %v8926, %v8927
    %v8929 = vrot.slane %v8927, 4
    %v8930 = vrot.slane %v7192, 5
    %v8931 = vsel %vm3794, %v8929, %v8930
    %v8932 = vrot.slane %v8764, 5
    %v8933 = vrot.slane %v8932, 4
    %v8934 = vrot.slane %v7125, 5
    %v8935 = vsel %vm3794, %v8933, %v8934
    %v8936 = vrot.slane %v8934, 4
    %v8937 = vrot.slane %v7193, 5
    %v8938 = vsel %vm3794, %v8936, %v8937
    %v8939 = vrot.slane %v8765, 5
    %v8940 = vrot.slane %v8939, 4
    %v8941 = vrot.slane %v7127, 5
    %v8942 = vsel %vm3794, %v8940, %v8941
    %v8943 = vrot.slane %v8941, 4
    %v8944 = vrot.slane %v7194, 5
    %v8945 = vsel %vm3794, %v8943, %v8944
    %v8946 = vrot.slane %v8766, 5
    %v8947 = vrot.slane %v8946, 4
    %v8948 = vrot.slane %v7129, 5
    %v8949 = vsel %vm3794, %v8947, %v8948
    %v8950 = vrot.slane %v8948, 4
    %v8951 = vrot.slane %v7195, 5
    %v8952 = vsel %vm3794, %v8950, %v8951
    %v8953 = vrot.slane %v8767, 5
    %v8954 = vrot.slane %v8953, 4
    %v8955 = vrot.slane %v7131, 5
    %v8956 = vsel %vm3794, %v8954, %v8955
    %v8957 = vrot.slane %v8955, 4
    %v8958 = vrot.slane %v7196, 5
    %v8959 = vsel %vm3794, %v8957, %v8958
    %v8960 = vrot.slane %v8768, 5
    %v8961 = vrot.slane %v8960, 4
    %v8962 = vrot.slane %v7133, 5
    %v8963 = vsel %vm3794, %v8961, %v8962
    %v8964 = vrot.slane %v8962, 4
    %v8965 = vrot.slane %v7197, 5
    %v8966 = vsel %vm3794, %v8964, %v8965
    %v8967 = vrot.slane %v8769, 5
    %v8968 = vrot.slane %v8967, 4
    %v8969 = vrot.slane %v7135, 5
    %v8970 = vsel %vm3794, %v8968, %v8969
    %v8971 = vrot.slane %v8969, 4
    %v8972 = vrot.slane %v7198, 5
    %v8973 = vsel %vm3794, %v8971, %v8972
    %v8974 = vrot.slane %v8770, 5
    %v8975 = vrot.slane %v8974, 4
    %v8976 = vrot.slane %v7137, 5
    %v8977 = vsel %vm3794, %v8975, %v8976
    %v8978 = vrot.slane %v8976, 4
    %v8979 = vrot.slane %v7199, 5
    %v8980 = vsel %vm3794, %v8978, %v8979
    %v8981 = vrot.slane %v8771, 5
    %v8982 = vrot.slane %v8981, 4
    %v8983 = vrot.slane %v7139, 5
    %v8984 = vsel %vm3794, %v8982, %v8983
    %v8985 = vrot.slane %v8983, 4
    %v8986 = vrot.slane %v7200, 5
    %v8987 = vsel %vm3794, %v8985, %v8986
    %v8988 = vrot.slane %v8772, 5
    %v8989 = vrot.slane %v8988, 4
    %v8990 = vrot.slane %v7141, 5
    %v8991 = vsel %vm3794, %v8989, %v8990
    %v8992 = vrot.slane %v8990, 4
    %v8993 = vrot.slane %v7201, 5
    %v8994 = vsel %vm3794, %v8992, %v8993
    %v8995 = vrot.slane %v8773, 5
    %v8996 = vrot.slane %v8995, 4
    %v8997 = vrot.slane %v7143, 5
    %v8998 = vsel %vm3794, %v8996, %v8997
    %v8999 = vrot.slane %v8997, 4
    %v9000 = vrot.slane %v7202, 5
    %v9001 = vsel %vm3794, %v8999, %v9000
    %v9002 = vrot.slane %v8774, 5
    %v9003 = vrot.slane %v9002, 4
    %v9004 = vrot.slane %v7145, 5
    %v9005 = vsel %vm3794, %v9003, %v9004
    %v9006 = vrot.slane %v9004, 4
    %v9007 = vrot.slane %v7203, 5
    %v9008 = vsel %vm3794, %v9006, %v9007
    %v9009 = vrot.slane %v8775, 5
    %v9010 = vrot.slane %v9009, 4
    %v9011 = vrot.slane %v7147, 5
    %v9012 = vsel %vm3794, %v9010, %v9011
    %v9013 = vrot.slane %v9011, 4
    %v9014 = vrot.slane %v7204, 5
    %v9015 = vsel %vm3794, %v9013, %v9014
    %v9016 = vrot.slane %v8776, 5
    %v9017 = vrot.slane %v9016, 4
    %v9018 = vrot.slane %v7149, 5
    %v9019 = vsel %vm3794, %v9017, %v9018
    %v9020 = vrot.slane %v9018, 4
    %v9021 = vrot.slane %v7205, 5
    %v9022 = vsel %vm3794, %v9020, %v9021
    %v9023 = vrot.slane %v8777, 5
    %v9024 = vrot.slane %v9023, 4
    %v9025 = vrot.slane %v7151, 5
    %v9026 = vsel %vm3794, %v9024, %v9025
    %v9027 = vrot.slane %v9025, 4
    %v9028 = vrot.slane %v7206, 5
    %v9029 = vsel %vm3794, %v9027, %v9028
    %v9030 = vrot.slane %v8778, 5
    %v9031 = vrot.slane %v9030, 4
    %v9032 = vrot.slane %v7153, 5
    %v9033 = vsel %vm3794, %v9031, %v9032
    %v9034 = vrot.slane %v9032, 4
    %v9035 = vrot.slane %v7207, 5
    %v9036 = vsel %vm3794, %v9034, %v9035
    %v9037 = vrot.slane %v8779, 5
    %v9038 = vrot.slane %v9037, 4
    %v9039 = vrot.slane %v7155, 5
    %v9040 = vsel %vm3794, %v9038, %v9039
    %v9041 = vrot.slane %v9039, 4
    %v9042 = vrot.slane %v7208, 5
    %v9043 = vsel %vm3794, %v9041, %v9042
    %v9044 = vrot.slane %v8780, 5
    %v9045 = vrot.slane %v9044, 4
    %v9046 = vrot.slane %v7157, 5
    %v9047 = vsel %vm3794, %v9045, %v9046
    %v9048 = vrot.slane %v9046, 4
    %v9049 = vrot.slane %v7209, 5
    %v9050 = vsel %vm3794, %v9048, %v9049
    %v9051 = vrot.slane %v8781, 5
    %v9052 = vrot.slane %v9051, 4
    %v9053 = vrot.slane %v7159, 5
    %v9054 = vsel %vm3794, %v9052, %v9053
    %v9055 = vrot.slane %v9053, 4
    %v9056 = vrot.slane %v7210, 5
    %v9057 = vsel %vm3794, %v9055, %v9056
    %v9058 = vrot.slane %v8782, 5
    %v9059 = vrot.slane %v9058, 4
    %v9060 = vrot.slane %v7161, 5
    %v9061 = vsel %vm3794, %v9059, %v9060
    %v9062 = vrot.slane %v9060, 4
    %v9063 = vrot.slane %v7211, 5
    %v9064 = vsel %vm3794, %v9062, %v9063
    %v9065 = vrot.slane %v8783, 5
    %v9066 = vrot.slane %v9065, 4
    %v9067 = vrot.slane %v7163, 5
    %v9068 = vsel %vm3794, %v9066, %v9067
    %v9069 = vrot.slane %v9067, 4
    %v9070 = vrot.slane %v7212, 5
    %v9071 = vsel %vm3794, %v9069, %v9070
    %s9072 = scalar_lea.vmem %s4, 512
    %v9073 = vld [vmem:[%s9072] sm:$0xf]
    %v9074 = vld [vmem:[%s9072 + $0x4] sm:$0xf]
    %v9075 = vld [vmem:[%s9072 + $0x8] sm:$0xf]
    %v9076 = vld [vmem:[%s9072 + $0xc] sm:$0xf]
    %v9077 = vld [vmem:[%s9072 + $0x10] sm:$0xf]
    %v9078 = vld [vmem:[%s9072 + $0x14] sm:$0xf]
    %v9079 = vld [vmem:[%s9072 + $0x18] sm:$0xf]
    %v9080 = vld [vmem:[%s9072 + $0x1c] sm:$0xf]
    %v9081 = vld [vmem:[%s9072 + $0x20] sm:$0xf]
    %v9082 = vld [vmem:[%s9072 + $0x24] sm:$0xf]
    %v9083 = vld [vmem:[%s9072 + $0x28] sm:$0xf]
    %v9084 = vld [vmem:[%s9072 + $0x2c] sm:$0xf]
    %v9085 = vld [vmem:[%s9072 + $0x30] sm:$0xf]
    %v9086 = vld [vmem:[%s9072 + $0x34] sm:$0xf]
    %v9087 = vld [vmem:[%s9072 + $0x38] sm:$0xf]
    %v9088 = vld [vmem:[%s9072 + $0x3c] sm:$0xf]
    %v9089 = vunpack.c.l.b16 %v8851
    %v9090 = vunpack.c.l.b16 %v8854
    %v9091 = vunpack.c.l.b16 %v8858
    %v9092 = vunpack.c.l.b16 %v8861
    %v9093 = vunpack.c.l.b16 %v8865
    %v9094 = vunpack.c.l.b16 %v8868
    %v9095 = vunpack.c.l.b16 %v8872
    %v9096 = vunpack.c.l.b16 %v8875
    %v9097 = vunpack.c.l.b16 %v8879
    %v9098 = vunpack.c.l.b16 %v8882
    %v9099 = vunpack.c.l.b16 %v8886
    %v9100 = vunpack.c.l.b16 %v8889
    %v9101 = vunpack.c.l.b16 %v8893
    %v9102 = vunpack.c.l.b16 %v8896
    %v9103 = vunpack.c.l.b16 %v8900
    %v9104 = vunpack.c.l.b16 %v8903
    %v9105 = vunpack.c.l.b16 %v8907
    %v9106 = vunpack.c.l.b16 %v8910
    %v9107 = vunpack.c.l.b16 %v8914
    %v9108 = vunpack.c.l.b16 %v8917
    %v9109 = vunpack.c.l.b16 %v8921
    %v9110 = vunpack.c.l.b16 %v8924
    %v9111 = vunpack.c.l.b16 %v8928
    %v9112 = vunpack.c.l.b16 %v8931
    %v9113 = vunpack.c.l.b16 %v8935
    %v9114 = vunpack.c.l.b16 %v8938
    %v9115 = vunpack.c.l.b16 %v8942
    %v9116 = vunpack.c.l.b16 %v8945
    %v9117 = vunpack.c.l.b16 %v8949
    %v9118 = vunpack.c.l.b16 %v8952
    %v9119 = vunpack.c.l.b16 %v8956
    %v9120 = vunpack.c.l.b16 %v8959
    %v9121 = vunpack.c.l.b16 %v8963
    %v9122 = vunpack.c.l.b16 %v8966
    %v9123 = vunpack.c.l.b16 %v8970
    %v9124 = vunpack.c.l.b16 %v8973
    %v9125 = vunpack.c.l.b16 %v8977
    %v9126 = vunpack.c.l.b16 %v8980
    %v9127 = vunpack.c.l.b16 %v8984
    %v9128 = vunpack.c.l.b16 %v8987
    %v9129 = vunpack.c.l.b16 %v8991
    %v9130 = vunpack.c.l.b16 %v8994
    %v9131 = vunpack.c.l.b16 %v8998
    %v9132 = vunpack.c.l.b16 %v9001
    %v9133 = vunpack.c.l.b16 %v9005
    %v9134 = vunpack.c.l.b16 %v9008
    %v9135 = vunpack.c.l.b16 %v9012
    %v9136 = vunpack.c.l.b16 %v9015
    %v9137 = vunpack.c.l.b16 %v9019
    %v9138 = vunpack.c.l.b16 %v9022
    %v9139 = vunpack.c.l.b16 %v9026
    %v9140 = vunpack.c.l.b16 %v9029
    %v9141 = vunpack.c.l.b16 %v9033
    %v9142 = vunpack.c.l.b16 %v9036
    %v9143 = vunpack.c.l.b16 %v9040
    %v9144 = vunpack.c.l.b16 %v9043
    %v9145 = vunpack.c.l.b16 %v9047
    %v9146 = vunpack.c.l.b16 %v9050
    %v9147 = vunpack.c.l.b16 %v9054
    %v9148 = vunpack.c.l.b16 %v9057
    %v9149 = vunpack.c.l.b16 %v9061
    %v9150 = vunpack.c.l.b16 %v9064
    %v9151 = vunpack.c.l.b16 %v9068
    %v9152 = vunpack.c.l.b16 %v9071
    %v9153 = vpack.c.b16 %v9090, %v9089
    %v9154 = vpack.c.b16 %v9092, %v9091
    %v9155 = vpack.c.b16 %v9094, %v9093
    %v9156 = vpack.c.b16 %v9096, %v9095
    %v9157 = vpack.c.b16 %v9098, %v9097
    %v9158 = vpack.c.b16 %v9100, %v9099
    %v9159 = vpack.c.b16 %v9102, %v9101
    %v9160 = vpack.c.b16 %v9104, %v9103
    %v9161 = vpack.c.b16 %v9106, %v9105
    %v9162 = vpack.c.b16 %v9108, %v9107
    %v9163 = vpack.c.b16 %v9110, %v9109
    %v9164 = vpack.c.b16 %v9112, %v9111
    %v9165 = vpack.c.b16 %v9114, %v9113
    %v9166 = vpack.c.b16 %v9116, %v9115
    %v9167 = vpack.c.b16 %v9118, %v9117
    %v9168 = vpack.c.b16 %v9120, %v9119
    %v9169 = vpack.c.b16 %v9122, %v9121
    %v9170 = vpack.c.b16 %v9124, %v9123
    %v9171 = vpack.c.b16 %v9126, %v9125
    %v9172 = vpack.c.b16 %v9128, %v9127
    %v9173 = vpack.c.b16 %v9130, %v9129
    %v9174 = vpack.c.b16 %v9132, %v9131
    %v9175 = vpack.c.b16 %v9134, %v9133
    %v9176 = vpack.c.b16 %v9136, %v9135
    %v9177 = vpack.c.b16 %v9138, %v9137
    %v9178 = vpack.c.b16 %v9140, %v9139
    %v9179 = vpack.c.b16 %v9142, %v9141
    %v9180 = vpack.c.b16 %v9144, %v9143
    %v9181 = vpack.c.b16 %v9146, %v9145
    %v9182 = vpack.c.b16 %v9148, %v9147
    %v9183 = vpack.c.b16 %v9150, %v9149
    %v9184 = vpack.c.b16 %v9152, %v9151
    %v9233 = vunpack.c.l.b16 %v9073
    %v9234 = vunpack.c.l.b16 %v9074
    %v9235 = vunpack.c.l.b16 %v9075
    %v9236 = vunpack.c.l.b16 %v9076
    %v9237 = vunpack.c.l.b16 %v9077
    %v9238 = vunpack.c.l.b16 %v9078
    %v9239 = vunpack.c.l.b16 %v9079
    %v9240 = vunpack.c.l.b16 %v9080
    %v9241 = vunpack.c.l.b16 %v9081
    %v9242 = vunpack.c.l.b16 %v9082
    %v9243 = vunpack.c.l.b16 %v9083
    %v9244 = vunpack.c.l.b16 %v9084
    %v9245 = vunpack.c.l.b16 %v9085
    %v9246 = vunpack.c.l.b16 %v9086
    %v9247 = vunpack.c.l.b16 %v9087
    %v9248 = vunpack.c.l.b16 %v9088
    %v9249 = vpack.c.b16 %v9234, %v9233
    %v9250 = vpack.c.b16 %v9236, %v9235
    %v9251 = vpack.c.b16 %v9238, %v9237
    %v9252 = vpack.c.b16 %v9240, %v9239
    %v9253 = vpack.c.b16 %v9242, %v9241
    %v9254 = vpack.c.b16 %v9244, %v9243
    %v9255 = vpack.c.b16 %v9246, %v9245
    %v9256 = vpack.c.b16 %v9248, %v9247
    %9265 = vmatpush.bf16.msra.mxu0 %v9256
    %9266 = vmatpush.bf16.msra.mxu0 %v9255
    %9267 = vmatpush.bf16.msra.mxu0 %v9254
    %9268 = vmatpush.bf16.msra.mxu0 %v9253
    %9269 = vmatpush.bf16.msra.mxu0 %v9252
    %9270 = vmatpush.bf16.msra.mxu0 %v9251
    %9271 = vmatpush.bf16.msra.mxu0 %v9250
    %9272 = vmatpush.bf16.msra.mxu0 %v9249
    %9273 = vmatmul.bf16.gmra.mxu0 %v9153
    %v9274 = vpop.f32.mrf.mxu0
    %v9275 = vadd.f32 0.0, %v9274
    %v9276 = vpop.f32.mrf.mxu0
    %v9277 = vadd.f32 0.0, %v9276
    %9278 = vmatmul.bf16.gmra.mxu0 %v9154
    %v9279 = vpop.f32.mrf.mxu0
    %v9280 = vadd.f32 0.0, %v9279
    %v9281 = vpop.f32.mrf.mxu0
    %v9282 = vadd.f32 0.0, %v9281
    %9283 = vmatmul.bf16.gmra.mxu0 %v9155
    %v9284 = vpop.f32.mrf.mxu0
    %v9285 = vadd.f32 0.0, %v9284
    %v9286 = vpop.f32.mrf.mxu0
    %v9287 = vadd.f32 0.0, %v9286
    %9288 = vmatmul.bf16.gmra.mxu0 %v9156
    %v9289 = vpop.f32.mrf.mxu0
    %v9290 = vadd.f32 0.0, %v9289
    %v9291 = vpop.f32.mrf.mxu0
    %v9292 = vadd.f32 0.0, %v9291
    %9293 = vmatmul.bf16.gmra.mxu0 %v9157
    %v9294 = vpop.f32.mrf.mxu0
    %v9295 = vadd.f32 0.0, %v9294
    %v9296 = vpop.f32.mrf.mxu0
    %v9297 = vadd.f32 0.0, %v9296
    %9298 = vmatmul.bf16.gmra.mxu0 %v9158
    %v9299 = vpop.f32.mrf.mxu0
    %v9300 = vadd.f32 0.0, %v9299
    %v9301 = vpop.f32.mrf.mxu0
    %v9302 = vadd.f32 0.0, %v9301
    %9303 = vmatmul.bf16.gmra.mxu0 %v9159
    %v9304 = vpop.f32.mrf.mxu0
    %v9305 = vadd.f32 0.0, %v9304
    %v9306 = vpop.f32.mrf.mxu0
    %v9307 = vadd.f32 0.0, %v9306
    %9308 = vmatmul.bf16.gmra.mxu0 %v9160
    %v9309 = vpop.f32.mrf.mxu0
    %v9310 = vadd.f32 0.0, %v9309
    %v9311 = vpop.f32.mrf.mxu0
    %v9312 = vadd.f32 0.0, %v9311
    %9313 = vmatmul.bf16.gmra.mxu0 %v9161
    %v9314 = vpop.f32.mrf.mxu0
    %v9315 = vadd.f32 0.0, %v9314
    %v9316 = vpop.f32.mrf.mxu0
    %v9317 = vadd.f32 0.0, %v9316
    %9318 = vmatmul.bf16.gmra.mxu0 %v9162
    %v9319 = vpop.f32.mrf.mxu0
    %v9320 = vadd.f32 0.0, %v9319
    %v9321 = vpop.f32.mrf.mxu0
    %v9322 = vadd.f32 0.0, %v9321
    %9323 = vmatmul.bf16.gmra.mxu0 %v9163
    %v9324 = vpop.f32.mrf.mxu0
    %v9325 = vadd.f32 0.0, %v9324
    %v9326 = vpop.f32.mrf.mxu0
    %v9327 = vadd.f32 0.0, %v9326
    %9328 = vmatmul.bf16.gmra.mxu0 %v9164
    %v9329 = vpop.f32.mrf.mxu0
    %v9330 = vadd.f32 0.0, %v9329
    %v9331 = vpop.f32.mrf.mxu0
    %v9332 = vadd.f32 0.0, %v9331
    %9333 = vmatmul.bf16.gmra.mxu0 %v9165
    %v9334 = vpop.f32.mrf.mxu0
    %v9335 = vadd.f32 0.0, %v9334
    %v9336 = vpop.f32.mrf.mxu0
    %v9337 = vadd.f32 0.0, %v9336
    %9338 = vmatmul.bf16.gmra.mxu0 %v9166
    %v9339 = vpop.f32.mrf.mxu0
    %v9340 = vadd.f32 0.0, %v9339
    %v9341 = vpop.f32.mrf.mxu0
    %v9342 = vadd.f32 0.0, %v9341
    %9343 = vmatmul.bf16.gmra.mxu0 %v9167
    %v9344 = vpop.f32.mrf.mxu0
    %v9345 = vadd.f32 0.0, %v9344
    %v9346 = vpop.f32.mrf.mxu0
    %v9347 = vadd.f32 0.0, %v9346
    %9348 = vmatmul.bf16.gmra.mxu0 %v9168
    %v9349 = vpop.f32.mrf.mxu0
    %v9350 = vadd.f32 0.0, %v9349
    %v9351 = vpop.f32.mrf.mxu0
    %v9352 = vadd.f32 0.0, %v9351
    %9353 = vmatmul.bf16.gmra.mxu0 %v9169
    %v9354 = vpop.f32.mrf.mxu0
    %v9355 = vadd.f32 0.0, %v9354
    %v9356 = vpop.f32.mrf.mxu0
    %v9357 = vadd.f32 0.0, %v9356
    %9358 = vmatmul.bf16.gmra.mxu0 %v9170
    %v9359 = vpop.f32.mrf.mxu0
    %v9360 = vadd.f32 0.0, %v9359
    %v9361 = vpop.f32.mrf.mxu0
    %v9362 = vadd.f32 0.0, %v9361
    %9363 = vmatmul.bf16.gmra.mxu0 %v9171
    %v9364 = vpop.f32.mrf.mxu0
    %v9365 = vadd.f32 0.0, %v9364
    %v9366 = vpop.f32.mrf.mxu0
    %v9367 = vadd.f32 0.0, %v9366
    %9368 = vmatmul.bf16.gmra.mxu0 %v9172
    %v9369 = vpop.f32.mrf.mxu0
    %v9370 = vadd.f32 0.0, %v9369
    %v9371 = vpop.f32.mrf.mxu0
    %v9372 = vadd.f32 0.0, %v9371
    %9373 = vmatmul.bf16.gmra.mxu0 %v9173
    %v9374 = vpop.f32.mrf.mxu0
    %v9375 = vadd.f32 0.0, %v9374
    %v9376 = vpop.f32.mrf.mxu0
    %v9377 = vadd.f32 0.0, %v9376
    %9378 = vmatmul.bf16.gmra.mxu0 %v9174
    %v9379 = vpop.f32.mrf.mxu0
    %v9380 = vadd.f32 0.0, %v9379
    %v9381 = vpop.f32.mrf.mxu0
    %v9382 = vadd.f32 0.0, %v9381
    %9383 = vmatmul.bf16.gmra.mxu0 %v9175
    %v9384 = vpop.f32.mrf.mxu0
    %v9385 = vadd.f32 0.0, %v9384
    %v9386 = vpop.f32.mrf.mxu0
    %v9387 = vadd.f32 0.0, %v9386
    %9388 = vmatmul.bf16.gmra.mxu0 %v9176
    %v9389 = vpop.f32.mrf.mxu0
    %v9390 = vadd.f32 0.0, %v9389
    %v9391 = vpop.f32.mrf.mxu0
    %v9392 = vadd.f32 0.0, %v9391
    %9393 = vmatmul.bf16.gmra.mxu0 %v9177
    %v9394 = vpop.f32.mrf.mxu0
    %v9395 = vadd.f32 0.0, %v9394
    %v9396 = vpop.f32.mrf.mxu0
    %v9397 = vadd.f32 0.0, %v9396
    %9398 = vmatmul.bf16.gmra.mxu0 %v9178
    %v9399 = vpop.f32.mrf.mxu0
    %v9400 = vadd.f32 0.0, %v9399
    %v9401 = vpop.f32.mrf.mxu0
    %v9402 = vadd.f32 0.0, %v9401
    %9403 = vmatmul.bf16.gmra.mxu0 %v9179
    %v9404 = vpop.f32.mrf.mxu0
    %v9405 = vadd.f32 0.0, %v9404
    %v9406 = vpop.f32.mrf.mxu0
    %v9407 = vadd.f32 0.0, %v9406
    %9408 = vmatmul.bf16.gmra.mxu0 %v9180
    %v9409 = vpop.f32.mrf.mxu0
    %v9410 = vadd.f32 0.0, %v9409
    %v9411 = vpop.f32.mrf.mxu0
    %v9412 = vadd.f32 0.0, %v9411
    %9413 = vmatmul.bf16.gmra.mxu0 %v9181
    %v9414 = vpop.f32.mrf.mxu0
    %v9415 = vadd.f32 0.0, %v9414
    %v9416 = vpop.f32.mrf.mxu0
    %v9417 = vadd.f32 0.0, %v9416
    %9418 = vmatmul.bf16.gmra.mxu0 %v9182
    %v9419 = vpop.f32.mrf.mxu0
    %v9420 = vadd.f32 0.0, %v9419
    %v9421 = vpop.f32.mrf.mxu0
    %v9422 = vadd.f32 0.0, %v9421
    %9423 = vmatmul.bf16.gmra.mxu0 %v9183
    %v9424 = vpop.f32.mrf.mxu0
    %v9425 = vadd.f32 0.0, %v9424
    %v9426 = vpop.f32.mrf.mxu0
    %v9427 = vadd.f32 0.0, %v9426
    %9428 = vmatmul.bf16.gmra.mxu0 %v9184
    %v9429 = vpop.f32.mrf.mxu0
    %v9430 = vadd.f32 0.0, %v9429
    %v9431 = vpop.f32.mrf.mxu0
    %v9432 = vadd.f32 0.0, %v9431
    %9433 = vdwg.mxu0
    %v9434 = vadd.f32 %v8593, %v9275
    %v9435 = vadd.f32 %v8595, %v9277
    %v9436 = vadd.f32 %v8598, %v9280
    %v9437 = vadd.f32 %v8600, %v9282
    %v9438 = vadd.f32 %v8603, %v9285
    %v9439 = vadd.f32 %v8605, %v9287
    %v9440 = vadd.f32 %v8608, %v9290
    %v9441 = vadd.f32 %v8610, %v9292
    %v9442 = vadd.f32 %v8613, %v9295
    %v9443 = vadd.f32 %v8615, %v9297
    %v9444 = vadd.f32 %v8618, %v9300
    %v9445 = vadd.f32 %v8620, %v9302
    %v9446 = vadd.f32 %v8623, %v9305
    %v9447 = vadd.f32 %v8625, %v9307
    %v9448 = vadd.f32 %v8628, %v9310
    %v9449 = vadd.f32 %v8630, %v9312
    %v9450 = vadd.f32 %v8633, %v9315
    %v9451 = vadd.f32 %v8635, %v9317
    %v9452 = vadd.f32 %v8638, %v9320
    %v9453 = vadd.f32 %v8640, %v9322
    %v9454 = vadd.f32 %v8643, %v9325
    %v9455 = vadd.f32 %v8645, %v9327
    %v9456 = vadd.f32 %v8648, %v9330
    %v9457 = vadd.f32 %v8650, %v9332
    %v9458 = vadd.f32 %v8653, %v9335
    %v9459 = vadd.f32 %v8655, %v9337
    %v9460 = vadd.f32 %v8658, %v9340
    %v9461 = vadd.f32 %v8660, %v9342
    %v9462 = vadd.f32 %v8663, %v9345
    %v9463 = vadd.f32 %v8665, %v9347
    %v9464 = vadd.f32 %v8668, %v9350
    %v9465 = vadd.f32 %v8670, %v9352
    %v9466 = vadd.f32 %v8673, %v9355
    %v9467 = vadd.f32 %v8675, %v9357
    %v9468 = vadd.f32 %v8678, %v9360
    %v9469 = vadd.f32 %v8680, %v9362
    %v9470 = vadd.f32 %v8683, %v9365
    %v9471 = vadd.f32 %v8685, %v9367
    %v9472 = vadd.f32 %v8688, %v9370
    %v9473 = vadd.f32 %v8690, %v9372
    %v9474 = vadd.f32 %v8693, %v9375
    %v9475 = vadd.f32 %v8695, %v9377
    %v9476 = vadd.f32 %v8698, %v9380
    %v9477 = vadd.f32 %v8700, %v9382
    %v9478 = vadd.f32 %v8703, %v9385
    %v9479 = vadd.f32 %v8705, %v9387
    %v9480 = vadd.f32 %v8708, %v9390
    %v9481 = vadd.f32 %v8710, %v9392
    %v9482 = vadd.f32 %v8713, %v9395
    %v9483 = vadd.f32 %v8715, %v9397
    %v9484 = vadd.f32 %v8718, %v9400
    %v9485 = vadd.f32 %v8720, %v9402
    %v9486 = vadd.f32 %v8723, %v9405
    %v9487 = vadd.f32 %v8725, %v9407
    %v9488 = vadd.f32 %v8728, %v9410
    %v9489 = vadd.f32 %v8730, %v9412
    %v9490 = vadd.f32 %v8733, %v9415
    %v9491 = vadd.f32 %v8735, %v9417
    %v9492 = vadd.f32 %v8738, %v9420
    %v9493 = vadd.f32 %v8740, %v9422
    %v9494 = vadd.f32 %v8743, %v9425
    %v9495 = vadd.f32 %v8745, %v9427
    %v9496 = vadd.f32 %v8748, %v9430
    %v9497 = vadd.f32 %v8750, %v9432
    %v9498 = vld [vmem:[#allocation3] sm:$0xff]
    %v9499 = vld [vmem:[#allocation3 + $0x8] sm:$0xff]
    %v9500 = vld [vmem:[#allocation3 + $0x10] sm:$0xff]
    %v9501 = vld [vmem:[#allocation3 + $0x18] sm:$0xff]
    %v9502 = vld [vmem:[#allocation3 + $0x20] sm:$0xff]
    %v9503 = vld [vmem:[#allocation3 + $0x28] sm:$0xff]
    %v9504 = vld [vmem:[#allocation3 + $0x30] sm:$0xff]
    %v9505 = vld [vmem:[#allocation3 + $0x38] sm:$0xff]
    %v9506 = vld [vmem:[#allocation3 + $0x40] sm:$0xff]
    %v9507 = vld [vmem:[#allocation3 + $0x48] sm:$0xff]
    %v9508 = vld [vmem:[#allocation3 + $0x50] sm:$0xff]
    %v9509 = vld [vmem:[#allocation3 + $0x58] sm:$0xff]
    %v9510 = vld [vmem:[#allocation3 + $0x60] sm:$0xff]
    %v9511 = vld [vmem:[#allocation3 + $0x68] sm:$0xff]
    %v9512 = vld [vmem:[#allocation3 + $0x70] sm:$0xff]
    %v9513 = vld [vmem:[#allocation3 + $0x78] sm:$0xff]
    %v9514 = vld [vmem:[#allocation3 + $0x80] sm:$0xff]
    %v9515 = vld [vmem:[#allocation3 + $0x88] sm:$0xff]
    %v9516 = vld [vmem:[#allocation3 + $0x90] sm:$0xff]
    %v9517 = vld [vmem:[#allocation3 + $0x98] sm:$0xff]
    %v9518 = vld [vmem:[#allocation3 + $0xa0] sm:$0xff]
    %v9519 = vld [vmem:[#allocation3 + $0xa8] sm:$0xff]
    %v9520 = vld [vmem:[#allocation3 + $0xb0] sm:$0xff]
    %v9521 = vld [vmem:[#allocation3 + $0xb8] sm:$0xff]
    %v9522 = vld [vmem:[#allocation3 + $0xc0] sm:$0xff]
    %v9523 = vld [vmem:[#allocation3 + $0xc8] sm:$0xff]
    %v9524 = vld [vmem:[#allocation3 + $0xd0] sm:$0xff]
    %v9525 = vld [vmem:[#allocation3 + $0xd8] sm:$0xff]
    %v9526 = vld [vmem:[#allocation3 + $0xe0] sm:$0xff]
    %v9527 = vld [vmem:[#allocation3 + $0xe8] sm:$0xff]
    %v9528 = vld [vmem:[#allocation3 + $0xf0] sm:$0xff]
    %v9529 = vld [vmem:[#allocation3 + $0xf8] sm:$0xff]
    %v9530 = vld [vmem:[#allocation3 + $0x100] sm:$0xff]
    %v9531 = vld [vmem:[#allocation3 + $0x108] sm:$0xff]
    %v9532 = vld [vmem:[#allocation3 + $0x110] sm:$0xff]
    %v9533 = vld [vmem:[#allocation3 + $0x118] sm:$0xff]
    %v9534 = vld [vmem:[#allocation3 + $0x120] sm:$0xff]
    %v9535 = vld [vmem:[#allocation3 + $0x128] sm:$0xff]
    %v9536 = vld [vmem:[#allocation3 + $0x130] sm:$0xff]
    %v9537 = vld [vmem:[#allocation3 + $0x138] sm:$0xff]
    %v9538 = vld [vmem:[#allocation3 + $0x140] sm:$0xff]
    %v9539 = vld [vmem:[#allocation3 + $0x148] sm:$0xff]
    %v9540 = vld [vmem:[#allocation3 + $0x150] sm:$0xff]
    %v9541 = vld [vmem:[#allocation3 + $0x158] sm:$0xff]
    %v9542 = vld [vmem:[#allocation3 + $0x160] sm:$0xff]
    %v9543 = vld [vmem:[#allocation3 + $0x168] sm:$0xff]
    %v9544 = vld [vmem:[#allocation3 + $0x170] sm:$0xff]
    %v9545 = vld [vmem:[#allocation3 + $0x178] sm:$0xff]
    %v9546 = vld [vmem:[#allocation3 + $0x180] sm:$0xff]
    %v9547 = vld [vmem:[#allocation3 + $0x188] sm:$0xff]
    %v9548 = vld [vmem:[#allocation3 + $0x190] sm:$0xff]
    %v9549 = vld [vmem:[#allocation3 + $0x198] sm:$0xff]
    %v9550 = vld [vmem:[#allocation3 + $0x1a0] sm:$0xff]
    %v9551 = vld [vmem:[#allocation3 + $0x1a8] sm:$0xff]
    %v9552 = vld [vmem:[#allocation3 + $0x1b0] sm:$0xff]
    %v9553 = vld [vmem:[#allocation3 + $0x1b8] sm:$0xff]
    %v9554 = vld [vmem:[#allocation3 + $0x1c0] sm:$0xff]
    %v9555 = vld [vmem:[#allocation3 + $0x1c8] sm:$0xff]
    %v9556 = vld [vmem:[#allocation3 + $0x1d0] sm:$0xff]
    %v9557 = vld [vmem:[#allocation3 + $0x1d8] sm:$0xff]
    %v9558 = vld [vmem:[#allocation3 + $0x1e0] sm:$0xff]
    %v9559 = vld [vmem:[#allocation3 + $0x1e8] sm:$0xff]
    %v9560 = vld [vmem:[#allocation3 + $0x1f0] sm:$0xff]
    %v9561 = vld [vmem:[#allocation3 + $0x1f8] sm:$0xff]
    %v9562 = vadd.f32 %v9498, %v9434
    %v9563 = vadd.f32 %v9499, %v9435
    %v9564 = vadd.f32 %v9500, %v9436
    %v9565 = vadd.f32 %v9501, %v9437
    %v9566 = vadd.f32 %v9502, %v9438
    %v9567 = vadd.f32 %v9503, %v9439
    %v9568 = vadd.f32 %v9504, %v9440
    %v9569 = vadd.f32 %v9505, %v9441
    %v9570 = vadd.f32 %v9506, %v9442
    %v9571 = vadd.f32 %v9507, %v9443
    %v9572 = vadd.f32 %v9508, %v9444
    %v9573 = vadd.f32 %v9509, %v9445
    %v9574 = vadd.f32 %v9510, %v9446
    %v9575 = vadd.f32 %v9511, %v9447
    %v9576 = vadd.f32 %v9512, %v9448
    %v9577 = vadd.f32 %v9513, %v9449
    %v9578 = vadd.f32 %v9514, %v9450
    %v9579 = vadd.f32 %v9515, %v9451
    %v9580 = vadd.f32 %v9516, %v9452
    %v9581 = vadd.f32 %v9517, %v9453
    %v9582 = vadd.f32 %v9518, %v9454
    %v9583 = vadd.f32 %v9519, %v9455
    %v9584 = vadd.f32 %v9520, %v9456
    %v9585 = vadd.f32 %v9521, %v9457
    %v9586 = vadd.f32 %v9522, %v9458
    %v9587 = vadd.f32 %v9523, %v9459
    %v9588 = vadd.f32 %v9524, %v9460
    %v9589 = vadd.f32 %v9525, %v9461
    %v9590 = vadd.f32 %v9526, %v9462
    %v9591 = vadd.f32 %v9527, %v9463
    %v9592 = vadd.f32 %v9528, %v9464
    %v9593 = vadd.f32 %v9529, %v9465
    %v9594 = vadd.f32 %v9530, %v9466
    %v9595 = vadd.f32 %v9531, %v9467
    %v9596 = vadd.f32 %v9532, %v9468
    %v9597 = vadd.f32 %v9533, %v9469
    %v9598 = vadd.f32 %v9534, %v9470
    %v9599 = vadd.f32 %v9535, %v9471
    %v9600 = vadd.f32 %v9536, %v9472
    %v9601 = vadd.f32 %v9537, %v9473
    %v9602 = vadd.f32 %v9538, %v9474
    %v9603 = vadd.f32 %v9539, %v9475
    %v9604 = vadd.f32 %v9540, %v9476
    %v9605 = vadd.f32 %v9541, %v9477
    %v9606 = vadd.f32 %v9542, %v9478
    %v9607 = vadd.f32 %v9543, %v9479
    %v9608 = vadd.f32 %v9544, %v9480
    %v9609 = vadd.f32 %v9545, %v9481
    %v9610 = vadd.f32 %v9546, %v9482
    %v9611 = vadd.f32 %v9547, %v9483
    %v9612 = vadd.f32 %v9548, %v9484
    %v9613 = vadd.f32 %v9549, %v9485
    %v9614 = vadd.f32 %v9550, %v9486
    %v9615 = vadd.f32 %v9551, %v9487
    %v9616 = vadd.f32 %v9552, %v9488
    %v9617 = vadd.f32 %v9553, %v9489
    %v9618 = vadd.f32 %v9554, %v9490
    %v9619 = vadd.f32 %v9555, %v9491
    %v9620 = vadd.f32 %v9556, %v9492
    %v9621 = vadd.f32 %v9557, %v9493
    %v9622 = vadd.f32 %v9558, %v9494
    %v9623 = vadd.f32 %v9559, %v9495
    %v9624 = vadd.f32 %v9560, %v9496
    %v9625 = vadd.f32 %v9561, %v9497
    %9626 = vst [vmem:[#allocation3] sm:$0xff] %v9562
    %9627 = vst [vmem:[#allocation3 + $0x8] sm:$0xff] %v9563
    %9628 = vst [vmem:[#allocation3 + $0x10] sm:$0xff] %v9564
    %9629 = vst [vmem:[#allocation3 + $0x18] sm:$0xff] %v9565
    %9630 = vst [vmem:[#allocation3 + $0x20] sm:$0xff] %v9566
    %9631 = vst [vmem:[#allocation3 + $0x28] sm:$0xff] %v9567
    %9632 = vst [vmem:[#allocation3 + $0x30] sm:$0xff] %v9568
    %9633 = vst [vmem:[#allocation3 + $0x38] sm:$0xff] %v9569
    %9634 = vst [vmem:[#allocation3 + $0x40] sm:$0xff] %v9570
    %9635 = vst [vmem:[#allocation3 + $0x48] sm:$0xff] %v9571
    %9636 = vst [vmem:[#allocation3 + $0x50] sm:$0xff] %v9572
    %9637 = vst [vmem:[#allocation3 + $0x58] sm:$0xff] %v9573
    %9638 = vst [vmem:[#allocation3 + $0x60] sm:$0xff] %v9574
    %9639 = vst [vmem:[#allocation3 + $0x68] sm:$0xff] %v9575
    %9640 = vst [vmem:[#allocation3 + $0x70] sm:$0xff] %v9576
    %9641 = vst [vmem:[#allocation3 + $0x78] sm:$0xff] %v9577
    %9642 = vst [vmem:[#allocation3 + $0x80] sm:$0xff] %v9578
    %9643 = vst [vmem:[#allocation3 + $0x88] sm:$0xff] %v9579
    %9644 = vst [vmem:[#allocation3 + $0x90] sm:$0xff] %v9580
    %9645 = vst [vmem:[#allocation3 + $0x98] sm:$0xff] %v9581
    %9646 = vst [vmem:[#allocation3 + $0xa0] sm:$0xff] %v9582
    %9647 = vst [vmem:[#allocation3 + $0xa8] sm:$0xff] %v9583
    %9648 = vst [vmem:[#allocation3 + $0xb0] sm:$0xff] %v9584
    %9649 = vst [vmem:[#allocation3 + $0xb8] sm:$0xff] %v9585
    %9650 = vst [vmem:[#allocation3 + $0xc0] sm:$0xff] %v9586
    %9651 = vst [vmem:[#allocation3 + $0xc8] sm:$0xff] %v9587
    %9652 = vst [vmem:[#allocation3 + $0xd0] sm:$0xff] %v9588
    %9653 = vst [vmem:[#allocation3 + $0xd8] sm:$0xff] %v9589
    %9654 = vst [vmem:[#allocation3 + $0xe0] sm:$0xff] %v9590
    %9655 = vst [vmem:[#allocation3 + $0xe8] sm:$0xff] %v9591
    %9656 = vst [vmem:[#allocation3 + $0xf0] sm:$0xff] %v9592
    %9657 = vst [vmem:[#allocation3 + $0xf8] sm:$0xff] %v9593
    %9658 = vst [vmem:[#allocation3 + $0x100] sm:$0xff] %v9594
    %9659 = vst [vmem:[#allocation3 + $0x108] sm:$0xff] %v9595
    %9660 = vst [vmem:[#allocation3 + $0x110] sm:$0xff] %v9596
    %9661 = vst [vmem:[#allocation3 + $0x118] sm:$0xff] %v9597
    %9662 = vst [vmem:[#allocation3 + $0x120] sm:$0xff] %v9598
    %9663 = vst [vmem:[#allocation3 + $0x128] sm:$0xff] %v9599
    %9664 = vst [vmem:[#allocation3 + $0x130] sm:$0xff] %v9600
    %9665 = vst [vmem:[#allocation3 + $0x138] sm:$0xff] %v9601
    %9666 = vst [vmem:[#allocation3 + $0x140] sm:$0xff] %v9602
    %9667 = vst [vmem:[#allocation3 + $0x148] sm:$0xff] %v9603
    %9668 = vst [vmem:[#allocation3 + $0x150] sm:$0xff] %v9604
    %9669 = vst [vmem:[#allocation3 + $0x158] sm:$0xff] %v9605
    %9670 = vst [vmem:[#allocation3 + $0x160] sm:$0xff] %v9606
    %9671 = vst [vmem:[#allocation3 + $0x168] sm:$0xff] %v9607
    %9672 = vst [vmem:[#allocation3 + $0x170] sm:$0xff] %v9608
    %9673 = vst [vmem:[#allocation3 + $0x178] sm:$0xff] %v9609
    %9674 = vst [vmem:[#allocation3 + $0x180] sm:$0xff] %v9610
    %9675 = vst [vmem:[#allocation3 + $0x188] sm:$0xff] %v9611
    %9676 = vst [vmem:[#allocation3 + $0x190] sm:$0xff] %v9612
    %9677 = vst [vmem:[#allocation3 + $0x198] sm:$0xff] %v9613
    %9678 = vst [vmem:[#allocation3 + $0x1a0] sm:$0xff] %v9614
    %9679 = vst [vmem:[#allocation3 + $0x1a8] sm:$0xff] %v9615
    %9680 = vst [vmem:[#allocation3 + $0x1b0] sm:$0xff] %v9616
    %9681 = vst [vmem:[#allocation3 + $0x1b8] sm:$0xff] %v9617
    %9682 = vst [vmem:[#allocation3 + $0x1c0] sm:$0xff] %v9618
    %9683 = vst [vmem:[#allocation3 + $0x1c8] sm:$0xff] %v9619
    %9684 = vst [vmem:[#allocation3 + $0x1d0] sm:$0xff] %v9620
    %9685 = vst [vmem:[#allocation3 + $0x1d8] sm:$0xff] %v9621
    %9686 = vst [vmem:[#allocation3 + $0x1e0] sm:$0xff] %v9622
    %9687 = vst [vmem:[#allocation3 + $0x1e8] sm:$0xff] %v9623
    %9688 = vst [vmem:[#allocation3 + $0x1f0] sm:$0xff] %v9624
    %9689 = vst [vmem:[#allocation3 + $0x1f8] sm:$0xff] %v9625
    %v9690 = vld [vmem:[#allocation3] sm:$0xff]
    %v9691 = vld [vmem:[#allocation3 + $0x8] sm:$0xff]
    %v9692 = vld [vmem:[#allocation3 + $0x10] sm:$0xff]
    %v9693 = vld [vmem:[#allocation3 + $0x18] sm:$0xff]
    %v9694 = vld [vmem:[#allocation3 + $0x20] sm:$0xff]
    %v9695 = vld [vmem:[#allocation3 + $0x28] sm:$0xff]
    %v9696 = vld [vmem:[#allocation3 + $0x30] sm:$0xff]
    %v9697 = vld [vmem:[#allocation3 + $0x38] sm:$0xff]
    %v9698 = vld [vmem:[#allocation3 + $0x40] sm:$0xff]
    %v9699 = vld [vmem:[#allocation3 + $0x48] sm:$0xff]
    %v9700 = vld [vmem:[#allocation3 + $0x50] sm:$0xff]
    %v9701 = vld [vmem:[#allocation3 + $0x58] sm:$0xff]
    %v9702 = vld [vmem:[#allocation3 + $0x60] sm:$0xff]
    %v9703 = vld [vmem:[#allocation3 + $0x68] sm:$0xff]
    %v9704 = vld [vmem:[#allocation3 + $0x70] sm:$0xff]
    %v9705 = vld [vmem:[#allocation3 + $0x78] sm:$0xff]
    %v9706 = vld [vmem:[#allocation3 + $0x80] sm:$0xff]
    %v9707 = vld [vmem:[#allocation3 + $0x88] sm:$0xff]
    %v9708 = vld [vmem:[#allocation3 + $0x90] sm:$0xff]
    %v9709 = vld [vmem:[#allocation3 + $0x98] sm:$0xff]
    %v9710 = vld [vmem:[#allocation3 + $0xa0] sm:$0xff]
    %v9711 = vld [vmem:[#allocation3 + $0xa8] sm:$0xff]
    %v9712 = vld [vmem:[#allocation3 + $0xb0] sm:$0xff]
    %v9713 = vld [vmem:[#allocation3 + $0xb8] sm:$0xff]
    %v9714 = vld [vmem:[#allocation3 + $0xc0] sm:$0xff]
    %v9715 = vld [vmem:[#allocation3 + $0xc8] sm:$0xff]
    %v9716 = vld [vmem:[#allocation3 + $0xd0] sm:$0xff]
    %v9717 = vld [vmem:[#allocation3 + $0xd8] sm:$0xff]
    %v9718 = vld [vmem:[#allocation3 + $0xe0] sm:$0xff]
    %v9719 = vld [vmem:[#allocation3 + $0xe8] sm:$0xff]
    %v9720 = vld [vmem:[#allocation3 + $0xf0] sm:$0xff]
    %v9721 = vld [vmem:[#allocation3 + $0xf8] sm:$0xff]
    %v9722 = vld [vmem:[#allocation3 + $0x100] sm:$0xff]
    %v9723 = vld [vmem:[#allocation3 + $0x108] sm:$0xff]
    %v9724 = vld [vmem:[#allocation3 + $0x110] sm:$0xff]
    %v9725 = vld [vmem:[#allocation3 + $0x118] sm:$0xff]
    %v9726 = vld [vmem:[#allocation3 + $0x120] sm:$0xff]
    %v9727 = vld [vmem:[#allocation3 + $0x128] sm:$0xff]
    %v9728 = vld [vmem:[#allocation3 + $0x130] sm:$0xff]
    %v9729 = vld [vmem:[#allocation3 + $0x138] sm:$0xff]
    %v9730 = vld [vmem:[#allocation3 + $0x140] sm:$0xff]
    %v9731 = vld [vmem:[#allocation3 + $0x148] sm:$0xff]
    %v9732 = vld [vmem:[#allocation3 + $0x150] sm:$0xff]
    %v9733 = vld [vmem:[#allocation3 + $0x158] sm:$0xff]
    %v9734 = vld [vmem:[#allocation3 + $0x160] sm:$0xff]
    %v9735 = vld [vmem:[#allocation3 + $0x168] sm:$0xff]
    %v9736 = vld [vmem:[#allocation3 + $0x170] sm:$0xff]
    %v9737 = vld [vmem:[#allocation3 + $0x178] sm:$0xff]
    %v9738 = vld [vmem:[#allocation3 + $0x180] sm:$0xff]
    %v9739 = vld [vmem:[#allocation3 + $0x188] sm:$0xff]
    %v9740 = vld [vmem:[#allocation3 + $0x190] sm:$0xff]
    %v9741 = vld [vmem:[#allocation3 + $0x198] sm:$0xff]
    %v9742 = vld [vmem:[#allocation3 + $0x1a0] sm:$0xff]
    %v9743 = vld [vmem:[#allocation3 + $0x1a8] sm:$0xff]
    %v9744 = vld [vmem:[#allocation3 + $0x1b0] sm:$0xff]
    %v9745 = vld [vmem:[#allocation3 + $0x1b8] sm:$0xff]
    %v9746 = vld [vmem:[#allocation3 + $0x1c0] sm:$0xff]
    %v9747 = vld [vmem:[#allocation3 + $0x1c8] sm:$0xff]
    %v9748 = vld [vmem:[#allocation3 + $0x1d0] sm:$0xff]
    %v9749 = vld [vmem:[#allocation3 + $0x1d8] sm:$0xff]
    %v9750 = vld [vmem:[#allocation3 + $0x1e0] sm:$0xff]
    %v9751 = vld [vmem:[#allocation3 + $0x1e8] sm:$0xff]
    %v9752 = vld [vmem:[#allocation3 + $0x1f0] sm:$0xff]
    %v9753 = vld [vmem:[#allocation3 + $0x1f8] sm:$0xff]
    %v9754 = vadd.f32 %v9690, %v9691
    %v9755 = vadd.f32 %v9754, %v9692
    %v9756 = vadd.f32 %v9755, %v9693
    %v9757 = vadd.f32 %v9756, %v9694
    %v9758 = vadd.f32 %v9757, %v9695
    %v9759 = vadd.f32 %v9758, %v9696
    %v9760 = vadd.f32 %v9759, %v9697
    %v9761 = vadd.f32 %v9760, %v9698
    %v9762 = vadd.f32 %v9761, %v9699
    %v9763 = vadd.f32 %v9762, %v9700
    %v9764 = vadd.f32 %v9763, %v9701
    %v9765 = vadd.f32 %v9764, %v9702
    %v9766 = vadd.f32 %v9765, %v9703
    %v9767 = vadd.f32 %v9766, %v9704
    %v9768 = vadd.f32 %v9767, %v9705
    %v9769 = vadd.f32 %v9768, %v9706
    %v9770 = vadd.f32 %v9769, %v9707
    %v9771 = vadd.f32 %v9770, %v9708
    %v9772 = vadd.f32 %v9771, %v9709
    %v9773 = vadd.f32 %v9772, %v9710
    %v9774 = vadd.f32 %v9773, %v9711
    %v9775 = vadd.f32 %v9774, %v9712
    %v9776 = vadd.f32 %v9775, %v9713
    %v9777 = vadd.f32 %v9776, %v9714
    %v9778 = vadd.f32 %v9777, %v9715
    %v9779 = vadd.f32 %v9778, %v9716
    %v9780 = vadd.f32 %v9779, %v9717
    %v9781 = vadd.f32 %v9780, %v9718
    %v9782 = vadd.f32 %v9781, %v9719
    %v9783 = vadd.f32 %v9782, %v9720
    %v9784 = vadd.f32 %v9783, %v9721
    %v9785 = vadd.f32 %v9784, %v9722
    %v9786 = vadd.f32 %v9785, %v9723
    %v9787 = vadd.f32 %v9786, %v9724
    %v9788 = vadd.f32 %v9787, %v9725
    %v9789 = vadd.f32 %v9788, %v9726
    %v9790 = vadd.f32 %v9789, %v9727
    %v9791 = vadd.f32 %v9790, %v9728
    %v9792 = vadd.f32 %v9791, %v9729
    %v9793 = vadd.f32 %v9792, %v9730
    %v9794 = vadd.f32 %v9793, %v9731
    %v9795 = vadd.f32 %v9794, %v9732
    %v9796 = vadd.f32 %v9795, %v9733
    %v9797 = vadd.f32 %v9796, %v9734
    %v9798 = vadd.f32 %v9797, %v9735
    %v9799 = vadd.f32 %v9798, %v9736
    %v9800 = vadd.f32 %v9799, %v9737
    %v9801 = vadd.f32 %v9800, %v9738
    %v9802 = vadd.f32 %v9801, %v9739
    %v9803 = vadd.f32 %v9802, %v9740
    %v9804 = vadd.f32 %v9803, %v9741
    %v9805 = vadd.f32 %v9804, %v9742
    %v9806 = vadd.f32 %v9805, %v9743
    %v9807 = vadd.f32 %v9806, %v9744
    %v9808 = vadd.f32 %v9807, %v9745
    %v9809 = vadd.f32 %v9808, %v9746
    %v9810 = vadd.f32 %v9809, %v9747
    %v9811 = vadd.f32 %v9810, %v9748
    %v9812 = vadd.f32 %v9811, %v9749
    %v9813 = vadd.f32 %v9812, %v9750
    %v9814 = vadd.f32 %v9813, %v9751
    %v9815 = vadd.f32 %v9814, %v9752
    %v9816 = vadd.f32 %v9815, %v9753
    %v9817 = vrot.slane %v9816, 4
    %v9818 = vadd.f32 %v9816, %v9817
    %v9819 = vrot.slane %v9818, 2
    %v9820 = vadd.f32 %v9818, %v9819
    %v9821 = vrot.slane %v9820, 1
    %v9822 = vadd.f32 %v9820, %v9821
    %v9823 = vmul.f32 %v9822, 0.001953125
    %v9824 = vsub.f32 %v9690, %v9823
    %v9825 = vsub.f32 %v9691, %v9823
    %v9826 = vsub.f32 %v9692, %v9823
    %v9827 = vsub.f32 %v9693, %v9823
    %v9828 = vsub.f32 %v9694, %v9823
    %v9829 = vsub.f32 %v9695, %v9823
    %v9830 = vsub.f32 %v9696, %v9823
    %v9831 = vsub.f32 %v9697, %v9823
    %v9832 = vsub.f32 %v9698, %v9823
    %v9833 = vsub.f32 %v9699, %v9823
    %v9834 = vsub.f32 %v9700, %v9823
    %v9835 = vsub.f32 %v9701, %v9823
    %v9836 = vsub.f32 %v9702, %v9823
    %v9837 = vsub.f32 %v9703, %v9823
    %v9838 = vsub.f32 %v9704, %v9823
    %v9839 = vsub.f32 %v9705, %v9823
    %v9840 = vsub.f32 %v9706, %v9823
    %v9841 = vsub.f32 %v9707, %v9823
    %v9842 = vsub.f32 %v9708, %v9823
    %v9843 = vsub.f32 %v9709, %v9823
    %v9844 = vsub.f32 %v9710, %v9823
    %v9845 = vsub.f32 %v9711, %v9823
    %v9846 = vsub.f32 %v9712, %v9823
    %v9847 = vsub.f32 %v9713, %v9823
    %v9848 = vsub.f32 %v9714, %v9823
    %v9849 = vsub.f32 %v9715, %v9823
    %v9850 = vsub.f32 %v9716, %v9823
    %v9851 = vsub.f32 %v9717, %v9823
    %v9852 = vsub.f32 %v9718, %v9823
    %v9853 = vsub.f32 %v9719, %v9823
    %v9854 = vsub.f32 %v9720, %v9823
    %v9855 = vsub.f32 %v9721, %v9823
    %v9856 = vsub.f32 %v9722, %v9823
    %v9857 = vsub.f32 %v9723, %v9823
    %v9858 = vsub.f32 %v9724, %v9823
    %v9859 = vsub.f32 %v9725, %v9823
    %v9860 = vsub.f32 %v9726, %v9823
    %v9861 = vsub.f32 %v9727, %v9823
    %v9862 = vsub.f32 %v9728, %v9823
    %v9863 = vsub.f32 %v9729, %v9823
    %v9864 = vsub.f32 %v9730, %v9823
    %v9865 = vsub.f32 %v9731, %v9823
    %v9866 = vsub.f32 %v9732, %v9823
    %v9867 = vsub.f32 %v9733, %v9823
    %v9868 = vsub.f32 %v9734, %v9823
    %v9869 = vsub.f32 %v9735, %v9823
    %v9870 = vsub.f32 %v9736, %v9823
    %v9871 = vsub.f32 %v9737, %v9823
    %v9872 = vsub.f32 %v9738, %v9823
    %v9873 = vsub.f32 %v9739, %v9823
    %v9874 = vsub.f32 %v9740, %v9823
    %v9875 = vsub.f32 %v9741, %v9823
    %v9876 = vsub.f32 %v9742, %v9823
    %v9877 = vsub.f32 %v9743, %v9823
    %v9878 = vsub.f32 %v9744, %v9823
    %v9879 = vsub.f32 %v9745, %v9823
    %v9880 = vsub.f32 %v9746, %v9823
    %v9881 = vsub.f32 %v9747, %v9823
    %v9882 = vsub.f32 %v9748, %v9823
    %v9883 = vsub.f32 %v9749, %v9823
    %v9884 = vsub.f32 %v9750, %v9823
    %v9885 = vsub.f32 %v9751, %v9823
    %v9886 = vsub.f32 %v9752, %v9823
    %v9887 = vsub.f32 %v9753, %v9823
    %v9888 = vmul.f32 %v9824, %v9824
    %v9889 = vmul.f32 %v9825, %v9825
    %v9890 = vmul.f32 %v9826, %v9826
    %v9891 = vmul.f32 %v9827, %v9827
    %v9892 = vmul.f32 %v9828, %v9828
    %v9893 = vmul.f32 %v9829, %v9829
    %v9894 = vmul.f32 %v9830, %v9830
    %v9895 = vmul.f32 %v9831, %v9831
    %v9896 = vmul.f32 %v9832, %v9832
    %v9897 = vmul.f32 %v9833, %v9833
    %v9898 = vmul.f32 %v9834, %v9834
    %v9899 = vmul.f32 %v9835, %v9835
    %v9900 = vmul.f32 %v9836, %v9836
    %v9901 = vmul.f32 %v9837, %v9837
    %v9902 = vmul.f32 %v9838, %v9838
    %v9903 = vmul.f32 %v9839, %v9839
    %v9904 = vmul.f32 %v9840, %v9840
    %v9905 = vmul.f32 %v9841, %v9841
    %v9906 = vmul.f32 %v9842, %v9842
    %v9907 = vmul.f32 %v9843, %v9843
    %v9908 = vmul.f32 %v9844, %v9844
    %v9909 = vmul.f32 %v9845, %v9845
    %v9910 = vmul.f32 %v9846, %v9846
    %v9911 = vmul.f32 %v9847, %v9847
    %v9912 = vmul.f32 %v9848, %v9848
    %v9913 = vmul.f32 %v9849, %v9849
    %v9914 = vmul.f32 %v9850, %v9850
    %v9915 = vmul.f32 %v9851, %v9851
    %v9916 = vmul.f32 %v9852, %v9852
    %v9917 = vmul.f32 %v9853, %v9853
    %v9918 = vmul.f32 %v9854, %v9854
    %v9919 = vmul.f32 %v9855, %v9855
    %v9920 = vmul.f32 %v9856, %v9856
    %v9921 = vmul.f32 %v9857, %v9857
    %v9922 = vmul.f32 %v9858, %v9858
    %v9923 = vmul.f32 %v9859, %v9859
    %v9924 = vmul.f32 %v9860, %v9860
    %v9925 = vmul.f32 %v9861, %v9861
    %v9926 = vmul.f32 %v9862, %v9862
    %v9927 = vmul.f32 %v9863, %v9863
    %v9928 = vmul.f32 %v9864, %v9864
    %v9929 = vmul.f32 %v9865, %v9865
    %v9930 = vmul.f32 %v9866, %v9866
    %v9931 = vmul.f32 %v9867, %v9867
    %v9932 = vmul.f32 %v9868, %v9868
    %v9933 = vmul.f32 %v9869, %v9869
    %v9934 = vmul.f32 %v9870, %v9870
    %v9935 = vmul.f32 %v9871, %v9871
    %v9936 = vmul.f32 %v9872, %v9872
    %v9937 = vmul.f32 %v9873, %v9873
    %v9938 = vmul.f32 %v9874, %v9874
    %v9939 = vmul.f32 %v9875, %v9875
    %v9940 = vmul.f32 %v9876, %v9876
    %v9941 = vmul.f32 %v9877, %v9877
    %v9942 = vmul.f32 %v9878, %v9878
    %v9943 = vmul.f32 %v9879, %v9879
    %v9944 = vmul.f32 %v9880, %v9880
    %v9945 = vmul.f32 %v9881, %v9881
    %v9946 = vmul.f32 %v9882, %v9882
    %v9947 = vmul.f32 %v9883, %v9883
    %v9948 = vmul.f32 %v9884, %v9884
    %v9949 = vmul.f32 %v9885, %v9885
    %v9950 = vmul.f32 %v9886, %v9886
    %v9951 = vmul.f32 %v9887, %v9887
    %v9952 = vadd.f32 %v9888, %v9889
    %v9953 = vadd.f32 %v9952, %v9890
    %v9954 = vadd.f32 %v9953, %v9891
    %v9955 = vadd.f32 %v9954, %v9892
    %v9956 = vadd.f32 %v9955, %v9893
    %v9957 = vadd.f32 %v9956, %v9894
    %v9958 = vadd.f32 %v9957, %v9895
    %v9959 = vadd.f32 %v9958, %v9896
    %v9960 = vadd.f32 %v9959, %v9897
    %v9961 = vadd.f32 %v9960, %v9898
    %v9962 = vadd.f32 %v9961, %v9899
    %v9963 = vadd.f32 %v9962, %v9900
    %v9964 = vadd.f32 %v9963, %v9901
    %v9965 = vadd.f32 %v9964, %v9902
    %v9966 = vadd.f32 %v9965, %v9903
    %v9967 = vadd.f32 %v9966, %v9904
    %v9968 = vadd.f32 %v9967, %v9905
    %v9969 = vadd.f32 %v9968, %v9906
    %v9970 = vadd.f32 %v9969, %v9907
    %v9971 = vadd.f32 %v9970, %v9908
    %v9972 = vadd.f32 %v9971, %v9909
    %v9973 = vadd.f32 %v9972, %v9910
    %v9974 = vadd.f32 %v9973, %v9911
    %v9975 = vadd.f32 %v9974, %v9912
    %v9976 = vadd.f32 %v9975, %v9913
    %v9977 = vadd.f32 %v9976, %v9914
    %v9978 = vadd.f32 %v9977, %v9915
    %v9979 = vadd.f32 %v9978, %v9916
    %v9980 = vadd.f32 %v9979, %v9917
    %v9981 = vadd.f32 %v9980, %v9918
    %v9982 = vadd.f32 %v9981, %v9919
    %v9983 = vadd.f32 %v9982, %v9920
    %v9984 = vadd.f32 %v9983, %v9921
    %v9985 = vadd.f32 %v9984, %v9922
    %v9986 = vadd.f32 %v9985, %v9923
    %v9987 = vadd.f32 %v9986, %v9924
    %v9988 = vadd.f32 %v9987, %v9925
    %v9989 = vadd.f32 %v9988, %v9926
    %v9990 = vadd.f32 %v9989, %v9927
    %v9991 = vadd.f32 %v9990, %v9928
    %v9992 = vadd.f32 %v9991, %v9929
    %v9993 = vadd.f32 %v9992, %v9930
    %v9994 = vadd.f32 %v9993, %v9931
    %v9995 = vadd.f32 %v9994, %v9932
    %v9996 = vadd.f32 %v9995, %v9933
    %v9997 = vadd.f32 %v9996, %v9934
    %v9998 = vadd.f32 %v9997, %v9935
    %v9999 = vadd.f32 %v9998, %v9936
    %v10000 = vadd.f32 %v9999, %v9937
    %v10001 = vadd.f32 %v10000, %v9938
    %v10002 = vadd.f32 %v10001, %v9939
    %v10003 = vadd.f32 %v10002, %v9940
    %v10004 = vadd.f32 %v10003, %v9941
    %v10005 = vadd.f32 %v10004, %v9942
    %v10006 = vadd.f32 %v10005, %v9943
    %v10007 = vadd.f32 %v10006, %v9944
    %v10008 = vadd.f32 %v10007, %v9945
    %v10009 = vadd.f32 %v10008, %v9946
    %v10010 = vadd.f32 %v10009, %v9947
    %v10011 = vadd.f32 %v10010, %v9948
    %v10012 = vadd.f32 %v10011, %v9949
    %v10013 = vadd.f32 %v10012, %v9950
    %v10014 = vadd.f32 %v10013, %v9951
    %v10015 = vrot.slane %v10014, 4
    %v10016 = vadd.f32 %v10014, %v10015
    %v10017 = vrot.slane %v10016, 2
    %v10018 = vadd.f32 %v10016, %v10017
    %v10019 = vrot.slane %v10018, 1
    %v10020 = vadd.f32 %v10018, %v10019
    %v10021 = vmul.f32 %v10020, 0.001953125
    %v10022 = vld [vmem:[%s5] sm:$0x1]
    %v10023 = vadd.f32 %v10021, 1e-05
    %v10024 = vrsqrt.pop %v10023
    %v10025 = vmul.f32 %v10024, %v10023
    %v10026 = vmul.f32 %v10025, %v10024
    %v10027 = vmul.f32 0.5, %v10026
    %v10028 = vsub.f32 1.5, %v10027
    %v10029 = vmul.f32 %v10024, %v10028
    %vm10030 = vweird.f32 %v10023
    %vm10031 = vweird.f32 %v10024
    %vm10032 = vmor %vm10030, %vm10031
    %v10033 = vsel %vm10032, %v10024, %v10029
    %v10034 = vmul.f32 %v10022, %v10033
    %v10036 = vperm.slane %v10034, 0
    %v10038 = vmul.f32 %v9824, %v10036
    %v10039 = vmul.f32 %v9825, %v10036
    %v10040 = vmul.f32 %v9826, %v10036
    %v10041 = vmul.f32 %v9827, %v10036
    %v10042 = vmul.f32 %v9828, %v10036
    %v10043 = vmul.f32 %v9829, %v10036
    %v10044 = vmul.f32 %v9830, %v10036
    %v10045 = vmul.f32 %v9831, %v10036
    %v10046 = vmul.f32 %v9832, %v10036
    %v10047 = vmul.f32 %v9833, %v10036
    %v10048 = vmul.f32 %v9834, %v10036
    %v10049 = vmul.f32 %v9835, %v10036
    %v10050 = vmul.f32 %v9836, %v10036
    %v10051 = vmul.f32 %v9837, %v10036
    %v10052 = vmul.f32 %v9838, %v10036
    %v10053 = vmul.f32 %v9839, %v10036
    %v10054 = vmul.f32 %v9840, %v10036
    %v10055 = vmul.f32 %v9841, %v10036
    %v10056 = vmul.f32 %v9842, %v10036
    %v10057 = vmul.f32 %v9843, %v10036
    %v10058 = vmul.f32 %v9844, %v10036
    %v10059 = vmul.f32 %v9845, %v10036
    %v10060 = vmul.f32 %v9846, %v10036
    %v10061 = vmul.f32 %v9847, %v10036
    %v10062 = vmul.f32 %v9848, %v10036
    %v10063 = vmul.f32 %v9849, %v10036
    %v10064 = vmul.f32 %v9850, %v10036
    %v10065 = vmul.f32 %v9851, %v10036
    %v10066 = vmul.f32 %v9852, %v10036
    %v10067 = vmul.f32 %v9853, %v10036
    %v10068 = vmul.f32 %v9854, %v10036
    %v10069 = vmul.f32 %v9855, %v10036
    %v10070 = vmul.f32 %v9856, %v10036
    %v10071 = vmul.f32 %v9857, %v10036
    %v10072 = vmul.f32 %v9858, %v10036
    %v10073 = vmul.f32 %v9859, %v10036
    %v10074 = vmul.f32 %v9860, %v10036
    %v10075 = vmul.f32 %v9861, %v10036
    %v10076 = vmul.f32 %v9862, %v10036
    %v10077 = vmul.f32 %v9863, %v10036
    %v10078 = vmul.f32 %v9864, %v10036
    %v10079 = vmul.f32 %v9865, %v10036
    %v10080 = vmul.f32 %v9866, %v10036
    %v10081 = vmul.f32 %v9867, %v10036
    %v10082 = vmul.f32 %v9868, %v10036
    %v10083 = vmul.f32 %v9869, %v10036
    %v10084 = vmul.f32 %v9870, %v10036
    %v10085 = vmul.f32 %v9871, %v10036
    %v10086 = vmul.f32 %v9872, %v10036
    %v10087 = vmul.f32 %v9873, %v10036
    %v10088 = vmul.f32 %v9874, %v10036
    %v10089 = vmul.f32 %v9875, %v10036
    %v10090 = vmul.f32 %v9876, %v10036
    %v10091 = vmul.f32 %v9877, %v10036
    %v10092 = vmul.f32 %v9878, %v10036
    %v10093 = vmul.f32 %v9879, %v10036
    %v10094 = vmul.f32 %v9880, %v10036
    %v10095 = vmul.f32 %v9881, %v10036
    %v10096 = vmul.f32 %v9882, %v10036
    %v10097 = vmul.f32 %v9883, %v10036
    %v10098 = vmul.f32 %v9884, %v10036
    %v10099 = vmul.f32 %v9885, %v10036
    %v10100 = vmul.f32 %v9886, %v10036
    %v10101 = vmul.f32 %v9887, %v10036
    %v10102 = vld [vmem:[%s6] sm:$0x1]
    %v10104 = vperm.slane %v10102, 0
    %v10106 = vadd.f32 %v10038, %v10104
    %v10107 = vadd.f32 %v10039, %v10104
    %v10108 = vadd.f32 %v10040, %v10104
    %v10109 = vadd.f32 %v10041, %v10104
    %v10110 = vadd.f32 %v10042, %v10104
    %v10111 = vadd.f32 %v10043, %v10104
    %v10112 = vadd.f32 %v10044, %v10104
    %v10113 = vadd.f32 %v10045, %v10104
    %v10114 = vadd.f32 %v10046, %v10104
    %v10115 = vadd.f32 %v10047, %v10104
    %v10116 = vadd.f32 %v10048, %v10104
    %v10117 = vadd.f32 %v10049, %v10104
    %v10118 = vadd.f32 %v10050, %v10104
    %v10119 = vadd.f32 %v10051, %v10104
    %v10120 = vadd.f32 %v10052, %v10104
    %v10121 = vadd.f32 %v10053, %v10104
    %v10122 = vadd.f32 %v10054, %v10104
    %v10123 = vadd.f32 %v10055, %v10104
    %v10124 = vadd.f32 %v10056, %v10104
    %v10125 = vadd.f32 %v10057, %v10104
    %v10126 = vadd.f32 %v10058, %v10104
    %v10127 = vadd.f32 %v10059, %v10104
    %v10128 = vadd.f32 %v10060, %v10104
    %v10129 = vadd.f32 %v10061, %v10104
    %v10130 = vadd.f32 %v10062, %v10104
    %v10131 = vadd.f32 %v10063, %v10104
    %v10132 = vadd.f32 %v10064, %v10104
    %v10133 = vadd.f32 %v10065, %v10104
    %v10134 = vadd.f32 %v10066, %v10104
    %v10135 = vadd.f32 %v10067, %v10104
    %v10136 = vadd.f32 %v10068, %v10104
    %v10137 = vadd.f32 %v10069, %v10104
    %v10138 = vadd.f32 %v10070, %v10104
    %v10139 = vadd.f32 %v10071, %v10104
    %v10140 = vadd.f32 %v10072, %v10104
    %v10141 = vadd.f32 %v10073, %v10104
    %v10142 = vadd.f32 %v10074, %v10104
    %v10143 = vadd.f32 %v10075, %v10104
    %v10144 = vadd.f32 %v10076, %v10104
    %v10145 = vadd.f32 %v10077, %v10104
    %v10146 = vadd.f32 %v10078, %v10104
    %v10147 = vadd.f32 %v10079, %v10104
    %v10148 = vadd.f32 %v10080, %v10104
    %v10149 = vadd.f32 %v10081, %v10104
    %v10150 = vadd.f32 %v10082, %v10104
    %v10151 = vadd.f32 %v10083, %v10104
    %v10152 = vadd.f32 %v10084, %v10104
    %v10153 = vadd.f32 %v10085, %v10104
    %v10154 = vadd.f32 %v10086, %v10104
    %v10155 = vadd.f32 %v10087, %v10104
    %v10156 = vadd.f32 %v10088, %v10104
    %v10157 = vadd.f32 %v10089, %v10104
    %v10158 = vadd.f32 %v10090, %v10104
    %v10159 = vadd.f32 %v10091, %v10104
    %v10160 = vadd.f32 %v10092, %v10104
    %v10161 = vadd.f32 %v10093, %v10104
    %v10162 = vadd.f32 %v10094, %v10104
    %v10163 = vadd.f32 %v10095, %v10104
    %v10164 = vadd.f32 %v10096, %v10104
    %v10165 = vadd.f32 %v10097, %v10104
    %v10166 = vadd.f32 %v10098, %v10104
    %v10167 = vadd.f32 %v10099, %v10104
    %v10168 = vadd.f32 %v10100, %v10104
    %v10169 = vadd.f32 %v10101, %v10104
    %v10170 = vmax.f32 %v10106, 0.0
    %v10171 = vmax.f32 %v10107, 0.0
    %v10172 = vmax.f32 %v10108, 0.0
    %v10173 = vmax.f32 %v10109, 0.0
    %v10174 = vmax.f32 %v10110, 0.0
    %v10175 = vmax.f32 %v10111, 0.0
    %v10176 = vmax.f32 %v10112, 0.0
    %v10177 = vmax.f32 %v10113, 0.0
    %v10178 = vmax.f32 %v10114, 0.0
    %v10179 = vmax.f32 %v10115, 0.0
    %v10180 = vmax.f32 %v10116, 0.0
    %v10181 = vmax.f32 %v10117, 0.0
    %v10182 = vmax.f32 %v10118, 0.0
    %v10183 = vmax.f32 %v10119, 0.0
    %v10184 = vmax.f32 %v10120, 0.0
    %v10185 = vmax.f32 %v10121, 0.0
    %v10186 = vmax.f32 %v10122, 0.0
    %v10187 = vmax.f32 %v10123, 0.0
    %v10188 = vmax.f32 %v10124, 0.0
    %v10189 = vmax.f32 %v10125, 0.0
    %v10190 = vmax.f32 %v10126, 0.0
    %v10191 = vmax.f32 %v10127, 0.0
    %v10192 = vmax.f32 %v10128, 0.0
    %v10193 = vmax.f32 %v10129, 0.0
    %v10194 = vmax.f32 %v10130, 0.0
    %v10195 = vmax.f32 %v10131, 0.0
    %v10196 = vmax.f32 %v10132, 0.0
    %v10197 = vmax.f32 %v10133, 0.0
    %v10198 = vmax.f32 %v10134, 0.0
    %v10199 = vmax.f32 %v10135, 0.0
    %v10200 = vmax.f32 %v10136, 0.0
    %v10201 = vmax.f32 %v10137, 0.0
    %v10202 = vmax.f32 %v10138, 0.0
    %v10203 = vmax.f32 %v10139, 0.0
    %v10204 = vmax.f32 %v10140, 0.0
    %v10205 = vmax.f32 %v10141, 0.0
    %v10206 = vmax.f32 %v10142, 0.0
    %v10207 = vmax.f32 %v10143, 0.0
    %v10208 = vmax.f32 %v10144, 0.0
    %v10209 = vmax.f32 %v10145, 0.0
    %v10210 = vmax.f32 %v10146, 0.0
    %v10211 = vmax.f32 %v10147, 0.0
    %v10212 = vmax.f32 %v10148, 0.0
    %v10213 = vmax.f32 %v10149, 0.0
    %v10214 = vmax.f32 %v10150, 0.0
    %v10215 = vmax.f32 %v10151, 0.0
    %v10216 = vmax.f32 %v10152, 0.0
    %v10217 = vmax.f32 %v10153, 0.0
    %v10218 = vmax.f32 %v10154, 0.0
    %v10219 = vmax.f32 %v10155, 0.0
    %v10220 = vmax.f32 %v10156, 0.0
    %v10221 = vmax.f32 %v10157, 0.0
    %v10222 = vmax.f32 %v10158, 0.0
    %v10223 = vmax.f32 %v10159, 0.0
    %v10224 = vmax.f32 %v10160, 0.0
    %v10225 = vmax.f32 %v10161, 0.0
    %v10226 = vmax.f32 %v10162, 0.0
    %v10227 = vmax.f32 %v10163, 0.0
    %v10228 = vmax.f32 %v10164, 0.0
    %v10229 = vmax.f32 %v10165, 0.0
    %v10230 = vmax.f32 %v10166, 0.0
    %v10231 = vmax.f32 %v10167, 0.0
    %v10232 = vmax.f32 %v10168, 0.0
    %v10233 = vmax.f32 %v10169, 0.0
    %10234 = vst [vmem:[#allocation3] sm:$0xff] %v10170
    %10235 = vst [vmem:[#allocation3 + $0x8] sm:$0xff] %v10171
    %10236 = vst [vmem:[#allocation3 + $0x10] sm:$0xff] %v10172
    %10237 = vst [vmem:[#allocation3 + $0x18] sm:$0xff] %v10173
    %10238 = vst [vmem:[#allocation3 + $0x20] sm:$0xff] %v10174
    %10239 = vst [vmem:[#allocation3 + $0x28] sm:$0xff] %v10175
    %10240 = vst [vmem:[#allocation3 + $0x30] sm:$0xff] %v10176
    %10241 = vst [vmem:[#allocation3 + $0x38] sm:$0xff] %v10177
    %10242 = vst [vmem:[#allocation3 + $0x40] sm:$0xff] %v10178
    %10243 = vst [vmem:[#allocation3 + $0x48] sm:$0xff] %v10179
    %10244 = vst [vmem:[#allocation3 + $0x50] sm:$0xff] %v10180
    %10245 = vst [vmem:[#allocation3 + $0x58] sm:$0xff] %v10181
    %10246 = vst [vmem:[#allocation3 + $0x60] sm:$0xff] %v10182
    %10247 = vst [vmem:[#allocation3 + $0x68] sm:$0xff] %v10183
    %10248 = vst [vmem:[#allocation3 + $0x70] sm:$0xff] %v10184
    %10249 = vst [vmem:[#allocation3 + $0x78] sm:$0xff] %v10185
    %10250 = vst [vmem:[#allocation3 + $0x80] sm:$0xff] %v10186
    %10251 = vst [vmem:[#allocation3 + $0x88] sm:$0xff] %v10187
    %10252 = vst [vmem:[#allocation3 + $0x90] sm:$0xff] %v10188
    %10253 = vst [vmem:[#allocation3 + $0x98] sm:$0xff] %v10189
    %10254 = vst [vmem:[#allocation3 + $0xa0] sm:$0xff] %v10190
    %10255 = vst [vmem:[#allocation3 + $0xa8] sm:$0xff] %v10191
    %10256 = vst [vmem:[#allocation3 + $0xb0] sm:$0xff] %v10192
    %10257 = vst [vmem:[#allocation3 + $0xb8] sm:$0xff] %v10193
    %10258 = vst [vmem:[#allocation3 + $0xc0] sm:$0xff] %v10194
    %10259 = vst [vmem:[#allocation3 + $0xc8] sm:$0xff] %v10195
    %10260 = vst [vmem:[#allocation3 + $0xd0] sm:$0xff] %v10196
    %10261 = vst [vmem:[#allocation3 + $0xd8] sm:$0xff] %v10197
    %10262 = vst [vmem:[#allocation3 + $0xe0] sm:$0xff] %v10198
    %10263 = vst [vmem:[#allocation3 + $0xe8] sm:$0xff] %v10199
    %10264 = vst [vmem:[#allocation3 + $0xf0] sm:$0xff] %v10200
    %10265 = vst [vmem:[#allocation3 + $0xf8] sm:$0xff] %v10201
    %10266 = vst [vmem:[#allocation3 + $0x100] sm:$0xff] %v10202
    %10267 = vst [vmem:[#allocation3 + $0x108] sm:$0xff] %v10203
    %10268 = vst [vmem:[#allocation3 + $0x110] sm:$0xff] %v10204
    %10269 = vst [vmem:[#allocation3 + $0x118] sm:$0xff] %v10205
    %10270 = vst [vmem:[#allocation3 + $0x120] sm:$0xff] %v10206
    %10271 = vst [vmem:[#allocation3 + $0x128] sm:$0xff] %v10207
    %10272 = vst [vmem:[#allocation3 + $0x130] sm:$0xff] %v10208
    %10273 = vst [vmem:[#allocation3 + $0x138] sm:$0xff] %v10209
    %10274 = vst [vmem:[#allocation3 + $0x140] sm:$0xff] %v10210
    %10275 = vst [vmem:[#allocation3 + $0x148] sm:$0xff] %v10211
    %10276 = vst [vmem:[#allocation3 + $0x150] sm:$0xff] %v10212
    %10277 = vst [vmem:[#allocation3 + $0x158] sm:$0xff] %v10213
    %10278 = vst [vmem:[#allocation3 + $0x160] sm:$0xff] %v10214
    %10279 = vst [vmem:[#allocation3 + $0x168] sm:$0xff] %v10215
    %10280 = vst [vmem:[#allocation3 + $0x170] sm:$0xff] %v10216
    %10281 = vst [vmem:[#allocation3 + $0x178] sm:$0xff] %v10217
    %10282 = vst [vmem:[#allocation3 + $0x180] sm:$0xff] %v10218
    %10283 = vst [vmem:[#allocation3 + $0x188] sm:$0xff] %v10219
    %10284 = vst [vmem:[#allocation3 + $0x190] sm:$0xff] %v10220
    %10285 = vst [vmem:[#allocation3 + $0x198] sm:$0xff] %v10221
    %10286 = vst [vmem:[#allocation3 + $0x1a0] sm:$0xff] %v10222
    %10287 = vst [vmem:[#allocation3 + $0x1a8] sm:$0xff] %v10223
    %10288 = vst [vmem:[#allocation3 + $0x1b0] sm:$0xff] %v10224
    %10289 = vst [vmem:[#allocation3 + $0x1b8] sm:$0xff] %v10225
    %10290 = vst [vmem:[#allocation3 + $0x1c0] sm:$0xff] %v10226
    %10291 = vst [vmem:[#allocation3 + $0x1c8] sm:$0xff] %v10227
    %10292 = vst [vmem:[#allocation3 + $0x1d0] sm:$0xff] %v10228
    %10293 = vst [vmem:[#allocation3 + $0x1d8] sm:$0xff] %v10229
    %10294 = vst [vmem:[#allocation3 + $0x1e0] sm:$0xff] %v10230
    %10295 = vst [vmem:[#allocation3 + $0x1e8] sm:$0xff] %v10231
    %10296 = vst [vmem:[#allocation3 + $0x1f0] sm:$0xff] %v10232
    %10297 = vst [vmem:[#allocation3 + $0x1f8] sm:$0xff] %v10233
    // Predicated region
    $region30: #{vgg_block_forward.1} parent=1 // pred_check
      _
    $region31: #{vgg_block_forward.1} parent=1 // pred_check_branch
      %10299 = sbr.rel (0) target = $region33
    $region32: #{vgg_block_forward.1} parent=1 // pred_region
      %10301 = vsyncadd [#allocation4], 0
      %s10302 = sshll.u32 [#allocation3], 4
      %s10303 = int_to_ptr.vmem [resolvable:$true] %s10302
      %s10304 = sshll.u32 %s7, 4
      %s10305 = int_to_ptr.hbm [resolvable:$true] %s10304
      %10310 = dma.vmem_to_hbm [thread:$0]  %s10303, 8192, %s10305, [#allocation4], 128, 128, 8
    $region33: #{vgg_block_forward.1} parent=1 // pred_fallthru
      _
    // Predicated region
    $region34: #{vgg_block_forward.1} parent=1 // pred_check
      _
    $region35: #{vgg_block_forward.1} parent=1 // pred_check_branch
      %10312 = sbr.rel (0) target = $region37
    $region36: #{vgg_block_forward.1} parent=1 // pred_region
      %10314 = dma.done [#allocation4], 8192
    $region37: #{vgg_block_forward.1} parent=1 // pred_fallthru
      _
    %10315 = vsyncpa [#allocation4], 1

</llo_original>
